<compile_context>
chip_gen: v5e
topology: v5e:2x2
jax: 0.10.0
libtpu: 0.0.40
codegen_flags: <defaults>
</compile_context>

<pallas_src>
import functools

import numpy as np
import jax
import jax.numpy as jnp
from jax.experimental import pallas as pl
from jax.experimental.pallas import tpu as pltpu


HEAD_N = 128            # lane-dense packed head output: [policy | v_ext | v_int | 0-pad]
HEAD_K = 3200           # 7*7*64 = 3136 flatten features zero-padded to 5 * 640
HEAD_TK = 640           # K tile for the l1 matmul (multiple of 128 lanes)
CONV_CPAD = 128         # conv1/conv2 output channels padded to a full lane width


def _round_up(v, m):
    return ((v + m - 1) // m) * m


def _cdiv(a, b):
    return -(-a // b)


def _elu(y):
    # ELU(alpha=1): y if y > 0 else exp(y) - 1  (computed in f32)
    return jnp.where(y > 0, y, jnp.exp(jnp.minimum(y, 0.0)) - 1.0)


# ----------------------------------------------------------------------------
# Kernel 1: tiled  y = ELU(x @ w + b)  for the im2col'd convolutions.
#   x: (tile_m, K) bf16, w: (K, N) bf16 (resident), b: (1, N) f32,
#   out: (tile_m, N) bf16.  f32 MXU accumulation, bias + ELU fused in f32.
# ----------------------------------------------------------------------------
def _mm_bias_elu_kernel(x_ref, w_ref, b_ref, o_ref):
    y = jnp.dot(x_ref[...], w_ref[...], preferred_element_type=jnp.float32)
    y = _elu(y + b_ref[...])
    o_ref[...] = y.astype(o_ref.dtype)


def pallas_matmul_bias_elu(x, w, b, *, tile_cap=512):
    """x: (M, K) bf16, w: (K, N) bf16, b: (1, N) f32 -> (M, N) bf16."""
    M, K = x.shape
    Kw, N = w.shape
    assert K == Kw and b.shape == (1, N)
    assert x.dtype == jnp.bfloat16 and w.dtype == jnp.bfloat16
    num = _cdiv(M, tile_cap)                       # VMEM-bounded grid
    tile_m = _round_up(_cdiv(M, num), 16)          # bf16 sublane-packing safe
    m_pad = tile_m * num
    if m_pad != M:
        x = jnp.pad(x, ((0, m_pad - M), (0, 0)))
    out = pl.pallas_call(
        _mm_bias_elu_kernel,
        out_shape=jax.ShapeDtypeStruct((m_pad, N), jnp.bfloat16),
        grid=(num,),
        in_specs=[
            pl.BlockSpec((tile_m, K), lambda i: (i, 0)),
            pl.BlockSpec((K, N), lambda i: (0, 0)),
            pl.BlockSpec((1, N), lambda i: (0, 0)),
        ],
        out_specs=pl.BlockSpec((tile_m, N), lambda i: (i, 0)),
        compiler_params=pltpu.CompilerParams(
            dimension_semantics=("parallel",)),
        cost_estimate=pl.CostEstimate(
            flops=2 * m_pad * K * N,
            transcendentals=m_pad * N,
            bytes_accessed=(int(x.size) * 2 + int(w.size) * 2
                            + int(b.size) * 4 + m_pad * N * 2)),
    )(x, w, b)
    return out[:M] if m_pad != M else out


# ----------------------------------------------------------------------------
# im2col glue (plain-JAX layout work on bf16; XLA fuses the strided slices):
#   NHWC -> (B*Ho*Wo, kh*kw*C) with (kh, kw, C) feature order (C on lanes).
# ----------------------------------------------------------------------------
def _im2col_nhwc(x, kh, kw, stride):
    B, H, W, C = x.shape
    ho = (H - kh) // stride + 1
    wo = (W - kw) // stride + 1
    cols = []
    for i in range(kh):
        for j in range(kw):
            cols.append(x[:, i:i + stride * ho:stride,
                          j:j + stride * wo:stride, :])
    p = jnp.stack(cols, axis=3)                     # (B, Ho, Wo, kh*kw, C)
    return p.reshape(B * ho * wo, kh * kw * C), ho, wo


def conv2d_elu(x, w_km, b, *, kh, kw, stride, tile_cap=512):
    """x: (B,H,W,Cin) bf16, w_km: (kh*kw*Cin, Cout) bf16 -> (B,Ho,Wo,Cout) bf16."""
    B = x.shape[0]
    patches, ho, wo = _im2col_nhwc(x, kh, kw, stride)
    y = pallas_matmul_bias_elu(patches, w_km, b, tile_cap=tile_cap)
    return y.reshape(B, ho, wo, -1)


# ----------------------------------------------------------------------------
# Kernel 2: fused dense head stack.  One launch, weights VMEM-resident,
# K-grid over the big l1 weight so its DMA pipelines with the matmul,
# intermediate activations on-chip, single lane-dense (B_pad, 128) store.
# ----------------------------------------------------------------------------
def _fused_head_kernel(x_ref, w1_ref, b1_ref, w2_ref, b2_ref,
                       wa1_ref, ba1_ref, wcc_ref, bcc_ref,
                       wpol_ref, wval_ref, bout_ref, o_ref, acc_ref):
    k = pl.program_id(0)

    @pl.when(k == 0)
    def _():
        acc_ref[...] = jnp.zeros_like(acc_ref)

    # Streamed l1 matmul: accumulate this K-chunk (f32 accumulator scratch).
    acc_ref[...] += jnp.dot(x_ref[...], w1_ref[...],
                            preferred_element_type=jnp.float32)

    @pl.when(k == pl.num_programs(0) - 1)
    def _():
        h1 = _elu(acc_ref[...] + b1_ref[...])                       # (Bp,256)
        feat = _elu(jnp.dot(h1.astype(jnp.bfloat16), w2_ref[...],
                            preferred_element_type=jnp.float32) + b2_ref[...])
        fb = feat.astype(jnp.bfloat16)
        # actor hidden and common critic layer share the same input `feat`
        ah = _elu(jnp.dot(fb, wa1_ref[...],
                          preferred_element_type=jnp.float32) + ba1_ref[...])
        common = _elu(jnp.dot(fb, wcc_ref[...],
                              preferred_element_type=jnp.float32) + bcc_ref[...])
        h = (common + feat).astype(jnp.bfloat16)                    # residual
        # lane-dense packed output: cols [0:out) = policy, [out:out+2) = values
        out = (jnp.dot(ah.astype(jnp.bfloat16), wpol_ref[...],
                       preferred_element_type=jnp.float32)
               + jnp.dot(h, wval_ref[...], preferred_element_type=jnp.float32)
               + bout_ref[...])
        o_ref[...] = out


def fused_head(x, p):
    """x: (B, 3136) bf16 -> (B, HEAD_N) f32 packed [policy | v_ext | v_int]."""
    B, K = x.shape
    assert K == 7 * 7 * 64 and x.dtype == jnp.bfloat16
    b_pad = _round_up(max(B, 8), 8)
    # single pad op: batch -> multiple of 8 sublanes, K -> 3200 (5 x 640 tiles)
    x = jnp.pad(x, ((0, b_pad - B), (0, HEAD_K - K)))
    kt = HEAD_K // HEAD_TK

    flops = 2 * b_pad * (HEAD_K * 256 + 256 * 448 + 2 * 448 * 448
                         + 2 * 448 * HEAD_N)
    w_bytes = sum(int(p[k].size) * 2
                  for k in ("l1_w", "l2_w", "a1_w", "cc_w", "pol_w", "val_w"))
    out = pl.pallas_call(
        _fused_head_kernel,
        out_shape=jax.ShapeDtypeStruct((b_pad, HEAD_N), jnp.float32),
        grid=(kt,),
        in_specs=[
            pl.BlockSpec((b_pad, HEAD_TK), lambda k: (0, k)),    # x (K-tiled)
            pl.BlockSpec((HEAD_TK, 256), lambda k: (k, 0)),      # l1_w (K-tiled)
            pl.BlockSpec((1, 256), lambda k: (0, 0)),            # l1_b
            pl.BlockSpec((256, 448), lambda k: (0, 0)),          # l2_w
            pl.BlockSpec((1, 448), lambda k: (0, 0)),            # l2_b
            pl.BlockSpec((448, 448), lambda k: (0, 0)),          # a1_w
            pl.BlockSpec((1, 448), lambda k: (0, 0)),            # a1_b
            pl.BlockSpec((448, 448), lambda k: (0, 0)),          # cc_w
            pl.BlockSpec((1, 448), lambda k: (0, 0)),            # cc_b
            pl.BlockSpec((448, HEAD_N), lambda k: (0, 0)),       # pol_w
            pl.BlockSpec((448, HEAD_N), lambda k: (0, 0)),       # val_w
            pl.BlockSpec((1, HEAD_N), lambda k: (0, 0)),         # out_b
        ],
        out_specs=pl.BlockSpec((b_pad, HEAD_N), lambda k: (0, 0)),
        scratch_shapes=[pltpu.VMEM((b_pad, 256), jnp.float32)],
        compiler_params=pltpu.CompilerParams(
            dimension_semantics=("arbitrary",)),
        cost_estimate=pl.CostEstimate(
            flops=flops,
            transcendentals=b_pad * (256 + 3 * 448),
            bytes_accessed=int(x.size) * 2 + w_bytes + b_pad * HEAD_N * 4),
    )(x, p["l1_w"], p["l1_b"], p["l2_w"], p["l2_b"],
      p["a1_w"], p["a1_b"], p["cc_w"], p["cc_b"],
      p["pol_w"], p["val_w"], p["out_b"])
    return out[:B]


# ----------------------------------------------------------------------------
# Deterministic parameter init (PyTorch-style orthogonal_, numpy QR), stored
# pre-laid-out for the kernels: conv weights (kh*kw*Cin_pad, Cout_pad) with
# 128-lane-padded channels, dense weights (K, N), heads packed lane-dense,
# all matmul weights bf16 (biases stay f32).
# ----------------------------------------------------------------------------
def _orthogonal(rng, shape, gain):
    rows = shape[0]
    cols = int(np.prod(shape[1:]))
    a = rng.standard_normal((rows, cols)) if rows >= cols else rng.standard_normal((cols, rows))
    q, r = np.linalg.qr(a)
    d = np.diag(r)
    q = q * np.where(d == 0, 1.0, np.sign(d))
    if rows < cols:
        q = q.T
    return (gain * q[:rows, :cols]).reshape(shape).astype(np.float32)


def init_params(output_size, seed=0):
    assert output_size + 2 <= HEAD_N
    rng = np.random.default_rng(seed)
    g2 = float(np.sqrt(2.0))

    def conv_w(cout, cin, kh, kw, gain, cin_pad, cout_pad):
        w = _orthogonal(rng, (cout, cin, kh, kw), gain)          # PyTorch (O,I,kh,kw)
        wp = np.zeros((kh, kw, cin_pad, cout_pad), np.float32)
        wp[:, :, :cin, :cout] = w.transpose(2, 3, 1, 0)          # (kh,kw,Cin,Cout)
        return wp.reshape(kh * kw * cin_pad, cout_pad)

    p = {}
    # conv1/conv2 outputs padded to 128 lanes; padded channels stay exactly 0
    # (zero weight columns + zero bias -> ELU(0) = 0), downstream zero K rows.
    p["c1_w"] = conv_w(32, 4, 8, 8, g2, cin_pad=4, cout_pad=CONV_CPAD)
    p["c1_b"] = np.zeros((1, CONV_CPAD), np.float32)
    p["c2_w"] = conv_w(64, 32, 4, 4, g2, cin_pad=CONV_CPAD, cout_pad=CONV_CPAD)
    p["c2_b"] = np.zeros((1, CONV_CPAD), np.float32)
    p["c3_w"] = conv_w(64, 64, 3, 3, g2, cin_pad=CONV_CPAD, cout_pad=64)
    p["c3_b"] = np.zeros((1, 64), np.float32)

    # Linear(3136,256): PyTorch flattens (C=64,H=7,W=7); the channels-last
    # trunk flattens (H,W,C), so permute the columns once here (host side),
    # then zero-pad K rows 3136 -> 3200 to match the head's K tiling.
    l1 = _orthogonal(rng, (256, 7 * 7 * 64), g2)
    l1 = l1.reshape(256, 64, 7, 7).transpose(0, 2, 3, 1).reshape(256, -1).T   # (3136,256)
    l1p = np.zeros((HEAD_K, 256), np.float32)
    l1p[:7 * 7 * 64] = l1
    p["l1_w"] = l1p
    p["l1_b"] = np.zeros((1, 256), np.float32)

    p["l2_w"] = _orthogonal(rng, (448, 256), g2).T               # (256, 448)
    p["l2_b"] = np.zeros((1, 448), np.float32)

    p["a1_w"] = _orthogonal(rng, (448, 448), 0.01).T             # actor hidden
    p["a1_b"] = np.zeros((1, 448), np.float32)
    p["cc_w"] = _orthogonal(rng, (448, 448), 0.1).T              # common critic
    p["cc_b"] = np.zeros((1, 448), np.float32)

    a2 = _orthogonal(rng, (output_size, 448), 0.01)              # actor out
    ce = _orthogonal(rng, (1, 448), 0.01)                        # critic_ext
    ci = _orthogonal(rng, (1, 448), 0.01)                        # critic_int

    # Pack actor output + both critic heads into lane-dense 128-wide slabs.
    pol = np.zeros((448, HEAD_N), np.float32)
    pol[:, :output_size] = a2.T
    val = np.zeros((448, HEAD_N), np.float32)
    val[:, output_size] = ce[0]
    val[:, output_size + 1] = ci[0]
    p["pol_w"] = pol
    p["val_w"] = val
    p["out_b"] = np.zeros((1, HEAD_N), np.float32)               # all biases zero

    out = {}
    for k, v in p.items():
        out[k] = jnp.asarray(v, dtype=jnp.float32 if k.endswith("_b") else jnp.bfloat16)
    return out


# ----------------------------------------------------------------------------
# Forward pass (matches PPOModel.forward).
# ----------------------------------------------------------------------------
def ppo_forward(params, state, output_size):
    """state: (B, 4, 84, 84) NCHW f32 -> (policy, value_ext, value_int)."""
    B = state.shape[0]
    # single NCHW->NHWC transpose + bf16 cast; whole conv chain stays bf16
    x = jnp.transpose(state, (0, 2, 3, 1)).astype(jnp.bfloat16)
    x = conv2d_elu(x, params["c1_w"], params["c1_b"],
                   kh=8, kw=8, stride=4, tile_cap=1024)           # (B,20,20,128)
    x = conv2d_elu(x, params["c2_w"], params["c2_b"],
                   kh=4, kw=4, stride=2, tile_cap=512)            # (B,9,9,128)
    x = conv2d_elu(x, params["c3_w"], params["c3_b"],
                   kh=3, kw=3, stride=1, tile_cap=512)            # (B,7,7,64)
    x = x.reshape(B, 7 * 7 * 64)                                  # free (H,W,C) flatten, bf16
    out = fused_head(x, params)                                   # (B, 128) packed f32
    policy = out[:, :output_size]
    value_ext = out[:, output_size:output_size + 1]
    value_int = out[:, output_size + 1:output_size + 2]
    return policy, value_ext, value_int


if __name__ == "__main__":
    OUTPUT_SIZE = 6          # number of discrete actions
    BATCH = 2
    # Spatial size must be 84x84 so the conv trunk yields 7x7x64 = 3136 feats
    # (required by Linear(7*7*64, 256) in the spec).
    key = jax.random.PRNGKey(0)
    state = jax.random.normal(key, (BATCH, 4, 84, 84), dtype=jnp.float32)

    params = init_params(OUTPUT_SIZE, seed=0)

    fwd = jax.jit(functools.partial(ppo_forward, output_size=OUTPUT_SIZE))
    policy, value_ext, value_int = fwd(params, state)
    jax.block_until_ready((policy, value_ext, value_int))

    assert policy.shape == (BATCH, OUTPUT_SIZE)
    assert value_ext.shape == (BATCH, 1)
    assert value_int.shape == (BATCH, 1)
    assert bool(jnp.all(jnp.isfinite(policy)))
    assert bool(jnp.all(jnp.isfinite(value_ext)))
    assert bool(jnp.all(jnp.isfinite(value_int)))
    print("KERNEL_OK")
</pallas_src>

<mosaic_0001>
module attributes {stable_mosaic.version = 11 : i64} {
  func.func @_mm_bias_elu_kernel(%arg0: i32, %arg1: memref<800x256xbf16, #tpu.memory_space<vmem>>, %arg2: memref<256x128xbf16, #tpu.memory_space<vmem>>, %arg3: memref<1x128xf32, #tpu.memory_space<vmem>>, %arg4: memref<800x128xbf16, #tpu.memory_space<vmem>>) attributes {dimension_semantics = [#tpu.dimension_semantics<parallel>], iteration_bounds = array<i64: 1>, scalar_prefetch = 0 : i64, scratch_operands = 0 : i64, tpu.core_type = #tpu.core_type<tc>, window_params = [{transform_indices = @transform_0, window_bounds = array<i64: 800, 256>}, {pipeline_mode = #tpu.pipeline_mode<synchronous>, transform_indices = @transform_1, window_bounds = array<i64: 256, 128>}, {pipeline_mode = #tpu.pipeline_mode<synchronous>, transform_indices = @transform_2, window_bounds = array<i64: 1, 128>}, {transform_indices = @transform_3, window_bounds = array<i64: 800, 128>}]} {
    %c0 = arith.constant 0 : index
    %c0_0 = arith.constant 0 : index
    %0 = vector.load %arg1[%c0, %c0_0] : memref<800x256xbf16, #tpu.memory_space<vmem>>, vector<800x256xbf16>
    %c0_1 = arith.constant 0 : index
    %c0_2 = arith.constant 0 : index
    %1 = vector.load %arg2[%c0_1, %c0_2] : memref<256x128xbf16, #tpu.memory_space<vmem>>, vector<256x128xbf16>
    %cst = arith.constant dense<0.000000e+00> : vector<800x128xf32>
    %2 = tpu.matmul %0, %1, %cst {dimension_numbers = #tpu.dot_dimension_numbers<[1], [0], [0], [1], [0, 0, 1, 1], [], []>} : vector<800x256xbf16>, vector<256x128xbf16>, vector<800x128xf32> -> vector<800x128xf32>
    %c0_3 = arith.constant 0 : index
    %c0_4 = arith.constant 0 : index
    %3 = vector.load %arg3[%c0_3, %c0_4] : memref<1x128xf32, #tpu.memory_space<vmem>>, vector<1x128xf32>
    %4 = vector.broadcast %3 : vector<1x128xf32> to vector<800x128xf32>
    %5 = arith.addf %2, %4 : vector<800x128xf32>
    %cst_5 = arith.constant 0.000000e+00 : f32
    %6 = vector.broadcast %cst_5 : f32 to vector<800x128xf32>
    %7 = arith.cmpf ogt, %5, %6 : vector<800x128xf32>
    %cst_6 = arith.constant 0.000000e+00 : f32
    %8 = vector.broadcast %cst_6 : f32 to vector<800x128xf32>
    %9 = arith.minimumf %5, %8 : vector<800x128xf32>
    %10 = math.exp %9 : vector<800x128xf32>
    %cst_7 = arith.constant 1.000000e+00 : f32
    %11 = vector.broadcast %cst_7 : f32 to vector<800x128xf32>
    %12 = arith.subf %10, %11 : vector<800x128xf32>
    %13 = arith.select %7, %5, %12 : vector<800x128xi1>, vector<800x128xf32>
    %14 = arith.truncf %13 : vector<800x128xf32> to vector<800x128xbf16>
    %c0_8 = arith.constant 0 : index
    %c0_9 = arith.constant 0 : index
    %15 = vector.load %arg4[%c0_8, %c0_9] : memref<800x128xbf16, #tpu.memory_space<vmem>>, vector<800x128xbf16>
    tpu.vector_store %arg4[%c0_8, %c0_9], %14 {strides = array<i32>} : memref<800x128xbf16, #tpu.memory_space<vmem>>, vector<800x128xbf16>,
    return
  }
  func.func @transform_0(%arg0: i32) -> (i32, i32) {
    %c0_i32 = arith.constant 0 : i32
    %c0_i32_0 = arith.constant 0 : i32
    return %arg0, %c0_i32 : i32, i32
  }
  func.func @transform_1(%arg0: i32) -> (i32, i32) {
    %c0_i32 = arith.constant 0 : i32
    %c0_i32_0 = arith.constant 0 : i32
    %c0_i32_1 = arith.constant 0 : i32
    return %c0_i32, %c0_i32_0 : i32, i32
  }
  func.func @transform_2(%arg0: i32) -> (i32, i32) {
    %c0_i32 = arith.constant 0 : i32
    %c0_i32_0 = arith.constant 0 : i32
    %c0_i32_1 = arith.constant 0 : i32
    return %c0_i32, %c0_i32_0 : i32, i32
  }
  func.func @transform_3(%arg0: i32) -> (i32, i32) {
    %c0_i32 = arith.constant 0 : i32
    %c0_i32_0 = arith.constant 0 : i32
    return %arg0, %c0_i32 : i32, i32
  }
}

module attributes {stable_mosaic.version = 11 : i64} {
  func.func @_mm_bias_elu_kernel(%arg0: i32, %arg1: memref<176x2048xbf16, #tpu.memory_space<vmem>>, %arg2: memref<2048x128xbf16, #tpu.memory_space<vmem>>, %arg3: memref<1x128xf32, #tpu.memory_space<vmem>>, %arg4: memref<176x128xbf16, #tpu.memory_space<vmem>>) attributes {dimension_semantics = [#tpu.dimension_semantics<parallel>], iteration_bounds = array<i64: 1>, scalar_prefetch = 0 : i64, scratch_operands = 0 : i64, tpu.core_type = #tpu.core_type<tc>, window_params = [{transform_indices = @transform_0, window_bounds = array<i64: 176, 2048>}, {pipeline_mode = #tpu.pipeline_mode<synchronous>, transform_indices = @transform_1, window_bounds = array<i64: 2048, 128>}, {pipeline_mode = #tpu.pipeline_mode<synchronous>, transform_indices = @transform_2, window_bounds = array<i64: 1, 128>}, {transform_indices = @transform_3, window_bounds = array<i64: 176, 128>}]} {
    %c0 = arith.constant 0 : index
    %c0_0 = arith.constant 0 : index
    %0 = vector.load %arg1[%c0, %c0_0] : memref<176x2048xbf16, #tpu.memory_space<vmem>>, vector<176x2048xbf16>
    %c0_1 = arith.constant 0 : index
    %c0_2 = arith.constant 0 : index
    %1 = vector.load %arg2[%c0_1, %c0_2] : memref<2048x128xbf16, #tpu.memory_space<vmem>>, vector<2048x128xbf16>
    %cst = arith.constant dense<0.000000e+00> : vector<176x128xf32>
    %2 = tpu.matmul %0, %1, %cst {dimension_numbers = #tpu.dot_dimension_numbers<[1], [0], [0], [1], [0, 0, 1, 1], [], []>} : vector<176x2048xbf16>, vector<2048x128xbf16>, vector<176x128xf32> -> vector<176x128xf32>
    %c0_3 = arith.constant 0 : index
    %c0_4 = arith.constant 0 : index
    %3 = vector.load %arg3[%c0_3, %c0_4] : memref<1x128xf32, #tpu.memory_space<vmem>>, vector<1x128xf32>
    %4 = vector.broadcast %3 : vector<1x128xf32> to vector<176x128xf32>
    %5 = arith.addf %2, %4 : vector<176x128xf32>
    %cst_5 = arith.constant 0.000000e+00 : f32
    %6 = vector.broadcast %cst_5 : f32 to vector<176x128xf32>
    %7 = arith.cmpf ogt, %5, %6 : vector<176x128xf32>
    %cst_6 = arith.constant 0.000000e+00 : f32
    %8 = vector.broadcast %cst_6 : f32 to vector<176x128xf32>
    %9 = arith.minimumf %5, %8 : vector<176x128xf32>
    %10 = math.exp %9 : vector<176x128xf32>
    %cst_7 = arith.constant 1.000000e+00 : f32
    %11 = vector.broadcast %cst_7 : f32 to vector<176x128xf32>
    %12 = arith.subf %10, %11 : vector<176x128xf32>
    %13 = arith.select %7, %5, %12 : vector<176x128xi1>, vector<176x128xf32>
    %14 = arith.truncf %13 : vector<176x128xf32> to vector<176x128xbf16>
    %c0_8 = arith.constant 0 : index
    %c0_9 = arith.constant 0 : index
    %15 = vector.load %arg4[%c0_8, %c0_9] : memref<176x128xbf16, #tpu.memory_space<vmem>>, vector<176x128xbf16>
    tpu.vector_store %arg4[%c0_8, %c0_9], %14 {strides = array<i32>} : memref<176x128xbf16, #tpu.memory_space<vmem>>, vector<176x128xbf16>,
    return
  }
  func.func @transform_0(%arg0: i32) -> (i32, i32) {
    %c0_i32 = arith.constant 0 : i32
    %c0_i32_0 = arith.constant 0 : i32
    return %arg0, %c0_i32 : i32, i32
  }
  func.func @transform_1(%arg0: i32) -> (i32, i32) {
    %c0_i32 = arith.constant 0 : i32
    %c0_i32_0 = arith.constant 0 : i32
    %c0_i32_1 = arith.constant 0 : i32
    return %c0_i32, %c0_i32_0 : i32, i32
  }
  func.func @transform_2(%arg0: i32) -> (i32, i32) {
    %c0_i32 = arith.constant 0 : i32
    %c0_i32_0 = arith.constant 0 : i32
    %c0_i32_1 = arith.constant 0 : i32
    return %c0_i32, %c0_i32_0 : i32, i32
  }
  func.func @transform_3(%arg0: i32) -> (i32, i32) {
    %c0_i32 = arith.constant 0 : i32
    %c0_i32_0 = arith.constant 0 : i32
    return %arg0, %c0_i32 : i32, i32
  }
}

module attributes {stable_mosaic.version = 11 : i64} {
  func.func @_mm_bias_elu_kernel(%arg0: i32, %arg1: memref<112x1152xbf16, #tpu.memory_space<vmem>>, %arg2: memref<1152x64xbf16, #tpu.memory_space<vmem>>, %arg3: memref<1x64xf32, #tpu.memory_space<vmem>>, %arg4: memref<112x64xbf16, #tpu.memory_space<vmem>>) attributes {dimension_semantics = [#tpu.dimension_semantics<parallel>], iteration_bounds = array<i64: 1>, scalar_prefetch = 0 : i64, scratch_operands = 0 : i64, tpu.core_type = #tpu.core_type<tc>, window_params = [{transform_indices = @transform_0, window_bounds = array<i64: 112, 1152>}, {pipeline_mode = #tpu.pipeline_mode<synchronous>, transform_indices = @transform_1, window_bounds = array<i64: 1152, 64>}, {pipeline_mode = #tpu.pipeline_mode<synchronous>, transform_indices = @transform_2, window_bounds = array<i64: 1, 64>}, {transform_indices = @transform_3, window_bounds = array<i64: 112, 64>}]} {
    %c0 = arith.constant 0 : index
    %c0_0 = arith.constant 0 : index
    %0 = vector.load %arg1[%c0, %c0_0] : memref<112x1152xbf16, #tpu.memory_space<vmem>>, vector<112x1152xbf16>
    %c0_1 = arith.constant 0 : index
    %c0_2 = arith.constant 0 : index
    %1 = vector.load %arg2[%c0_1, %c0_2] : memref<1152x64xbf16, #tpu.memory_space<vmem>>, vector<1152x64xbf16>
    %cst = arith.constant dense<0.000000e+00> : vector<112x64xf32>
    %2 = tpu.matmul %0, %1, %cst {dimension_numbers = #tpu.dot_dimension_numbers<[1], [0], [0], [1], [0, 0, 1, 1], [], []>} : vector<112x1152xbf16>, vector<1152x64xbf16>, vector<112x64xf32> -> vector<112x64xf32>
    %c0_3 = arith.constant 0 : index
    %c0_4 = arith.constant 0 : index
    %3 = vector.load %arg3[%c0_3, %c0_4] : memref<1x64xf32, #tpu.memory_space<vmem>>, vector<1x64xf32>
    %4 = vector.broadcast %3 : vector<1x64xf32> to vector<112x64xf32>
    %5 = arith.addf %2, %4 : vector<112x64xf32>
    %cst_5 = arith.constant 0.000000e+00 : f32
    %6 = vector.broadcast %cst_5 : f32 to vector<112x64xf32>
    %7 = arith.cmpf ogt, %5, %6 : vector<112x64xf32>
    %cst_6 = arith.constant 0.000000e+00 : f32
    %8 = vector.broadcast %cst_6 : f32 to vector<112x64xf32>
    %9 = arith.minimumf %5, %8 : vector<112x64xf32>
    %10 = math.exp %9 : vector<112x64xf32>
    %cst_7 = arith.constant 1.000000e+00 : f32
    %11 = vector.broadcast %cst_7 : f32 to vector<112x64xf32>
    %12 = arith.subf %10, %11 : vector<112x64xf32>
    %13 = arith.select %7, %5, %12 : vector<112x64xi1>, vector<112x64xf32>
    %14 = arith.truncf %13 : vector<112x64xf32> to vector<112x64xbf16>
    %c0_8 = arith.constant 0 : index
    %c0_9 = arith.constant 0 : index
    %15 = vector.load %arg4[%c0_8, %c0_9] : memref<112x64xbf16, #tpu.memory_space<vmem>>, vector<112x64xbf16>
    tpu.vector_store %arg4[%c0_8, %c0_9], %14 {strides = array<i32>} : memref<112x64xbf16, #tpu.memory_space<vmem>>, vector<112x64xbf16>,
    return
  }
  func.func @transform_0(%arg0: i32) -> (i32, i32) {
    %c0_i32 = arith.constant 0 : i32
    %c0_i32_0 = arith.constant 0 : i32
    return %arg0, %c0_i32 : i32, i32
  }
  func.func @transform_1(%arg0: i32) -> (i32, i32) {
    %c0_i32 = arith.constant 0 : i32
    %c0_i32_0 = arith.constant 0 : i32
    %c0_i32_1 = arith.constant 0 : i32
    return %c0_i32, %c0_i32_0 : i32, i32
  }
  func.func @transform_2(%arg0: i32) -> (i32, i32) {
    %c0_i32 = arith.constant 0 : i32
    %c0_i32_0 = arith.constant 0 : i32
    %c0_i32_1 = arith.constant 0 : i32
    return %c0_i32, %c0_i32_0 : i32, i32
  }
  func.func @transform_3(%arg0: i32) -> (i32, i32) {
    %c0_i32 = arith.constant 0 : i32
    %c0_i32_0 = arith.constant 0 : i32
    return %arg0, %c0_i32 : i32, i32
  }
}

module attributes {stable_mosaic.version = 11 : i64} {
  func.func @_fused_head_kernel(%arg0: i32, %arg1: memref<8x640xbf16, #tpu.memory_space<vmem>>, %arg2: memref<640x256xbf16, #tpu.memory_space<vmem>>, %arg3: memref<1x256xf32, #tpu.memory_space<vmem>>, %arg4: memref<256x448xbf16, #tpu.memory_space<vmem>>, %arg5: memref<1x448xf32, #tpu.memory_space<vmem>>, %arg6: memref<448x448xbf16, #tpu.memory_space<vmem>>, %arg7: memref<1x448xf32, #tpu.memory_space<vmem>>, %arg8: memref<448x448xbf16, #tpu.memory_space<vmem>>, %arg9: memref<1x448xf32, #tpu.memory_space<vmem>>, %arg10: memref<448x128xbf16, #tpu.memory_space<vmem>>, %arg11: memref<448x128xbf16, #tpu.memory_space<vmem>>, %arg12: memref<1x128xf32, #tpu.memory_space<vmem>>, %arg13: memref<8x128xf32, #tpu.memory_space<vmem>>, %arg14: memref<8x256xf32, #tpu.memory_space<vmem>>) attributes {dimension_semantics = [#tpu.dimension_semantics<arbitrary>], iteration_bounds = array<i64: 5>, scalar_prefetch = 0 : i64, scratch_operands = 1 : i64, tpu.core_type = #tpu.core_type<tc>, window_params = [{transform_indices = @transform_0, window_bounds = array<i64: 8, 640>}, {transform_indices = @transform_1, window_bounds = array<i64: 640, 256>}, {pipeline_mode = #tpu.pipeline_mode<synchronous>, transform_indices = @transform_2, window_bounds = array<i64: 1, 256>}, {pipeline_mode = #tpu.pipeline_mode<synchronous>, transform_indices = @transform_3, window_bounds = array<i64: 256, 448>}, {pipeline_mode = #tpu.pipeline_mode<synchronous>, transform_indices = @transform_4, window_bounds = array<i64: 1, 448>}, {pipeline_mode = #tpu.pipeline_mode<synchronous>, transform_indices = @transform_5, window_bounds = array<i64: 448, 448>}, {pipeline_mode = #tpu.pipeline_mode<synchronous>, transform_indices = @transform_6, window_bounds = array<i64: 1, 448>}, {pipeline_mode = #tpu.pipeline_mode<synchronous>, transform_indices = @transform_7, window_bounds = array<i64: 448, 448>}, {pipeline_mode = #tpu.pipeline_mode<synchronous>, transform_indices = @transform_8, window_bounds = array<i64: 1, 448>}, {pipeline_mode = #tpu.pipeline_mode<synchronous>, transform_indices = @transform_9, window_bounds = array<i64: 448, 128>}, {pipeline_mode = #tpu.pipeline_mode<synchronous>, transform_indices = @transform_10, window_bounds = array<i64: 448, 128>}, {pipeline_mode = #tpu.pipeline_mode<synchronous>, transform_indices = @transform_11, window_bounds = array<i64: 1, 128>}, {pipeline_mode = #tpu.pipeline_mode<synchronous>, transform_indices = @transform_12, window_bounds = array<i64: 8, 128>}]} {
    %c0_i32 = arith.constant 0 : i32
    %0 = arith.cmpi eq, %arg0, %c0_i32 : i32
    %1 = arith.extui %0 : i1 to i32
    %c0_i32_0 = arith.constant 0 : i32
    %2 = arith.cmpi ne, %1, %c0_i32_0 : i32
    scf.if %2 {
      %cst_9 = arith.constant 0.000000e+00 : f32
      %12 = vector.broadcast %cst_9 : f32 to vector<8x256xf32>
      %c0_10 = arith.constant 0 : index
      %c0_11 = arith.constant 0 : index
      %13 = vector.load %arg14[%c0_10, %c0_11] : memref<8x256xf32, #tpu.memory_space<vmem>>, vector<8x256xf32>
      tpu.vector_store %arg14[%c0_10, %c0_11], %12 {strides = array<i32>} : memref<8x256xf32, #tpu.memory_space<vmem>>, vector<8x256xf32>,
    } else {
    }
    %c0 = arith.constant 0 : index
    %c0_1 = arith.constant 0 : index
    %3 = vector.load %arg14[%c0, %c0_1] : memref<8x256xf32, #tpu.memory_space<vmem>>, vector<8x256xf32>
    %c0_2 = arith.constant 0 : index
    %c0_3 = arith.constant 0 : index
    %4 = vector.load %arg1[%c0_2, %c0_3] : memref<8x640xbf16, #tpu.memory_space<vmem>>, vector<8x640xbf16>
    %c0_4 = arith.constant 0 : index
    %c0_5 = arith.constant 0 : index
    %5 = vector.load %arg2[%c0_4, %c0_5] : memref<640x256xbf16, #tpu.memory_space<vmem>>, vector<640x256xbf16>
    %cst = arith.constant dense<0.000000e+00> : vector<8x256xf32>
    %6 = tpu.matmul %4, %5, %cst {dimension_numbers = #tpu.dot_dimension_numbers<[1], [0], [0], [1], [0, 0, 1, 1], [], []>} : vector<8x640xbf16>, vector<640x256xbf16>, vector<8x256xf32> -> vector<8x256xf32>
    %7 = arith.addf %3, %6 : vector<8x256xf32>
    %c0_6 = arith.constant 0 : index
    %c0_7 = arith.constant 0 : index
    %8 = vector.load %arg14[%c0_6, %c0_7] : memref<8x256xf32, #tpu.memory_space<vmem>>, vector<8x256xf32>
    tpu.vector_store %arg14[%c0_6, %c0_7], %7 {strides = array<i32>} : memref<8x256xf32, #tpu.memory_space<vmem>>, vector<8x256xf32>,
    %c4_i32 = arith.constant 4 : i32
    %9 = arith.cmpi eq, %arg0, %c4_i32 : i32
    %10 = arith.extui %9 : i1 to i32
    %c0_i32_8 = arith.constant 0 : i32
    %11 = arith.cmpi ne, %10, %c0_i32_8 : i32
    scf.if %11 {
      %c0_9 = arith.constant 0 : index
      %c0_10 = arith.constant 0 : index
      %12 = vector.load %arg14[%c0_9, %c0_10] : memref<8x256xf32, #tpu.memory_space<vmem>>, vector<8x256xf32>
      %c0_11 = arith.constant 0 : index
      %c0_12 = arith.constant 0 : index
      %13 = vector.load %arg3[%c0_11, %c0_12] : memref<1x256xf32, #tpu.memory_space<vmem>>, vector<1x256xf32>
      %14 = vector.broadcast %13 : vector<1x256xf32> to vector<8x256xf32>
      %15 = arith.addf %12, %14 : vector<8x256xf32>
      %cst_13 = arith.constant 0.000000e+00 : f32
      %16 = vector.broadcast %cst_13 : f32 to vector<8x256xf32>
      %17 = arith.cmpf ogt, %15, %16 : vector<8x256xf32>
      %cst_14 = arith.constant 0.000000e+00 : f32
      %18 = vector.broadcast %cst_14 : f32 to vector<8x256xf32>
      %19 = arith.minimumf %15, %18 : vector<8x256xf32>
      %20 = math.exp %19 : vector<8x256xf32>
      %cst_15 = arith.constant 1.000000e+00 : f32
      %21 = vector.broadcast %cst_15 : f32 to vector<8x256xf32>
      %22 = arith.subf %20, %21 : vector<8x256xf32>
      %23 = arith.select %17, %15, %22 : vector<8x256xi1>, vector<8x256xf32>
      %24 = arith.truncf %23 : vector<8x256xf32> to vector<8x256xbf16>
      %c0_16 = arith.constant 0 : index
      %c0_17 = arith.constant 0 : index
      %25 = vector.load %arg4[%c0_16, %c0_17] : memref<256x448xbf16, #tpu.memory_space<vmem>>, vector<256x448xbf16>
      %cst_18 = arith.constant dense<0.000000e+00> : vector<8x448xf32>
      %26 = tpu.matmul %24, %25, %cst_18 {dimension_numbers = #tpu.dot_dimension_numbers<[1], [0], [0], [1], [0, 0, 1, 1], [], []>} : vector<8x256xbf16>, vector<256x448xbf16>, vector<8x448xf32> -> vector<8x448xf32>
      %c0_19 = arith.constant 0 : index
      %c0_20 = arith.constant 0 : index
      %27 = vector.load %arg5[%c0_19, %c0_20] : memref<1x448xf32, #tpu.memory_space<vmem>>, vector<1x448xf32>
      %28 = vector.broadcast %27 : vector<1x448xf32> to vector<8x448xf32>
      %29 = arith.addf %26, %28 : vector<8x448xf32>
      %cst_21 = arith.constant 0.000000e+00 : f32
      %30 = vector.broadcast %cst_21 : f32 to vector<8x448xf32>
      %31 = arith.cmpf ogt, %29, %30 : vector<8x448xf32>
      %cst_22 = arith.constant 0.000000e+00 : f32
      %32 = vector.broadcast %cst_22 : f32 to vector<8x448xf32>
      %33 = arith.minimumf %29, %32 : vector<8x448xf32>
      %34 = math.exp %33 : vector<8x448xf32>
      %cst_23 = arith.constant 1.000000e+00 : f32
      %35 = vector.broadcast %cst_23 : f32 to vector<8x448xf32>
      %36 = arith.subf %34, %35 : vector<8x448xf32>
      %37 = arith.select %31, %29, %36 : vector<8x448xi1>, vector<8x448xf32>
      %38 = arith.truncf %37 : vector<8x448xf32> to vector<8x448xbf16>
      %c0_24 = arith.constant 0 : index
      %c0_25 = arith.constant 0 : index
      %39 = vector.load %arg6[%c0_24, %c0_25] : memref<448x448xbf16, #tpu.memory_space<vmem>>, vector<448x448xbf16>
      %cst_26 = arith.constant dense<0.000000e+00> : vector<8x448xf32>
      %40 = tpu.matmul %38, %39, %cst_26 {dimension_numbers = #tpu.dot_dimension_numbers<[1], [0], [0], [1], [0, 0, 1, 1], [], []>} : vector<8x448xbf16>, vector<448x448xbf16>, vector<8x448xf32> -> vector<8x448xf32>
      %c0_27 = arith.constant 0 : index
      %c0_28 = arith.constant 0 : index
      %41 = vector.load %arg7[%c0_27, %c0_28] : memref<1x448xf32, #tpu.memory_space<vmem>>, vector<1x448xf32>
      %42 = vector.broadcast %41 : vector<1x448xf32> to vector<8x448xf32>
      %43 = arith.addf %40, %42 : vector<8x448xf32>
      %cst_29 = arith.constant 0.000000e+00 : f32
      %44 = vector.broadcast %cst_29 : f32 to vector<8x448xf32>
      %45 = arith.cmpf ogt, %43, %44 : vector<8x448xf32>
      %cst_30 = arith.constant 0.000000e+00 : f32
      %46 = vector.broadcast %cst_30 : f32 to vector<8x448xf32>
      %47 = arith.minimumf %43, %46 : vector<8x448xf32>
      %48 = math.exp %47 : vector<8x448xf32>
      %cst_31 = arith.constant 1.000000e+00 : f32
      %49 = vector.broadcast %cst_31 : f32 to vector<8x448xf32>
      %50 = arith.subf %48, %49 : vector<8x448xf32>
      %51 = arith.select %45, %43, %50 : vector<8x448xi1>, vector<8x448xf32>
      %c0_32 = arith.constant 0 : index
      %c0_33 = arith.constant 0 : index
      %52 = vector.load %arg8[%c0_32, %c0_33] : memref<448x448xbf16, #tpu.memory_space<vmem>>, vector<448x448xbf16>
      %cst_34 = arith.constant dense<0.000000e+00> : vector<8x448xf32>
      %53 = tpu.matmul %38, %52, %cst_34 {dimension_numbers = #tpu.dot_dimension_numbers<[1], [0], [0], [1], [0, 0, 1, 1], [], []>} : vector<8x448xbf16>, vector<448x448xbf16>, vector<8x448xf32> -> vector<8x448xf32>
      %c0_35 = arith.constant 0 : index
      %c0_36 = arith.constant 0 : index
      %54 = vector.load %arg9[%c0_35, %c0_36] : memref<1x448xf32, #tpu.memory_space<vmem>>, vector<1x448xf32>
      %55 = vector.broadcast %54 : vector<1x448xf32> to vector<8x448xf32>
      %56 = arith.addf %53, %55 : vector<8x448xf32>
      %cst_37 = arith.constant 0.000000e+00 : f32
      %57 = vector.broadcast %cst_37 : f32 to vector<8x448xf32>
      %58 = arith.cmpf ogt, %56, %57 : vector<8x448xf32>
      %cst_38 = arith.constant 0.000000e+00 : f32
      %59 = vector.broadcast %cst_38 : f32 to vector<8x448xf32>
      %60 = arith.minimumf %56, %59 : vector<8x448xf32>
      %61 = math.exp %60 : vector<8x448xf32>
      %cst_39 = arith.constant 1.000000e+00 : f32
      %62 = vector.broadcast %cst_39 : f32 to vector<8x448xf32>
      %63 = arith.subf %61, %62 : vector<8x448xf32>
      %64 = arith.select %58, %56, %63 : vector<8x448xi1>, vector<8x448xf32>
      %65 = arith.addf %64, %37 : vector<8x448xf32>
      %66 = arith.truncf %65 : vector<8x448xf32> to vector<8x448xbf16>
      %67 = arith.truncf %51 : vector<8x448xf32> to vector<8x448xbf16>
      %c0_40 = arith.constant 0 : index
      %c0_41 = arith.constant 0 : index
      %68 = vector.load %arg10[%c0_40, %c0_41] : memref<448x128xbf16, #tpu.memory_space<vmem>>, vector<448x128xbf16>
      %cst_42 = arith.constant dense<0.000000e+00> : vector<8x128xf32>
      %69 = tpu.matmul %67, %68, %cst_42 {dimension_numbers = #tpu.dot_dimension_numbers<[1], [0], [0], [1], [0, 0, 1, 1], [], []>} : vector<8x448xbf16>, vector<448x128xbf16>, vector<8x128xf32> -> vector<8x128xf32>
      %c0_43 = arith.constant 0 : index
      %c0_44 = arith.constant 0 : index
      %70 = vector.load %arg11[%c0_43, %c0_44] : memref<448x128xbf16, #tpu.memory_space<vmem>>, vector<448x128xbf16>
      %cst_45 = arith.constant dense<0.000000e+00> : vector<8x128xf32>
      %71 = tpu.matmul %66, %70, %cst_45 {dimension_numbers = #tpu.dot_dimension_numbers<[1], [0], [0], [1], [0, 0, 1, 1], [], []>} : vector<8x448xbf16>, vector<448x128xbf16>, vector<8x128xf32> -> vector<8x128xf32>
      %72 = arith.addf %69, %71 : vector<8x128xf32>
      %c0_46 = arith.constant 0 : index
      %c0_47 = arith.constant 0 : index
      %73 = vector.load %arg12[%c0_46, %c0_47] : memref<1x128xf32, #tpu.memory_space<vmem>>, vector<1x128xf32>
      %74 = vector.broadcast %73 : vector<1x128xf32> to vector<8x128xf32>
      %75 = arith.addf %72, %74 : vector<8x128xf32>
      %c0_48 = arith.constant 0 : index
      %c0_49 = arith.constant 0 : index
      %76 = vector.load %arg13[%c0_48, %c0_49] : memref<8x128xf32, #tpu.memory_space<vmem>>, vector<8x128xf32>
      tpu.vector_store %arg13[%c0_48, %c0_49], %75 {strides = array<i32>} : memref<8x128xf32, #tpu.memory_space<vmem>>, vector<8x128xf32>,
    } else {
    }
    return
  }
  func.func @transform_0(%arg0: i32) -> (i32, i32) {
    %c0_i32 = arith.constant 0 : i32
    %c0_i32_0 = arith.constant 0 : i32
    return %c0_i32, %arg0 : i32, i32
  }
  func.func @transform_1(%arg0: i32) -> (i32, i32) {
    %c0_i32 = arith.constant 0 : i32
    %c0_i32_0 = arith.constant 0 : i32
    return %arg0, %c0_i32 : i32, i32
  }
  func.func @transform_2(%arg0: i32) -> (i32, i32) {
    %c0_i32 = arith.constant 0 : i32
    %c0_i32_0 = arith.constant 0 : i32
    %c0_i32_1 = arith.constant 0 : i32
    return %c0_i32, %c0_i32_0 : i32, i32
  }
  func.func @transform_3(%arg0: i32) -> (i32, i32) {
    %c0_i32 = arith.constant 0 : i32
    %c0_i32_0 = arith.constant 0 : i32
    %c0_i32_1 = arith.constant 0 : i32
    return %c0_i32, %c0_i32_0 : i32, i32
  }
  func.func @transform_4(%arg0: i32) -> (i32, i32) {
    %c0_i32 = arith.constant 0 : i32
    %c0_i32_0 = arith.constant 0 : i32
    %c0_i32_1 = arith.constant 0 : i32
    return %c0_i32, %c0_i32_0 : i32, i32
  }
  func.func @transform_5(%arg0: i32) -> (i32, i32) {
    %c0_i32 = arith.constant 0 : i32
    %c0_i32_0 = arith.constant 0 : i32
    %c0_i32_1 = arith.constant 0 : i32
    return %c0_i32, %c0_i32_0 : i32, i32
  }
  func.func @transform_6(%arg0: i32) -> (i32, i32) {
    %c0_i32 = arith.constant 0 : i32
    %c0_i32_0 = arith.constant 0 : i32
    %c0_i32_1 = arith.constant 0 : i32
    return %c0_i32, %c0_i32_0 : i32, i32
  }
  func.func @transform_7(%arg0: i32) -> (i32, i32) {
    %c0_i32 = arith.constant 0 : i32
    %c0_i32_0 = arith.constant 0 : i32
    %c0_i32_1 = arith.constant 0 : i32
    return %c0_i32, %c0_i32_0 : i32, i32
  }
  func.func @transform_8(%arg0: i32) -> (i32, i32) {
    %c0_i32 = arith.constant 0 : i32
    %c0_i32_0 = arith.constant 0 : i32
    %c0_i32_1 = arith.constant 0 : i32
    return %c0_i32, %c0_i32_0 : i32, i32
  }
  func.func @transform_9(%arg0: i32) -> (i32, i32) {
    %c0_i32 = arith.constant 0 : i32
    %c0_i32_0 = arith.constant 0 : i32
    %c0_i32_1 = arith.constant 0 : i32
    return %c0_i32, %c0_i32_0 : i32, i32
  }
  func.func @transform_10(%arg0: i32) -> (i32, i32) {
    %c0_i32 = arith.constant 0 : i32
    %c0_i32_0 = arith.constant 0 : i32
    %c0_i32_1 = arith.constant 0 : i32
    return %c0_i32, %c0_i32_0 : i32, i32
  }
  func.func @transform_11(%arg0: i32) -> (i32, i32) {
    %c0_i32 = arith.constant 0 : i32
    %c0_i32_0 = arith.constant 0 : i32
    %c0_i32_1 = arith.constant 0 : i32
    return %c0_i32, %c0_i32_0 : i32, i32
  }
  func.func @transform_12(%arg0: i32) -> (i32, i32) {
    %c0_i32 = arith.constant 0 : i32
    %c0_i32_0 = arith.constant 0 : i32
    %c0_i32_1 = arith.constant 0 : i32
    return %c0_i32, %c0_i32_0 : i32, i32
  }
}

</mosaic_0001>

<llo_original>
// kernel: ppo_forward.4
$region0: #{ppo_forward.4}
  #allocation0 [shape = 'u32[]', space=smem, size = 0x4, offset = 0x4, fixed_abs, tag = 'smem constant byte address 0x4 - core index']
  #allocation1 [shape = 'u32[72,128]{1,0:T(1,128)}', space=vmem, size = 0x9000, scoped, tag = 'internal scratch']
  %s0 = inlined_call_operand.vmem [shape: bf16[800,256], index: 0, kind: input, shape index: {}]
  %s1 = inlined_call_operand.vmem [shape: bf16[256,128], index: 1, kind: input, shape index: {}]
  %s2 = inlined_call_operand.vmem [shape: f32[1,128], index: 2, kind: input, shape index: {}]
  %s3 = inlined_call_operand.vmem [shape: bf16[800,128], index: 3, kind: output, shape index: {}]
  %s4 = sld [smem:[#allocation0]]
  $region22: #{ppo_forward.4} parent=0
    _
  %s6 = ssub.s32 1, %s4
  %s7 = scalar_select 0, %s6, %s4
  // Predicated region
  $region2: #{ppo_forward.4} parent=0 // pred_check
    _
  $region3: #{ppo_forward.4} parent=0 // pred_check_branch
    %9 = sbr.rel (0) target = $region5
  $region4: #{ppo_forward.4} parent=0 // pred_region
    _
  $region5: #{ppo_forward.4} parent=0 // pred_fallthru
    _
  // Predicated region
  $region6: #{ppo_forward.4} parent=0 // pred_check
    _
  $region7: #{ppo_forward.4} parent=0 // pred_check_branch
    %11 = sbr.rel (0) target = $region9
  $region8: #{ppo_forward.4} parent=0 // pred_region
    _
  $region9: #{ppo_forward.4} parent=0 // pred_fallthru
    _
  // Predicated region
  $region10: #{ppo_forward.4} parent=0 // pred_check
    _
  $region11: #{ppo_forward.4} parent=0 // pred_check_branch
    %13 = sbr.rel (0) target = $region13
  $region12: #{ppo_forward.4} parent=0 // pred_region
    _
  $region13: #{ppo_forward.4} parent=0 // pred_fallthru
    _
  %v14 = vld [vmem:[%s0] sm:$0xff]
  %v15 = vld [vmem:[%s0 + $0x8] sm:$0xff]
  %v16 = vld [vmem:[%s0 + $0x10] sm:$0xff]
  %v17 = vld [vmem:[%s0 + $0x18] sm:$0xff]
  %v18 = vld [vmem:[%s0 + $0x20] sm:$0xff]
  %v19 = vld [vmem:[%s0 + $0x28] sm:$0xff]
  %v20 = vld [vmem:[%s0 + $0x30] sm:$0xff]
  %v21 = vld [vmem:[%s0 + $0x38] sm:$0xff]
  %v22 = vld [vmem:[%s0 + $0x40] sm:$0xff]
  %v23 = vld [vmem:[%s0 + $0x48] sm:$0xff]
  %v24 = vld [vmem:[%s0 + $0x50] sm:$0xff]
  %v25 = vld [vmem:[%s0 + $0x58] sm:$0xff]
  %v26 = vld [vmem:[%s0 + $0x60] sm:$0xff]
  %v27 = vld [vmem:[%s0 + $0x68] sm:$0xff]
  %v28 = vld [vmem:[%s0 + $0x70] sm:$0xff]
  %v29 = vld [vmem:[%s0 + $0x78] sm:$0xff]
  %v30 = vld [vmem:[%s0 + $0x80] sm:$0xff]
  %v31 = vld [vmem:[%s0 + $0x88] sm:$0xff]
  %v32 = vld [vmem:[%s0 + $0x90] sm:$0xff]
  %v33 = vld [vmem:[%s0 + $0x98] sm:$0xff]
  %v34 = vld [vmem:[%s0 + $0xa0] sm:$0xff]
  %v35 = vld [vmem:[%s0 + $0xa8] sm:$0xff]
  %v36 = vld [vmem:[%s0 + $0xb0] sm:$0xff]
  %v37 = vld [vmem:[%s0 + $0xb8] sm:$0xff]
  %v38 = vld [vmem:[%s0 + $0xc0] sm:$0xff]
  %v39 = vld [vmem:[%s0 + $0xc8] sm:$0xff]
  %v40 = vld [vmem:[%s0 + $0xd0] sm:$0xff]
  %v41 = vld [vmem:[%s0 + $0xd8] sm:$0xff]
  %v42 = vld [vmem:[%s0 + $0xe0] sm:$0xff]
  %v43 = vld [vmem:[%s0 + $0xe8] sm:$0xff]
  %v44 = vld [vmem:[%s0 + $0xf0] sm:$0xff]
  %v45 = vld [vmem:[%s0 + $0xf8] sm:$0xff]
  %v46 = vld [vmem:[%s0 + $0x100] sm:$0xff]
  %v47 = vld [vmem:[%s0 + $0x108] sm:$0xff]
  %v48 = vld [vmem:[%s0 + $0x110] sm:$0xff]
  %v49 = vld [vmem:[%s0 + $0x118] sm:$0xff]
  %v50 = vld [vmem:[%s0 + $0x120] sm:$0xff]
  %v51 = vld [vmem:[%s0 + $0x128] sm:$0xff]
  %v52 = vld [vmem:[%s0 + $0x130] sm:$0xff]
  %v53 = vld [vmem:[%s0 + $0x138] sm:$0xff]
  %v54 = vld [vmem:[%s0 + $0x140] sm:$0xff]
  %v55 = vld [vmem:[%s0 + $0x148] sm:$0xff]
  %v56 = vld [vmem:[%s0 + $0x150] sm:$0xff]
  %v57 = vld [vmem:[%s0 + $0x158] sm:$0xff]
  %v58 = vld [vmem:[%s0 + $0x160] sm:$0xff]
  %v59 = vld [vmem:[%s0 + $0x168] sm:$0xff]
  %v60 = vld [vmem:[%s0 + $0x170] sm:$0xff]
  %v61 = vld [vmem:[%s0 + $0x178] sm:$0xff]
  %v62 = vld [vmem:[%s0 + $0x180] sm:$0xff]
  %v63 = vld [vmem:[%s0 + $0x188] sm:$0xff]
  %v64 = vld [vmem:[%s0 + $0x190] sm:$0xff]
  %v65 = vld [vmem:[%s0 + $0x198] sm:$0xff]
  %v66 = vld [vmem:[%s0 + $0x1a0] sm:$0xff]
  %v67 = vld [vmem:[%s0 + $0x1a8] sm:$0xff]
  %v68 = vld [vmem:[%s0 + $0x1b0] sm:$0xff]
  %v69 = vld [vmem:[%s0 + $0x1b8] sm:$0xff]
  %v70 = vld [vmem:[%s0 + $0x1c0] sm:$0xff]
  %v71 = vld [vmem:[%s0 + $0x1c8] sm:$0xff]
  %v72 = vld [vmem:[%s0 + $0x1d0] sm:$0xff]
  %v73 = vld [vmem:[%s0 + $0x1d8] sm:$0xff]
  %v74 = vld [vmem:[%s0 + $0x1e0] sm:$0xff]
  %v75 = vld [vmem:[%s0 + $0x1e8] sm:$0xff]
  %v76 = vld [vmem:[%s0 + $0x1f0] sm:$0xff]
  %v77 = vld [vmem:[%s0 + $0x1f8] sm:$0xff]
  %v78 = vld [vmem:[%s0 + $0x200] sm:$0xff]
  %v79 = vld [vmem:[%s0 + $0x208] sm:$0xff]
  %v80 = vld [vmem:[%s0 + $0x210] sm:$0xff]
  %v81 = vld [vmem:[%s0 + $0x218] sm:$0xff]
  %v82 = vld [vmem:[%s0 + $0x220] sm:$0xff]
  %v83 = vld [vmem:[%s0 + $0x228] sm:$0xff]
  %v84 = vld [vmem:[%s0 + $0x230] sm:$0xff]
  %v85 = vld [vmem:[%s0 + $0x238] sm:$0xff]
  %v86 = vld [vmem:[%s0 + $0x240] sm:$0xff]
  %v87 = vld [vmem:[%s0 + $0x248] sm:$0xff]
  %v88 = vld [vmem:[%s0 + $0x250] sm:$0xff]
  %v89 = vld [vmem:[%s0 + $0x258] sm:$0xff]
  %v90 = vld [vmem:[%s0 + $0x260] sm:$0xff]
  %v91 = vld [vmem:[%s0 + $0x268] sm:$0xff]
  %v92 = vld [vmem:[%s0 + $0x270] sm:$0xff]
  %v93 = vld [vmem:[%s0 + $0x278] sm:$0xff]
  %v94 = vld [vmem:[%s0 + $0x280] sm:$0xff]
  %v95 = vld [vmem:[%s0 + $0x288] sm:$0xff]
  %v96 = vld [vmem:[%s0 + $0x290] sm:$0xff]
  %v97 = vld [vmem:[%s0 + $0x298] sm:$0xff]
  %v98 = vld [vmem:[%s0 + $0x2a0] sm:$0xff]
  %v99 = vld [vmem:[%s0 + $0x2a8] sm:$0xff]
  %v100 = vld [vmem:[%s0 + $0x2b0] sm:$0xff]
  %v101 = vld [vmem:[%s0 + $0x2b8] sm:$0xff]
  %v102 = vld [vmem:[%s0 + $0x2c0] sm:$0xff]
  %v103 = vld [vmem:[%s0 + $0x2c8] sm:$0xff]
  %v104 = vld [vmem:[%s0 + $0x2d0] sm:$0xff]
  %v105 = vld [vmem:[%s0 + $0x2d8] sm:$0xff]
  %v106 = vld [vmem:[%s0 + $0x2e0] sm:$0xff]
  %v107 = vld [vmem:[%s0 + $0x2e8] sm:$0xff]
  %v108 = vld [vmem:[%s0 + $0x2f0] sm:$0xff]
  %v109 = vld [vmem:[%s0 + $0x2f8] sm:$0xff]
  %v110 = vld [vmem:[%s0 + $0x300] sm:$0xff]
  %v111 = vld [vmem:[%s0 + $0x308] sm:$0xff]
  %v112 = vld [vmem:[%s0 + $0x310] sm:$0xff]
  %v113 = vld [vmem:[%s0 + $0x318] sm:$0xff]
  %v114 = vld [vmem:[%s1] sm:$0xf]
  %v115 = vld [vmem:[%s1 + $0x4] sm:$0xf]
  %v116 = vld [vmem:[%s1 + $0x8] sm:$0xf]
  %v117 = vld [vmem:[%s1 + $0xc] sm:$0xf]
  %v118 = vld [vmem:[%s1 + $0x10] sm:$0xf]
  %v119 = vld [vmem:[%s1 + $0x14] sm:$0xf]
  %v120 = vld [vmem:[%s1 + $0x18] sm:$0xf]
  %v121 = vld [vmem:[%s1 + $0x1c] sm:$0xf]
  %v122 = vld [vmem:[%s1 + $0x20] sm:$0xf]
  %v123 = vld [vmem:[%s1 + $0x24] sm:$0xf]
  %v124 = vld [vmem:[%s1 + $0x28] sm:$0xf]
  %v125 = vld [vmem:[%s1 + $0x2c] sm:$0xf]
  %v126 = vld [vmem:[%s1 + $0x30] sm:$0xf]
  %v127 = vld [vmem:[%s1 + $0x34] sm:$0xf]
  %v128 = vld [vmem:[%s1 + $0x38] sm:$0xf]
  %v129 = vld [vmem:[%s1 + $0x3c] sm:$0xf]
  %v130 = vld [vmem:[%s1 + $0x40] sm:$0xf]
  %v131 = vld [vmem:[%s1 + $0x44] sm:$0xf]
  %v132 = vld [vmem:[%s1 + $0x48] sm:$0xf]
  %v133 = vld [vmem:[%s1 + $0x4c] sm:$0xf]
  %v134 = vld [vmem:[%s1 + $0x50] sm:$0xf]
  %v135 = vld [vmem:[%s1 + $0x54] sm:$0xf]
  %v136 = vld [vmem:[%s1 + $0x58] sm:$0xf]
  %v137 = vld [vmem:[%s1 + $0x5c] sm:$0xf]
  %v138 = vld [vmem:[%s1 + $0x60] sm:$0xf]
  %v139 = vld [vmem:[%s1 + $0x64] sm:$0xf]
  %v140 = vld [vmem:[%s1 + $0x68] sm:$0xf]
  %v141 = vld [vmem:[%s1 + $0x6c] sm:$0xf]
  %v142 = vld [vmem:[%s1 + $0x70] sm:$0xf]
  %v143 = vld [vmem:[%s1 + $0x74] sm:$0xf]
  %v144 = vld [vmem:[%s1 + $0x78] sm:$0xf]
  %v145 = vld [vmem:[%s1 + $0x7c] sm:$0xf]
  %v146 = vld [vmem:[%s2] sm:$0x1]
  %v148 = vperm.slane %v146, 0
  %v250 = vunpack.c.l.b16 %v14
  %v251 = vunpack.c.h.b16 %v14
  %v252 = vunpack.c.l.b16 %v15
  %v253 = vunpack.c.h.b16 %v15
  %v254 = vunpack.c.l.b16 %v16
  %v255 = vunpack.c.h.b16 %v16
  %v256 = vunpack.c.l.b16 %v17
  %v257 = vunpack.c.h.b16 %v17
  %v258 = vunpack.c.l.b16 %v18
  %v259 = vunpack.c.h.b16 %v18
  %v260 = vunpack.c.l.b16 %v19
  %v261 = vunpack.c.h.b16 %v19
  %v262 = vunpack.c.l.b16 %v20
  %v263 = vunpack.c.h.b16 %v20
  %v264 = vunpack.c.l.b16 %v21
  %v265 = vunpack.c.h.b16 %v21
  %v266 = vunpack.c.l.b16 %v22
  %v267 = vunpack.c.h.b16 %v22
  %v268 = vunpack.c.l.b16 %v23
  %v269 = vunpack.c.h.b16 %v23
  %v270 = vunpack.c.l.b16 %v24
  %v271 = vunpack.c.h.b16 %v24
  %v272 = vunpack.c.l.b16 %v25
  %v273 = vunpack.c.h.b16 %v25
  %v274 = vunpack.c.l.b16 %v26
  %v275 = vunpack.c.h.b16 %v26
  %v276 = vunpack.c.l.b16 %v27
  %v277 = vunpack.c.h.b16 %v27
  %v278 = vunpack.c.l.b16 %v28
  %v279 = vunpack.c.h.b16 %v28
  %v280 = vunpack.c.l.b16 %v29
  %v281 = vunpack.c.h.b16 %v29
  %v282 = vunpack.c.l.b16 %v30
  %v283 = vunpack.c.h.b16 %v30
  %v284 = vunpack.c.l.b16 %v31
  %v285 = vunpack.c.h.b16 %v31
  %v286 = vunpack.c.l.b16 %v32
  %v287 = vunpack.c.h.b16 %v32
  %v288 = vunpack.c.l.b16 %v33
  %v289 = vunpack.c.h.b16 %v33
  %v290 = vunpack.c.l.b16 %v34
  %v291 = vunpack.c.h.b16 %v34
  %v292 = vunpack.c.l.b16 %v35
  %v293 = vunpack.c.h.b16 %v35
  %v294 = vunpack.c.l.b16 %v36
  %v295 = vunpack.c.h.b16 %v36
  %v296 = vunpack.c.l.b16 %v37
  %v297 = vunpack.c.h.b16 %v37
  %v298 = vunpack.c.l.b16 %v38
  %v299 = vunpack.c.h.b16 %v38
  %v300 = vunpack.c.l.b16 %v39
  %v301 = vunpack.c.h.b16 %v39
  %v302 = vunpack.c.l.b16 %v40
  %v303 = vunpack.c.h.b16 %v40
  %v304 = vunpack.c.l.b16 %v41
  %v305 = vunpack.c.h.b16 %v41
  %v306 = vunpack.c.l.b16 %v42
  %v307 = vunpack.c.h.b16 %v42
  %v308 = vunpack.c.l.b16 %v43
  %v309 = vunpack.c.h.b16 %v43
  %v310 = vunpack.c.l.b16 %v44
  %v311 = vunpack.c.h.b16 %v44
  %v312 = vunpack.c.l.b16 %v45
  %v313 = vunpack.c.h.b16 %v45
  %v314 = vunpack.c.l.b16 %v46
  %v315 = vunpack.c.h.b16 %v46
  %v316 = vunpack.c.l.b16 %v47
  %v317 = vunpack.c.h.b16 %v47
  %v318 = vunpack.c.l.b16 %v48
  %v319 = vunpack.c.h.b16 %v48
  %v320 = vunpack.c.l.b16 %v49
  %v321 = vunpack.c.h.b16 %v49
  %v322 = vunpack.c.l.b16 %v50
  %v323 = vunpack.c.h.b16 %v50
  %v324 = vunpack.c.l.b16 %v51
  %v325 = vunpack.c.h.b16 %v51
  %v326 = vunpack.c.l.b16 %v52
  %v327 = vunpack.c.h.b16 %v52
  %v328 = vunpack.c.l.b16 %v53
  %v329 = vunpack.c.h.b16 %v53
  %v330 = vunpack.c.l.b16 %v54
  %v331 = vunpack.c.h.b16 %v54
  %v332 = vunpack.c.l.b16 %v55
  %v333 = vunpack.c.h.b16 %v55
  %v334 = vunpack.c.l.b16 %v56
  %v335 = vunpack.c.h.b16 %v56
  %v336 = vunpack.c.l.b16 %v57
  %v337 = vunpack.c.h.b16 %v57
  %v338 = vunpack.c.l.b16 %v58
  %v339 = vunpack.c.h.b16 %v58
  %v340 = vunpack.c.l.b16 %v59
  %v341 = vunpack.c.h.b16 %v59
  %v342 = vunpack.c.l.b16 %v60
  %v343 = vunpack.c.h.b16 %v60
  %v344 = vunpack.c.l.b16 %v61
  %v345 = vunpack.c.h.b16 %v61
  %v346 = vunpack.c.l.b16 %v62
  %v347 = vunpack.c.h.b16 %v62
  %v348 = vunpack.c.l.b16 %v63
  %v349 = vunpack.c.h.b16 %v63
  %v350 = vunpack.c.l.b16 %v64
  %v351 = vunpack.c.h.b16 %v64
  %v352 = vunpack.c.l.b16 %v65
  %v353 = vunpack.c.h.b16 %v65
  %v354 = vunpack.c.l.b16 %v66
  %v355 = vunpack.c.h.b16 %v66
  %v356 = vunpack.c.l.b16 %v67
  %v357 = vunpack.c.h.b16 %v67
  %v358 = vunpack.c.l.b16 %v68
  %v359 = vunpack.c.h.b16 %v68
  %v360 = vunpack.c.l.b16 %v69
  %v361 = vunpack.c.h.b16 %v69
  %v362 = vunpack.c.l.b16 %v70
  %v363 = vunpack.c.h.b16 %v70
  %v364 = vunpack.c.l.b16 %v71
  %v365 = vunpack.c.h.b16 %v71
  %v366 = vunpack.c.l.b16 %v72
  %v367 = vunpack.c.h.b16 %v72
  %v368 = vunpack.c.l.b16 %v73
  %v369 = vunpack.c.h.b16 %v73
  %v370 = vunpack.c.l.b16 %v74
  %v371 = vunpack.c.h.b16 %v74
  %v372 = vunpack.c.l.b16 %v75
  %v373 = vunpack.c.h.b16 %v75
  %v374 = vunpack.c.l.b16 %v76
  %v375 = vunpack.c.h.b16 %v76
  %v376 = vunpack.c.l.b16 %v77
  %v377 = vunpack.c.h.b16 %v77
  %v378 = vunpack.c.l.b16 %v78
  %v379 = vunpack.c.h.b16 %v78
  %v380 = vunpack.c.l.b16 %v79
  %v381 = vunpack.c.h.b16 %v79
  %v382 = vunpack.c.l.b16 %v80
  %v383 = vunpack.c.h.b16 %v80
  %v384 = vunpack.c.l.b16 %v81
  %v385 = vunpack.c.h.b16 %v81
  %v386 = vunpack.c.l.b16 %v82
  %v387 = vunpack.c.h.b16 %v82
  %v388 = vunpack.c.l.b16 %v83
  %v389 = vunpack.c.h.b16 %v83
  %v390 = vunpack.c.l.b16 %v84
  %v391 = vunpack.c.h.b16 %v84
  %v392 = vunpack.c.l.b16 %v85
  %v393 = vunpack.c.h.b16 %v85
  %v394 = vunpack.c.l.b16 %v86
  %v395 = vunpack.c.h.b16 %v86
  %v396 = vunpack.c.l.b16 %v87
  %v397 = vunpack.c.h.b16 %v87
  %v398 = vunpack.c.l.b16 %v88
  %v399 = vunpack.c.h.b16 %v88
  %v400 = vunpack.c.l.b16 %v89
  %v401 = vunpack.c.h.b16 %v89
  %v402 = vunpack.c.l.b16 %v90
  %v403 = vunpack.c.h.b16 %v90
  %v404 = vunpack.c.l.b16 %v91
  %v405 = vunpack.c.h.b16 %v91
  %v406 = vunpack.c.l.b16 %v92
  %v407 = vunpack.c.h.b16 %v92
  %v408 = vunpack.c.l.b16 %v93
  %v409 = vunpack.c.h.b16 %v93
  %v410 = vunpack.c.l.b16 %v94
  %v411 = vunpack.c.h.b16 %v94
  %v412 = vunpack.c.l.b16 %v95
  %v413 = vunpack.c.h.b16 %v95
  %v414 = vunpack.c.l.b16 %v96
  %v415 = vunpack.c.h.b16 %v96
  %v416 = vunpack.c.l.b16 %v97
  %v417 = vunpack.c.h.b16 %v97
  %v418 = vunpack.c.l.b16 %v98
  %v419 = vunpack.c.h.b16 %v98
  %v420 = vunpack.c.l.b16 %v99
  %v421 = vunpack.c.h.b16 %v99
  %v422 = vunpack.c.l.b16 %v100
  %v423 = vunpack.c.h.b16 %v100
  %v424 = vunpack.c.l.b16 %v101
  %v425 = vunpack.c.h.b16 %v101
  %v426 = vunpack.c.l.b16 %v102
  %v427 = vunpack.c.h.b16 %v102
  %v428 = vunpack.c.l.b16 %v103
  %v429 = vunpack.c.h.b16 %v103
  %v430 = vunpack.c.l.b16 %v104
  %v431 = vunpack.c.h.b16 %v104
  %v432 = vunpack.c.l.b16 %v105
  %v433 = vunpack.c.h.b16 %v105
  %v434 = vunpack.c.l.b16 %v106
  %v435 = vunpack.c.h.b16 %v106
  %v436 = vunpack.c.l.b16 %v107
  %v437 = vunpack.c.h.b16 %v107
  %v438 = vunpack.c.l.b16 %v108
  %v439 = vunpack.c.h.b16 %v108
  %v440 = vunpack.c.l.b16 %v109
  %v441 = vunpack.c.h.b16 %v109
  %v442 = vunpack.c.l.b16 %v110
  %v443 = vunpack.c.h.b16 %v110
  %v444 = vunpack.c.l.b16 %v111
  %v445 = vunpack.c.h.b16 %v111
  %v446 = vunpack.c.l.b16 %v112
  %v447 = vunpack.c.h.b16 %v112
  %v448 = vunpack.c.l.b16 %v113
  %v449 = vunpack.c.h.b16 %v113
  %v450 = vpack.c.b16 %v252, %v250
  %v451 = vpack.c.b16 %v253, %v251
  %v452 = vpack.c.b16 %v256, %v254
  %v453 = vpack.c.b16 %v257, %v255
  %v454 = vpack.c.b16 %v260, %v258
  %v455 = vpack.c.b16 %v261, %v259
  %v456 = vpack.c.b16 %v264, %v262
  %v457 = vpack.c.b16 %v265, %v263
  %v458 = vpack.c.b16 %v268, %v266
  %v459 = vpack.c.b16 %v269, %v267
  %v460 = vpack.c.b16 %v272, %v270
  %v461 = vpack.c.b16 %v273, %v271
  %v462 = vpack.c.b16 %v276, %v274
  %v463 = vpack.c.b16 %v277, %v275
  %v464 = vpack.c.b16 %v280, %v278
  %v465 = vpack.c.b16 %v281, %v279
  %v466 = vpack.c.b16 %v284, %v282
  %v467 = vpack.c.b16 %v285, %v283
  %v468 = vpack.c.b16 %v288, %v286
  %v469 = vpack.c.b16 %v289, %v287
  %v470 = vpack.c.b16 %v292, %v290
  %v471 = vpack.c.b16 %v293, %v291
  %v472 = vpack.c.b16 %v296, %v294
  %v473 = vpack.c.b16 %v297, %v295
  %v474 = vpack.c.b16 %v300, %v298
  %v475 = vpack.c.b16 %v301, %v299
  %v476 = vpack.c.b16 %v304, %v302
  %v477 = vpack.c.b16 %v305, %v303
  %v478 = vpack.c.b16 %v308, %v306
  %v479 = vpack.c.b16 %v309, %v307
  %v480 = vpack.c.b16 %v312, %v310
  %v481 = vpack.c.b16 %v313, %v311
  %v482 = vpack.c.b16 %v316, %v314
  %v483 = vpack.c.b16 %v317, %v315
  %v484 = vpack.c.b16 %v320, %v318
  %v485 = vpack.c.b16 %v321, %v319
  %v486 = vpack.c.b16 %v324, %v322
  %v487 = vpack.c.b16 %v325, %v323
  %v488 = vpack.c.b16 %v328, %v326
  %v489 = vpack.c.b16 %v329, %v327
  %v490 = vpack.c.b16 %v332, %v330
  %v491 = vpack.c.b16 %v333, %v331
  %v492 = vpack.c.b16 %v336, %v334
  %v493 = vpack.c.b16 %v337, %v335
  %v494 = vpack.c.b16 %v340, %v338
  %v495 = vpack.c.b16 %v341, %v339
  %v496 = vpack.c.b16 %v344, %v342
  %v497 = vpack.c.b16 %v345, %v343
  %v498 = vpack.c.b16 %v348, %v346
  %v499 = vpack.c.b16 %v349, %v347
  %v500 = vpack.c.b16 %v352, %v350
  %v501 = vpack.c.b16 %v353, %v351
  %v502 = vpack.c.b16 %v356, %v354
  %v503 = vpack.c.b16 %v357, %v355
  %v504 = vpack.c.b16 %v360, %v358
  %v505 = vpack.c.b16 %v361, %v359
  %v506 = vpack.c.b16 %v364, %v362
  %v507 = vpack.c.b16 %v365, %v363
  %v508 = vpack.c.b16 %v368, %v366
  %v509 = vpack.c.b16 %v369, %v367
  %v510 = vpack.c.b16 %v372, %v370
  %v511 = vpack.c.b16 %v373, %v371
  %v512 = vpack.c.b16 %v376, %v374
  %v513 = vpack.c.b16 %v377, %v375
  %v514 = vpack.c.b16 %v380, %v378
  %v515 = vpack.c.b16 %v381, %v379
  %v516 = vpack.c.b16 %v384, %v382
  %v517 = vpack.c.b16 %v385, %v383
  %v518 = vpack.c.b16 %v388, %v386
  %v519 = vpack.c.b16 %v389, %v387
  %v520 = vpack.c.b16 %v392, %v390
  %v521 = vpack.c.b16 %v393, %v391
  %v522 = vpack.c.b16 %v396, %v394
  %v523 = vpack.c.b16 %v397, %v395
  %v524 = vpack.c.b16 %v400, %v398
  %v525 = vpack.c.b16 %v401, %v399
  %v526 = vpack.c.b16 %v404, %v402
  %v527 = vpack.c.b16 %v405, %v403
  %v528 = vpack.c.b16 %v408, %v406
  %v529 = vpack.c.b16 %v409, %v407
  %v530 = vpack.c.b16 %v412, %v410
  %v531 = vpack.c.b16 %v413, %v411
  %v532 = vpack.c.b16 %v416, %v414
  %v533 = vpack.c.b16 %v417, %v415
  %v534 = vpack.c.b16 %v420, %v418
  %v535 = vpack.c.b16 %v421, %v419
  %v536 = vpack.c.b16 %v424, %v422
  %v537 = vpack.c.b16 %v425, %v423
  %v538 = vpack.c.b16 %v428, %v426
  %v539 = vpack.c.b16 %v429, %v427
  %v540 = vpack.c.b16 %v432, %v430
  %v541 = vpack.c.b16 %v433, %v431
  %v542 = vpack.c.b16 %v436, %v434
  %v543 = vpack.c.b16 %v437, %v435
  %v544 = vpack.c.b16 %v440, %v438
  %v545 = vpack.c.b16 %v441, %v439
  %v546 = vpack.c.b16 %v444, %v442
  %v547 = vpack.c.b16 %v445, %v443
  %v548 = vpack.c.b16 %v448, %v446
  %v549 = vpack.c.b16 %v449, %v447
  %v682 = vunpack.c.l.b16 %v114
  %v683 = vunpack.c.l.b16 %v115
  %v684 = vunpack.c.l.b16 %v116
  %v685 = vunpack.c.l.b16 %v117
  %v686 = vunpack.c.l.b16 %v118
  %v687 = vunpack.c.l.b16 %v119
  %v688 = vunpack.c.l.b16 %v120
  %v689 = vunpack.c.l.b16 %v121
  %v690 = vunpack.c.l.b16 %v122
  %v691 = vunpack.c.l.b16 %v123
  %v692 = vunpack.c.l.b16 %v124
  %v693 = vunpack.c.l.b16 %v125
  %v694 = vunpack.c.l.b16 %v126
  %v695 = vunpack.c.l.b16 %v127
  %v696 = vunpack.c.l.b16 %v128
  %v697 = vunpack.c.l.b16 %v129
  %v698 = vunpack.c.l.b16 %v130
  %v699 = vunpack.c.l.b16 %v131
  %v700 = vunpack.c.l.b16 %v132
  %v701 = vunpack.c.l.b16 %v133
  %v702 = vunpack.c.l.b16 %v134
  %v703 = vunpack.c.l.b16 %v135
  %v704 = vunpack.c.l.b16 %v136
  %v705 = vunpack.c.l.b16 %v137
  %v706 = vunpack.c.l.b16 %v138
  %v707 = vunpack.c.l.b16 %v139
  %v708 = vunpack.c.l.b16 %v140
  %v709 = vunpack.c.l.b16 %v141
  %v710 = vunpack.c.l.b16 %v142
  %v711 = vunpack.c.l.b16 %v143
  %v712 = vunpack.c.l.b16 %v144
  %v713 = vunpack.c.l.b16 %v145
  %v714 = vpack.c.b16 %v683, %v682
  %v715 = vpack.c.b16 %v685, %v684
  %v716 = vpack.c.b16 %v687, %v686
  %v717 = vpack.c.b16 %v689, %v688
  %v718 = vpack.c.b16 %v691, %v690
  %v719 = vpack.c.b16 %v693, %v692
  %v720 = vpack.c.b16 %v695, %v694
  %v721 = vpack.c.b16 %v697, %v696
  %v722 = vpack.c.b16 %v699, %v698
  %v723 = vpack.c.b16 %v701, %v700
  %v724 = vpack.c.b16 %v703, %v702
  %v725 = vpack.c.b16 %v705, %v704
  %v726 = vpack.c.b16 %v707, %v706
  %v727 = vpack.c.b16 %v709, %v708
  %v728 = vpack.c.b16 %v711, %v710
  %v729 = vpack.c.b16 %v713, %v712
  %746 = vmatpush.bf16.msra.mxu0 %v721
  %747 = vmatpush.bf16.msra.mxu0 %v720
  %748 = vmatpush.bf16.msra.mxu0 %v719
  %749 = vmatpush.bf16.msra.mxu0 %v718
  %750 = vmatpush.bf16.msra.mxu0 %v717
  %751 = vmatpush.bf16.msra.mxu0 %v716
  %752 = vmatpush.bf16.msra.mxu0 %v715
  %753 = vmatpush.bf16.msra.mxu0 %v714
  %754 = vmatmul.bf16.gmra.mxu0 %v450
  %v755 = vpop.f32.mrf.mxu0
  %v756 = vadd.f32 %v148, %v755
  %v757 = vpop.f32.mrf.mxu0
  %v758 = vadd.f32 %v148, %v757
  %759 = vmatmul.bf16.gmra.mxu0 %v452
  %v760 = vpop.f32.mrf.mxu0
  %v761 = vadd.f32 %v148, %v760
  %v762 = vpop.f32.mrf.mxu0
  %v763 = vadd.f32 %v148, %v762
  %764 = vmatmul.bf16.gmra.mxu0 %v454
  %v765 = vpop.f32.mrf.mxu0
  %v766 = vadd.f32 %v148, %v765
  %v767 = vpop.f32.mrf.mxu0
  %v768 = vadd.f32 %v148, %v767
  %769 = vmatmul.bf16.gmra.mxu0 %v456
  %v770 = vpop.f32.mrf.mxu0
  %v771 = vadd.f32 %v148, %v770
  %v772 = vpop.f32.mrf.mxu0
  %v773 = vadd.f32 %v148, %v772
  %774 = vmatmul.bf16.gmra.mxu0 %v458
  %v775 = vpop.f32.mrf.mxu0
  %v776 = vadd.f32 %v148, %v775
  %v777 = vpop.f32.mrf.mxu0
  %v778 = vadd.f32 %v148, %v777
  %779 = vmatmul.bf16.gmra.mxu0 %v460
  %v780 = vpop.f32.mrf.mxu0
  %v781 = vadd.f32 %v148, %v780
  %v782 = vpop.f32.mrf.mxu0
  %v783 = vadd.f32 %v148, %v782
  %784 = vmatmul.bf16.gmra.mxu0 %v462
  %v785 = vpop.f32.mrf.mxu0
  %v786 = vadd.f32 %v148, %v785
  %v787 = vpop.f32.mrf.mxu0
  %v788 = vadd.f32 %v148, %v787
  %789 = vmatmul.bf16.gmra.mxu0 %v464
  %v790 = vpop.f32.mrf.mxu0
  %v791 = vadd.f32 %v148, %v790
  %v792 = vpop.f32.mrf.mxu0
  %v793 = vadd.f32 %v148, %v792
  %794 = vmatmul.bf16.gmra.mxu0 %v466
  %v795 = vpop.f32.mrf.mxu0
  %v796 = vadd.f32 %v148, %v795
  %v797 = vpop.f32.mrf.mxu0
  %v798 = vadd.f32 %v148, %v797
  %799 = vmatmul.bf16.gmra.mxu0 %v468
  %v800 = vpop.f32.mrf.mxu0
  %v801 = vadd.f32 %v148, %v800
  %v802 = vpop.f32.mrf.mxu0
  %v803 = vadd.f32 %v148, %v802
  %804 = vmatmul.bf16.gmra.mxu0 %v470
  %v805 = vpop.f32.mrf.mxu0
  %v806 = vadd.f32 %v148, %v805
  %v807 = vpop.f32.mrf.mxu0
  %v808 = vadd.f32 %v148, %v807
  %809 = vmatmul.bf16.gmra.mxu0 %v472
  %v810 = vpop.f32.mrf.mxu0
  %v811 = vadd.f32 %v148, %v810
  %v812 = vpop.f32.mrf.mxu0
  %v813 = vadd.f32 %v148, %v812
  %814 = vmatmul.bf16.gmra.mxu0 %v474
  %v815 = vpop.f32.mrf.mxu0
  %v816 = vadd.f32 %v148, %v815
  %v817 = vpop.f32.mrf.mxu0
  %v818 = vadd.f32 %v148, %v817
  %819 = vmatmul.bf16.gmra.mxu0 %v476
  %v820 = vpop.f32.mrf.mxu0
  %v821 = vadd.f32 %v148, %v820
  %v822 = vpop.f32.mrf.mxu0
  %v823 = vadd.f32 %v148, %v822
  %824 = vmatmul.bf16.gmra.mxu0 %v478
  %v825 = vpop.f32.mrf.mxu0
  %v826 = vadd.f32 %v148, %v825
  %v827 = vpop.f32.mrf.mxu0
  %v828 = vadd.f32 %v148, %v827
  %829 = vmatmul.bf16.gmra.mxu0 %v480
  %v830 = vpop.f32.mrf.mxu0
  %v831 = vadd.f32 %v148, %v830
  %v832 = vpop.f32.mrf.mxu0
  %v833 = vadd.f32 %v148, %v832
  %834 = vmatmul.bf16.gmra.mxu0 %v482
  %v835 = vpop.f32.mrf.mxu0
  %v836 = vadd.f32 %v148, %v835
  %v837 = vpop.f32.mrf.mxu0
  %v838 = vadd.f32 %v148, %v837
  %839 = vmatmul.bf16.gmra.mxu0 %v484
  %v840 = vpop.f32.mrf.mxu0
  %v841 = vadd.f32 %v148, %v840
  %v842 = vpop.f32.mrf.mxu0
  %v843 = vadd.f32 %v148, %v842
  %844 = vmatmul.bf16.gmra.mxu0 %v486
  %v845 = vpop.f32.mrf.mxu0
  %v846 = vadd.f32 %v148, %v845
  %v847 = vpop.f32.mrf.mxu0
  %v848 = vadd.f32 %v148, %v847
  %849 = vmatmul.bf16.gmra.mxu0 %v488
  %v850 = vpop.f32.mrf.mxu0
  %v851 = vadd.f32 %v148, %v850
  %v852 = vpop.f32.mrf.mxu0
  %v853 = vadd.f32 %v148, %v852
  %854 = vmatmul.bf16.gmra.mxu0 %v490
  %v855 = vpop.f32.mrf.mxu0
  %v856 = vadd.f32 %v148, %v855
  %v857 = vpop.f32.mrf.mxu0
  %v858 = vadd.f32 %v148, %v857
  %859 = vmatmul.bf16.gmra.mxu0 %v492
  %v860 = vpop.f32.mrf.mxu0
  %v861 = vadd.f32 %v148, %v860
  %v862 = vpop.f32.mrf.mxu0
  %v863 = vadd.f32 %v148, %v862
  %864 = vmatmul.bf16.gmra.mxu0 %v494
  %v865 = vpop.f32.mrf.mxu0
  %v866 = vadd.f32 %v148, %v865
  %v867 = vpop.f32.mrf.mxu0
  %v868 = vadd.f32 %v148, %v867
  %869 = vmatmul.bf16.gmra.mxu0 %v496
  %v870 = vpop.f32.mrf.mxu0
  %v871 = vadd.f32 %v148, %v870
  %v872 = vpop.f32.mrf.mxu0
  %v873 = vadd.f32 %v148, %v872
  %874 = vmatmul.bf16.gmra.mxu0 %v498
  %v875 = vpop.f32.mrf.mxu0
  %v876 = vadd.f32 %v148, %v875
  %v877 = vpop.f32.mrf.mxu0
  %v878 = vadd.f32 %v148, %v877
  %879 = vmatmul.bf16.gmra.mxu0 %v500
  %v880 = vpop.f32.mrf.mxu0
  %v881 = vadd.f32 %v148, %v880
  %v882 = vpop.f32.mrf.mxu0
  %v883 = vadd.f32 %v148, %v882
  %884 = vmatmul.bf16.gmra.mxu0 %v502
  %v885 = vpop.f32.mrf.mxu0
  %v886 = vadd.f32 %v148, %v885
  %v887 = vpop.f32.mrf.mxu0
  %v888 = vadd.f32 %v148, %v887
  %889 = vmatmul.bf16.gmra.mxu0 %v504
  %v890 = vpop.f32.mrf.mxu0
  %v891 = vadd.f32 %v148, %v890
  %v892 = vpop.f32.mrf.mxu0
  %v893 = vadd.f32 %v148, %v892
  %894 = vmatmul.bf16.gmra.mxu0 %v506
  %v895 = vpop.f32.mrf.mxu0
  %v896 = vadd.f32 %v148, %v895
  %v897 = vpop.f32.mrf.mxu0
  %v898 = vadd.f32 %v148, %v897
  %899 = vmatmul.bf16.gmra.mxu0 %v508
  %v900 = vpop.f32.mrf.mxu0
  %v901 = vadd.f32 %v148, %v900
  %v902 = vpop.f32.mrf.mxu0
  %v903 = vadd.f32 %v148, %v902
  %904 = vmatmul.bf16.gmra.mxu0 %v510
  %v905 = vpop.f32.mrf.mxu0
  %v906 = vadd.f32 %v148, %v905
  %v907 = vpop.f32.mrf.mxu0
  %v908 = vadd.f32 %v148, %v907
  %909 = vmatmul.bf16.gmra.mxu0 %v512
  %v910 = vpop.f32.mrf.mxu0
  %v911 = vadd.f32 %v148, %v910
  %v912 = vpop.f32.mrf.mxu0
  %v913 = vadd.f32 %v148, %v912
  %914 = vmatmul.bf16.gmra.mxu0 %v514
  %v915 = vpop.f32.mrf.mxu0
  %v916 = vadd.f32 %v148, %v915
  %v917 = vpop.f32.mrf.mxu0
  %v918 = vadd.f32 %v148, %v917
  %919 = vmatmul.bf16.gmra.mxu0 %v516
  %v920 = vpop.f32.mrf.mxu0
  %v921 = vadd.f32 %v148, %v920
  %v922 = vpop.f32.mrf.mxu0
  %v923 = vadd.f32 %v148, %v922
  %924 = vmatmul.bf16.gmra.mxu0 %v518
  %v925 = vpop.f32.mrf.mxu0
  %v926 = vadd.f32 %v148, %v925
  %v927 = vpop.f32.mrf.mxu0
  %v928 = vadd.f32 %v148, %v927
  %929 = vmatmul.bf16.gmra.mxu0 %v520
  %v930 = vpop.f32.mrf.mxu0
  %v931 = vadd.f32 %v148, %v930
  %v932 = vpop.f32.mrf.mxu0
  %v933 = vadd.f32 %v148, %v932
  %934 = vmatmul.bf16.gmra.mxu0 %v522
  %v935 = vpop.f32.mrf.mxu0
  %v936 = vadd.f32 %v148, %v935
  %v937 = vpop.f32.mrf.mxu0
  %v938 = vadd.f32 %v148, %v937
  %939 = vmatmul.bf16.gmra.mxu0 %v524
  %v940 = vpop.f32.mrf.mxu0
  %v941 = vadd.f32 %v148, %v940
  %v942 = vpop.f32.mrf.mxu0
  %v943 = vadd.f32 %v148, %v942
  %944 = vmatmul.bf16.gmra.mxu0 %v526
  %v945 = vpop.f32.mrf.mxu0
  %v946 = vadd.f32 %v148, %v945
  %v947 = vpop.f32.mrf.mxu0
  %v948 = vadd.f32 %v148, %v947
  %949 = vmatmul.bf16.gmra.mxu0 %v528
  %v950 = vpop.f32.mrf.mxu0
  %v951 = vadd.f32 %v148, %v950
  %v952 = vpop.f32.mrf.mxu0
  %v953 = vadd.f32 %v148, %v952
  %954 = vmatmul.bf16.gmra.mxu0 %v530
  %v955 = vpop.f32.mrf.mxu0
  %v956 = vadd.f32 %v148, %v955
  %v957 = vpop.f32.mrf.mxu0
  %v958 = vadd.f32 %v148, %v957
  %959 = vmatmul.bf16.gmra.mxu0 %v532
  %v960 = vpop.f32.mrf.mxu0
  %v961 = vadd.f32 %v148, %v960
  %v962 = vpop.f32.mrf.mxu0
  %v963 = vadd.f32 %v148, %v962
  %964 = vmatmul.bf16.gmra.mxu0 %v534
  %v965 = vpop.f32.mrf.mxu0
  %v966 = vadd.f32 %v148, %v965
  %v967 = vpop.f32.mrf.mxu0
  %v968 = vadd.f32 %v148, %v967
  %969 = vmatmul.bf16.gmra.mxu0 %v536
  %v970 = vpop.f32.mrf.mxu0
  %v971 = vadd.f32 %v148, %v970
  %v972 = vpop.f32.mrf.mxu0
  %v973 = vadd.f32 %v148, %v972
  %974 = vmatmul.bf16.gmra.mxu0 %v538
  %v975 = vpop.f32.mrf.mxu0
  %v976 = vadd.f32 %v148, %v975
  %v977 = vpop.f32.mrf.mxu0
  %v978 = vadd.f32 %v148, %v977
  %979 = vmatmul.bf16.gmra.mxu0 %v540
  %v980 = vpop.f32.mrf.mxu0
  %v981 = vadd.f32 %v148, %v980
  %v982 = vpop.f32.mrf.mxu0
  %v983 = vadd.f32 %v148, %v982
  %984 = vmatmul.bf16.gmra.mxu0 %v542
  %v985 = vpop.f32.mrf.mxu0
  %v986 = vadd.f32 %v148, %v985
  %v987 = vpop.f32.mrf.mxu0
  %v988 = vadd.f32 %v148, %v987
  %989 = vmatmul.bf16.gmra.mxu0 %v544
  %v990 = vpop.f32.mrf.mxu0
  %v991 = vadd.f32 %v148, %v990
  %v992 = vpop.f32.mrf.mxu0
  %v993 = vadd.f32 %v148, %v992
  %994 = vmatmul.bf16.gmra.mxu0 %v546
  %v995 = vpop.f32.mrf.mxu0
  %v996 = vadd.f32 %v148, %v995
  %v997 = vpop.f32.mrf.mxu0
  %v998 = vadd.f32 %v148, %v997
  %999 = vmatmul.bf16.gmra.mxu0 %v548
  %v1000 = vpop.f32.mrf.mxu0
  %v1001 = vadd.f32 %v148, %v1000
  %v1002 = vpop.f32.mrf.mxu0
  %v1003 = vadd.f32 %v148, %v1002
  %1004 = vdwg.mxu0
  %1005 = vmatpush.bf16.msra.mxu0 %v729
  %1006 = vmatpush.bf16.msra.mxu0 %v728
  %1007 = vmatpush.bf16.msra.mxu0 %v727
  %1008 = vmatpush.bf16.msra.mxu0 %v726
  %1009 = vmatpush.bf16.msra.mxu0 %v725
  %1010 = vmatpush.bf16.msra.mxu0 %v724
  %1011 = vmatpush.bf16.msra.mxu0 %v723
  %1012 = vmatpush.bf16.msra.mxu0 %v722
  %1013 = vmatmul.bf16.gmra.mxu0 %v451
  %v1014 = vpop.f32.mrf.mxu0
  %v1015 = vadd.f32 %v756, %v1014
  %v1016 = vpop.f32.mrf.mxu0
  %v1017 = vadd.f32 %v758, %v1016
  %1018 = vmatmul.bf16.gmra.mxu0 %v453
  %v1019 = vpop.f32.mrf.mxu0
  %v1020 = vadd.f32 %v761, %v1019
  %v1021 = vpop.f32.mrf.mxu0
  %v1022 = vadd.f32 %v763, %v1021
  %1023 = vmatmul.bf16.gmra.mxu0 %v455
  %v1024 = vpop.f32.mrf.mxu0
  %v1025 = vadd.f32 %v766, %v1024
  %v1026 = vpop.f32.mrf.mxu0
  %v1027 = vadd.f32 %v768, %v1026
  %1028 = vmatmul.bf16.gmra.mxu0 %v457
  %v1029 = vpop.f32.mrf.mxu0
  %v1030 = vadd.f32 %v771, %v1029
  %v1031 = vpop.f32.mrf.mxu0
  %v1032 = vadd.f32 %v773, %v1031
  %1033 = vmatmul.bf16.gmra.mxu0 %v459
  %v1034 = vpop.f32.mrf.mxu0
  %v1035 = vadd.f32 %v776, %v1034
  %v1036 = vpop.f32.mrf.mxu0
  %v1037 = vadd.f32 %v778, %v1036
  %1038 = vmatmul.bf16.gmra.mxu0 %v461
  %v1039 = vpop.f32.mrf.mxu0
  %v1040 = vadd.f32 %v781, %v1039
  %v1041 = vpop.f32.mrf.mxu0
  %v1042 = vadd.f32 %v783, %v1041
  %1043 = vmatmul.bf16.gmra.mxu0 %v463
  %v1044 = vpop.f32.mrf.mxu0
  %v1045 = vadd.f32 %v786, %v1044
  %v1046 = vpop.f32.mrf.mxu0
  %v1047 = vadd.f32 %v788, %v1046
  %1048 = vmatmul.bf16.gmra.mxu0 %v465
  %v1049 = vpop.f32.mrf.mxu0
  %v1050 = vadd.f32 %v791, %v1049
  %v1051 = vpop.f32.mrf.mxu0
  %v1052 = vadd.f32 %v793, %v1051
  %1053 = vmatmul.bf16.gmra.mxu0 %v467
  %v1054 = vpop.f32.mrf.mxu0
  %v1055 = vadd.f32 %v796, %v1054
  %v1056 = vpop.f32.mrf.mxu0
  %v1057 = vadd.f32 %v798, %v1056
  %1058 = vmatmul.bf16.gmra.mxu0 %v469
  %v1059 = vpop.f32.mrf.mxu0
  %v1060 = vadd.f32 %v801, %v1059
  %v1061 = vpop.f32.mrf.mxu0
  %v1062 = vadd.f32 %v803, %v1061
  %1063 = vmatmul.bf16.gmra.mxu0 %v471
  %v1064 = vpop.f32.mrf.mxu0
  %v1065 = vadd.f32 %v806, %v1064
  %v1066 = vpop.f32.mrf.mxu0
  %v1067 = vadd.f32 %v808, %v1066
  %1068 = vmatmul.bf16.gmra.mxu0 %v473
  %v1069 = vpop.f32.mrf.mxu0
  %v1070 = vadd.f32 %v811, %v1069
  %v1071 = vpop.f32.mrf.mxu0
  %v1072 = vadd.f32 %v813, %v1071
  %1073 = vmatmul.bf16.gmra.mxu0 %v475
  %v1074 = vpop.f32.mrf.mxu0
  %v1075 = vadd.f32 %v816, %v1074
  %v1076 = vpop.f32.mrf.mxu0
  %v1077 = vadd.f32 %v818, %v1076
  %1078 = vmatmul.bf16.gmra.mxu0 %v477
  %v1079 = vpop.f32.mrf.mxu0
  %v1080 = vadd.f32 %v821, %v1079
  %v1081 = vpop.f32.mrf.mxu0
  %v1082 = vadd.f32 %v823, %v1081
  %1083 = vmatmul.bf16.gmra.mxu0 %v479
  %v1084 = vpop.f32.mrf.mxu0
  %v1085 = vadd.f32 %v826, %v1084
  %v1086 = vpop.f32.mrf.mxu0
  %v1087 = vadd.f32 %v828, %v1086
  %1088 = vmatmul.bf16.gmra.mxu0 %v481
  %v1089 = vpop.f32.mrf.mxu0
  %v1090 = vadd.f32 %v831, %v1089
  %v1091 = vpop.f32.mrf.mxu0
  %v1092 = vadd.f32 %v833, %v1091
  %1093 = vmatmul.bf16.gmra.mxu0 %v483
  %v1094 = vpop.f32.mrf.mxu0
  %v1095 = vadd.f32 %v836, %v1094
  %v1096 = vpop.f32.mrf.mxu0
  %v1097 = vadd.f32 %v838, %v1096
  %1098 = vmatmul.bf16.gmra.mxu0 %v485
  %v1099 = vpop.f32.mrf.mxu0
  %v1100 = vadd.f32 %v841, %v1099
  %v1101 = vpop.f32.mrf.mxu0
  %v1102 = vadd.f32 %v843, %v1101
  %1103 = vmatmul.bf16.gmra.mxu0 %v487
  %v1104 = vpop.f32.mrf.mxu0
  %v1105 = vadd.f32 %v846, %v1104
  %v1106 = vpop.f32.mrf.mxu0
  %v1107 = vadd.f32 %v848, %v1106
  %1108 = vmatmul.bf16.gmra.mxu0 %v489
  %v1109 = vpop.f32.mrf.mxu0
  %v1110 = vadd.f32 %v851, %v1109
  %v1111 = vpop.f32.mrf.mxu0
  %v1112 = vadd.f32 %v853, %v1111
  %1113 = vmatmul.bf16.gmra.mxu0 %v491
  %v1114 = vpop.f32.mrf.mxu0
  %v1115 = vadd.f32 %v856, %v1114
  %v1116 = vpop.f32.mrf.mxu0
  %v1117 = vadd.f32 %v858, %v1116
  %1118 = vmatmul.bf16.gmra.mxu0 %v493
  %v1119 = vpop.f32.mrf.mxu0
  %v1120 = vadd.f32 %v861, %v1119
  %v1121 = vpop.f32.mrf.mxu0
  %v1122 = vadd.f32 %v863, %v1121
  %1123 = vmatmul.bf16.gmra.mxu0 %v495
  %v1124 = vpop.f32.mrf.mxu0
  %v1125 = vadd.f32 %v866, %v1124
  %v1126 = vpop.f32.mrf.mxu0
  %v1127 = vadd.f32 %v868, %v1126
  %1128 = vmatmul.bf16.gmra.mxu0 %v497
  %v1129 = vpop.f32.mrf.mxu0
  %v1130 = vadd.f32 %v871, %v1129
  %v1131 = vpop.f32.mrf.mxu0
  %v1132 = vadd.f32 %v873, %v1131
  %1133 = vmatmul.bf16.gmra.mxu0 %v499
  %v1134 = vpop.f32.mrf.mxu0
  %v1135 = vadd.f32 %v876, %v1134
  %v1136 = vpop.f32.mrf.mxu0
  %v1137 = vadd.f32 %v878, %v1136
  %1138 = vmatmul.bf16.gmra.mxu0 %v501
  %v1139 = vpop.f32.mrf.mxu0
  %v1140 = vadd.f32 %v881, %v1139
  %v1141 = vpop.f32.mrf.mxu0
  %v1142 = vadd.f32 %v883, %v1141
  %1143 = vmatmul.bf16.gmra.mxu0 %v503
  %v1144 = vpop.f32.mrf.mxu0
  %v1145 = vadd.f32 %v886, %v1144
  %v1146 = vpop.f32.mrf.mxu0
  %v1147 = vadd.f32 %v888, %v1146
  %1148 = vmatmul.bf16.gmra.mxu0 %v505
  %v1149 = vpop.f32.mrf.mxu0
  %v1150 = vadd.f32 %v891, %v1149
  %v1151 = vpop.f32.mrf.mxu0
  %v1152 = vadd.f32 %v893, %v1151
  %1153 = vmatmul.bf16.gmra.mxu0 %v507
  %v1154 = vpop.f32.mrf.mxu0
  %v1155 = vadd.f32 %v896, %v1154
  %v1156 = vpop.f32.mrf.mxu0
  %v1157 = vadd.f32 %v898, %v1156
  %1158 = vmatmul.bf16.gmra.mxu0 %v509
  %v1159 = vpop.f32.mrf.mxu0
  %v1160 = vadd.f32 %v901, %v1159
  %v1161 = vpop.f32.mrf.mxu0
  %v1162 = vadd.f32 %v903, %v1161
  %1163 = vmatmul.bf16.gmra.mxu0 %v511
  %v1164 = vpop.f32.mrf.mxu0
  %v1165 = vadd.f32 %v906, %v1164
  %v1166 = vpop.f32.mrf.mxu0
  %v1167 = vadd.f32 %v908, %v1166
  %1168 = vmatmul.bf16.gmra.mxu0 %v513
  %v1169 = vpop.f32.mrf.mxu0
  %v1170 = vadd.f32 %v911, %v1169
  %v1171 = vpop.f32.mrf.mxu0
  %v1172 = vadd.f32 %v913, %v1171
  %1173 = vmatmul.bf16.gmra.mxu0 %v515
  %v1174 = vpop.f32.mrf.mxu0
  %v1175 = vadd.f32 %v916, %v1174
  %v1176 = vpop.f32.mrf.mxu0
  %v1177 = vadd.f32 %v918, %v1176
  %1178 = vmatmul.bf16.gmra.mxu0 %v517
  %v1179 = vpop.f32.mrf.mxu0
  %v1180 = vadd.f32 %v921, %v1179
  %v1181 = vpop.f32.mrf.mxu0
  %v1182 = vadd.f32 %v923, %v1181
  %1183 = vmatmul.bf16.gmra.mxu0 %v519
  %v1184 = vpop.f32.mrf.mxu0
  %v1185 = vadd.f32 %v926, %v1184
  %v1186 = vpop.f32.mrf.mxu0
  %v1187 = vadd.f32 %v928, %v1186
  %1188 = vmatmul.bf16.gmra.mxu0 %v521
  %v1189 = vpop.f32.mrf.mxu0
  %v1190 = vadd.f32 %v931, %v1189
  %v1191 = vpop.f32.mrf.mxu0
  %v1192 = vadd.f32 %v933, %v1191
  %1193 = vmatmul.bf16.gmra.mxu0 %v523
  %v1194 = vpop.f32.mrf.mxu0
  %v1195 = vadd.f32 %v936, %v1194
  %v1196 = vpop.f32.mrf.mxu0
  %v1197 = vadd.f32 %v938, %v1196
  %1198 = vmatmul.bf16.gmra.mxu0 %v525
  %v1199 = vpop.f32.mrf.mxu0
  %v1200 = vadd.f32 %v941, %v1199
  %v1201 = vpop.f32.mrf.mxu0
  %v1202 = vadd.f32 %v943, %v1201
  %1203 = vmatmul.bf16.gmra.mxu0 %v527
  %v1204 = vpop.f32.mrf.mxu0
  %v1205 = vadd.f32 %v946, %v1204
  %v1206 = vpop.f32.mrf.mxu0
  %v1207 = vadd.f32 %v948, %v1206
  %1208 = vmatmul.bf16.gmra.mxu0 %v529
  %v1209 = vpop.f32.mrf.mxu0
  %v1210 = vadd.f32 %v951, %v1209
  %v1211 = vpop.f32.mrf.mxu0
  %v1212 = vadd.f32 %v953, %v1211
  %1213 = vmatmul.bf16.gmra.mxu0 %v531
  %v1214 = vpop.f32.mrf.mxu0
  %v1215 = vadd.f32 %v956, %v1214
  %v1216 = vpop.f32.mrf.mxu0
  %v1217 = vadd.f32 %v958, %v1216
  %1218 = vmatmul.bf16.gmra.mxu0 %v533
  %v1219 = vpop.f32.mrf.mxu0
  %v1220 = vadd.f32 %v961, %v1219
  %v1221 = vpop.f32.mrf.mxu0
  %v1222 = vadd.f32 %v963, %v1221
  %1223 = vmatmul.bf16.gmra.mxu0 %v535
  %v1224 = vpop.f32.mrf.mxu0
  %v1225 = vadd.f32 %v966, %v1224
  %v1226 = vpop.f32.mrf.mxu0
  %v1227 = vadd.f32 %v968, %v1226
  %1228 = vmatmul.bf16.gmra.mxu0 %v537
  %v1229 = vpop.f32.mrf.mxu0
  %v1230 = vadd.f32 %v971, %v1229
  %v1231 = vpop.f32.mrf.mxu0
  %v1232 = vadd.f32 %v973, %v1231
  %1233 = vmatmul.bf16.gmra.mxu0 %v539
  %v1234 = vpop.f32.mrf.mxu0
  %v1235 = vadd.f32 %v976, %v1234
  %v1236 = vpop.f32.mrf.mxu0
  %v1237 = vadd.f32 %v978, %v1236
  %1238 = vmatmul.bf16.gmra.mxu0 %v541
  %v1239 = vpop.f32.mrf.mxu0
  %v1240 = vadd.f32 %v981, %v1239
  %v1241 = vpop.f32.mrf.mxu0
  %v1242 = vadd.f32 %v983, %v1241
  %1243 = vmatmul.bf16.gmra.mxu0 %v543
  %v1244 = vpop.f32.mrf.mxu0
  %v1245 = vadd.f32 %v986, %v1244
  %v1246 = vpop.f32.mrf.mxu0
  %v1247 = vadd.f32 %v988, %v1246
  %1248 = vmatmul.bf16.gmra.mxu0 %v545
  %v1249 = vpop.f32.mrf.mxu0
  %v1250 = vadd.f32 %v991, %v1249
  %v1251 = vpop.f32.mrf.mxu0
  %v1252 = vadd.f32 %v993, %v1251
  %1253 = vmatmul.bf16.gmra.mxu0 %v547
  %v1254 = vpop.f32.mrf.mxu0
  %v1255 = vadd.f32 %v996, %v1254
  %v1256 = vpop.f32.mrf.mxu0
  %v1257 = vadd.f32 %v998, %v1256
  %1258 = vmatmul.bf16.gmra.mxu0 %v549
  %v1259 = vpop.f32.mrf.mxu0
  %v1260 = vadd.f32 %v1001, %v1259
  %v1261 = vpop.f32.mrf.mxu0
  %v1262 = vadd.f32 %v1003, %v1261
  %1263 = vdwg.mxu0
  %vm1264 = vcmp.gt.f32.partialorder %v1015, 0.0
  %vm1265 = vcmp.gt.f32.partialorder %v1017, 0.0
  %vm1266 = vcmp.gt.f32.partialorder %v1020, 0.0
  %vm1267 = vcmp.gt.f32.partialorder %v1022, 0.0
  %vm1268 = vcmp.gt.f32.partialorder %v1025, 0.0
  %vm1269 = vcmp.gt.f32.partialorder %v1027, 0.0
  %vm1270 = vcmp.gt.f32.partialorder %v1030, 0.0
  %vm1271 = vcmp.gt.f32.partialorder %v1032, 0.0
  %vm1272 = vcmp.gt.f32.partialorder %v1035, 0.0
  %vm1273 = vcmp.gt.f32.partialorder %v1037, 0.0
  %vm1274 = vcmp.gt.f32.partialorder %v1040, 0.0
  %vm1275 = vcmp.gt.f32.partialorder %v1042, 0.0
  %vm1276 = vcmp.gt.f32.partialorder %v1045, 0.0
  %vm1277 = vcmp.gt.f32.partialorder %v1047, 0.0
  %vm1278 = vcmp.gt.f32.partialorder %v1050, 0.0
  %vm1279 = vcmp.gt.f32.partialorder %v1052, 0.0
  %vm1280 = vcmp.gt.f32.partialorder %v1055, 0.0
  %vm1281 = vcmp.gt.f32.partialorder %v1057, 0.0
  %vm1282 = vcmp.gt.f32.partialorder %v1060, 0.0
  %vm1283 = vcmp.gt.f32.partialorder %v1062, 0.0
  %vm1284 = vcmp.gt.f32.partialorder %v1065, 0.0
  %vm1285 = vcmp.gt.f32.partialorder %v1067, 0.0
  %vm1286 = vcmp.gt.f32.partialorder %v1070, 0.0
  %vm1287 = vcmp.gt.f32.partialorder %v1072, 0.0
  %vm1288 = vcmp.gt.f32.partialorder %v1075, 0.0
  %vm1289 = vcmp.gt.f32.partialorder %v1077, 0.0
  %vm1290 = vcmp.gt.f32.partialorder %v1080, 0.0
  %vm1291 = vcmp.gt.f32.partialorder %v1082, 0.0
  %vm1292 = vcmp.gt.f32.partialorder %v1085, 0.0
  %vm1293 = vcmp.gt.f32.partialorder %v1087, 0.0
  %vm1294 = vcmp.gt.f32.partialorder %v1090, 0.0
  %vm1295 = vcmp.gt.f32.partialorder %v1092, 0.0
  %vm1296 = vcmp.gt.f32.partialorder %v1095, 0.0
  %vm1297 = vcmp.gt.f32.partialorder %v1097, 0.0
  %vm1298 = vcmp.gt.f32.partialorder %v1100, 0.0
  %vm1299 = vcmp.gt.f32.partialorder %v1102, 0.0
  %vm1300 = vcmp.gt.f32.partialorder %v1105, 0.0
  %vm1301 = vcmp.gt.f32.partialorder %v1107, 0.0
  %vm1302 = vcmp.gt.f32.partialorder %v1110, 0.0
  %vm1303 = vcmp.gt.f32.partialorder %v1112, 0.0
  %vm1304 = vcmp.gt.f32.partialorder %v1115, 0.0
  %vm1305 = vcmp.gt.f32.partialorder %v1117, 0.0
  %vm1306 = vcmp.gt.f32.partialorder %v1120, 0.0
  %vm1307 = vcmp.gt.f32.partialorder %v1122, 0.0
  %vm1308 = vcmp.gt.f32.partialorder %v1125, 0.0
  %vm1309 = vcmp.gt.f32.partialorder %v1127, 0.0
  %vm1310 = vcmp.gt.f32.partialorder %v1130, 0.0
  %vm1311 = vcmp.gt.f32.partialorder %v1132, 0.0
  %vm1312 = vcmp.gt.f32.partialorder %v1135, 0.0
  %vm1313 = vcmp.gt.f32.partialorder %v1137, 0.0
  %vm1314 = vcmp.gt.f32.partialorder %v1140, 0.0
  %vm1315 = vcmp.gt.f32.partialorder %v1142, 0.0
  %vm1316 = vcmp.gt.f32.partialorder %v1145, 0.0
  %vm1317 = vcmp.gt.f32.partialorder %v1147, 0.0
  %vm1318 = vcmp.gt.f32.partialorder %v1150, 0.0
  %vm1319 = vcmp.gt.f32.partialorder %v1152, 0.0
  %vm1320 = vcmp.gt.f32.partialorder %v1155, 0.0
  %vm1321 = vcmp.gt.f32.partialorder %v1157, 0.0
  %vm1322 = vcmp.gt.f32.partialorder %v1160, 0.0
  %vm1323 = vcmp.gt.f32.partialorder %v1162, 0.0
  %vm1324 = vcmp.gt.f32.partialorder %v1165, 0.0
  %vm1325 = vcmp.gt.f32.partialorder %v1167, 0.0
  %vm1326 = vcmp.gt.f32.partialorder %v1170, 0.0
  %vm1327 = vcmp.gt.f32.partialorder %v1172, 0.0
  %vm1328 = vcmp.gt.f32.partialorder %v1175, 0.0
  %vm1329 = vcmp.gt.f32.partialorder %v1177, 0.0
  %vm1330 = vcmp.gt.f32.partialorder %v1180, 0.0
  %vm1331 = vcmp.gt.f32.partialorder %v1182, 0.0
  %vm1332 = vcmp.gt.f32.partialorder %v1185, 0.0
  %vm1333 = vcmp.gt.f32.partialorder %v1187, 0.0
  %vm1334 = vcmp.gt.f32.partialorder %v1190, 0.0
  %vm1335 = vcmp.gt.f32.partialorder %v1192, 0.0
  %vm1336 = vcmp.gt.f32.partialorder %v1195, 0.0
  %vm1337 = vcmp.gt.f32.partialorder %v1197, 0.0
  %vm1338 = vcmp.gt.f32.partialorder %v1200, 0.0
  %vm1339 = vcmp.gt.f32.partialorder %v1202, 0.0
  %vm1340 = vcmp.gt.f32.partialorder %v1205, 0.0
  %vm1341 = vcmp.gt.f32.partialorder %v1207, 0.0
  %vm1342 = vcmp.gt.f32.partialorder %v1210, 0.0
  %vm1343 = vcmp.gt.f32.partialorder %v1212, 0.0
  %vm1344 = vcmp.gt.f32.partialorder %v1215, 0.0
  %vm1345 = vcmp.gt.f32.partialorder %v1217, 0.0
  %vm1346 = vcmp.gt.f32.partialorder %v1220, 0.0
  %vm1347 = vcmp.gt.f32.partialorder %v1222, 0.0
  %vm1348 = vcmp.gt.f32.partialorder %v1225, 0.0
  %vm1349 = vcmp.gt.f32.partialorder %v1227, 0.0
  %vm1350 = vcmp.gt.f32.partialorder %v1230, 0.0
  %vm1351 = vcmp.gt.f32.partialorder %v1232, 0.0
  %vm1352 = vcmp.gt.f32.partialorder %v1235, 0.0
  %vm1353 = vcmp.gt.f32.partialorder %v1237, 0.0
  %vm1354 = vcmp.gt.f32.partialorder %v1240, 0.0
  %vm1355 = vcmp.gt.f32.partialorder %v1242, 0.0
  %vm1356 = vcmp.gt.f32.partialorder %v1245, 0.0
  %vm1357 = vcmp.gt.f32.partialorder %v1247, 0.0
  %vm1358 = vcmp.gt.f32.partialorder %v1250, 0.0
  %vm1359 = vcmp.gt.f32.partialorder %v1252, 0.0
  %vm1360 = vcmp.gt.f32.partialorder %v1255, 0.0
  %vm1361 = vcmp.gt.f32.partialorder %v1257, 0.0
  %vm1362 = vcmp.gt.f32.partialorder %v1260, 0.0
  %vm1363 = vcmp.gt.f32.partialorder %v1262, 0.0
  %v1364 = vmin.f32 %v1015, 0.0
  %v1365 = vmin.f32 %v1017, 0.0
  %v1366 = vmin.f32 %v1020, 0.0
  %v1367 = vmin.f32 %v1022, 0.0
  %v1368 = vmin.f32 %v1025, 0.0
  %v1369 = vmin.f32 %v1027, 0.0
  %v1370 = vmin.f32 %v1030, 0.0
  %v1371 = vmin.f32 %v1032, 0.0
  %v1372 = vmin.f32 %v1035, 0.0
  %v1373 = vmin.f32 %v1037, 0.0
  %v1374 = vmin.f32 %v1040, 0.0
  %v1375 = vmin.f32 %v1042, 0.0
  %v1376 = vmin.f32 %v1045, 0.0
  %v1377 = vmin.f32 %v1047, 0.0
  %v1378 = vmin.f32 %v1050, 0.0
  %v1379 = vmin.f32 %v1052, 0.0
  %v1380 = vmin.f32 %v1055, 0.0
  %v1381 = vmin.f32 %v1057, 0.0
  %v1382 = vmin.f32 %v1060, 0.0
  %v1383 = vmin.f32 %v1062, 0.0
  %v1384 = vmin.f32 %v1065, 0.0
  %v1385 = vmin.f32 %v1067, 0.0
  %v1386 = vmin.f32 %v1070, 0.0
  %v1387 = vmin.f32 %v1072, 0.0
  %v1388 = vmin.f32 %v1075, 0.0
  %v1389 = vmin.f32 %v1077, 0.0
  %v1390 = vmin.f32 %v1080, 0.0
  %v1391 = vmin.f32 %v1082, 0.0
  %v1392 = vmin.f32 %v1085, 0.0
  %v1393 = vmin.f32 %v1087, 0.0
  %v1394 = vmin.f32 %v1090, 0.0
  %v1395 = vmin.f32 %v1092, 0.0
  %v1396 = vmin.f32 %v1095, 0.0
  %v1397 = vmin.f32 %v1097, 0.0
  %v1398 = vmin.f32 %v1100, 0.0
  %v1399 = vmin.f32 %v1102, 0.0
  %v1400 = vmin.f32 %v1105, 0.0
  %v1401 = vmin.f32 %v1107, 0.0
  %v1402 = vmin.f32 %v1110, 0.0
  %v1403 = vmin.f32 %v1112, 0.0
  %v1404 = vmin.f32 %v1115, 0.0
  %v1405 = vmin.f32 %v1117, 0.0
  %v1406 = vmin.f32 %v1120, 0.0
  %v1407 = vmin.f32 %v1122, 0.0
  %v1408 = vmin.f32 %v1125, 0.0
  %v1409 = vmin.f32 %v1127, 0.0
  %v1410 = vmin.f32 %v1130, 0.0
  %v1411 = vmin.f32 %v1132, 0.0
  %v1412 = vmin.f32 %v1135, 0.0
  %v1413 = vmin.f32 %v1137, 0.0
  %v1414 = vmin.f32 %v1140, 0.0
  %v1415 = vmin.f32 %v1142, 0.0
  %v1416 = vmin.f32 %v1145, 0.0
  %v1417 = vmin.f32 %v1147, 0.0
  %v1418 = vmin.f32 %v1150, 0.0
  %v1419 = vmin.f32 %v1152, 0.0
  %v1420 = vmin.f32 %v1155, 0.0
  %v1421 = vmin.f32 %v1157, 0.0
  %v1422 = vmin.f32 %v1160, 0.0
  %v1423 = vmin.f32 %v1162, 0.0
  %v1424 = vmin.f32 %v1165, 0.0
  %v1425 = vmin.f32 %v1167, 0.0
  %v1426 = vmin.f32 %v1170, 0.0
  %v1427 = vmin.f32 %v1172, 0.0
  %v1428 = vmin.f32 %v1175, 0.0
  %v1429 = vmin.f32 %v1177, 0.0
  %v1430 = vmin.f32 %v1180, 0.0
  %v1431 = vmin.f32 %v1182, 0.0
  %v1432 = vmin.f32 %v1185, 0.0
  %v1433 = vmin.f32 %v1187, 0.0
  %v1434 = vmin.f32 %v1190, 0.0
  %v1435 = vmin.f32 %v1192, 0.0
  %v1436 = vmin.f32 %v1195, 0.0
  %v1437 = vmin.f32 %v1197, 0.0
  %v1438 = vmin.f32 %v1200, 0.0
  %v1439 = vmin.f32 %v1202, 0.0
  %v1440 = vmin.f32 %v1205, 0.0
  %v1441 = vmin.f32 %v1207, 0.0
  %v1442 = vmin.f32 %v1210, 0.0
  %v1443 = vmin.f32 %v1212, 0.0
  %v1444 = vmin.f32 %v1215, 0.0
  %v1445 = vmin.f32 %v1217, 0.0
  %v1446 = vmin.f32 %v1220, 0.0
  %v1447 = vmin.f32 %v1222, 0.0
  %v1448 = vmin.f32 %v1225, 0.0
  %v1449 = vmin.f32 %v1227, 0.0
  %v1450 = vmin.f32 %v1230, 0.0
  %v1451 = vmin.f32 %v1232, 0.0
  %v1452 = vmin.f32 %v1235, 0.0
  %v1453 = vmin.f32 %v1237, 0.0
  %v1454 = vmin.f32 %v1240, 0.0
  %v1455 = vmin.f32 %v1242, 0.0
  %v1456 = vmin.f32 %v1245, 0.0
  %v1457 = vmin.f32 %v1247, 0.0
  %v1458 = vmin.f32 %v1250, 0.0
  %v1459 = vmin.f32 %v1252, 0.0
  %v1460 = vmin.f32 %v1255, 0.0
  %v1461 = vmin.f32 %v1257, 0.0
  %v1462 = vmin.f32 %v1260, 0.0
  %v1463 = vmin.f32 %v1262, 0.0
  %v1464 = vmul.f32 %v1364, 1.442695
  %v1465 = vpow.pop %v1464
  %v1466 = vmul.f32 %v1365, 1.442695
  %v1467 = vpow.pop %v1466
  %v1468 = vmul.f32 %v1366, 1.442695
  %v1469 = vpow.pop %v1468
  %v1470 = vmul.f32 %v1367, 1.442695
  %v1471 = vpow.pop %v1470
  %v1472 = vmul.f32 %v1368, 1.442695
  %v1473 = vpow.pop %v1472
  %v1474 = vmul.f32 %v1369, 1.442695
  %v1475 = vpow.pop %v1474
  %v1476 = vmul.f32 %v1370, 1.442695
  %v1477 = vpow.pop %v1476
  %v1478 = vmul.f32 %v1371, 1.442695
  %v1479 = vpow.pop %v1478
  %v1480 = vmul.f32 %v1372, 1.442695
  %v1481 = vpow.pop %v1480
  %v1482 = vmul.f32 %v1373, 1.442695
  %v1483 = vpow.pop %v1482
  %v1484 = vmul.f32 %v1374, 1.442695
  %v1485 = vpow.pop %v1484
  %v1486 = vmul.f32 %v1375, 1.442695
  %v1487 = vpow.pop %v1486
  %v1488 = vmul.f32 %v1376, 1.442695
  %v1489 = vpow.pop %v1488
  %v1490 = vmul.f32 %v1377, 1.442695
  %v1491 = vpow.pop %v1490
  %v1492 = vmul.f32 %v1378, 1.442695
  %v1493 = vpow.pop %v1492
  %v1494 = vmul.f32 %v1379, 1.442695
  %v1495 = vpow.pop %v1494
  %v1496 = vmul.f32 %v1380, 1.442695
  %v1497 = vpow.pop %v1496
  %v1498 = vmul.f32 %v1381, 1.442695
  %v1499 = vpow.pop %v1498
  %v1500 = vmul.f32 %v1382, 1.442695
  %v1501 = vpow.pop %v1500
  %v1502 = vmul.f32 %v1383, 1.442695
  %v1503 = vpow.pop %v1502
  %v1504 = vmul.f32 %v1384, 1.442695
  %v1505 = vpow.pop %v1504
  %v1506 = vmul.f32 %v1385, 1.442695
  %v1507 = vpow.pop %v1506
  %v1508 = vmul.f32 %v1386, 1.442695
  %v1509 = vpow.pop %v1508
  %v1510 = vmul.f32 %v1387, 1.442695
  %v1511 = vpow.pop %v1510
  %v1512 = vmul.f32 %v1388, 1.442695
  %v1513 = vpow.pop %v1512
  %v1514 = vmul.f32 %v1389, 1.442695
  %v1515 = vpow.pop %v1514
  %v1516 = vmul.f32 %v1390, 1.442695
  %v1517 = vpow.pop %v1516
  %v1518 = vmul.f32 %v1391, 1.442695
  %v1519 = vpow.pop %v1518
  %v1520 = vmul.f32 %v1392, 1.442695
  %v1521 = vpow.pop %v1520
  %v1522 = vmul.f32 %v1393, 1.442695
  %v1523 = vpow.pop %v1522
  %v1524 = vmul.f32 %v1394, 1.442695
  %v1525 = vpow.pop %v1524
  %v1526 = vmul.f32 %v1395, 1.442695
  %v1527 = vpow.pop %v1526
  %v1528 = vmul.f32 %v1396, 1.442695
  %v1529 = vpow.pop %v1528
  %v1530 = vmul.f32 %v1397, 1.442695
  %v1531 = vpow.pop %v1530
  %v1532 = vmul.f32 %v1398, 1.442695
  %v1533 = vpow.pop %v1532
  %v1534 = vmul.f32 %v1399, 1.442695
  %v1535 = vpow.pop %v1534
  %v1536 = vmul.f32 %v1400, 1.442695
  %v1537 = vpow.pop %v1536
  %v1538 = vmul.f32 %v1401, 1.442695
  %v1539 = vpow.pop %v1538
  %v1540 = vmul.f32 %v1402, 1.442695
  %v1541 = vpow.pop %v1540
  %v1542 = vmul.f32 %v1403, 1.442695
  %v1543 = vpow.pop %v1542
  %v1544 = vmul.f32 %v1404, 1.442695
  %v1545 = vpow.pop %v1544
  %v1546 = vmul.f32 %v1405, 1.442695
  %v1547 = vpow.pop %v1546
  %v1548 = vmul.f32 %v1406, 1.442695
  %v1549 = vpow.pop %v1548
  %v1550 = vmul.f32 %v1407, 1.442695
  %v1551 = vpow.pop %v1550
  %v1552 = vmul.f32 %v1408, 1.442695
  %v1553 = vpow.pop %v1552
  %v1554 = vmul.f32 %v1409, 1.442695
  %v1555 = vpow.pop %v1554
  %v1556 = vmul.f32 %v1410, 1.442695
  %v1557 = vpow.pop %v1556
  %v1558 = vmul.f32 %v1411, 1.442695
  %v1559 = vpow.pop %v1558
  %v1560 = vmul.f32 %v1412, 1.442695
  %v1561 = vpow.pop %v1560
  %v1562 = vmul.f32 %v1413, 1.442695
  %v1563 = vpow.pop %v1562
  %v1564 = vmul.f32 %v1414, 1.442695
  %v1565 = vpow.pop %v1564
  %v1566 = vmul.f32 %v1415, 1.442695
  %v1567 = vpow.pop %v1566
  %v1568 = vmul.f32 %v1416, 1.442695
  %v1569 = vpow.pop %v1568
  %v1570 = vmul.f32 %v1417, 1.442695
  %v1571 = vpow.pop %v1570
  %v1572 = vmul.f32 %v1418, 1.442695
  %v1573 = vpow.pop %v1572
  %v1574 = vmul.f32 %v1419, 1.442695
  %v1575 = vpow.pop %v1574
  %v1576 = vmul.f32 %v1420, 1.442695
  %v1577 = vpow.pop %v1576
  %v1578 = vmul.f32 %v1421, 1.442695
  %v1579 = vpow.pop %v1578
  %v1580 = vmul.f32 %v1422, 1.442695
  %v1581 = vpow.pop %v1580
  %v1582 = vmul.f32 %v1423, 1.442695
  %v1583 = vpow.pop %v1582
  %v1584 = vmul.f32 %v1424, 1.442695
  %v1585 = vpow.pop %v1584
  %v1586 = vmul.f32 %v1425, 1.442695
  %v1587 = vpow.pop %v1586
  %v1588 = vmul.f32 %v1426, 1.442695
  %v1589 = vpow.pop %v1588
  %v1590 = vmul.f32 %v1427, 1.442695
  %v1591 = vpow.pop %v1590
  %v1592 = vmul.f32 %v1428, 1.442695
  %v1593 = vpow.pop %v1592
  %v1594 = vmul.f32 %v1429, 1.442695
  %v1595 = vpow.pop %v1594
  %v1596 = vmul.f32 %v1430, 1.442695
  %v1597 = vpow.pop %v1596
  %v1598 = vmul.f32 %v1431, 1.442695
  %v1599 = vpow.pop %v1598
  %v1600 = vmul.f32 %v1432, 1.442695
  %v1601 = vpow.pop %v1600
  %v1602 = vmul.f32 %v1433, 1.442695
  %v1603 = vpow.pop %v1602
  %v1604 = vmul.f32 %v1434, 1.442695
  %v1605 = vpow.pop %v1604
  %v1606 = vmul.f32 %v1435, 1.442695
  %v1607 = vpow.pop %v1606
  %v1608 = vmul.f32 %v1436, 1.442695
  %v1609 = vpow.pop %v1608
  %v1610 = vmul.f32 %v1437, 1.442695
  %v1611 = vpow.pop %v1610
  %v1612 = vmul.f32 %v1438, 1.442695
  %v1613 = vpow.pop %v1612
  %v1614 = vmul.f32 %v1439, 1.442695
  %v1615 = vpow.pop %v1614
  %v1616 = vmul.f32 %v1440, 1.442695
  %v1617 = vpow.pop %v1616
  %v1618 = vmul.f32 %v1441, 1.442695
  %v1619 = vpow.pop %v1618
  %v1620 = vmul.f32 %v1442, 1.442695
  %v1621 = vpow.pop %v1620
  %v1622 = vmul.f32 %v1443, 1.442695
  %v1623 = vpow.pop %v1622
  %v1624 = vmul.f32 %v1444, 1.442695
  %v1625 = vpow.pop %v1624
  %v1626 = vmul.f32 %v1445, 1.442695
  %v1627 = vpow.pop %v1626
  %v1628 = vmul.f32 %v1446, 1.442695
  %v1629 = vpow.pop %v1628
  %v1630 = vmul.f32 %v1447, 1.442695
  %v1631 = vpow.pop %v1630
  %v1632 = vmul.f32 %v1448, 1.442695
  %v1633 = vpow.pop %v1632
  %v1634 = vmul.f32 %v1449, 1.442695
  %v1635 = vpow.pop %v1634
  %v1636 = vmul.f32 %v1450, 1.442695
  %v1637 = vpow.pop %v1636
  %v1638 = vmul.f32 %v1451, 1.442695
  %v1639 = vpow.pop %v1638
  %v1640 = vmul.f32 %v1452, 1.442695
  %v1641 = vpow.pop %v1640
  %v1642 = vmul.f32 %v1453, 1.442695
  %v1643 = vpow.pop %v1642
  %v1644 = vmul.f32 %v1454, 1.442695
  %v1645 = vpow.pop %v1644
  %v1646 = vmul.f32 %v1455, 1.442695
  %v1647 = vpow.pop %v1646
  %v1648 = vmul.f32 %v1456, 1.442695
  %v1649 = vpow.pop %v1648
  %v1650 = vmul.f32 %v1457, 1.442695
  %v1651 = vpow.pop %v1650
  %v1652 = vmul.f32 %v1458, 1.442695
  %v1653 = vpow.pop %v1652
  %v1654 = vmul.f32 %v1459, 1.442695
  %v1655 = vpow.pop %v1654
  %v1656 = vmul.f32 %v1460, 1.442695
  %v1657 = vpow.pop %v1656
  %v1658 = vmul.f32 %v1461, 1.442695
  %v1659 = vpow.pop %v1658
  %v1660 = vmul.f32 %v1462, 1.442695
  %v1661 = vpow.pop %v1660
  %v1662 = vmul.f32 %v1463, 1.442695
  %v1663 = vpow.pop %v1662
  %v1664 = vsub.f32 %v1465, 1.0
  %v1665 = vsub.f32 %v1467, 1.0
  %v1666 = vsub.f32 %v1469, 1.0
  %v1667 = vsub.f32 %v1471, 1.0
  %v1668 = vsub.f32 %v1473, 1.0
  %v1669 = vsub.f32 %v1475, 1.0
  %v1670 = vsub.f32 %v1477, 1.0
  %v1671 = vsub.f32 %v1479, 1.0
  %v1672 = vsub.f32 %v1481, 1.0
  %v1673 = vsub.f32 %v1483, 1.0
  %v1674 = vsub.f32 %v1485, 1.0
  %v1675 = vsub.f32 %v1487, 1.0
  %v1676 = vsub.f32 %v1489, 1.0
  %v1677 = vsub.f32 %v1491, 1.0
  %v1678 = vsub.f32 %v1493, 1.0
  %v1679 = vsub.f32 %v1495, 1.0
  %v1680 = vsub.f32 %v1497, 1.0
  %v1681 = vsub.f32 %v1499, 1.0
  %v1682 = vsub.f32 %v1501, 1.0
  %v1683 = vsub.f32 %v1503, 1.0
  %v1684 = vsub.f32 %v1505, 1.0
  %v1685 = vsub.f32 %v1507, 1.0
  %v1686 = vsub.f32 %v1509, 1.0
  %v1687 = vsub.f32 %v1511, 1.0
  %v1688 = vsub.f32 %v1513, 1.0
  %v1689 = vsub.f32 %v1515, 1.0
  %v1690 = vsub.f32 %v1517, 1.0
  %v1691 = vsub.f32 %v1519, 1.0
  %v1692 = vsub.f32 %v1521, 1.0
  %v1693 = vsub.f32 %v1523, 1.0
  %v1694 = vsub.f32 %v1525, 1.0
  %v1695 = vsub.f32 %v1527, 1.0
  %v1696 = vsub.f32 %v1529, 1.0
  %v1697 = vsub.f32 %v1531, 1.0
  %v1698 = vsub.f32 %v1533, 1.0
  %v1699 = vsub.f32 %v1535, 1.0
  %v1700 = vsub.f32 %v1537, 1.0
  %v1701 = vsub.f32 %v1539, 1.0
  %v1702 = vsub.f32 %v1541, 1.0
  %v1703 = vsub.f32 %v1543, 1.0
  %v1704 = vsub.f32 %v1545, 1.0
  %v1705 = vsub.f32 %v1547, 1.0
  %v1706 = vsub.f32 %v1549, 1.0
  %v1707 = vsub.f32 %v1551, 1.0
  %v1708 = vsub.f32 %v1553, 1.0
  %v1709 = vsub.f32 %v1555, 1.0
  %v1710 = vsub.f32 %v1557, 1.0
  %v1711 = vsub.f32 %v1559, 1.0
  %v1712 = vsub.f32 %v1561, 1.0
  %v1713 = vsub.f32 %v1563, 1.0
  %v1714 = vsub.f32 %v1565, 1.0
  %v1715 = vsub.f32 %v1567, 1.0
  %v1716 = vsub.f32 %v1569, 1.0
  %v1717 = vsub.f32 %v1571, 1.0
  %v1718 = vsub.f32 %v1573, 1.0
  %v1719 = vsub.f32 %v1575, 1.0
  %v1720 = vsub.f32 %v1577, 1.0
  %v1721 = vsub.f32 %v1579, 1.0
  %v1722 = vsub.f32 %v1581, 1.0
  %v1723 = vsub.f32 %v1583, 1.0
  %v1724 = vsub.f32 %v1585, 1.0
  %v1725 = vsub.f32 %v1587, 1.0
  %v1726 = vsub.f32 %v1589, 1.0
  %v1727 = vsub.f32 %v1591, 1.0
  %v1728 = vsub.f32 %v1593, 1.0
  %v1729 = vsub.f32 %v1595, 1.0
  %v1730 = vsub.f32 %v1597, 1.0
  %v1731 = vsub.f32 %v1599, 1.0
  %v1732 = vsub.f32 %v1601, 1.0
  %v1733 = vsub.f32 %v1603, 1.0
  %v1734 = vsub.f32 %v1605, 1.0
  %v1735 = vsub.f32 %v1607, 1.0
  %v1736 = vsub.f32 %v1609, 1.0
  %v1737 = vsub.f32 %v1611, 1.0
  %v1738 = vsub.f32 %v1613, 1.0
  %v1739 = vsub.f32 %v1615, 1.0
  %v1740 = vsub.f32 %v1617, 1.0
  %v1741 = vsub.f32 %v1619, 1.0
  %v1742 = vsub.f32 %v1621, 1.0
  %v1743 = vsub.f32 %v1623, 1.0
  %v1744 = vsub.f32 %v1625, 1.0
  %v1745 = vsub.f32 %v1627, 1.0
  %v1746 = vsub.f32 %v1629, 1.0
  %v1747 = vsub.f32 %v1631, 1.0
  %v1748 = vsub.f32 %v1633, 1.0
  %v1749 = vsub.f32 %v1635, 1.0
  %v1750 = vsub.f32 %v1637, 1.0
  %v1751 = vsub.f32 %v1639, 1.0
  %v1752 = vsub.f32 %v1641, 1.0
  %v1753 = vsub.f32 %v1643, 1.0
  %v1754 = vsub.f32 %v1645, 1.0
  %v1755 = vsub.f32 %v1647, 1.0
  %v1756 = vsub.f32 %v1649, 1.0
  %v1757 = vsub.f32 %v1651, 1.0
  %v1758 = vsub.f32 %v1653, 1.0
  %v1759 = vsub.f32 %v1655, 1.0
  %v1760 = vsub.f32 %v1657, 1.0
  %v1761 = vsub.f32 %v1659, 1.0
  %v1762 = vsub.f32 %v1661, 1.0
  %v1763 = vsub.f32 %v1663, 1.0
  %v1764 = vsel %vm1264, %v1015, %v1664
  %v1765 = vsel %vm1265, %v1017, %v1665
  %v1766 = vsel %vm1266, %v1020, %v1666
  %v1767 = vsel %vm1267, %v1022, %v1667
  %v1768 = vsel %vm1268, %v1025, %v1668
  %v1769 = vsel %vm1269, %v1027, %v1669
  %v1770 = vsel %vm1270, %v1030, %v1670
  %v1771 = vsel %vm1271, %v1032, %v1671
  %v1772 = vsel %vm1272, %v1035, %v1672
  %v1773 = vsel %vm1273, %v1037, %v1673
  %v1774 = vsel %vm1274, %v1040, %v1674
  %v1775 = vsel %vm1275, %v1042, %v1675
  %v1776 = vsel %vm1276, %v1045, %v1676
  %v1777 = vsel %vm1277, %v1047, %v1677
  %v1778 = vsel %vm1278, %v1050, %v1678
  %v1779 = vsel %vm1279, %v1052, %v1679
  %v1780 = vsel %vm1280, %v1055, %v1680
  %v1781 = vsel %vm1281, %v1057, %v1681
  %v1782 = vsel %vm1282, %v1060, %v1682
  %v1783 = vsel %vm1283, %v1062, %v1683
  %v1784 = vsel %vm1284, %v1065, %v1684
  %v1785 = vsel %vm1285, %v1067, %v1685
  %v1786 = vsel %vm1286, %v1070, %v1686
  %v1787 = vsel %vm1287, %v1072, %v1687
  %v1788 = vsel %vm1288, %v1075, %v1688
  %v1789 = vsel %vm1289, %v1077, %v1689
  %v1790 = vsel %vm1290, %v1080, %v1690
  %v1791 = vsel %vm1291, %v1082, %v1691
  %v1792 = vsel %vm1292, %v1085, %v1692
  %v1793 = vsel %vm1293, %v1087, %v1693
  %v1794 = vsel %vm1294, %v1090, %v1694
  %v1795 = vsel %vm1295, %v1092, %v1695
  %v1796 = vsel %vm1296, %v1095, %v1696
  %v1797 = vsel %vm1297, %v1097, %v1697
  %v1798 = vsel %vm1298, %v1100, %v1698
  %v1799 = vsel %vm1299, %v1102, %v1699
  %v1800 = vsel %vm1300, %v1105, %v1700
  %v1801 = vsel %vm1301, %v1107, %v1701
  %v1802 = vsel %vm1302, %v1110, %v1702
  %v1803 = vsel %vm1303, %v1112, %v1703
  %v1804 = vsel %vm1304, %v1115, %v1704
  %v1805 = vsel %vm1305, %v1117, %v1705
  %v1806 = vsel %vm1306, %v1120, %v1706
  %v1807 = vsel %vm1307, %v1122, %v1707
  %v1808 = vsel %vm1308, %v1125, %v1708
  %v1809 = vsel %vm1309, %v1127, %v1709
  %v1810 = vsel %vm1310, %v1130, %v1710
  %v1811 = vsel %vm1311, %v1132, %v1711
  %v1812 = vsel %vm1312, %v1135, %v1712
  %v1813 = vsel %vm1313, %v1137, %v1713
  %v1814 = vsel %vm1314, %v1140, %v1714
  %v1815 = vsel %vm1315, %v1142, %v1715
  %v1816 = vsel %vm1316, %v1145, %v1716
  %v1817 = vsel %vm1317, %v1147, %v1717
  %v1818 = vsel %vm1318, %v1150, %v1718
  %v1819 = vsel %vm1319, %v1152, %v1719
  %v1820 = vsel %vm1320, %v1155, %v1720
  %v1821 = vsel %vm1321, %v1157, %v1721
  %v1822 = vsel %vm1322, %v1160, %v1722
  %v1823 = vsel %vm1323, %v1162, %v1723
  %v1824 = vsel %vm1324, %v1165, %v1724
  %v1825 = vsel %vm1325, %v1167, %v1725
  %v1826 = vsel %vm1326, %v1170, %v1726
  %v1827 = vsel %vm1327, %v1172, %v1727
  %v1828 = vsel %vm1328, %v1175, %v1728
  %v1829 = vsel %vm1329, %v1177, %v1729
  %v1830 = vsel %vm1330, %v1180, %v1730
  %v1831 = vsel %vm1331, %v1182, %v1731
  %v1832 = vsel %vm1332, %v1185, %v1732
  %v1833 = vsel %vm1333, %v1187, %v1733
  %v1834 = vsel %vm1334, %v1190, %v1734
  %v1835 = vsel %vm1335, %v1192, %v1735
  %v1836 = vsel %vm1336, %v1195, %v1736
  %v1837 = vsel %vm1337, %v1197, %v1737
  %v1838 = vsel %vm1338, %v1200, %v1738
  %v1839 = vsel %vm1339, %v1202, %v1739
  %v1840 = vsel %vm1340, %v1205, %v1740
  %v1841 = vsel %vm1341, %v1207, %v1741
  %v1842 = vsel %vm1342, %v1210, %v1742
  %v1843 = vsel %vm1343, %v1212, %v1743
  %v1844 = vsel %vm1344, %v1215, %v1744
  %v1845 = vsel %vm1345, %v1217, %v1745
  %v1846 = vsel %vm1346, %v1220, %v1746
  %v1847 = vsel %vm1347, %v1222, %v1747
  %v1848 = vsel %vm1348, %v1225, %v1748
  %v1849 = vsel %vm1349, %v1227, %v1749
  %v1850 = vsel %vm1350, %v1230, %v1750
  %v1851 = vsel %vm1351, %v1232, %v1751
  %v1852 = vsel %vm1352, %v1235, %v1752
  %v1853 = vsel %vm1353, %v1237, %v1753
  %v1854 = vsel %vm1354, %v1240, %v1754
  %v1855 = vsel %vm1355, %v1242, %v1755
  %v1856 = vsel %vm1356, %v1245, %v1756
  %v1857 = vsel %vm1357, %v1247, %v1757
  %v1858 = vsel %vm1358, %v1250, %v1758
  %v1859 = vsel %vm1359, %v1252, %v1759
  %v1860 = vsel %vm1360, %v1255, %v1760
  %v1861 = vsel %vm1361, %v1257, %v1761
  %v1862 = vsel %vm1362, %v1260, %v1762
  %v1863 = vsel %vm1363, %v1262, %v1763
  %v1864 = vpack.c.bf16 %v1764, %v1764
  %v1865 = vpack.c.bf16 %v1765, %v1765
  %v1866 = vpack.c.bf16 %v1766, %v1766
  %v1867 = vpack.c.bf16 %v1767, %v1767
  %v1868 = vpack.c.bf16 %v1768, %v1768
  %v1869 = vpack.c.bf16 %v1769, %v1769
  %v1870 = vpack.c.bf16 %v1770, %v1770
  %v1871 = vpack.c.bf16 %v1771, %v1771
  %v1872 = vpack.c.bf16 %v1772, %v1772
  %v1873 = vpack.c.bf16 %v1773, %v1773
  %v1874 = vpack.c.bf16 %v1774, %v1774
  %v1875 = vpack.c.bf16 %v1775, %v1775
  %v1876 = vpack.c.bf16 %v1776, %v1776
  %v1877 = vpack.c.bf16 %v1777, %v1777
  %v1878 = vpack.c.bf16 %v1778, %v1778
  %v1879 = vpack.c.bf16 %v1779, %v1779
  %v1880 = vpack.c.bf16 %v1780, %v1780
  %v1881 = vpack.c.bf16 %v1781, %v1781
  %v1882 = vpack.c.bf16 %v1782, %v1782
  %v1883 = vpack.c.bf16 %v1783, %v1783
  %v1884 = vpack.c.bf16 %v1784, %v1784
  %v1885 = vpack.c.bf16 %v1785, %v1785
  %v1886 = vpack.c.bf16 %v1786, %v1786
  %v1887 = vpack.c.bf16 %v1787, %v1787
  %v1888 = vpack.c.bf16 %v1788, %v1788
  %v1889 = vpack.c.bf16 %v1789, %v1789
  %v1890 = vpack.c.bf16 %v1790, %v1790
  %v1891 = vpack.c.bf16 %v1791, %v1791
  %v1892 = vpack.c.bf16 %v1792, %v1792
  %v1893 = vpack.c.bf16 %v1793, %v1793
  %v1894 = vpack.c.bf16 %v1794, %v1794
  %v1895 = vpack.c.bf16 %v1795, %v1795
  %v1896 = vpack.c.bf16 %v1796, %v1796
  %v1897 = vpack.c.bf16 %v1797, %v1797
  %v1898 = vpack.c.bf16 %v1798, %v1798
  %v1899 = vpack.c.bf16 %v1799, %v1799
  %v1900 = vpack.c.bf16 %v1800, %v1800
  %v1901 = vpack.c.bf16 %v1801, %v1801
  %v1902 = vpack.c.bf16 %v1802, %v1802
  %v1903 = vpack.c.bf16 %v1803, %v1803
  %v1904 = vpack.c.bf16 %v1804, %v1804
  %v1905 = vpack.c.bf16 %v1805, %v1805
  %v1906 = vpack.c.bf16 %v1806, %v1806
  %v1907 = vpack.c.bf16 %v1807, %v1807
  %v1908 = vpack.c.bf16 %v1808, %v1808
  %v1909 = vpack.c.bf16 %v1809, %v1809
  %v1910 = vpack.c.bf16 %v1810, %v1810
  %v1911 = vpack.c.bf16 %v1811, %v1811
  %v1912 = vpack.c.bf16 %v1812, %v1812
  %v1913 = vpack.c.bf16 %v1813, %v1813
  %v1914 = vpack.c.bf16 %v1814, %v1814
  %v1915 = vpack.c.bf16 %v1815, %v1815
  %v1916 = vpack.c.bf16 %v1816, %v1816
  %v1917 = vpack.c.bf16 %v1817, %v1817
  %v1918 = vpack.c.bf16 %v1818, %v1818
  %v1919 = vpack.c.bf16 %v1819, %v1819
  %v1920 = vpack.c.bf16 %v1820, %v1820
  %v1921 = vpack.c.bf16 %v1821, %v1821
  %v1922 = vpack.c.bf16 %v1822, %v1822
  %v1923 = vpack.c.bf16 %v1823, %v1823
  %v1924 = vpack.c.bf16 %v1824, %v1824
  %v1925 = vpack.c.bf16 %v1825, %v1825
  %v1926 = vpack.c.bf16 %v1826, %v1826
  %v1927 = vpack.c.bf16 %v1827, %v1827
  %v1928 = vpack.c.bf16 %v1828, %v1828
  %v1929 = vpack.c.bf16 %v1829, %v1829
  %v1930 = vpack.c.bf16 %v1830, %v1830
  %v1931 = vpack.c.bf16 %v1831, %v1831
  %v1932 = vpack.c.bf16 %v1832, %v1832
  %v1933 = vpack.c.bf16 %v1833, %v1833
  %v1934 = vpack.c.bf16 %v1834, %v1834
  %v1935 = vpack.c.bf16 %v1835, %v1835
  %v1936 = vpack.c.bf16 %v1836, %v1836
  %v1937 = vpack.c.bf16 %v1837, %v1837
  %v1938 = vpack.c.bf16 %v1838, %v1838
  %v1939 = vpack.c.bf16 %v1839, %v1839
  %v1940 = vpack.c.bf16 %v1840, %v1840
  %v1941 = vpack.c.bf16 %v1841, %v1841
  %v1942 = vpack.c.bf16 %v1842, %v1842
  %v1943 = vpack.c.bf16 %v1843, %v1843
  %v1944 = vpack.c.bf16 %v1844, %v1844
  %v1945 = vpack.c.bf16 %v1845, %v1845
  %v1946 = vpack.c.bf16 %v1846, %v1846
  %v1947 = vpack.c.bf16 %v1847, %v1847
  %v1948 = vpack.c.bf16 %v1848, %v1848
  %v1949 = vpack.c.bf16 %v1849, %v1849
  %v1950 = vpack.c.bf16 %v1850, %v1850
  %v1951 = vpack.c.bf16 %v1851, %v1851
  %v1952 = vpack.c.bf16 %v1852, %v1852
  %v1953 = vpack.c.bf16 %v1853, %v1853
  %v1954 = vpack.c.bf16 %v1854, %v1854
  %v1955 = vpack.c.bf16 %v1855, %v1855
  %v1956 = vpack.c.bf16 %v1856, %v1856
  %v1957 = vpack.c.bf16 %v1857, %v1857
  %v1958 = vpack.c.bf16 %v1858, %v1858
  %v1959 = vpack.c.bf16 %v1859, %v1859
  %v1960 = vpack.c.bf16 %v1860, %v1860
  %v1961 = vpack.c.bf16 %v1861, %v1861
  %v1962 = vpack.c.bf16 %v1862, %v1862
  %v1963 = vpack.c.bf16 %v1863, %v1863
  %1964 = vst [vmem:[%s3] sm:$0xf] %v1864
  %1965 = vst [vmem:[%s3 + $0x4] sm:$0xf] %v1865
  %1966 = vst [vmem:[%s3 + $0x8] sm:$0xf] %v1866
  %1967 = vst [vmem:[%s3 + $0xc] sm:$0xf] %v1867
  %1968 = vst [vmem:[%s3 + $0x10] sm:$0xf] %v1868
  %1969 = vst [vmem:[%s3 + $0x14] sm:$0xf] %v1869
  %1970 = vst [vmem:[%s3 + $0x18] sm:$0xf] %v1870
  %1971 = vst [vmem:[%s3 + $0x1c] sm:$0xf] %v1871
  %1972 = vst [vmem:[%s3 + $0x20] sm:$0xf] %v1872
  %1973 = vst [vmem:[%s3 + $0x24] sm:$0xf] %v1873
  %1974 = vst [vmem:[%s3 + $0x28] sm:$0xf] %v1874
  %1975 = vst [vmem:[%s3 + $0x2c] sm:$0xf] %v1875
  %1976 = vst [vmem:[%s3 + $0x30] sm:$0xf] %v1876
  %1977 = vst [vmem:[%s3 + $0x34] sm:$0xf] %v1877
  %1978 = vst [vmem:[%s3 + $0x38] sm:$0xf] %v1878
  %1979 = vst [vmem:[%s3 + $0x3c] sm:$0xf] %v1879
  %1980 = vst [vmem:[%s3 + $0x40] sm:$0xf] %v1880
  %1981 = vst [vmem:[%s3 + $0x44] sm:$0xf] %v1881
  %1982 = vst [vmem:[%s3 + $0x48] sm:$0xf] %v1882
  %1983 = vst [vmem:[%s3 + $0x4c] sm:$0xf] %v1883
  %1984 = vst [vmem:[%s3 + $0x50] sm:$0xf] %v1884
  %1985 = vst [vmem:[%s3 + $0x54] sm:$0xf] %v1885
  %1986 = vst [vmem:[%s3 + $0x58] sm:$0xf] %v1886
  %1987 = vst [vmem:[%s3 + $0x5c] sm:$0xf] %v1887
  %1988 = vst [vmem:[%s3 + $0x60] sm:$0xf] %v1888
  %1989 = vst [vmem:[%s3 + $0x64] sm:$0xf] %v1889
  %1990 = vst [vmem:[%s3 + $0x68] sm:$0xf] %v1890
  %1991 = vst [vmem:[%s3 + $0x6c] sm:$0xf] %v1891
  %1992 = vst [vmem:[%s3 + $0x70] sm:$0xf] %v1892
  %1993 = vst [vmem:[%s3 + $0x74] sm:$0xf] %v1893
  %1994 = vst [vmem:[%s3 + $0x78] sm:$0xf] %v1894
  %1995 = vst [vmem:[%s3 + $0x7c] sm:$0xf] %v1895
  %1996 = vst [vmem:[%s3 + $0x80] sm:$0xf] %v1896
  %1997 = vst [vmem:[%s3 + $0x84] sm:$0xf] %v1897
  %1998 = vst [vmem:[%s3 + $0x88] sm:$0xf] %v1898
  %1999 = vst [vmem:[%s3 + $0x8c] sm:$0xf] %v1899
  %2000 = vst [vmem:[%s3 + $0x90] sm:$0xf] %v1900
  %2001 = vst [vmem:[%s3 + $0x94] sm:$0xf] %v1901
  %2002 = vst [vmem:[%s3 + $0x98] sm:$0xf] %v1902
  %2003 = vst [vmem:[%s3 + $0x9c] sm:$0xf] %v1903
  %2004 = vst [vmem:[%s3 + $0xa0] sm:$0xf] %v1904
  %2005 = vst [vmem:[%s3 + $0xa4] sm:$0xf] %v1905
  %2006 = vst [vmem:[%s3 + $0xa8] sm:$0xf] %v1906
  %2007 = vst [vmem:[%s3 + $0xac] sm:$0xf] %v1907
  %2008 = vst [vmem:[%s3 + $0xb0] sm:$0xf] %v1908
  %2009 = vst [vmem:[%s3 + $0xb4] sm:$0xf] %v1909
  %2010 = vst [vmem:[%s3 + $0xb8] sm:$0xf] %v1910
  %2011 = vst [vmem:[%s3 + $0xbc] sm:$0xf] %v1911
  %2012 = vst [vmem:[%s3 + $0xc0] sm:$0xf] %v1912
  %2013 = vst [vmem:[%s3 + $0xc4] sm:$0xf] %v1913
  %2014 = vst [vmem:[%s3 + $0xc8] sm:$0xf] %v1914
  %2015 = vst [vmem:[%s3 + $0xcc] sm:$0xf] %v1915
  %2016 = vst [vmem:[%s3 + $0xd0] sm:$0xf] %v1916
  %2017 = vst [vmem:[%s3 + $0xd4] sm:$0xf] %v1917
  %2018 = vst [vmem:[%s3 + $0xd8] sm:$0xf] %v1918
  %2019 = vst [vmem:[%s3 + $0xdc] sm:$0xf] %v1919
  %2020 = vst [vmem:[%s3 + $0xe0] sm:$0xf] %v1920
  %2021 = vst [vmem:[%s3 + $0xe4] sm:$0xf] %v1921
  %2022 = vst [vmem:[%s3 + $0xe8] sm:$0xf] %v1922
  %2023 = vst [vmem:[%s3 + $0xec] sm:$0xf] %v1923
  %2024 = vst [vmem:[%s3 + $0xf0] sm:$0xf] %v1924
  %2025 = vst [vmem:[%s3 + $0xf4] sm:$0xf] %v1925
  %2026 = vst [vmem:[%s3 + $0xf8] sm:$0xf] %v1926
  %2027 = vst [vmem:[%s3 + $0xfc] sm:$0xf] %v1927
  %2028 = vst [vmem:[%s3 + $0x100] sm:$0xf] %v1928
  %2029 = vst [vmem:[%s3 + $0x104] sm:$0xf] %v1929
  %2030 = vst [vmem:[%s3 + $0x108] sm:$0xf] %v1930
  %2031 = vst [vmem:[%s3 + $0x10c] sm:$0xf] %v1931
  %2032 = vst [vmem:[%s3 + $0x110] sm:$0xf] %v1932
  %2033 = vst [vmem:[%s3 + $0x114] sm:$0xf] %v1933
  %2034 = vst [vmem:[%s3 + $0x118] sm:$0xf] %v1934
  %2035 = vst [vmem:[%s3 + $0x11c] sm:$0xf] %v1935
  %2036 = vst [vmem:[%s3 + $0x120] sm:$0xf] %v1936
  %2037 = vst [vmem:[%s3 + $0x124] sm:$0xf] %v1937
  %2038 = vst [vmem:[%s3 + $0x128] sm:$0xf] %v1938
  %2039 = vst [vmem:[%s3 + $0x12c] sm:$0xf] %v1939
  %2040 = vst [vmem:[%s3 + $0x130] sm:$0xf] %v1940
  %2041 = vst [vmem:[%s3 + $0x134] sm:$0xf] %v1941
  %2042 = vst [vmem:[%s3 + $0x138] sm:$0xf] %v1942
  %2043 = vst [vmem:[%s3 + $0x13c] sm:$0xf] %v1943
  %2044 = vst [vmem:[%s3 + $0x140] sm:$0xf] %v1944
  %2045 = vst [vmem:[%s3 + $0x144] sm:$0xf] %v1945
  %2046 = vst [vmem:[%s3 + $0x148] sm:$0xf] %v1946
  %2047 = vst [vmem:[%s3 + $0x14c] sm:$0xf] %v1947
  %2048 = vst [vmem:[%s3 + $0x150] sm:$0xf] %v1948
  %2049 = vst [vmem:[%s3 + $0x154] sm:$0xf] %v1949
  %2050 = vst [vmem:[%s3 + $0x158] sm:$0xf] %v1950
  %2051 = vst [vmem:[%s3 + $0x15c] sm:$0xf] %v1951
  %2052 = vst [vmem:[%s3 + $0x160] sm:$0xf] %v1952
  %2053 = vst [vmem:[%s3 + $0x164] sm:$0xf] %v1953
  %2054 = vst [vmem:[%s3 + $0x168] sm:$0xf] %v1954
  %2055 = vst [vmem:[%s3 + $0x16c] sm:$0xf] %v1955
  %2056 = vst [vmem:[%s3 + $0x170] sm:$0xf] %v1956
  %2057 = vst [vmem:[%s3 + $0x174] sm:$0xf] %v1957
  %2058 = vst [vmem:[%s3 + $0x178] sm:$0xf] %v1958
  %2059 = vst [vmem:[%s3 + $0x17c] sm:$0xf] %v1959
  %2060 = vst [vmem:[%s3 + $0x180] sm:$0xf] %v1960
  %2061 = vst [vmem:[%s3 + $0x184] sm:$0xf] %v1961
  %2062 = vst [vmem:[%s3 + $0x188] sm:$0xf] %v1962
  %2063 = vst [vmem:[%s3 + $0x18c] sm:$0xf] %v1963
  // Predicated region
  $region14: #{ppo_forward.4} parent=0 // pred_check
    _
  $region15: #{ppo_forward.4} parent=0 // pred_check_branch
    %2065 = sbr.rel (0) target = $region17
  $region16: #{ppo_forward.4} parent=0 // pred_region
    _
  $region17: #{ppo_forward.4} parent=0 // pred_fallthru
    _
  // Predicated region
  $region18: #{ppo_forward.4} parent=0 // pred_check
    _
  $region19: #{ppo_forward.4} parent=0 // pred_check_branch
    %2067 = sbr.rel (0) target = $region21
  $region20: #{ppo_forward.4} parent=0 // pred_region
    _
  $region21: #{ppo_forward.4} parent=0 // pred_fallthru
    _

// kernel: ppo_forward.5
$region0: #{ppo_forward.5}
  #allocation0 [shape = 'u32[]', space=smem, size = 0x4, offset = 0x4, fixed_abs, tag = 'smem constant byte address 0x4 - core index']
  #allocation1 [shape = 'u32[72,128]{1,0:T(1,128)}', space=vmem, size = 0x9000, scoped, tag = 'internal scratch']
  %s0 = inlined_call_operand.vmem [shape: bf16[176,2048], index: 0, kind: input, shape index: {}]
  %s1 = inlined_call_operand.vmem [shape: bf16[2048,128], index: 1, kind: input, shape index: {}]
  %s2 = inlined_call_operand.vmem [shape: f32[1,128], index: 2, kind: input, shape index: {}]
  %s3 = inlined_call_operand.vmem [shape: bf16[176,128], index: 3, kind: output, shape index: {}]
  %s4 = sld [smem:[#allocation0]]
  $region22: #{ppo_forward.5} parent=0
    _
  %s6 = ssub.s32 1, %s4
  %s7 = scalar_select 0, %s6, %s4
  // Predicated region
  $region2: #{ppo_forward.5} parent=0 // pred_check
    _
  $region3: #{ppo_forward.5} parent=0 // pred_check_branch
    %9 = sbr.rel (0) target = $region5
  $region4: #{ppo_forward.5} parent=0 // pred_region
    _
  $region5: #{ppo_forward.5} parent=0 // pred_fallthru
    _
  // Predicated region
  $region6: #{ppo_forward.5} parent=0 // pred_check
    _
  $region7: #{ppo_forward.5} parent=0 // pred_check_branch
    %11 = sbr.rel (0) target = $region9
  $region8: #{ppo_forward.5} parent=0 // pred_region
    _
  $region9: #{ppo_forward.5} parent=0 // pred_fallthru
    _
  // Predicated region
  $region10: #{ppo_forward.5} parent=0 // pred_check
    _
  $region11: #{ppo_forward.5} parent=0 // pred_check_branch
    %13 = sbr.rel (0) target = $region13
  $region12: #{ppo_forward.5} parent=0 // pred_region
    _
  $region13: #{ppo_forward.5} parent=0 // pred_fallthru
    _
  %v14 = vld [vmem:[%s0] sm:$0xff]
  %v15 = vld [vmem:[%s0 + $0x8] sm:$0xff]
  %v16 = vld [vmem:[%s0 + $0x10] sm:$0xff]
  %v17 = vld [vmem:[%s0 + $0x18] sm:$0xff]
  %v18 = vld [vmem:[%s0 + $0x20] sm:$0xff]
  %v19 = vld [vmem:[%s0 + $0x28] sm:$0xff]
  %v20 = vld [vmem:[%s0 + $0x30] sm:$0xff]
  %v21 = vld [vmem:[%s0 + $0x38] sm:$0xff]
  %v22 = vld [vmem:[%s0 + $0x40] sm:$0xff]
  %v23 = vld [vmem:[%s0 + $0x48] sm:$0xff]
  %v24 = vld [vmem:[%s0 + $0x50] sm:$0xff]
  %v25 = vld [vmem:[%s0 + $0x58] sm:$0xff]
  %v26 = vld [vmem:[%s0 + $0x60] sm:$0xff]
  %v27 = vld [vmem:[%s0 + $0x68] sm:$0xff]
  %v28 = vld [vmem:[%s0 + $0x70] sm:$0xff]
  %v29 = vld [vmem:[%s0 + $0x78] sm:$0xff]
  %v30 = vld [vmem:[%s0 + $0x80] sm:$0xff]
  %v31 = vld [vmem:[%s0 + $0x88] sm:$0xff]
  %v32 = vld [vmem:[%s0 + $0x90] sm:$0xff]
  %v33 = vld [vmem:[%s0 + $0x98] sm:$0xff]
  %v34 = vld [vmem:[%s0 + $0xa0] sm:$0xff]
  %v35 = vld [vmem:[%s0 + $0xa8] sm:$0xff]
  %v36 = vld [vmem:[%s0 + $0xb0] sm:$0xff]
  %v37 = vld [vmem:[%s0 + $0xb8] sm:$0xff]
  %v38 = vld [vmem:[%s0 + $0xc0] sm:$0xff]
  %v39 = vld [vmem:[%s0 + $0xc8] sm:$0xff]
  %v40 = vld [vmem:[%s0 + $0xd0] sm:$0xff]
  %v41 = vld [vmem:[%s0 + $0xd8] sm:$0xff]
  %v42 = vld [vmem:[%s0 + $0xe0] sm:$0xff]
  %v43 = vld [vmem:[%s0 + $0xe8] sm:$0xff]
  %v44 = vld [vmem:[%s0 + $0xf0] sm:$0xff]
  %v45 = vld [vmem:[%s0 + $0xf8] sm:$0xff]
  %v46 = vld [vmem:[%s0 + $0x100] sm:$0xff]
  %v47 = vld [vmem:[%s0 + $0x108] sm:$0xff]
  %v48 = vld [vmem:[%s0 + $0x110] sm:$0xff]
  %v49 = vld [vmem:[%s0 + $0x118] sm:$0xff]
  %v50 = vld [vmem:[%s0 + $0x120] sm:$0xff]
  %v51 = vld [vmem:[%s0 + $0x128] sm:$0xff]
  %v52 = vld [vmem:[%s0 + $0x130] sm:$0xff]
  %v53 = vld [vmem:[%s0 + $0x138] sm:$0xff]
  %v54 = vld [vmem:[%s0 + $0x140] sm:$0xff]
  %v55 = vld [vmem:[%s0 + $0x148] sm:$0xff]
  %v56 = vld [vmem:[%s0 + $0x150] sm:$0xff]
  %v57 = vld [vmem:[%s0 + $0x158] sm:$0xff]
  %v58 = vld [vmem:[%s0 + $0x160] sm:$0xff]
  %v59 = vld [vmem:[%s0 + $0x168] sm:$0xff]
  %v60 = vld [vmem:[%s0 + $0x170] sm:$0xff]
  %v61 = vld [vmem:[%s0 + $0x178] sm:$0xff]
  %v62 = vld [vmem:[%s0 + $0x180] sm:$0xff]
  %v63 = vld [vmem:[%s0 + $0x188] sm:$0xff]
  %v64 = vld [vmem:[%s0 + $0x190] sm:$0xff]
  %v65 = vld [vmem:[%s0 + $0x198] sm:$0xff]
  %v66 = vld [vmem:[%s0 + $0x1a0] sm:$0xff]
  %v67 = vld [vmem:[%s0 + $0x1a8] sm:$0xff]
  %v68 = vld [vmem:[%s0 + $0x1b0] sm:$0xff]
  %v69 = vld [vmem:[%s0 + $0x1b8] sm:$0xff]
  %v70 = vld [vmem:[%s0 + $0x1c0] sm:$0xff]
  %v71 = vld [vmem:[%s0 + $0x1c8] sm:$0xff]
  %v72 = vld [vmem:[%s0 + $0x1d0] sm:$0xff]
  %v73 = vld [vmem:[%s0 + $0x1d8] sm:$0xff]
  %v74 = vld [vmem:[%s0 + $0x1e0] sm:$0xff]
  %v75 = vld [vmem:[%s0 + $0x1e8] sm:$0xff]
  %v76 = vld [vmem:[%s0 + $0x1f0] sm:$0xff]
  %v77 = vld [vmem:[%s0 + $0x1f8] sm:$0xff]
  %v78 = vld [vmem:[%s0 + $0x200] sm:$0xff]
  %v79 = vld [vmem:[%s0 + $0x208] sm:$0xff]
  %v80 = vld [vmem:[%s0 + $0x210] sm:$0xff]
  %v81 = vld [vmem:[%s0 + $0x218] sm:$0xff]
  %v82 = vld [vmem:[%s0 + $0x220] sm:$0xff]
  %v83 = vld [vmem:[%s0 + $0x228] sm:$0xff]
  %v84 = vld [vmem:[%s0 + $0x230] sm:$0xff]
  %v85 = vld [vmem:[%s0 + $0x238] sm:$0xff]
  %v86 = vld [vmem:[%s0 + $0x240] sm:$0xff]
  %v87 = vld [vmem:[%s0 + $0x248] sm:$0xff]
  %v88 = vld [vmem:[%s0 + $0x250] sm:$0xff]
  %v89 = vld [vmem:[%s0 + $0x258] sm:$0xff]
  %v90 = vld [vmem:[%s0 + $0x260] sm:$0xff]
  %v91 = vld [vmem:[%s0 + $0x268] sm:$0xff]
  %v92 = vld [vmem:[%s0 + $0x270] sm:$0xff]
  %v93 = vld [vmem:[%s0 + $0x278] sm:$0xff]
  %v94 = vld [vmem:[%s0 + $0x280] sm:$0xff]
  %v95 = vld [vmem:[%s0 + $0x288] sm:$0xff]
  %v96 = vld [vmem:[%s0 + $0x290] sm:$0xff]
  %v97 = vld [vmem:[%s0 + $0x298] sm:$0xff]
  %v98 = vld [vmem:[%s0 + $0x2a0] sm:$0xff]
  %v99 = vld [vmem:[%s0 + $0x2a8] sm:$0xff]
  %v100 = vld [vmem:[%s0 + $0x2b0] sm:$0xff]
  %v101 = vld [vmem:[%s0 + $0x2b8] sm:$0xff]
  %v102 = vld [vmem:[%s0 + $0x2c0] sm:$0xff]
  %v103 = vld [vmem:[%s0 + $0x2c8] sm:$0xff]
  %v104 = vld [vmem:[%s0 + $0x2d0] sm:$0xff]
  %v105 = vld [vmem:[%s0 + $0x2d8] sm:$0xff]
  %v106 = vld [vmem:[%s0 + $0x2e0] sm:$0xff]
  %v107 = vld [vmem:[%s0 + $0x2e8] sm:$0xff]
  %v108 = vld [vmem:[%s0 + $0x2f0] sm:$0xff]
  %v109 = vld [vmem:[%s0 + $0x2f8] sm:$0xff]
  %v110 = vld [vmem:[%s0 + $0x300] sm:$0xff]
  %v111 = vld [vmem:[%s0 + $0x308] sm:$0xff]
  %v112 = vld [vmem:[%s0 + $0x310] sm:$0xff]
  %v113 = vld [vmem:[%s0 + $0x318] sm:$0xff]
  %v114 = vld [vmem:[%s0 + $0x320] sm:$0xff]
  %v115 = vld [vmem:[%s0 + $0x328] sm:$0xff]
  %v116 = vld [vmem:[%s0 + $0x330] sm:$0xff]
  %v117 = vld [vmem:[%s0 + $0x338] sm:$0xff]
  %v118 = vld [vmem:[%s0 + $0x340] sm:$0xff]
  %v119 = vld [vmem:[%s0 + $0x348] sm:$0xff]
  %v120 = vld [vmem:[%s0 + $0x350] sm:$0xff]
  %v121 = vld [vmem:[%s0 + $0x358] sm:$0xff]
  %v122 = vld [vmem:[%s0 + $0x360] sm:$0xff]
  %v123 = vld [vmem:[%s0 + $0x368] sm:$0xff]
  %v124 = vld [vmem:[%s0 + $0x370] sm:$0xff]
  %v125 = vld [vmem:[%s0 + $0x378] sm:$0xff]
  %v126 = vld [vmem:[%s0 + $0x380] sm:$0xff]
  %v127 = vld [vmem:[%s0 + $0x388] sm:$0xff]
  %v128 = vld [vmem:[%s0 + $0x390] sm:$0xff]
  %v129 = vld [vmem:[%s0 + $0x398] sm:$0xff]
  %v130 = vld [vmem:[%s0 + $0x3a0] sm:$0xff]
  %v131 = vld [vmem:[%s0 + $0x3a8] sm:$0xff]
  %v132 = vld [vmem:[%s0 + $0x3b0] sm:$0xff]
  %v133 = vld [vmem:[%s0 + $0x3b8] sm:$0xff]
  %v134 = vld [vmem:[%s0 + $0x3c0] sm:$0xff]
  %v135 = vld [vmem:[%s0 + $0x3c8] sm:$0xff]
  %v136 = vld [vmem:[%s0 + $0x3d0] sm:$0xff]
  %v137 = vld [vmem:[%s0 + $0x3d8] sm:$0xff]
  %v138 = vld [vmem:[%s0 + $0x3e0] sm:$0xff]
  %v139 = vld [vmem:[%s0 + $0x3e8] sm:$0xff]
  %v140 = vld [vmem:[%s0 + $0x3f0] sm:$0xff]
  %v141 = vld [vmem:[%s0 + $0x3f8] sm:$0xff]
  %v142 = vld [vmem:[%s0 + $0x400] sm:$0xff]
  %v143 = vld [vmem:[%s0 + $0x408] sm:$0xff]
  %v144 = vld [vmem:[%s0 + $0x410] sm:$0xff]
  %v145 = vld [vmem:[%s0 + $0x418] sm:$0xff]
  %v146 = vld [vmem:[%s0 + $0x420] sm:$0xff]
  %v147 = vld [vmem:[%s0 + $0x428] sm:$0xff]
  %v148 = vld [vmem:[%s0 + $0x430] sm:$0xff]
  %v149 = vld [vmem:[%s0 + $0x438] sm:$0xff]
  %v150 = vld [vmem:[%s0 + $0x440] sm:$0xff]
  %v151 = vld [vmem:[%s0 + $0x448] sm:$0xff]
  %v152 = vld [vmem:[%s0 + $0x450] sm:$0xff]
  %v153 = vld [vmem:[%s0 + $0x458] sm:$0xff]
  %v154 = vld [vmem:[%s0 + $0x460] sm:$0xff]
  %v155 = vld [vmem:[%s0 + $0x468] sm:$0xff]
  %v156 = vld [vmem:[%s0 + $0x470] sm:$0xff]
  %v157 = vld [vmem:[%s0 + $0x478] sm:$0xff]
  %v158 = vld [vmem:[%s0 + $0x480] sm:$0xff]
  %v159 = vld [vmem:[%s0 + $0x488] sm:$0xff]
  %v160 = vld [vmem:[%s0 + $0x490] sm:$0xff]
  %v161 = vld [vmem:[%s0 + $0x498] sm:$0xff]
  %v162 = vld [vmem:[%s0 + $0x4a0] sm:$0xff]
  %v163 = vld [vmem:[%s0 + $0x4a8] sm:$0xff]
  %v164 = vld [vmem:[%s0 + $0x4b0] sm:$0xff]
  %v165 = vld [vmem:[%s0 + $0x4b8] sm:$0xff]
  %v166 = vld [vmem:[%s0 + $0x4c0] sm:$0xff]
  %v167 = vld [vmem:[%s0 + $0x4c8] sm:$0xff]
  %v168 = vld [vmem:[%s0 + $0x4d0] sm:$0xff]
  %v169 = vld [vmem:[%s0 + $0x4d8] sm:$0xff]
  %v170 = vld [vmem:[%s0 + $0x4e0] sm:$0xff]
  %v171 = vld [vmem:[%s0 + $0x4e8] sm:$0xff]
  %v172 = vld [vmem:[%s0 + $0x4f0] sm:$0xff]
  %v173 = vld [vmem:[%s0 + $0x4f8] sm:$0xff]
  %v174 = vld [vmem:[%s0 + $0x500] sm:$0xff]
  %v175 = vld [vmem:[%s0 + $0x508] sm:$0xff]
  %v176 = vld [vmem:[%s0 + $0x510] sm:$0xff]
  %v177 = vld [vmem:[%s0 + $0x518] sm:$0xff]
  %v178 = vld [vmem:[%s0 + $0x520] sm:$0xff]
  %v179 = vld [vmem:[%s0 + $0x528] sm:$0xff]
  %v180 = vld [vmem:[%s0 + $0x530] sm:$0xff]
  %v181 = vld [vmem:[%s0 + $0x538] sm:$0xff]
  %v182 = vld [vmem:[%s0 + $0x540] sm:$0xff]
  %v183 = vld [vmem:[%s0 + $0x548] sm:$0xff]
  %v184 = vld [vmem:[%s0 + $0x550] sm:$0xff]
  %v185 = vld [vmem:[%s0 + $0x558] sm:$0xff]
  %v186 = vld [vmem:[%s0 + $0x560] sm:$0xff]
  %v187 = vld [vmem:[%s0 + $0x568] sm:$0xff]
  %v188 = vld [vmem:[%s0 + $0x570] sm:$0xff]
  %v189 = vld [vmem:[%s0 + $0x578] sm:$0xff]
  %v190 = vld [vmem:[%s1] sm:$0xf]
  %v191 = vld [vmem:[%s1 + $0x4] sm:$0xf]
  %v192 = vld [vmem:[%s1 + $0x8] sm:$0xf]
  %v193 = vld [vmem:[%s1 + $0xc] sm:$0xf]
  %v194 = vld [vmem:[%s1 + $0x10] sm:$0xf]
  %v195 = vld [vmem:[%s1 + $0x14] sm:$0xf]
  %v196 = vld [vmem:[%s1 + $0x18] sm:$0xf]
  %v197 = vld [vmem:[%s1 + $0x1c] sm:$0xf]
  %v198 = vld [vmem:[%s1 + $0x20] sm:$0xf]
  %v199 = vld [vmem:[%s1 + $0x24] sm:$0xf]
  %v200 = vld [vmem:[%s1 + $0x28] sm:$0xf]
  %v201 = vld [vmem:[%s1 + $0x2c] sm:$0xf]
  %v202 = vld [vmem:[%s1 + $0x30] sm:$0xf]
  %v203 = vld [vmem:[%s1 + $0x34] sm:$0xf]
  %v204 = vld [vmem:[%s1 + $0x38] sm:$0xf]
  %v205 = vld [vmem:[%s1 + $0x3c] sm:$0xf]
  %v206 = vld [vmem:[%s1 + $0x40] sm:$0xf]
  %v207 = vld [vmem:[%s1 + $0x44] sm:$0xf]
  %v208 = vld [vmem:[%s1 + $0x48] sm:$0xf]
  %v209 = vld [vmem:[%s1 + $0x4c] sm:$0xf]
  %v210 = vld [vmem:[%s1 + $0x50] sm:$0xf]
  %v211 = vld [vmem:[%s1 + $0x54] sm:$0xf]
  %v212 = vld [vmem:[%s1 + $0x58] sm:$0xf]
  %v213 = vld [vmem:[%s1 + $0x5c] sm:$0xf]
  %v214 = vld [vmem:[%s1 + $0x60] sm:$0xf]
  %v215 = vld [vmem:[%s1 + $0x64] sm:$0xf]
  %v216 = vld [vmem:[%s1 + $0x68] sm:$0xf]
  %v217 = vld [vmem:[%s1 + $0x6c] sm:$0xf]
  %v218 = vld [vmem:[%s1 + $0x70] sm:$0xf]
  %v219 = vld [vmem:[%s1 + $0x74] sm:$0xf]
  %v220 = vld [vmem:[%s1 + $0x78] sm:$0xf]
  %v221 = vld [vmem:[%s1 + $0x7c] sm:$0xf]
  %v222 = vld [vmem:[%s1 + $0x80] sm:$0xf]
  %v223 = vld [vmem:[%s1 + $0x84] sm:$0xf]
  %v224 = vld [vmem:[%s1 + $0x88] sm:$0xf]
  %v225 = vld [vmem:[%s1 + $0x8c] sm:$0xf]
  %v226 = vld [vmem:[%s1 + $0x90] sm:$0xf]
  %v227 = vld [vmem:[%s1 + $0x94] sm:$0xf]
  %v228 = vld [vmem:[%s1 + $0x98] sm:$0xf]
  %v229 = vld [vmem:[%s1 + $0x9c] sm:$0xf]
  %v230 = vld [vmem:[%s1 + $0xa0] sm:$0xf]
  %v231 = vld [vmem:[%s1 + $0xa4] sm:$0xf]
  %v232 = vld [vmem:[%s1 + $0xa8] sm:$0xf]
  %v233 = vld [vmem:[%s1 + $0xac] sm:$0xf]
  %v234 = vld [vmem:[%s1 + $0xb0] sm:$0xf]
  %v235 = vld [vmem:[%s1 + $0xb4] sm:$0xf]
  %v236 = vld [vmem:[%s1 + $0xb8] sm:$0xf]
  %v237 = vld [vmem:[%s1 + $0xbc] sm:$0xf]
  %v238 = vld [vmem:[%s1 + $0xc0] sm:$0xf]
  %v239 = vld [vmem:[%s1 + $0xc4] sm:$0xf]
  %v240 = vld [vmem:[%s1 + $0xc8] sm:$0xf]
  %v241 = vld [vmem:[%s1 + $0xcc] sm:$0xf]
  %v242 = vld [vmem:[%s1 + $0xd0] sm:$0xf]
  %v243 = vld [vmem:[%s1 + $0xd4] sm:$0xf]
  %v244 = vld [vmem:[%s1 + $0xd8] sm:$0xf]
  %v245 = vld [vmem:[%s1 + $0xdc] sm:$0xf]
  %v246 = vld [vmem:[%s1 + $0xe0] sm:$0xf]
  %v247 = vld [vmem:[%s1 + $0xe4] sm:$0xf]
  %v248 = vld [vmem:[%s1 + $0xe8] sm:$0xf]
  %v249 = vld [vmem:[%s1 + $0xec] sm:$0xf]
  %v250 = vld [vmem:[%s1 + $0xf0] sm:$0xf]
  %v251 = vld [vmem:[%s1 + $0xf4] sm:$0xf]
  %v252 = vld [vmem:[%s1 + $0xf8] sm:$0xf]
  %v253 = vld [vmem:[%s1 + $0xfc] sm:$0xf]
  %v254 = vld [vmem:[%s1 + $0x100] sm:$0xf]
  %v255 = vld [vmem:[%s1 + $0x104] sm:$0xf]
  %v256 = vld [vmem:[%s1 + $0x108] sm:$0xf]
  %v257 = vld [vmem:[%s1 + $0x10c] sm:$0xf]
  %v258 = vld [vmem:[%s1 + $0x110] sm:$0xf]
  %v259 = vld [vmem:[%s1 + $0x114] sm:$0xf]
  %v260 = vld [vmem:[%s1 + $0x118] sm:$0xf]
  %v261 = vld [vmem:[%s1 + $0x11c] sm:$0xf]
  %v262 = vld [vmem:[%s1 + $0x120] sm:$0xf]
  %v263 = vld [vmem:[%s1 + $0x124] sm:$0xf]
  %v264 = vld [vmem:[%s1 + $0x128] sm:$0xf]
  %v265 = vld [vmem:[%s1 + $0x12c] sm:$0xf]
  %v266 = vld [vmem:[%s1 + $0x130] sm:$0xf]
  %v267 = vld [vmem:[%s1 + $0x134] sm:$0xf]
  %v268 = vld [vmem:[%s1 + $0x138] sm:$0xf]
  %v269 = vld [vmem:[%s1 + $0x13c] sm:$0xf]
  %v270 = vld [vmem:[%s1 + $0x140] sm:$0xf]
  %v271 = vld [vmem:[%s1 + $0x144] sm:$0xf]
  %v272 = vld [vmem:[%s1 + $0x148] sm:$0xf]
  %v273 = vld [vmem:[%s1 + $0x14c] sm:$0xf]
  %v274 = vld [vmem:[%s1 + $0x150] sm:$0xf]
  %v275 = vld [vmem:[%s1 + $0x154] sm:$0xf]
  %v276 = vld [vmem:[%s1 + $0x158] sm:$0xf]
  %v277 = vld [vmem:[%s1 + $0x15c] sm:$0xf]
  %v278 = vld [vmem:[%s1 + $0x160] sm:$0xf]
  %v279 = vld [vmem:[%s1 + $0x164] sm:$0xf]
  %v280 = vld [vmem:[%s1 + $0x168] sm:$0xf]
  %v281 = vld [vmem:[%s1 + $0x16c] sm:$0xf]
  %v282 = vld [vmem:[%s1 + $0x170] sm:$0xf]
  %v283 = vld [vmem:[%s1 + $0x174] sm:$0xf]
  %v284 = vld [vmem:[%s1 + $0x178] sm:$0xf]
  %v285 = vld [vmem:[%s1 + $0x17c] sm:$0xf]
  %v286 = vld [vmem:[%s1 + $0x180] sm:$0xf]
  %v287 = vld [vmem:[%s1 + $0x184] sm:$0xf]
  %v288 = vld [vmem:[%s1 + $0x188] sm:$0xf]
  %v289 = vld [vmem:[%s1 + $0x18c] sm:$0xf]
  %v290 = vld [vmem:[%s1 + $0x190] sm:$0xf]
  %v291 = vld [vmem:[%s1 + $0x194] sm:$0xf]
  %v292 = vld [vmem:[%s1 + $0x198] sm:$0xf]
  %v293 = vld [vmem:[%s1 + $0x19c] sm:$0xf]
  %v294 = vld [vmem:[%s1 + $0x1a0] sm:$0xf]
  %v295 = vld [vmem:[%s1 + $0x1a4] sm:$0xf]
  %v296 = vld [vmem:[%s1 + $0x1a8] sm:$0xf]
  %v297 = vld [vmem:[%s1 + $0x1ac] sm:$0xf]
  %v298 = vld [vmem:[%s1 + $0x1b0] sm:$0xf]
  %v299 = vld [vmem:[%s1 + $0x1b4] sm:$0xf]
  %v300 = vld [vmem:[%s1 + $0x1b8] sm:$0xf]
  %v301 = vld [vmem:[%s1 + $0x1bc] sm:$0xf]
  %v302 = vld [vmem:[%s1 + $0x1c0] sm:$0xf]
  %v303 = vld [vmem:[%s1 + $0x1c4] sm:$0xf]
  %v304 = vld [vmem:[%s1 + $0x1c8] sm:$0xf]
  %v305 = vld [vmem:[%s1 + $0x1cc] sm:$0xf]
  %v306 = vld [vmem:[%s1 + $0x1d0] sm:$0xf]
  %v307 = vld [vmem:[%s1 + $0x1d4] sm:$0xf]
  %v308 = vld [vmem:[%s1 + $0x1d8] sm:$0xf]
  %v309 = vld [vmem:[%s1 + $0x1dc] sm:$0xf]
  %v310 = vld [vmem:[%s1 + $0x1e0] sm:$0xf]
  %v311 = vld [vmem:[%s1 + $0x1e4] sm:$0xf]
  %v312 = vld [vmem:[%s1 + $0x1e8] sm:$0xf]
  %v313 = vld [vmem:[%s1 + $0x1ec] sm:$0xf]
  %v314 = vld [vmem:[%s1 + $0x1f0] sm:$0xf]
  %v315 = vld [vmem:[%s1 + $0x1f4] sm:$0xf]
  %v316 = vld [vmem:[%s1 + $0x1f8] sm:$0xf]
  %v317 = vld [vmem:[%s1 + $0x1fc] sm:$0xf]
  %v318 = vld [vmem:[%s1 + $0x200] sm:$0xf]
  %v319 = vld [vmem:[%s1 + $0x204] sm:$0xf]
  %v320 = vld [vmem:[%s1 + $0x208] sm:$0xf]
  %v321 = vld [vmem:[%s1 + $0x20c] sm:$0xf]
  %v322 = vld [vmem:[%s1 + $0x210] sm:$0xf]
  %v323 = vld [vmem:[%s1 + $0x214] sm:$0xf]
  %v324 = vld [vmem:[%s1 + $0x218] sm:$0xf]
  %v325 = vld [vmem:[%s1 + $0x21c] sm:$0xf]
  %v326 = vld [vmem:[%s1 + $0x220] sm:$0xf]
  %v327 = vld [vmem:[%s1 + $0x224] sm:$0xf]
  %v328 = vld [vmem:[%s1 + $0x228] sm:$0xf]
  %v329 = vld [vmem:[%s1 + $0x22c] sm:$0xf]
  %v330 = vld [vmem:[%s1 + $0x230] sm:$0xf]
  %v331 = vld [vmem:[%s1 + $0x234] sm:$0xf]
  %v332 = vld [vmem:[%s1 + $0x238] sm:$0xf]
  %v333 = vld [vmem:[%s1 + $0x23c] sm:$0xf]
  %v334 = vld [vmem:[%s1 + $0x240] sm:$0xf]
  %v335 = vld [vmem:[%s1 + $0x244] sm:$0xf]
  %v336 = vld [vmem:[%s1 + $0x248] sm:$0xf]
  %v337 = vld [vmem:[%s1 + $0x24c] sm:$0xf]
  %v338 = vld [vmem:[%s1 + $0x250] sm:$0xf]
  %v339 = vld [vmem:[%s1 + $0x254] sm:$0xf]
  %v340 = vld [vmem:[%s1 + $0x258] sm:$0xf]
  %v341 = vld [vmem:[%s1 + $0x25c] sm:$0xf]
  %v342 = vld [vmem:[%s1 + $0x260] sm:$0xf]
  %v343 = vld [vmem:[%s1 + $0x264] sm:$0xf]
  %v344 = vld [vmem:[%s1 + $0x268] sm:$0xf]
  %v345 = vld [vmem:[%s1 + $0x26c] sm:$0xf]
  %v346 = vld [vmem:[%s1 + $0x270] sm:$0xf]
  %v347 = vld [vmem:[%s1 + $0x274] sm:$0xf]
  %v348 = vld [vmem:[%s1 + $0x278] sm:$0xf]
  %v349 = vld [vmem:[%s1 + $0x27c] sm:$0xf]
  %v350 = vld [vmem:[%s1 + $0x280] sm:$0xf]
  %v351 = vld [vmem:[%s1 + $0x284] sm:$0xf]
  %v352 = vld [vmem:[%s1 + $0x288] sm:$0xf]
  %v353 = vld [vmem:[%s1 + $0x28c] sm:$0xf]
  %v354 = vld [vmem:[%s1 + $0x290] sm:$0xf]
  %v355 = vld [vmem:[%s1 + $0x294] sm:$0xf]
  %v356 = vld [vmem:[%s1 + $0x298] sm:$0xf]
  %v357 = vld [vmem:[%s1 + $0x29c] sm:$0xf]
  %v358 = vld [vmem:[%s1 + $0x2a0] sm:$0xf]
  %v359 = vld [vmem:[%s1 + $0x2a4] sm:$0xf]
  %v360 = vld [vmem:[%s1 + $0x2a8] sm:$0xf]
  %v361 = vld [vmem:[%s1 + $0x2ac] sm:$0xf]
  %v362 = vld [vmem:[%s1 + $0x2b0] sm:$0xf]
  %v363 = vld [vmem:[%s1 + $0x2b4] sm:$0xf]
  %v364 = vld [vmem:[%s1 + $0x2b8] sm:$0xf]
  %v365 = vld [vmem:[%s1 + $0x2bc] sm:$0xf]
  %v366 = vld [vmem:[%s1 + $0x2c0] sm:$0xf]
  %v367 = vld [vmem:[%s1 + $0x2c4] sm:$0xf]
  %v368 = vld [vmem:[%s1 + $0x2c8] sm:$0xf]
  %v369 = vld [vmem:[%s1 + $0x2cc] sm:$0xf]
  %v370 = vld [vmem:[%s1 + $0x2d0] sm:$0xf]
  %v371 = vld [vmem:[%s1 + $0x2d4] sm:$0xf]
  %v372 = vld [vmem:[%s1 + $0x2d8] sm:$0xf]
  %v373 = vld [vmem:[%s1 + $0x2dc] sm:$0xf]
  %v374 = vld [vmem:[%s1 + $0x2e0] sm:$0xf]
  %v375 = vld [vmem:[%s1 + $0x2e4] sm:$0xf]
  %v376 = vld [vmem:[%s1 + $0x2e8] sm:$0xf]
  %v377 = vld [vmem:[%s1 + $0x2ec] sm:$0xf]
  %v378 = vld [vmem:[%s1 + $0x2f0] sm:$0xf]
  %v379 = vld [vmem:[%s1 + $0x2f4] sm:$0xf]
  %v380 = vld [vmem:[%s1 + $0x2f8] sm:$0xf]
  %v381 = vld [vmem:[%s1 + $0x2fc] sm:$0xf]
  %v382 = vld [vmem:[%s1 + $0x300] sm:$0xf]
  %v383 = vld [vmem:[%s1 + $0x304] sm:$0xf]
  %v384 = vld [vmem:[%s1 + $0x308] sm:$0xf]
  %v385 = vld [vmem:[%s1 + $0x30c] sm:$0xf]
  %v386 = vld [vmem:[%s1 + $0x310] sm:$0xf]
  %v387 = vld [vmem:[%s1 + $0x314] sm:$0xf]
  %v388 = vld [vmem:[%s1 + $0x318] sm:$0xf]
  %v389 = vld [vmem:[%s1 + $0x31c] sm:$0xf]
  %v390 = vld [vmem:[%s1 + $0x320] sm:$0xf]
  %v391 = vld [vmem:[%s1 + $0x324] sm:$0xf]
  %v392 = vld [vmem:[%s1 + $0x328] sm:$0xf]
  %v393 = vld [vmem:[%s1 + $0x32c] sm:$0xf]
  %v394 = vld [vmem:[%s1 + $0x330] sm:$0xf]
  %v395 = vld [vmem:[%s1 + $0x334] sm:$0xf]
  %v396 = vld [vmem:[%s1 + $0x338] sm:$0xf]
  %v397 = vld [vmem:[%s1 + $0x33c] sm:$0xf]
  %v398 = vld [vmem:[%s1 + $0x340] sm:$0xf]
  %v399 = vld [vmem:[%s1 + $0x344] sm:$0xf]
  %v400 = vld [vmem:[%s1 + $0x348] sm:$0xf]
  %v401 = vld [vmem:[%s1 + $0x34c] sm:$0xf]
  %v402 = vld [vmem:[%s1 + $0x350] sm:$0xf]
  %v403 = vld [vmem:[%s1 + $0x354] sm:$0xf]
  %v404 = vld [vmem:[%s1 + $0x358] sm:$0xf]
  %v405 = vld [vmem:[%s1 + $0x35c] sm:$0xf]
  %v406 = vld [vmem:[%s1 + $0x360] sm:$0xf]
  %v407 = vld [vmem:[%s1 + $0x364] sm:$0xf]
  %v408 = vld [vmem:[%s1 + $0x368] sm:$0xf]
  %v409 = vld [vmem:[%s1 + $0x36c] sm:$0xf]
  %v410 = vld [vmem:[%s1 + $0x370] sm:$0xf]
  %v411 = vld [vmem:[%s1 + $0x374] sm:$0xf]
  %v412 = vld [vmem:[%s1 + $0x378] sm:$0xf]
  %v413 = vld [vmem:[%s1 + $0x37c] sm:$0xf]
  %v414 = vld [vmem:[%s1 + $0x380] sm:$0xf]
  %v415 = vld [vmem:[%s1 + $0x384] sm:$0xf]
  %v416 = vld [vmem:[%s1 + $0x388] sm:$0xf]
  %v417 = vld [vmem:[%s1 + $0x38c] sm:$0xf]
  %v418 = vld [vmem:[%s1 + $0x390] sm:$0xf]
  %v419 = vld [vmem:[%s1 + $0x394] sm:$0xf]
  %v420 = vld [vmem:[%s1 + $0x398] sm:$0xf]
  %v421 = vld [vmem:[%s1 + $0x39c] sm:$0xf]
  %v422 = vld [vmem:[%s1 + $0x3a0] sm:$0xf]
  %v423 = vld [vmem:[%s1 + $0x3a4] sm:$0xf]
  %v424 = vld [vmem:[%s1 + $0x3a8] sm:$0xf]
  %v425 = vld [vmem:[%s1 + $0x3ac] sm:$0xf]
  %v426 = vld [vmem:[%s1 + $0x3b0] sm:$0xf]
  %v427 = vld [vmem:[%s1 + $0x3b4] sm:$0xf]
  %v428 = vld [vmem:[%s1 + $0x3b8] sm:$0xf]
  %v429 = vld [vmem:[%s1 + $0x3bc] sm:$0xf]
  %v430 = vld [vmem:[%s1 + $0x3c0] sm:$0xf]
  %v431 = vld [vmem:[%s1 + $0x3c4] sm:$0xf]
  %v432 = vld [vmem:[%s1 + $0x3c8] sm:$0xf]
  %v433 = vld [vmem:[%s1 + $0x3cc] sm:$0xf]
  %v434 = vld [vmem:[%s1 + $0x3d0] sm:$0xf]
  %v435 = vld [vmem:[%s1 + $0x3d4] sm:$0xf]
  %v436 = vld [vmem:[%s1 + $0x3d8] sm:$0xf]
  %v437 = vld [vmem:[%s1 + $0x3dc] sm:$0xf]
  %v438 = vld [vmem:[%s1 + $0x3e0] sm:$0xf]
  %v439 = vld [vmem:[%s1 + $0x3e4] sm:$0xf]
  %v440 = vld [vmem:[%s1 + $0x3e8] sm:$0xf]
  %v441 = vld [vmem:[%s1 + $0x3ec] sm:$0xf]
  %v442 = vld [vmem:[%s1 + $0x3f0] sm:$0xf]
  %v443 = vld [vmem:[%s1 + $0x3f4] sm:$0xf]
  %v444 = vld [vmem:[%s1 + $0x3f8] sm:$0xf]
  %v445 = vld [vmem:[%s1 + $0x3fc] sm:$0xf]
  %v446 = vld [vmem:[%s2] sm:$0x1]
  %v448 = vperm.slane %v446, 0
  %v626 = vunpack.c.l.b16 %v14
  %v627 = vunpack.c.h.b16 %v14
  %v628 = vunpack.c.l.b16 %v15
  %v629 = vunpack.c.h.b16 %v15
  %v630 = vunpack.c.l.b16 %v16
  %v631 = vunpack.c.h.b16 %v16
  %v632 = vunpack.c.l.b16 %v17
  %v633 = vunpack.c.h.b16 %v17
  %v634 = vunpack.c.l.b16 %v18
  %v635 = vunpack.c.h.b16 %v18
  %v636 = vunpack.c.l.b16 %v19
  %v637 = vunpack.c.h.b16 %v19
  %v638 = vunpack.c.l.b16 %v20
  %v639 = vunpack.c.h.b16 %v20
  %v640 = vunpack.c.l.b16 %v21
  %v641 = vunpack.c.h.b16 %v21
  %v642 = vunpack.c.l.b16 %v22
  %v643 = vunpack.c.h.b16 %v22
  %v644 = vunpack.c.l.b16 %v23
  %v645 = vunpack.c.h.b16 %v23
  %v646 = vunpack.c.l.b16 %v24
  %v647 = vunpack.c.h.b16 %v24
  %v648 = vunpack.c.l.b16 %v25
  %v649 = vunpack.c.h.b16 %v25
  %v650 = vunpack.c.l.b16 %v26
  %v651 = vunpack.c.h.b16 %v26
  %v652 = vunpack.c.l.b16 %v27
  %v653 = vunpack.c.h.b16 %v27
  %v654 = vunpack.c.l.b16 %v28
  %v655 = vunpack.c.h.b16 %v28
  %v656 = vunpack.c.l.b16 %v29
  %v657 = vunpack.c.h.b16 %v29
  %v658 = vunpack.c.l.b16 %v30
  %v659 = vunpack.c.h.b16 %v30
  %v660 = vunpack.c.l.b16 %v31
  %v661 = vunpack.c.h.b16 %v31
  %v662 = vunpack.c.l.b16 %v32
  %v663 = vunpack.c.h.b16 %v32
  %v664 = vunpack.c.l.b16 %v33
  %v665 = vunpack.c.h.b16 %v33
  %v666 = vunpack.c.l.b16 %v34
  %v667 = vunpack.c.h.b16 %v34
  %v668 = vunpack.c.l.b16 %v35
  %v669 = vunpack.c.h.b16 %v35
  %v670 = vunpack.c.l.b16 %v36
  %v671 = vunpack.c.h.b16 %v36
  %v672 = vunpack.c.l.b16 %v37
  %v673 = vunpack.c.h.b16 %v37
  %v674 = vunpack.c.l.b16 %v38
  %v675 = vunpack.c.h.b16 %v38
  %v676 = vunpack.c.l.b16 %v39
  %v677 = vunpack.c.h.b16 %v39
  %v678 = vunpack.c.l.b16 %v40
  %v679 = vunpack.c.h.b16 %v40
  %v680 = vunpack.c.l.b16 %v41
  %v681 = vunpack.c.h.b16 %v41
  %v682 = vunpack.c.l.b16 %v42
  %v683 = vunpack.c.h.b16 %v42
  %v684 = vunpack.c.l.b16 %v43
  %v685 = vunpack.c.h.b16 %v43
  %v686 = vunpack.c.l.b16 %v44
  %v687 = vunpack.c.h.b16 %v44
  %v688 = vunpack.c.l.b16 %v45
  %v689 = vunpack.c.h.b16 %v45
  %v690 = vunpack.c.l.b16 %v46
  %v691 = vunpack.c.h.b16 %v46
  %v692 = vunpack.c.l.b16 %v47
  %v693 = vunpack.c.h.b16 %v47
  %v694 = vunpack.c.l.b16 %v48
  %v695 = vunpack.c.h.b16 %v48
  %v696 = vunpack.c.l.b16 %v49
  %v697 = vunpack.c.h.b16 %v49
  %v698 = vunpack.c.l.b16 %v50
  %v699 = vunpack.c.h.b16 %v50
  %v700 = vunpack.c.l.b16 %v51
  %v701 = vunpack.c.h.b16 %v51
  %v702 = vunpack.c.l.b16 %v52
  %v703 = vunpack.c.h.b16 %v52
  %v704 = vunpack.c.l.b16 %v53
  %v705 = vunpack.c.h.b16 %v53
  %v706 = vunpack.c.l.b16 %v54
  %v707 = vunpack.c.h.b16 %v54
  %v708 = vunpack.c.l.b16 %v55
  %v709 = vunpack.c.h.b16 %v55
  %v710 = vunpack.c.l.b16 %v56
  %v711 = vunpack.c.h.b16 %v56
  %v712 = vunpack.c.l.b16 %v57
  %v713 = vunpack.c.h.b16 %v57
  %v714 = vunpack.c.l.b16 %v58
  %v715 = vunpack.c.h.b16 %v58
  %v716 = vunpack.c.l.b16 %v59
  %v717 = vunpack.c.h.b16 %v59
  %v718 = vunpack.c.l.b16 %v60
  %v719 = vunpack.c.h.b16 %v60
  %v720 = vunpack.c.l.b16 %v61
  %v721 = vunpack.c.h.b16 %v61
  %v722 = vunpack.c.l.b16 %v62
  %v723 = vunpack.c.h.b16 %v62
  %v724 = vunpack.c.l.b16 %v63
  %v725 = vunpack.c.h.b16 %v63
  %v726 = vunpack.c.l.b16 %v64
  %v727 = vunpack.c.h.b16 %v64
  %v728 = vunpack.c.l.b16 %v65
  %v729 = vunpack.c.h.b16 %v65
  %v730 = vunpack.c.l.b16 %v66
  %v731 = vunpack.c.h.b16 %v66
  %v732 = vunpack.c.l.b16 %v67
  %v733 = vunpack.c.h.b16 %v67
  %v734 = vunpack.c.l.b16 %v68
  %v735 = vunpack.c.h.b16 %v68
  %v736 = vunpack.c.l.b16 %v69
  %v737 = vunpack.c.h.b16 %v69
  %v738 = vunpack.c.l.b16 %v70
  %v739 = vunpack.c.h.b16 %v70
  %v740 = vunpack.c.l.b16 %v71
  %v741 = vunpack.c.h.b16 %v71
  %v742 = vunpack.c.l.b16 %v72
  %v743 = vunpack.c.h.b16 %v72
  %v744 = vunpack.c.l.b16 %v73
  %v745 = vunpack.c.h.b16 %v73
  %v746 = vunpack.c.l.b16 %v74
  %v747 = vunpack.c.h.b16 %v74
  %v748 = vunpack.c.l.b16 %v75
  %v749 = vunpack.c.h.b16 %v75
  %v750 = vunpack.c.l.b16 %v76
  %v751 = vunpack.c.h.b16 %v76
  %v752 = vunpack.c.l.b16 %v77
  %v753 = vunpack.c.h.b16 %v77
  %v754 = vunpack.c.l.b16 %v78
  %v755 = vunpack.c.h.b16 %v78
  %v756 = vunpack.c.l.b16 %v79
  %v757 = vunpack.c.h.b16 %v79
  %v758 = vunpack.c.l.b16 %v80
  %v759 = vunpack.c.h.b16 %v80
  %v760 = vunpack.c.l.b16 %v81
  %v761 = vunpack.c.h.b16 %v81
  %v762 = vunpack.c.l.b16 %v82
  %v763 = vunpack.c.h.b16 %v82
  %v764 = vunpack.c.l.b16 %v83
  %v765 = vunpack.c.h.b16 %v83
  %v766 = vunpack.c.l.b16 %v84
  %v767 = vunpack.c.h.b16 %v84
  %v768 = vunpack.c.l.b16 %v85
  %v769 = vunpack.c.h.b16 %v85
  %v770 = vunpack.c.l.b16 %v86
  %v771 = vunpack.c.h.b16 %v86
  %v772 = vunpack.c.l.b16 %v87
  %v773 = vunpack.c.h.b16 %v87
  %v774 = vunpack.c.l.b16 %v88
  %v775 = vunpack.c.h.b16 %v88
  %v776 = vunpack.c.l.b16 %v89
  %v777 = vunpack.c.h.b16 %v89
  %v778 = vunpack.c.l.b16 %v90
  %v779 = vunpack.c.h.b16 %v90
  %v780 = vunpack.c.l.b16 %v91
  %v781 = vunpack.c.h.b16 %v91
  %v782 = vunpack.c.l.b16 %v92
  %v783 = vunpack.c.h.b16 %v92
  %v784 = vunpack.c.l.b16 %v93
  %v785 = vunpack.c.h.b16 %v93
  %v786 = vunpack.c.l.b16 %v94
  %v787 = vunpack.c.h.b16 %v94
  %v788 = vunpack.c.l.b16 %v95
  %v789 = vunpack.c.h.b16 %v95
  %v790 = vunpack.c.l.b16 %v96
  %v791 = vunpack.c.h.b16 %v96
  %v792 = vunpack.c.l.b16 %v97
  %v793 = vunpack.c.h.b16 %v97
  %v794 = vunpack.c.l.b16 %v98
  %v795 = vunpack.c.h.b16 %v98
  %v796 = vunpack.c.l.b16 %v99
  %v797 = vunpack.c.h.b16 %v99
  %v798 = vunpack.c.l.b16 %v100
  %v799 = vunpack.c.h.b16 %v100
  %v800 = vunpack.c.l.b16 %v101
  %v801 = vunpack.c.h.b16 %v101
  %v802 = vunpack.c.l.b16 %v102
  %v803 = vunpack.c.h.b16 %v102
  %v804 = vunpack.c.l.b16 %v103
  %v805 = vunpack.c.h.b16 %v103
  %v806 = vunpack.c.l.b16 %v104
  %v807 = vunpack.c.h.b16 %v104
  %v808 = vunpack.c.l.b16 %v105
  %v809 = vunpack.c.h.b16 %v105
  %v810 = vunpack.c.l.b16 %v106
  %v811 = vunpack.c.h.b16 %v106
  %v812 = vunpack.c.l.b16 %v107
  %v813 = vunpack.c.h.b16 %v107
  %v814 = vunpack.c.l.b16 %v108
  %v815 = vunpack.c.h.b16 %v108
  %v816 = vunpack.c.l.b16 %v109
  %v817 = vunpack.c.h.b16 %v109
  %v818 = vunpack.c.l.b16 %v110
  %v819 = vunpack.c.h.b16 %v110
  %v820 = vunpack.c.l.b16 %v111
  %v821 = vunpack.c.h.b16 %v111
  %v822 = vunpack.c.l.b16 %v112
  %v823 = vunpack.c.h.b16 %v112
  %v824 = vunpack.c.l.b16 %v113
  %v825 = vunpack.c.h.b16 %v113
  %v826 = vunpack.c.l.b16 %v114
  %v827 = vunpack.c.h.b16 %v114
  %v828 = vunpack.c.l.b16 %v115
  %v829 = vunpack.c.h.b16 %v115
  %v830 = vunpack.c.l.b16 %v116
  %v831 = vunpack.c.h.b16 %v116
  %v832 = vunpack.c.l.b16 %v117
  %v833 = vunpack.c.h.b16 %v117
  %v834 = vunpack.c.l.b16 %v118
  %v835 = vunpack.c.h.b16 %v118
  %v836 = vunpack.c.l.b16 %v119
  %v837 = vunpack.c.h.b16 %v119
  %v838 = vunpack.c.l.b16 %v120
  %v839 = vunpack.c.h.b16 %v120
  %v840 = vunpack.c.l.b16 %v121
  %v841 = vunpack.c.h.b16 %v121
  %v842 = vunpack.c.l.b16 %v122
  %v843 = vunpack.c.h.b16 %v122
  %v844 = vunpack.c.l.b16 %v123
  %v845 = vunpack.c.h.b16 %v123
  %v846 = vunpack.c.l.b16 %v124
  %v847 = vunpack.c.h.b16 %v124
  %v848 = vunpack.c.l.b16 %v125
  %v849 = vunpack.c.h.b16 %v125
  %v850 = vunpack.c.l.b16 %v126
  %v851 = vunpack.c.h.b16 %v126
  %v852 = vunpack.c.l.b16 %v127
  %v853 = vunpack.c.h.b16 %v127
  %v854 = vunpack.c.l.b16 %v128
  %v855 = vunpack.c.h.b16 %v128
  %v856 = vunpack.c.l.b16 %v129
  %v857 = vunpack.c.h.b16 %v129
  %v858 = vunpack.c.l.b16 %v130
  %v859 = vunpack.c.h.b16 %v130
  %v860 = vunpack.c.l.b16 %v131
  %v861 = vunpack.c.h.b16 %v131
  %v862 = vunpack.c.l.b16 %v132
  %v863 = vunpack.c.h.b16 %v132
  %v864 = vunpack.c.l.b16 %v133
  %v865 = vunpack.c.h.b16 %v133
  %v866 = vunpack.c.l.b16 %v134
  %v867 = vunpack.c.h.b16 %v134
  %v868 = vunpack.c.l.b16 %v135
  %v869 = vunpack.c.h.b16 %v135
  %v870 = vunpack.c.l.b16 %v136
  %v871 = vunpack.c.h.b16 %v136
  %v872 = vunpack.c.l.b16 %v137
  %v873 = vunpack.c.h.b16 %v137
  %v874 = vunpack.c.l.b16 %v138
  %v875 = vunpack.c.h.b16 %v138
  %v876 = vunpack.c.l.b16 %v139
  %v877 = vunpack.c.h.b16 %v139
  %v878 = vunpack.c.l.b16 %v140
  %v879 = vunpack.c.h.b16 %v140
  %v880 = vunpack.c.l.b16 %v141
  %v881 = vunpack.c.h.b16 %v141
  %v882 = vunpack.c.l.b16 %v142
  %v883 = vunpack.c.h.b16 %v142
  %v884 = vunpack.c.l.b16 %v143
  %v885 = vunpack.c.h.b16 %v143
  %v886 = vunpack.c.l.b16 %v144
  %v887 = vunpack.c.h.b16 %v144
  %v888 = vunpack.c.l.b16 %v145
  %v889 = vunpack.c.h.b16 %v145
  %v890 = vunpack.c.l.b16 %v146
  %v891 = vunpack.c.h.b16 %v146
  %v892 = vunpack.c.l.b16 %v147
  %v893 = vunpack.c.h.b16 %v147
  %v894 = vunpack.c.l.b16 %v148
  %v895 = vunpack.c.h.b16 %v148
  %v896 = vunpack.c.l.b16 %v149
  %v897 = vunpack.c.h.b16 %v149
  %v898 = vunpack.c.l.b16 %v150
  %v899 = vunpack.c.h.b16 %v150
  %v900 = vunpack.c.l.b16 %v151
  %v901 = vunpack.c.h.b16 %v151
  %v902 = vunpack.c.l.b16 %v152
  %v903 = vunpack.c.h.b16 %v152
  %v904 = vunpack.c.l.b16 %v153
  %v905 = vunpack.c.h.b16 %v153
  %v906 = vunpack.c.l.b16 %v154
  %v907 = vunpack.c.h.b16 %v154
  %v908 = vunpack.c.l.b16 %v155
  %v909 = vunpack.c.h.b16 %v155
  %v910 = vunpack.c.l.b16 %v156
  %v911 = vunpack.c.h.b16 %v156
  %v912 = vunpack.c.l.b16 %v157
  %v913 = vunpack.c.h.b16 %v157
  %v914 = vunpack.c.l.b16 %v158
  %v915 = vunpack.c.h.b16 %v158
  %v916 = vunpack.c.l.b16 %v159
  %v917 = vunpack.c.h.b16 %v159
  %v918 = vunpack.c.l.b16 %v160
  %v919 = vunpack.c.h.b16 %v160
  %v920 = vunpack.c.l.b16 %v161
  %v921 = vunpack.c.h.b16 %v161
  %v922 = vunpack.c.l.b16 %v162
  %v923 = vunpack.c.h.b16 %v162
  %v924 = vunpack.c.l.b16 %v163
  %v925 = vunpack.c.h.b16 %v163
  %v926 = vunpack.c.l.b16 %v164
  %v927 = vunpack.c.h.b16 %v164
  %v928 = vunpack.c.l.b16 %v165
  %v929 = vunpack.c.h.b16 %v165
  %v930 = vunpack.c.l.b16 %v166
  %v931 = vunpack.c.h.b16 %v166
  %v932 = vunpack.c.l.b16 %v167
  %v933 = vunpack.c.h.b16 %v167
  %v934 = vunpack.c.l.b16 %v168
  %v935 = vunpack.c.h.b16 %v168
  %v936 = vunpack.c.l.b16 %v169
  %v937 = vunpack.c.h.b16 %v169
  %v938 = vunpack.c.l.b16 %v170
  %v939 = vunpack.c.h.b16 %v170
  %v940 = vunpack.c.l.b16 %v171
  %v941 = vunpack.c.h.b16 %v171
  %v942 = vunpack.c.l.b16 %v172
  %v943 = vunpack.c.h.b16 %v172
  %v944 = vunpack.c.l.b16 %v173
  %v945 = vunpack.c.h.b16 %v173
  %v946 = vunpack.c.l.b16 %v174
  %v947 = vunpack.c.h.b16 %v174
  %v948 = vunpack.c.l.b16 %v175
  %v949 = vunpack.c.h.b16 %v175
  %v950 = vunpack.c.l.b16 %v176
  %v951 = vunpack.c.h.b16 %v176
  %v952 = vunpack.c.l.b16 %v177
  %v953 = vunpack.c.h.b16 %v177
  %v954 = vunpack.c.l.b16 %v178
  %v955 = vunpack.c.h.b16 %v178
  %v956 = vunpack.c.l.b16 %v179
  %v957 = vunpack.c.h.b16 %v179
  %v958 = vunpack.c.l.b16 %v180
  %v959 = vunpack.c.h.b16 %v180
  %v960 = vunpack.c.l.b16 %v181
  %v961 = vunpack.c.h.b16 %v181
  %v962 = vunpack.c.l.b16 %v182
  %v963 = vunpack.c.h.b16 %v182
  %v964 = vunpack.c.l.b16 %v183
  %v965 = vunpack.c.h.b16 %v183
  %v966 = vunpack.c.l.b16 %v184
  %v967 = vunpack.c.h.b16 %v184
  %v968 = vunpack.c.l.b16 %v185
  %v969 = vunpack.c.h.b16 %v185
  %v970 = vunpack.c.l.b16 %v186
  %v971 = vunpack.c.h.b16 %v186
  %v972 = vunpack.c.l.b16 %v187
  %v973 = vunpack.c.h.b16 %v187
  %v974 = vunpack.c.l.b16 %v188
  %v975 = vunpack.c.h.b16 %v188
  %v976 = vunpack.c.l.b16 %v189
  %v977 = vunpack.c.h.b16 %v189
  %v978 = vpack.c.b16 %v642, %v626
  %v979 = vpack.c.b16 %v643, %v627
  %v980 = vpack.c.b16 %v644, %v628
  %v981 = vpack.c.b16 %v645, %v629
  %v982 = vpack.c.b16 %v646, %v630
  %v983 = vpack.c.b16 %v647, %v631
  %v984 = vpack.c.b16 %v648, %v632
  %v985 = vpack.c.b16 %v649, %v633
  %v986 = vpack.c.b16 %v650, %v634
  %v987 = vpack.c.b16 %v651, %v635
  %v988 = vpack.c.b16 %v652, %v636
  %v989 = vpack.c.b16 %v653, %v637
  %v990 = vpack.c.b16 %v654, %v638
  %v991 = vpack.c.b16 %v655, %v639
  %v992 = vpack.c.b16 %v656, %v640
  %v993 = vpack.c.b16 %v657, %v641
  %v994 = vpack.c.b16 %v674, %v658
  %v995 = vpack.c.b16 %v675, %v659
  %v996 = vpack.c.b16 %v676, %v660
  %v997 = vpack.c.b16 %v677, %v661
  %v998 = vpack.c.b16 %v678, %v662
  %v999 = vpack.c.b16 %v679, %v663
  %v1000 = vpack.c.b16 %v680, %v664
  %v1001 = vpack.c.b16 %v681, %v665
  %v1002 = vpack.c.b16 %v682, %v666
  %v1003 = vpack.c.b16 %v683, %v667
  %v1004 = vpack.c.b16 %v684, %v668
  %v1005 = vpack.c.b16 %v685, %v669
  %v1006 = vpack.c.b16 %v686, %v670
  %v1007 = vpack.c.b16 %v687, %v671
  %v1008 = vpack.c.b16 %v688, %v672
  %v1009 = vpack.c.b16 %v689, %v673
  %v1010 = vpack.c.b16 %v706, %v690
  %v1011 = vpack.c.b16 %v707, %v691
  %v1012 = vpack.c.b16 %v708, %v692
  %v1013 = vpack.c.b16 %v709, %v693
  %v1014 = vpack.c.b16 %v710, %v694
  %v1015 = vpack.c.b16 %v711, %v695
  %v1016 = vpack.c.b16 %v712, %v696
  %v1017 = vpack.c.b16 %v713, %v697
  %v1018 = vpack.c.b16 %v714, %v698
  %v1019 = vpack.c.b16 %v715, %v699
  %v1020 = vpack.c.b16 %v716, %v700
  %v1021 = vpack.c.b16 %v717, %v701
  %v1022 = vpack.c.b16 %v718, %v702
  %v1023 = vpack.c.b16 %v719, %v703
  %v1024 = vpack.c.b16 %v720, %v704
  %v1025 = vpack.c.b16 %v721, %v705
  %v1026 = vpack.c.b16 %v738, %v722
  %v1027 = vpack.c.b16 %v739, %v723
  %v1028 = vpack.c.b16 %v740, %v724
  %v1029 = vpack.c.b16 %v741, %v725
  %v1030 = vpack.c.b16 %v742, %v726
  %v1031 = vpack.c.b16 %v743, %v727
  %v1032 = vpack.c.b16 %v744, %v728
  %v1033 = vpack.c.b16 %v745, %v729
  %v1034 = vpack.c.b16 %v746, %v730
  %v1035 = vpack.c.b16 %v747, %v731
  %v1036 = vpack.c.b16 %v748, %v732
  %v1037 = vpack.c.b16 %v749, %v733
  %v1038 = vpack.c.b16 %v750, %v734
  %v1039 = vpack.c.b16 %v751, %v735
  %v1040 = vpack.c.b16 %v752, %v736
  %v1041 = vpack.c.b16 %v753, %v737
  %v1042 = vpack.c.b16 %v770, %v754
  %v1043 = vpack.c.b16 %v771, %v755
  %v1044 = vpack.c.b16 %v772, %v756
  %v1045 = vpack.c.b16 %v773, %v757
  %v1046 = vpack.c.b16 %v774, %v758
  %v1047 = vpack.c.b16 %v775, %v759
  %v1048 = vpack.c.b16 %v776, %v760
  %v1049 = vpack.c.b16 %v777, %v761
  %v1050 = vpack.c.b16 %v778, %v762
  %v1051 = vpack.c.b16 %v779, %v763
  %v1052 = vpack.c.b16 %v780, %v764
  %v1053 = vpack.c.b16 %v781, %v765
  %v1054 = vpack.c.b16 %v782, %v766
  %v1055 = vpack.c.b16 %v783, %v767
  %v1056 = vpack.c.b16 %v784, %v768
  %v1057 = vpack.c.b16 %v785, %v769
  %v1058 = vpack.c.b16 %v802, %v786
  %v1059 = vpack.c.b16 %v803, %v787
  %v1060 = vpack.c.b16 %v804, %v788
  %v1061 = vpack.c.b16 %v805, %v789
  %v1062 = vpack.c.b16 %v806, %v790
  %v1063 = vpack.c.b16 %v807, %v791
  %v1064 = vpack.c.b16 %v808, %v792
  %v1065 = vpack.c.b16 %v809, %v793
  %v1066 = vpack.c.b16 %v810, %v794
  %v1067 = vpack.c.b16 %v811, %v795
  %v1068 = vpack.c.b16 %v812, %v796
  %v1069 = vpack.c.b16 %v813, %v797
  %v1070 = vpack.c.b16 %v814, %v798
  %v1071 = vpack.c.b16 %v815, %v799
  %v1072 = vpack.c.b16 %v816, %v800
  %v1073 = vpack.c.b16 %v817, %v801
  %v1074 = vpack.c.b16 %v834, %v818
  %v1075 = vpack.c.b16 %v835, %v819
  %v1076 = vpack.c.b16 %v836, %v820
  %v1077 = vpack.c.b16 %v837, %v821
  %v1078 = vpack.c.b16 %v838, %v822
  %v1079 = vpack.c.b16 %v839, %v823
  %v1080 = vpack.c.b16 %v840, %v824
  %v1081 = vpack.c.b16 %v841, %v825
  %v1082 = vpack.c.b16 %v842, %v826
  %v1083 = vpack.c.b16 %v843, %v827
  %v1084 = vpack.c.b16 %v844, %v828
  %v1085 = vpack.c.b16 %v845, %v829
  %v1086 = vpack.c.b16 %v846, %v830
  %v1087 = vpack.c.b16 %v847, %v831
  %v1088 = vpack.c.b16 %v848, %v832
  %v1089 = vpack.c.b16 %v849, %v833
  %v1090 = vpack.c.b16 %v866, %v850
  %v1091 = vpack.c.b16 %v867, %v851
  %v1092 = vpack.c.b16 %v868, %v852
  %v1093 = vpack.c.b16 %v869, %v853
  %v1094 = vpack.c.b16 %v870, %v854
  %v1095 = vpack.c.b16 %v871, %v855
  %v1096 = vpack.c.b16 %v872, %v856
  %v1097 = vpack.c.b16 %v873, %v857
  %v1098 = vpack.c.b16 %v874, %v858
  %v1099 = vpack.c.b16 %v875, %v859
  %v1100 = vpack.c.b16 %v876, %v860
  %v1101 = vpack.c.b16 %v877, %v861
  %v1102 = vpack.c.b16 %v878, %v862
  %v1103 = vpack.c.b16 %v879, %v863
  %v1104 = vpack.c.b16 %v880, %v864
  %v1105 = vpack.c.b16 %v881, %v865
  %v1106 = vpack.c.b16 %v898, %v882
  %v1107 = vpack.c.b16 %v899, %v883
  %v1108 = vpack.c.b16 %v900, %v884
  %v1109 = vpack.c.b16 %v901, %v885
  %v1110 = vpack.c.b16 %v902, %v886
  %v1111 = vpack.c.b16 %v903, %v887
  %v1112 = vpack.c.b16 %v904, %v888
  %v1113 = vpack.c.b16 %v905, %v889
  %v1114 = vpack.c.b16 %v906, %v890
  %v1115 = vpack.c.b16 %v907, %v891
  %v1116 = vpack.c.b16 %v908, %v892
  %v1117 = vpack.c.b16 %v909, %v893
  %v1118 = vpack.c.b16 %v910, %v894
  %v1119 = vpack.c.b16 %v911, %v895
  %v1120 = vpack.c.b16 %v912, %v896
  %v1121 = vpack.c.b16 %v913, %v897
  %v1122 = vpack.c.b16 %v930, %v914
  %v1123 = vpack.c.b16 %v931, %v915
  %v1124 = vpack.c.b16 %v932, %v916
  %v1125 = vpack.c.b16 %v933, %v917
  %v1126 = vpack.c.b16 %v934, %v918
  %v1127 = vpack.c.b16 %v935, %v919
  %v1128 = vpack.c.b16 %v936, %v920
  %v1129 = vpack.c.b16 %v937, %v921
  %v1130 = vpack.c.b16 %v938, %v922
  %v1131 = vpack.c.b16 %v939, %v923
  %v1132 = vpack.c.b16 %v940, %v924
  %v1133 = vpack.c.b16 %v941, %v925
  %v1134 = vpack.c.b16 %v942, %v926
  %v1135 = vpack.c.b16 %v943, %v927
  %v1136 = vpack.c.b16 %v944, %v928
  %v1137 = vpack.c.b16 %v945, %v929
  %v1138 = vpack.c.b16 %v962, %v946
  %v1139 = vpack.c.b16 %v963, %v947
  %v1140 = vpack.c.b16 %v964, %v948
  %v1141 = vpack.c.b16 %v965, %v949
  %v1142 = vpack.c.b16 %v966, %v950
  %v1143 = vpack.c.b16 %v967, %v951
  %v1144 = vpack.c.b16 %v968, %v952
  %v1145 = vpack.c.b16 %v969, %v953
  %v1146 = vpack.c.b16 %v970, %v954
  %v1147 = vpack.c.b16 %v971, %v955
  %v1148 = vpack.c.b16 %v972, %v956
  %v1149 = vpack.c.b16 %v973, %v957
  %v1150 = vpack.c.b16 %v974, %v958
  %v1151 = vpack.c.b16 %v975, %v959
  %v1152 = vpack.c.b16 %v976, %v960
  %v1153 = vpack.c.b16 %v977, %v961
  %v1586 = vunpack.c.l.b16 %v190
  %v1587 = vunpack.c.l.b16 %v191
  %v1588 = vunpack.c.l.b16 %v192
  %v1589 = vunpack.c.l.b16 %v193
  %v1590 = vunpack.c.l.b16 %v194
  %v1591 = vunpack.c.l.b16 %v195
  %v1592 = vunpack.c.l.b16 %v196
  %v1593 = vunpack.c.l.b16 %v197
  %v1594 = vunpack.c.l.b16 %v198
  %v1595 = vunpack.c.l.b16 %v199
  %v1596 = vunpack.c.l.b16 %v200
  %v1597 = vunpack.c.l.b16 %v201
  %v1598 = vunpack.c.l.b16 %v202
  %v1599 = vunpack.c.l.b16 %v203
  %v1600 = vunpack.c.l.b16 %v204
  %v1601 = vunpack.c.l.b16 %v205
  %v1602 = vunpack.c.l.b16 %v206
  %v1603 = vunpack.c.l.b16 %v207
  %v1604 = vunpack.c.l.b16 %v208
  %v1605 = vunpack.c.l.b16 %v209
  %v1606 = vunpack.c.l.b16 %v210
  %v1607 = vunpack.c.l.b16 %v211
  %v1608 = vunpack.c.l.b16 %v212
  %v1609 = vunpack.c.l.b16 %v213
  %v1610 = vunpack.c.l.b16 %v214
  %v1611 = vunpack.c.l.b16 %v215
  %v1612 = vunpack.c.l.b16 %v216
  %v1613 = vunpack.c.l.b16 %v217
  %v1614 = vunpack.c.l.b16 %v218
  %v1615 = vunpack.c.l.b16 %v219
  %v1616 = vunpack.c.l.b16 %v220
  %v1617 = vunpack.c.l.b16 %v221
  %v1618 = vunpack.c.l.b16 %v222
  %v1619 = vunpack.c.l.b16 %v223
  %v1620 = vunpack.c.l.b16 %v224
  %v1621 = vunpack.c.l.b16 %v225
  %v1622 = vunpack.c.l.b16 %v226
  %v1623 = vunpack.c.l.b16 %v227
  %v1624 = vunpack.c.l.b16 %v228
  %v1625 = vunpack.c.l.b16 %v229
  %v1626 = vunpack.c.l.b16 %v230
  %v1627 = vunpack.c.l.b16 %v231
  %v1628 = vunpack.c.l.b16 %v232
  %v1629 = vunpack.c.l.b16 %v233
  %v1630 = vunpack.c.l.b16 %v234
  %v1631 = vunpack.c.l.b16 %v235
  %v1632 = vunpack.c.l.b16 %v236
  %v1633 = vunpack.c.l.b16 %v237
  %v1634 = vunpack.c.l.b16 %v238
  %v1635 = vunpack.c.l.b16 %v239
  %v1636 = vunpack.c.l.b16 %v240
  %v1637 = vunpack.c.l.b16 %v241
  %v1638 = vunpack.c.l.b16 %v242
  %v1639 = vunpack.c.l.b16 %v243
  %v1640 = vunpack.c.l.b16 %v244
  %v1641 = vunpack.c.l.b16 %v245
  %v1642 = vunpack.c.l.b16 %v246
  %v1643 = vunpack.c.l.b16 %v247
  %v1644 = vunpack.c.l.b16 %v248
  %v1645 = vunpack.c.l.b16 %v249
  %v1646 = vunpack.c.l.b16 %v250
  %v1647 = vunpack.c.l.b16 %v251
  %v1648 = vunpack.c.l.b16 %v252
  %v1649 = vunpack.c.l.b16 %v253
  %v1650 = vunpack.c.l.b16 %v254
  %v1651 = vunpack.c.l.b16 %v255
  %v1652 = vunpack.c.l.b16 %v256
  %v1653 = vunpack.c.l.b16 %v257
  %v1654 = vunpack.c.l.b16 %v258
  %v1655 = vunpack.c.l.b16 %v259
  %v1656 = vunpack.c.l.b16 %v260
  %v1657 = vunpack.c.l.b16 %v261
  %v1658 = vunpack.c.l.b16 %v262
  %v1659 = vunpack.c.l.b16 %v263
  %v1660 = vunpack.c.l.b16 %v264
  %v1661 = vunpack.c.l.b16 %v265
  %v1662 = vunpack.c.l.b16 %v266
  %v1663 = vunpack.c.l.b16 %v267
  %v1664 = vunpack.c.l.b16 %v268
  %v1665 = vunpack.c.l.b16 %v269
  %v1666 = vunpack.c.l.b16 %v270
  %v1667 = vunpack.c.l.b16 %v271
  %v1668 = vunpack.c.l.b16 %v272
  %v1669 = vunpack.c.l.b16 %v273
  %v1670 = vunpack.c.l.b16 %v274
  %v1671 = vunpack.c.l.b16 %v275
  %v1672 = vunpack.c.l.b16 %v276
  %v1673 = vunpack.c.l.b16 %v277
  %v1674 = vunpack.c.l.b16 %v278
  %v1675 = vunpack.c.l.b16 %v279
  %v1676 = vunpack.c.l.b16 %v280
  %v1677 = vunpack.c.l.b16 %v281
  %v1678 = vunpack.c.l.b16 %v282
  %v1679 = vunpack.c.l.b16 %v283
  %v1680 = vunpack.c.l.b16 %v284
  %v1681 = vunpack.c.l.b16 %v285
  %v1682 = vunpack.c.l.b16 %v286
  %v1683 = vunpack.c.l.b16 %v287
  %v1684 = vunpack.c.l.b16 %v288
  %v1685 = vunpack.c.l.b16 %v289
  %v1686 = vunpack.c.l.b16 %v290
  %v1687 = vunpack.c.l.b16 %v291
  %v1688 = vunpack.c.l.b16 %v292
  %v1689 = vunpack.c.l.b16 %v293
  %v1690 = vunpack.c.l.b16 %v294
  %v1691 = vunpack.c.l.b16 %v295
  %v1692 = vunpack.c.l.b16 %v296
  %v1693 = vunpack.c.l.b16 %v297
  %v1694 = vunpack.c.l.b16 %v298
  %v1695 = vunpack.c.l.b16 %v299
  %v1696 = vunpack.c.l.b16 %v300
  %v1697 = vunpack.c.l.b16 %v301
  %v1698 = vunpack.c.l.b16 %v302
  %v1699 = vunpack.c.l.b16 %v303
  %v1700 = vunpack.c.l.b16 %v304
  %v1701 = vunpack.c.l.b16 %v305
  %v1702 = vunpack.c.l.b16 %v306
  %v1703 = vunpack.c.l.b16 %v307
  %v1704 = vunpack.c.l.b16 %v308
  %v1705 = vunpack.c.l.b16 %v309
  %v1706 = vunpack.c.l.b16 %v310
  %v1707 = vunpack.c.l.b16 %v311
  %v1708 = vunpack.c.l.b16 %v312
  %v1709 = vunpack.c.l.b16 %v313
  %v1710 = vunpack.c.l.b16 %v314
  %v1711 = vunpack.c.l.b16 %v315
  %v1712 = vunpack.c.l.b16 %v316
  %v1713 = vunpack.c.l.b16 %v317
  %v1714 = vunpack.c.l.b16 %v318
  %v1715 = vunpack.c.l.b16 %v319
  %v1716 = vunpack.c.l.b16 %v320
  %v1717 = vunpack.c.l.b16 %v321
  %v1718 = vunpack.c.l.b16 %v322
  %v1719 = vunpack.c.l.b16 %v323
  %v1720 = vunpack.c.l.b16 %v324
  %v1721 = vunpack.c.l.b16 %v325
  %v1722 = vunpack.c.l.b16 %v326
  %v1723 = vunpack.c.l.b16 %v327
  %v1724 = vunpack.c.l.b16 %v328
  %v1725 = vunpack.c.l.b16 %v329
  %v1726 = vunpack.c.l.b16 %v330
  %v1727 = vunpack.c.l.b16 %v331
  %v1728 = vunpack.c.l.b16 %v332
  %v1729 = vunpack.c.l.b16 %v333
  %v1730 = vunpack.c.l.b16 %v334
  %v1731 = vunpack.c.l.b16 %v335
  %v1732 = vunpack.c.l.b16 %v336
  %v1733 = vunpack.c.l.b16 %v337
  %v1734 = vunpack.c.l.b16 %v338
  %v1735 = vunpack.c.l.b16 %v339
  %v1736 = vunpack.c.l.b16 %v340
  %v1737 = vunpack.c.l.b16 %v341
  %v1738 = vunpack.c.l.b16 %v342
  %v1739 = vunpack.c.l.b16 %v343
  %v1740 = vunpack.c.l.b16 %v344
  %v1741 = vunpack.c.l.b16 %v345
  %v1742 = vunpack.c.l.b16 %v346
  %v1743 = vunpack.c.l.b16 %v347
  %v1744 = vunpack.c.l.b16 %v348
  %v1745 = vunpack.c.l.b16 %v349
  %v1746 = vunpack.c.l.b16 %v350
  %v1747 = vunpack.c.l.b16 %v351
  %v1748 = vunpack.c.l.b16 %v352
  %v1749 = vunpack.c.l.b16 %v353
  %v1750 = vunpack.c.l.b16 %v354
  %v1751 = vunpack.c.l.b16 %v355
  %v1752 = vunpack.c.l.b16 %v356
  %v1753 = vunpack.c.l.b16 %v357
  %v1754 = vunpack.c.l.b16 %v358
  %v1755 = vunpack.c.l.b16 %v359
  %v1756 = vunpack.c.l.b16 %v360
  %v1757 = vunpack.c.l.b16 %v361
  %v1758 = vunpack.c.l.b16 %v362
  %v1759 = vunpack.c.l.b16 %v363
  %v1760 = vunpack.c.l.b16 %v364
  %v1761 = vunpack.c.l.b16 %v365
  %v1762 = vunpack.c.l.b16 %v366
  %v1763 = vunpack.c.l.b16 %v367
  %v1764 = vunpack.c.l.b16 %v368
  %v1765 = vunpack.c.l.b16 %v369
  %v1766 = vunpack.c.l.b16 %v370
  %v1767 = vunpack.c.l.b16 %v371
  %v1768 = vunpack.c.l.b16 %v372
  %v1769 = vunpack.c.l.b16 %v373
  %v1770 = vunpack.c.l.b16 %v374
  %v1771 = vunpack.c.l.b16 %v375
  %v1772 = vunpack.c.l.b16 %v376
  %v1773 = vunpack.c.l.b16 %v377
  %v1774 = vunpack.c.l.b16 %v378
  %v1775 = vunpack.c.l.b16 %v379
  %v1776 = vunpack.c.l.b16 %v380
  %v1777 = vunpack.c.l.b16 %v381
  %v1778 = vunpack.c.l.b16 %v382
  %v1779 = vunpack.c.l.b16 %v383
  %v1780 = vunpack.c.l.b16 %v384
  %v1781 = vunpack.c.l.b16 %v385
  %v1782 = vunpack.c.l.b16 %v386
  %v1783 = vunpack.c.l.b16 %v387
  %v1784 = vunpack.c.l.b16 %v388
  %v1785 = vunpack.c.l.b16 %v389
  %v1786 = vunpack.c.l.b16 %v390
  %v1787 = vunpack.c.l.b16 %v391
  %v1788 = vunpack.c.l.b16 %v392
  %v1789 = vunpack.c.l.b16 %v393
  %v1790 = vunpack.c.l.b16 %v394
  %v1791 = vunpack.c.l.b16 %v395
  %v1792 = vunpack.c.l.b16 %v396
  %v1793 = vunpack.c.l.b16 %v397
  %v1794 = vunpack.c.l.b16 %v398
  %v1795 = vunpack.c.l.b16 %v399
  %v1796 = vunpack.c.l.b16 %v400
  %v1797 = vunpack.c.l.b16 %v401
  %v1798 = vunpack.c.l.b16 %v402
  %v1799 = vunpack.c.l.b16 %v403
  %v1800 = vunpack.c.l.b16 %v404
  %v1801 = vunpack.c.l.b16 %v405
  %v1802 = vunpack.c.l.b16 %v406
  %v1803 = vunpack.c.l.b16 %v407
  %v1804 = vunpack.c.l.b16 %v408
  %v1805 = vunpack.c.l.b16 %v409
  %v1806 = vunpack.c.l.b16 %v410
  %v1807 = vunpack.c.l.b16 %v411
  %v1808 = vunpack.c.l.b16 %v412
  %v1809 = vunpack.c.l.b16 %v413
  %v1810 = vunpack.c.l.b16 %v414
  %v1811 = vunpack.c.l.b16 %v415
  %v1812 = vunpack.c.l.b16 %v416
  %v1813 = vunpack.c.l.b16 %v417
  %v1814 = vunpack.c.l.b16 %v418
  %v1815 = vunpack.c.l.b16 %v419
  %v1816 = vunpack.c.l.b16 %v420
  %v1817 = vunpack.c.l.b16 %v421
  %v1818 = vunpack.c.l.b16 %v422
  %v1819 = vunpack.c.l.b16 %v423
  %v1820 = vunpack.c.l.b16 %v424
  %v1821 = vunpack.c.l.b16 %v425
  %v1822 = vunpack.c.l.b16 %v426
  %v1823 = vunpack.c.l.b16 %v427
  %v1824 = vunpack.c.l.b16 %v428
  %v1825 = vunpack.c.l.b16 %v429
  %v1826 = vunpack.c.l.b16 %v430
  %v1827 = vunpack.c.l.b16 %v431
  %v1828 = vunpack.c.l.b16 %v432
  %v1829 = vunpack.c.l.b16 %v433
  %v1830 = vunpack.c.l.b16 %v434
  %v1831 = vunpack.c.l.b16 %v435
  %v1832 = vunpack.c.l.b16 %v436
  %v1833 = vunpack.c.l.b16 %v437
  %v1834 = vunpack.c.l.b16 %v438
  %v1835 = vunpack.c.l.b16 %v439
  %v1836 = vunpack.c.l.b16 %v440
  %v1837 = vunpack.c.l.b16 %v441
  %v1838 = vunpack.c.l.b16 %v442
  %v1839 = vunpack.c.l.b16 %v443
  %v1840 = vunpack.c.l.b16 %v444
  %v1841 = vunpack.c.l.b16 %v445
  %v1842 = vpack.c.b16 %v1587, %v1586
  %v1843 = vpack.c.b16 %v1589, %v1588
  %v1844 = vpack.c.b16 %v1591, %v1590
  %v1845 = vpack.c.b16 %v1593, %v1592
  %v1846 = vpack.c.b16 %v1595, %v1594
  %v1847 = vpack.c.b16 %v1597, %v1596
  %v1848 = vpack.c.b16 %v1599, %v1598
  %v1849 = vpack.c.b16 %v1601, %v1600
  %v1850 = vpack.c.b16 %v1603, %v1602
  %v1851 = vpack.c.b16 %v1605, %v1604
  %v1852 = vpack.c.b16 %v1607, %v1606
  %v1853 = vpack.c.b16 %v1609, %v1608
  %v1854 = vpack.c.b16 %v1611, %v1610
  %v1855 = vpack.c.b16 %v1613, %v1612
  %v1856 = vpack.c.b16 %v1615, %v1614
  %v1857 = vpack.c.b16 %v1617, %v1616
  %v1858 = vpack.c.b16 %v1619, %v1618
  %v1859 = vpack.c.b16 %v1621, %v1620
  %v1860 = vpack.c.b16 %v1623, %v1622
  %v1861 = vpack.c.b16 %v1625, %v1624
  %v1862 = vpack.c.b16 %v1627, %v1626
  %v1863 = vpack.c.b16 %v1629, %v1628
  %v1864 = vpack.c.b16 %v1631, %v1630
  %v1865 = vpack.c.b16 %v1633, %v1632
  %v1866 = vpack.c.b16 %v1635, %v1634
  %v1867 = vpack.c.b16 %v1637, %v1636
  %v1868 = vpack.c.b16 %v1639, %v1638
  %v1869 = vpack.c.b16 %v1641, %v1640
  %v1870 = vpack.c.b16 %v1643, %v1642
  %v1871 = vpack.c.b16 %v1645, %v1644
  %v1872 = vpack.c.b16 %v1647, %v1646
  %v1873 = vpack.c.b16 %v1649, %v1648
  %v1874 = vpack.c.b16 %v1651, %v1650
  %v1875 = vpack.c.b16 %v1653, %v1652
  %v1876 = vpack.c.b16 %v1655, %v1654
  %v1877 = vpack.c.b16 %v1657, %v1656
  %v1878 = vpack.c.b16 %v1659, %v1658
  %v1879 = vpack.c.b16 %v1661, %v1660
  %v1880 = vpack.c.b16 %v1663, %v1662
  %v1881 = vpack.c.b16 %v1665, %v1664
  %v1882 = vpack.c.b16 %v1667, %v1666
  %v1883 = vpack.c.b16 %v1669, %v1668
  %v1884 = vpack.c.b16 %v1671, %v1670
  %v1885 = vpack.c.b16 %v1673, %v1672
  %v1886 = vpack.c.b16 %v1675, %v1674
  %v1887 = vpack.c.b16 %v1677, %v1676
  %v1888 = vpack.c.b16 %v1679, %v1678
  %v1889 = vpack.c.b16 %v1681, %v1680
  %v1890 = vpack.c.b16 %v1683, %v1682
  %v1891 = vpack.c.b16 %v1685, %v1684
  %v1892 = vpack.c.b16 %v1687, %v1686
  %v1893 = vpack.c.b16 %v1689, %v1688
  %v1894 = vpack.c.b16 %v1691, %v1690
  %v1895 = vpack.c.b16 %v1693, %v1692
  %v1896 = vpack.c.b16 %v1695, %v1694
  %v1897 = vpack.c.b16 %v1697, %v1696
  %v1898 = vpack.c.b16 %v1699, %v1698
  %v1899 = vpack.c.b16 %v1701, %v1700
  %v1900 = vpack.c.b16 %v1703, %v1702
  %v1901 = vpack.c.b16 %v1705, %v1704
  %v1902 = vpack.c.b16 %v1707, %v1706
  %v1903 = vpack.c.b16 %v1709, %v1708
  %v1904 = vpack.c.b16 %v1711, %v1710
  %v1905 = vpack.c.b16 %v1713, %v1712
  %v1906 = vpack.c.b16 %v1715, %v1714
  %v1907 = vpack.c.b16 %v1717, %v1716
  %v1908 = vpack.c.b16 %v1719, %v1718
  %v1909 = vpack.c.b16 %v1721, %v1720
  %v1910 = vpack.c.b16 %v1723, %v1722
  %v1911 = vpack.c.b16 %v1725, %v1724
  %v1912 = vpack.c.b16 %v1727, %v1726
  %v1913 = vpack.c.b16 %v1729, %v1728
  %v1914 = vpack.c.b16 %v1731, %v1730
  %v1915 = vpack.c.b16 %v1733, %v1732
  %v1916 = vpack.c.b16 %v1735, %v1734
  %v1917 = vpack.c.b16 %v1737, %v1736
  %v1918 = vpack.c.b16 %v1739, %v1738
  %v1919 = vpack.c.b16 %v1741, %v1740
  %v1920 = vpack.c.b16 %v1743, %v1742
  %v1921 = vpack.c.b16 %v1745, %v1744
  %v1922 = vpack.c.b16 %v1747, %v1746
  %v1923 = vpack.c.b16 %v1749, %v1748
  %v1924 = vpack.c.b16 %v1751, %v1750
  %v1925 = vpack.c.b16 %v1753, %v1752
  %v1926 = vpack.c.b16 %v1755, %v1754
  %v1927 = vpack.c.b16 %v1757, %v1756
  %v1928 = vpack.c.b16 %v1759, %v1758
  %v1929 = vpack.c.b16 %v1761, %v1760
  %v1930 = vpack.c.b16 %v1763, %v1762
  %v1931 = vpack.c.b16 %v1765, %v1764
  %v1932 = vpack.c.b16 %v1767, %v1766
  %v1933 = vpack.c.b16 %v1769, %v1768
  %v1934 = vpack.c.b16 %v1771, %v1770
  %v1935 = vpack.c.b16 %v1773, %v1772
  %v1936 = vpack.c.b16 %v1775, %v1774
  %v1937 = vpack.c.b16 %v1777, %v1776
  %v1938 = vpack.c.b16 %v1779, %v1778
  %v1939 = vpack.c.b16 %v1781, %v1780
  %v1940 = vpack.c.b16 %v1783, %v1782
  %v1941 = vpack.c.b16 %v1785, %v1784
  %v1942 = vpack.c.b16 %v1787, %v1786
  %v1943 = vpack.c.b16 %v1789, %v1788
  %v1944 = vpack.c.b16 %v1791, %v1790
  %v1945 = vpack.c.b16 %v1793, %v1792
  %v1946 = vpack.c.b16 %v1795, %v1794
  %v1947 = vpack.c.b16 %v1797, %v1796
  %v1948 = vpack.c.b16 %v1799, %v1798
  %v1949 = vpack.c.b16 %v1801, %v1800
  %v1950 = vpack.c.b16 %v1803, %v1802
  %v1951 = vpack.c.b16 %v1805, %v1804
  %v1952 = vpack.c.b16 %v1807, %v1806
  %v1953 = vpack.c.b16 %v1809, %v1808
  %v1954 = vpack.c.b16 %v1811, %v1810
  %v1955 = vpack.c.b16 %v1813, %v1812
  %v1956 = vpack.c.b16 %v1815, %v1814
  %v1957 = vpack.c.b16 %v1817, %v1816
  %v1958 = vpack.c.b16 %v1819, %v1818
  %v1959 = vpack.c.b16 %v1821, %v1820
  %v1960 = vpack.c.b16 %v1823, %v1822
  %v1961 = vpack.c.b16 %v1825, %v1824
  %v1962 = vpack.c.b16 %v1827, %v1826
  %v1963 = vpack.c.b16 %v1829, %v1828
  %v1964 = vpack.c.b16 %v1831, %v1830
  %v1965 = vpack.c.b16 %v1833, %v1832
  %v1966 = vpack.c.b16 %v1835, %v1834
  %v1967 = vpack.c.b16 %v1837, %v1836
  %v1968 = vpack.c.b16 %v1839, %v1838
  %v1969 = vpack.c.b16 %v1841, %v1840
  %2098 = vmatpush.bf16.msra.mxu0 %v1849
  %2099 = vmatpush.bf16.msra.mxu0 %v1848
  %2100 = vmatpush.bf16.msra.mxu0 %v1847
  %2101 = vmatpush.bf16.msra.mxu0 %v1846
  %2102 = vmatpush.bf16.msra.mxu0 %v1845
  %2103 = vmatpush.bf16.msra.mxu0 %v1844
  %2104 = vmatpush.bf16.msra.mxu0 %v1843
  %2105 = vmatpush.bf16.msra.mxu0 %v1842
  %2106 = vmatmul.bf16.gmra.mxu0 %v978
  %v2107 = vpop.f32.mrf.mxu0
  %v2108 = vadd.f32 %v448, %v2107
  %v2109 = vpop.f32.mrf.mxu0
  %v2110 = vadd.f32 %v448, %v2109
  %2111 = vmatmul.bf16.gmra.mxu0 %v994
  %v2112 = vpop.f32.mrf.mxu0
  %v2113 = vadd.f32 %v448, %v2112
  %v2114 = vpop.f32.mrf.mxu0
  %v2115 = vadd.f32 %v448, %v2114
  %2116 = vmatmul.bf16.gmra.mxu0 %v1010
  %v2117 = vpop.f32.mrf.mxu0
  %v2118 = vadd.f32 %v448, %v2117
  %v2119 = vpop.f32.mrf.mxu0
  %v2120 = vadd.f32 %v448, %v2119
  %2121 = vmatmul.bf16.gmra.mxu0 %v1026
  %v2122 = vpop.f32.mrf.mxu0
  %v2123 = vadd.f32 %v448, %v2122
  %v2124 = vpop.f32.mrf.mxu0
  %v2125 = vadd.f32 %v448, %v2124
  %2126 = vmatmul.bf16.gmra.mxu0 %v1042
  %v2127 = vpop.f32.mrf.mxu0
  %v2128 = vadd.f32 %v448, %v2127
  %v2129 = vpop.f32.mrf.mxu0
  %v2130 = vadd.f32 %v448, %v2129
  %2131 = vmatmul.bf16.gmra.mxu0 %v1058
  %v2132 = vpop.f32.mrf.mxu0
  %v2133 = vadd.f32 %v448, %v2132
  %v2134 = vpop.f32.mrf.mxu0
  %v2135 = vadd.f32 %v448, %v2134
  %2136 = vmatmul.bf16.gmra.mxu0 %v1074
  %v2137 = vpop.f32.mrf.mxu0
  %v2138 = vadd.f32 %v448, %v2137
  %v2139 = vpop.f32.mrf.mxu0
  %v2140 = vadd.f32 %v448, %v2139
  %2141 = vmatmul.bf16.gmra.mxu0 %v1090
  %v2142 = vpop.f32.mrf.mxu0
  %v2143 = vadd.f32 %v448, %v2142
  %v2144 = vpop.f32.mrf.mxu0
  %v2145 = vadd.f32 %v448, %v2144
  %2146 = vmatmul.bf16.gmra.mxu0 %v1106
  %v2147 = vpop.f32.mrf.mxu0
  %v2148 = vadd.f32 %v448, %v2147
  %v2149 = vpop.f32.mrf.mxu0
  %v2150 = vadd.f32 %v448, %v2149
  %2151 = vmatmul.bf16.gmra.mxu0 %v1122
  %v2152 = vpop.f32.mrf.mxu0
  %v2153 = vadd.f32 %v448, %v2152
  %v2154 = vpop.f32.mrf.mxu0
  %v2155 = vadd.f32 %v448, %v2154
  %2156 = vmatmul.bf16.gmra.mxu0 %v1138
  %v2157 = vpop.f32.mrf.mxu0
  %v2158 = vadd.f32 %v448, %v2157
  %v2159 = vpop.f32.mrf.mxu0
  %v2160 = vadd.f32 %v448, %v2159
  %2161 = vdwg.mxu0
  %2162 = vmatpush.bf16.msra.mxu0 %v1857
  %2163 = vmatpush.bf16.msra.mxu0 %v1856
  %2164 = vmatpush.bf16.msra.mxu0 %v1855
  %2165 = vmatpush.bf16.msra.mxu0 %v1854
  %2166 = vmatpush.bf16.msra.mxu0 %v1853
  %2167 = vmatpush.bf16.msra.mxu0 %v1852
  %2168 = vmatpush.bf16.msra.mxu0 %v1851
  %2169 = vmatpush.bf16.msra.mxu0 %v1850
  %2170 = vmatmul.bf16.gmra.mxu0 %v979
  %v2171 = vpop.f32.mrf.mxu0
  %v2172 = vadd.f32 %v2108, %v2171
  %v2173 = vpop.f32.mrf.mxu0
  %v2174 = vadd.f32 %v2110, %v2173
  %2175 = vmatmul.bf16.gmra.mxu0 %v995
  %v2176 = vpop.f32.mrf.mxu0
  %v2177 = vadd.f32 %v2113, %v2176
  %v2178 = vpop.f32.mrf.mxu0
  %v2179 = vadd.f32 %v2115, %v2178
  %2180 = vmatmul.bf16.gmra.mxu0 %v1011
  %v2181 = vpop.f32.mrf.mxu0
  %v2182 = vadd.f32 %v2118, %v2181
  %v2183 = vpop.f32.mrf.mxu0
  %v2184 = vadd.f32 %v2120, %v2183
  %2185 = vmatmul.bf16.gmra.mxu0 %v1027
  %v2186 = vpop.f32.mrf.mxu0
  %v2187 = vadd.f32 %v2123, %v2186
  %v2188 = vpop.f32.mrf.mxu0
  %v2189 = vadd.f32 %v2125, %v2188
  %2190 = vmatmul.bf16.gmra.mxu0 %v1043
  %v2191 = vpop.f32.mrf.mxu0
  %v2192 = vadd.f32 %v2128, %v2191
  %v2193 = vpop.f32.mrf.mxu0
  %v2194 = vadd.f32 %v2130, %v2193
  %2195 = vmatmul.bf16.gmra.mxu0 %v1059
  %v2196 = vpop.f32.mrf.mxu0
  %v2197 = vadd.f32 %v2133, %v2196
  %v2198 = vpop.f32.mrf.mxu0
  %v2199 = vadd.f32 %v2135, %v2198
  %2200 = vmatmul.bf16.gmra.mxu0 %v1075
  %v2201 = vpop.f32.mrf.mxu0
  %v2202 = vadd.f32 %v2138, %v2201
  %v2203 = vpop.f32.mrf.mxu0
  %v2204 = vadd.f32 %v2140, %v2203
  %2205 = vmatmul.bf16.gmra.mxu0 %v1091
  %v2206 = vpop.f32.mrf.mxu0
  %v2207 = vadd.f32 %v2143, %v2206
  %v2208 = vpop.f32.mrf.mxu0
  %v2209 = vadd.f32 %v2145, %v2208
  %2210 = vmatmul.bf16.gmra.mxu0 %v1107
  %v2211 = vpop.f32.mrf.mxu0
  %v2212 = vadd.f32 %v2148, %v2211
  %v2213 = vpop.f32.mrf.mxu0
  %v2214 = vadd.f32 %v2150, %v2213
  %2215 = vmatmul.bf16.gmra.mxu0 %v1123
  %v2216 = vpop.f32.mrf.mxu0
  %v2217 = vadd.f32 %v2153, %v2216
  %v2218 = vpop.f32.mrf.mxu0
  %v2219 = vadd.f32 %v2155, %v2218
  %2220 = vmatmul.bf16.gmra.mxu0 %v1139
  %v2221 = vpop.f32.mrf.mxu0
  %v2222 = vadd.f32 %v2158, %v2221
  %v2223 = vpop.f32.mrf.mxu0
  %v2224 = vadd.f32 %v2160, %v2223
  %2225 = vdwg.mxu0
  %2226 = vmatpush.bf16.msra.mxu0 %v1865
  %2227 = vmatpush.bf16.msra.mxu0 %v1864
  %2228 = vmatpush.bf16.msra.mxu0 %v1863
  %2229 = vmatpush.bf16.msra.mxu0 %v1862
  %2230 = vmatpush.bf16.msra.mxu0 %v1861
  %2231 = vmatpush.bf16.msra.mxu0 %v1860
  %2232 = vmatpush.bf16.msra.mxu0 %v1859
  %2233 = vmatpush.bf16.msra.mxu0 %v1858
  %2234 = vmatmul.bf16.gmra.mxu0 %v980
  %v2235 = vpop.f32.mrf.mxu0
  %v2236 = vadd.f32 %v2172, %v2235
  %v2237 = vpop.f32.mrf.mxu0
  %v2238 = vadd.f32 %v2174, %v2237
  %2239 = vmatmul.bf16.gmra.mxu0 %v996
  %v2240 = vpop.f32.mrf.mxu0
  %v2241 = vadd.f32 %v2177, %v2240
  %v2242 = vpop.f32.mrf.mxu0
  %v2243 = vadd.f32 %v2179, %v2242
  %2244 = vmatmul.bf16.gmra.mxu0 %v1012
  %v2245 = vpop.f32.mrf.mxu0
  %v2246 = vadd.f32 %v2182, %v2245
  %v2247 = vpop.f32.mrf.mxu0
  %v2248 = vadd.f32 %v2184, %v2247
  %2249 = vmatmul.bf16.gmra.mxu0 %v1028
  %v2250 = vpop.f32.mrf.mxu0
  %v2251 = vadd.f32 %v2187, %v2250
  %v2252 = vpop.f32.mrf.mxu0
  %v2253 = vadd.f32 %v2189, %v2252
  %2254 = vmatmul.bf16.gmra.mxu0 %v1044
  %v2255 = vpop.f32.mrf.mxu0
  %v2256 = vadd.f32 %v2192, %v2255
  %v2257 = vpop.f32.mrf.mxu0
  %v2258 = vadd.f32 %v2194, %v2257
  %2259 = vmatmul.bf16.gmra.mxu0 %v1060
  %v2260 = vpop.f32.mrf.mxu0
  %v2261 = vadd.f32 %v2197, %v2260
  %v2262 = vpop.f32.mrf.mxu0
  %v2263 = vadd.f32 %v2199, %v2262
  %2264 = vmatmul.bf16.gmra.mxu0 %v1076
  %v2265 = vpop.f32.mrf.mxu0
  %v2266 = vadd.f32 %v2202, %v2265
  %v2267 = vpop.f32.mrf.mxu0
  %v2268 = vadd.f32 %v2204, %v2267
  %2269 = vmatmul.bf16.gmra.mxu0 %v1092
  %v2270 = vpop.f32.mrf.mxu0
  %v2271 = vadd.f32 %v2207, %v2270
  %v2272 = vpop.f32.mrf.mxu0
  %v2273 = vadd.f32 %v2209, %v2272
  %2274 = vmatmul.bf16.gmra.mxu0 %v1108
  %v2275 = vpop.f32.mrf.mxu0
  %v2276 = vadd.f32 %v2212, %v2275
  %v2277 = vpop.f32.mrf.mxu0
  %v2278 = vadd.f32 %v2214, %v2277
  %2279 = vmatmul.bf16.gmra.mxu0 %v1124
  %v2280 = vpop.f32.mrf.mxu0
  %v2281 = vadd.f32 %v2217, %v2280
  %v2282 = vpop.f32.mrf.mxu0
  %v2283 = vadd.f32 %v2219, %v2282
  %2284 = vmatmul.bf16.gmra.mxu0 %v1140
  %v2285 = vpop.f32.mrf.mxu0
  %v2286 = vadd.f32 %v2222, %v2285
  %v2287 = vpop.f32.mrf.mxu0
  %v2288 = vadd.f32 %v2224, %v2287
  %2289 = vdwg.mxu0
  %2290 = vmatpush.bf16.msra.mxu0 %v1873
  %2291 = vmatpush.bf16.msra.mxu0 %v1872
  %2292 = vmatpush.bf16.msra.mxu0 %v1871
  %2293 = vmatpush.bf16.msra.mxu0 %v1870
  %2294 = vmatpush.bf16.msra.mxu0 %v1869
  %2295 = vmatpush.bf16.msra.mxu0 %v1868
  %2296 = vmatpush.bf16.msra.mxu0 %v1867
  %2297 = vmatpush.bf16.msra.mxu0 %v1866
  %2298 = vmatmul.bf16.gmra.mxu0 %v981
  %v2299 = vpop.f32.mrf.mxu0
  %v2300 = vadd.f32 %v2236, %v2299
  %v2301 = vpop.f32.mrf.mxu0
  %v2302 = vadd.f32 %v2238, %v2301
  %2303 = vmatmul.bf16.gmra.mxu0 %v997
  %v2304 = vpop.f32.mrf.mxu0
  %v2305 = vadd.f32 %v2241, %v2304
  %v2306 = vpop.f32.mrf.mxu0
  %v2307 = vadd.f32 %v2243, %v2306
  %2308 = vmatmul.bf16.gmra.mxu0 %v1013
  %v2309 = vpop.f32.mrf.mxu0
  %v2310 = vadd.f32 %v2246, %v2309
  %v2311 = vpop.f32.mrf.mxu0
  %v2312 = vadd.f32 %v2248, %v2311
  %2313 = vmatmul.bf16.gmra.mxu0 %v1029
  %v2314 = vpop.f32.mrf.mxu0
  %v2315 = vadd.f32 %v2251, %v2314
  %v2316 = vpop.f32.mrf.mxu0
  %v2317 = vadd.f32 %v2253, %v2316
  %2318 = vmatmul.bf16.gmra.mxu0 %v1045
  %v2319 = vpop.f32.mrf.mxu0
  %v2320 = vadd.f32 %v2256, %v2319
  %v2321 = vpop.f32.mrf.mxu0
  %v2322 = vadd.f32 %v2258, %v2321
  %2323 = vmatmul.bf16.gmra.mxu0 %v1061
  %v2324 = vpop.f32.mrf.mxu0
  %v2325 = vadd.f32 %v2261, %v2324
  %v2326 = vpop.f32.mrf.mxu0
  %v2327 = vadd.f32 %v2263, %v2326
  %2328 = vmatmul.bf16.gmra.mxu0 %v1077
  %v2329 = vpop.f32.mrf.mxu0
  %v2330 = vadd.f32 %v2266, %v2329
  %v2331 = vpop.f32.mrf.mxu0
  %v2332 = vadd.f32 %v2268, %v2331
  %2333 = vmatmul.bf16.gmra.mxu0 %v1093
  %v2334 = vpop.f32.mrf.mxu0
  %v2335 = vadd.f32 %v2271, %v2334
  %v2336 = vpop.f32.mrf.mxu0
  %v2337 = vadd.f32 %v2273, %v2336
  %2338 = vmatmul.bf16.gmra.mxu0 %v1109
  %v2339 = vpop.f32.mrf.mxu0
  %v2340 = vadd.f32 %v2276, %v2339
  %v2341 = vpop.f32.mrf.mxu0
  %v2342 = vadd.f32 %v2278, %v2341
  %2343 = vmatmul.bf16.gmra.mxu0 %v1125
  %v2344 = vpop.f32.mrf.mxu0
  %v2345 = vadd.f32 %v2281, %v2344
  %v2346 = vpop.f32.mrf.mxu0
  %v2347 = vadd.f32 %v2283, %v2346
  %2348 = vmatmul.bf16.gmra.mxu0 %v1141
  %v2349 = vpop.f32.mrf.mxu0
  %v2350 = vadd.f32 %v2286, %v2349
  %v2351 = vpop.f32.mrf.mxu0
  %v2352 = vadd.f32 %v2288, %v2351
  %2353 = vdwg.mxu0
  %2354 = vmatpush.bf16.msra.mxu0 %v1881
  %2355 = vmatpush.bf16.msra.mxu0 %v1880
  %2356 = vmatpush.bf16.msra.mxu0 %v1879
  %2357 = vmatpush.bf16.msra.mxu0 %v1878
  %2358 = vmatpush.bf16.msra.mxu0 %v1877
  %2359 = vmatpush.bf16.msra.mxu0 %v1876
  %2360 = vmatpush.bf16.msra.mxu0 %v1875
  %2361 = vmatpush.bf16.msra.mxu0 %v1874
  %2362 = vmatmul.bf16.gmra.mxu0 %v982
  %v2363 = vpop.f32.mrf.mxu0
  %v2364 = vadd.f32 %v2300, %v2363
  %v2365 = vpop.f32.mrf.mxu0
  %v2366 = vadd.f32 %v2302, %v2365
  %2367 = vmatmul.bf16.gmra.mxu0 %v998
  %v2368 = vpop.f32.mrf.mxu0
  %v2369 = vadd.f32 %v2305, %v2368
  %v2370 = vpop.f32.mrf.mxu0
  %v2371 = vadd.f32 %v2307, %v2370
  %2372 = vmatmul.bf16.gmra.mxu0 %v1014
  %v2373 = vpop.f32.mrf.mxu0
  %v2374 = vadd.f32 %v2310, %v2373
  %v2375 = vpop.f32.mrf.mxu0
  %v2376 = vadd.f32 %v2312, %v2375
  %2377 = vmatmul.bf16.gmra.mxu0 %v1030
  %v2378 = vpop.f32.mrf.mxu0
  %v2379 = vadd.f32 %v2315, %v2378
  %v2380 = vpop.f32.mrf.mxu0
  %v2381 = vadd.f32 %v2317, %v2380
  %2382 = vmatmul.bf16.gmra.mxu0 %v1046
  %v2383 = vpop.f32.mrf.mxu0
  %v2384 = vadd.f32 %v2320, %v2383
  %v2385 = vpop.f32.mrf.mxu0
  %v2386 = vadd.f32 %v2322, %v2385
  %2387 = vmatmul.bf16.gmra.mxu0 %v1062
  %v2388 = vpop.f32.mrf.mxu0
  %v2389 = vadd.f32 %v2325, %v2388
  %v2390 = vpop.f32.mrf.mxu0
  %v2391 = vadd.f32 %v2327, %v2390
  %2392 = vmatmul.bf16.gmra.mxu0 %v1078
  %v2393 = vpop.f32.mrf.mxu0
  %v2394 = vadd.f32 %v2330, %v2393
  %v2395 = vpop.f32.mrf.mxu0
  %v2396 = vadd.f32 %v2332, %v2395
  %2397 = vmatmul.bf16.gmra.mxu0 %v1094
  %v2398 = vpop.f32.mrf.mxu0
  %v2399 = vadd.f32 %v2335, %v2398
  %v2400 = vpop.f32.mrf.mxu0
  %v2401 = vadd.f32 %v2337, %v2400
  %2402 = vmatmul.bf16.gmra.mxu0 %v1110
  %v2403 = vpop.f32.mrf.mxu0
  %v2404 = vadd.f32 %v2340, %v2403
  %v2405 = vpop.f32.mrf.mxu0
  %v2406 = vadd.f32 %v2342, %v2405
  %2407 = vmatmul.bf16.gmra.mxu0 %v1126
  %v2408 = vpop.f32.mrf.mxu0
  %v2409 = vadd.f32 %v2345, %v2408
  %v2410 = vpop.f32.mrf.mxu0
  %v2411 = vadd.f32 %v2347, %v2410
  %2412 = vmatmul.bf16.gmra.mxu0 %v1142
  %v2413 = vpop.f32.mrf.mxu0
  %v2414 = vadd.f32 %v2350, %v2413
  %v2415 = vpop.f32.mrf.mxu0
  %v2416 = vadd.f32 %v2352, %v2415
  %2417 = vdwg.mxu0
  %2418 = vmatpush.bf16.msra.mxu0 %v1889
  %2419 = vmatpush.bf16.msra.mxu0 %v1888
  %2420 = vmatpush.bf16.msra.mxu0 %v1887
  %2421 = vmatpush.bf16.msra.mxu0 %v1886
  %2422 = vmatpush.bf16.msra.mxu0 %v1885
  %2423 = vmatpush.bf16.msra.mxu0 %v1884
  %2424 = vmatpush.bf16.msra.mxu0 %v1883
  %2425 = vmatpush.bf16.msra.mxu0 %v1882
  %2426 = vmatmul.bf16.gmra.mxu0 %v983
  %v2427 = vpop.f32.mrf.mxu0
  %v2428 = vadd.f32 %v2364, %v2427
  %v2429 = vpop.f32.mrf.mxu0
  %v2430 = vadd.f32 %v2366, %v2429
  %2431 = vmatmul.bf16.gmra.mxu0 %v999
  %v2432 = vpop.f32.mrf.mxu0
  %v2433 = vadd.f32 %v2369, %v2432
  %v2434 = vpop.f32.mrf.mxu0
  %v2435 = vadd.f32 %v2371, %v2434
  %2436 = vmatmul.bf16.gmra.mxu0 %v1015
  %v2437 = vpop.f32.mrf.mxu0
  %v2438 = vadd.f32 %v2374, %v2437
  %v2439 = vpop.f32.mrf.mxu0
  %v2440 = vadd.f32 %v2376, %v2439
  %2441 = vmatmul.bf16.gmra.mxu0 %v1031
  %v2442 = vpop.f32.mrf.mxu0
  %v2443 = vadd.f32 %v2379, %v2442
  %v2444 = vpop.f32.mrf.mxu0
  %v2445 = vadd.f32 %v2381, %v2444
  %2446 = vmatmul.bf16.gmra.mxu0 %v1047
  %v2447 = vpop.f32.mrf.mxu0
  %v2448 = vadd.f32 %v2384, %v2447
  %v2449 = vpop.f32.mrf.mxu0
  %v2450 = vadd.f32 %v2386, %v2449
  %2451 = vmatmul.bf16.gmra.mxu0 %v1063
  %v2452 = vpop.f32.mrf.mxu0
  %v2453 = vadd.f32 %v2389, %v2452
  %v2454 = vpop.f32.mrf.mxu0
  %v2455 = vadd.f32 %v2391, %v2454
  %2456 = vmatmul.bf16.gmra.mxu0 %v1079
  %v2457 = vpop.f32.mrf.mxu0
  %v2458 = vadd.f32 %v2394, %v2457
  %v2459 = vpop.f32.mrf.mxu0
  %v2460 = vadd.f32 %v2396, %v2459
  %2461 = vmatmul.bf16.gmra.mxu0 %v1095
  %v2462 = vpop.f32.mrf.mxu0
  %v2463 = vadd.f32 %v2399, %v2462
  %v2464 = vpop.f32.mrf.mxu0
  %v2465 = vadd.f32 %v2401, %v2464
  %2466 = vmatmul.bf16.gmra.mxu0 %v1111
  %v2467 = vpop.f32.mrf.mxu0
  %v2468 = vadd.f32 %v2404, %v2467
  %v2469 = vpop.f32.mrf.mxu0
  %v2470 = vadd.f32 %v2406, %v2469
  %2471 = vmatmul.bf16.gmra.mxu0 %v1127
  %v2472 = vpop.f32.mrf.mxu0
  %v2473 = vadd.f32 %v2409, %v2472
  %v2474 = vpop.f32.mrf.mxu0
  %v2475 = vadd.f32 %v2411, %v2474
  %2476 = vmatmul.bf16.gmra.mxu0 %v1143
  %v2477 = vpop.f32.mrf.mxu0
  %v2478 = vadd.f32 %v2414, %v2477
  %v2479 = vpop.f32.mrf.mxu0
  %v2480 = vadd.f32 %v2416, %v2479
  %2481 = vdwg.mxu0
  %2482 = vmatpush.bf16.msra.mxu0 %v1897
  %2483 = vmatpush.bf16.msra.mxu0 %v1896
  %2484 = vmatpush.bf16.msra.mxu0 %v1895
  %2485 = vmatpush.bf16.msra.mxu0 %v1894
  %2486 = vmatpush.bf16.msra.mxu0 %v1893
  %2487 = vmatpush.bf16.msra.mxu0 %v1892
  %2488 = vmatpush.bf16.msra.mxu0 %v1891
  %2489 = vmatpush.bf16.msra.mxu0 %v1890
  %2490 = vmatmul.bf16.gmra.mxu0 %v984
  %v2491 = vpop.f32.mrf.mxu0
  %v2492 = vadd.f32 %v2428, %v2491
  %v2493 = vpop.f32.mrf.mxu0
  %v2494 = vadd.f32 %v2430, %v2493
  %2495 = vmatmul.bf16.gmra.mxu0 %v1000
  %v2496 = vpop.f32.mrf.mxu0
  %v2497 = vadd.f32 %v2433, %v2496
  %v2498 = vpop.f32.mrf.mxu0
  %v2499 = vadd.f32 %v2435, %v2498
  %2500 = vmatmul.bf16.gmra.mxu0 %v1016
  %v2501 = vpop.f32.mrf.mxu0
  %v2502 = vadd.f32 %v2438, %v2501
  %v2503 = vpop.f32.mrf.mxu0
  %v2504 = vadd.f32 %v2440, %v2503
  %2505 = vmatmul.bf16.gmra.mxu0 %v1032
  %v2506 = vpop.f32.mrf.mxu0
  %v2507 = vadd.f32 %v2443, %v2506
  %v2508 = vpop.f32.mrf.mxu0
  %v2509 = vadd.f32 %v2445, %v2508
  %2510 = vmatmul.bf16.gmra.mxu0 %v1048
  %v2511 = vpop.f32.mrf.mxu0
  %v2512 = vadd.f32 %v2448, %v2511
  %v2513 = vpop.f32.mrf.mxu0
  %v2514 = vadd.f32 %v2450, %v2513
  %2515 = vmatmul.bf16.gmra.mxu0 %v1064
  %v2516 = vpop.f32.mrf.mxu0
  %v2517 = vadd.f32 %v2453, %v2516
  %v2518 = vpop.f32.mrf.mxu0
  %v2519 = vadd.f32 %v2455, %v2518
  %2520 = vmatmul.bf16.gmra.mxu0 %v1080
  %v2521 = vpop.f32.mrf.mxu0
  %v2522 = vadd.f32 %v2458, %v2521
  %v2523 = vpop.f32.mrf.mxu0
  %v2524 = vadd.f32 %v2460, %v2523
  %2525 = vmatmul.bf16.gmra.mxu0 %v1096
  %v2526 = vpop.f32.mrf.mxu0
  %v2527 = vadd.f32 %v2463, %v2526
  %v2528 = vpop.f32.mrf.mxu0
  %v2529 = vadd.f32 %v2465, %v2528
  %2530 = vmatmul.bf16.gmra.mxu0 %v1112
  %v2531 = vpop.f32.mrf.mxu0
  %v2532 = vadd.f32 %v2468, %v2531
  %v2533 = vpop.f32.mrf.mxu0
  %v2534 = vadd.f32 %v2470, %v2533
  %2535 = vmatmul.bf16.gmra.mxu0 %v1128
  %v2536 = vpop.f32.mrf.mxu0
  %v2537 = vadd.f32 %v2473, %v2536
  %v2538 = vpop.f32.mrf.mxu0
  %v2539 = vadd.f32 %v2475, %v2538
  %2540 = vmatmul.bf16.gmra.mxu0 %v1144
  %v2541 = vpop.f32.mrf.mxu0
  %v2542 = vadd.f32 %v2478, %v2541
  %v2543 = vpop.f32.mrf.mxu0
  %v2544 = vadd.f32 %v2480, %v2543
  %2545 = vdwg.mxu0
  %2546 = vmatpush.bf16.msra.mxu0 %v1905
  %2547 = vmatpush.bf16.msra.mxu0 %v1904
  %2548 = vmatpush.bf16.msra.mxu0 %v1903
  %2549 = vmatpush.bf16.msra.mxu0 %v1902
  %2550 = vmatpush.bf16.msra.mxu0 %v1901
  %2551 = vmatpush.bf16.msra.mxu0 %v1900
  %2552 = vmatpush.bf16.msra.mxu0 %v1899
  %2553 = vmatpush.bf16.msra.mxu0 %v1898
  %2554 = vmatmul.bf16.gmra.mxu0 %v985
  %v2555 = vpop.f32.mrf.mxu0
  %v2556 = vadd.f32 %v2492, %v2555
  %v2557 = vpop.f32.mrf.mxu0
  %v2558 = vadd.f32 %v2494, %v2557
  %2559 = vmatmul.bf16.gmra.mxu0 %v1001
  %v2560 = vpop.f32.mrf.mxu0
  %v2561 = vadd.f32 %v2497, %v2560
  %v2562 = vpop.f32.mrf.mxu0
  %v2563 = vadd.f32 %v2499, %v2562
  %2564 = vmatmul.bf16.gmra.mxu0 %v1017
  %v2565 = vpop.f32.mrf.mxu0
  %v2566 = vadd.f32 %v2502, %v2565
  %v2567 = vpop.f32.mrf.mxu0
  %v2568 = vadd.f32 %v2504, %v2567
  %2569 = vmatmul.bf16.gmra.mxu0 %v1033
  %v2570 = vpop.f32.mrf.mxu0
  %v2571 = vadd.f32 %v2507, %v2570
  %v2572 = vpop.f32.mrf.mxu0
  %v2573 = vadd.f32 %v2509, %v2572
  %2574 = vmatmul.bf16.gmra.mxu0 %v1049
  %v2575 = vpop.f32.mrf.mxu0
  %v2576 = vadd.f32 %v2512, %v2575
  %v2577 = vpop.f32.mrf.mxu0
  %v2578 = vadd.f32 %v2514, %v2577
  %2579 = vmatmul.bf16.gmra.mxu0 %v1065
  %v2580 = vpop.f32.mrf.mxu0
  %v2581 = vadd.f32 %v2517, %v2580
  %v2582 = vpop.f32.mrf.mxu0
  %v2583 = vadd.f32 %v2519, %v2582
  %2584 = vmatmul.bf16.gmra.mxu0 %v1081
  %v2585 = vpop.f32.mrf.mxu0
  %v2586 = vadd.f32 %v2522, %v2585
  %v2587 = vpop.f32.mrf.mxu0
  %v2588 = vadd.f32 %v2524, %v2587
  %2589 = vmatmul.bf16.gmra.mxu0 %v1097
  %v2590 = vpop.f32.mrf.mxu0
  %v2591 = vadd.f32 %v2527, %v2590
  %v2592 = vpop.f32.mrf.mxu0
  %v2593 = vadd.f32 %v2529, %v2592
  %2594 = vmatmul.bf16.gmra.mxu0 %v1113
  %v2595 = vpop.f32.mrf.mxu0
  %v2596 = vadd.f32 %v2532, %v2595
  %v2597 = vpop.f32.mrf.mxu0
  %v2598 = vadd.f32 %v2534, %v2597
  %2599 = vmatmul.bf16.gmra.mxu0 %v1129
  %v2600 = vpop.f32.mrf.mxu0
  %v2601 = vadd.f32 %v2537, %v2600
  %v2602 = vpop.f32.mrf.mxu0
  %v2603 = vadd.f32 %v2539, %v2602
  %2604 = vmatmul.bf16.gmra.mxu0 %v1145
  %v2605 = vpop.f32.mrf.mxu0
  %v2606 = vadd.f32 %v2542, %v2605
  %v2607 = vpop.f32.mrf.mxu0
  %v2608 = vadd.f32 %v2544, %v2607
  %2609 = vdwg.mxu0
  %2610 = vmatpush.bf16.msra.mxu0 %v1913
  %2611 = vmatpush.bf16.msra.mxu0 %v1912
  %2612 = vmatpush.bf16.msra.mxu0 %v1911
  %2613 = vmatpush.bf16.msra.mxu0 %v1910
  %2614 = vmatpush.bf16.msra.mxu0 %v1909
  %2615 = vmatpush.bf16.msra.mxu0 %v1908
  %2616 = vmatpush.bf16.msra.mxu0 %v1907
  %2617 = vmatpush.bf16.msra.mxu0 %v1906
  %2618 = vmatmul.bf16.gmra.mxu0 %v986
  %v2619 = vpop.f32.mrf.mxu0
  %v2620 = vadd.f32 %v2556, %v2619
  %v2621 = vpop.f32.mrf.mxu0
  %v2622 = vadd.f32 %v2558, %v2621
  %2623 = vmatmul.bf16.gmra.mxu0 %v1002
  %v2624 = vpop.f32.mrf.mxu0
  %v2625 = vadd.f32 %v2561, %v2624
  %v2626 = vpop.f32.mrf.mxu0
  %v2627 = vadd.f32 %v2563, %v2626
  %2628 = vmatmul.bf16.gmra.mxu0 %v1018
  %v2629 = vpop.f32.mrf.mxu0
  %v2630 = vadd.f32 %v2566, %v2629
  %v2631 = vpop.f32.mrf.mxu0
  %v2632 = vadd.f32 %v2568, %v2631
  %2633 = vmatmul.bf16.gmra.mxu0 %v1034
  %v2634 = vpop.f32.mrf.mxu0
  %v2635 = vadd.f32 %v2571, %v2634
  %v2636 = vpop.f32.mrf.mxu0
  %v2637 = vadd.f32 %v2573, %v2636
  %2638 = vmatmul.bf16.gmra.mxu0 %v1050
  %v2639 = vpop.f32.mrf.mxu0
  %v2640 = vadd.f32 %v2576, %v2639
  %v2641 = vpop.f32.mrf.mxu0
  %v2642 = vadd.f32 %v2578, %v2641
  %2643 = vmatmul.bf16.gmra.mxu0 %v1066
  %v2644 = vpop.f32.mrf.mxu0
  %v2645 = vadd.f32 %v2581, %v2644
  %v2646 = vpop.f32.mrf.mxu0
  %v2647 = vadd.f32 %v2583, %v2646
  %2648 = vmatmul.bf16.gmra.mxu0 %v1082
  %v2649 = vpop.f32.mrf.mxu0
  %v2650 = vadd.f32 %v2586, %v2649
  %v2651 = vpop.f32.mrf.mxu0
  %v2652 = vadd.f32 %v2588, %v2651
  %2653 = vmatmul.bf16.gmra.mxu0 %v1098
  %v2654 = vpop.f32.mrf.mxu0
  %v2655 = vadd.f32 %v2591, %v2654
  %v2656 = vpop.f32.mrf.mxu0
  %v2657 = vadd.f32 %v2593, %v2656
  %2658 = vmatmul.bf16.gmra.mxu0 %v1114
  %v2659 = vpop.f32.mrf.mxu0
  %v2660 = vadd.f32 %v2596, %v2659
  %v2661 = vpop.f32.mrf.mxu0
  %v2662 = vadd.f32 %v2598, %v2661
  %2663 = vmatmul.bf16.gmra.mxu0 %v1130
  %v2664 = vpop.f32.mrf.mxu0
  %v2665 = vadd.f32 %v2601, %v2664
  %v2666 = vpop.f32.mrf.mxu0
  %v2667 = vadd.f32 %v2603, %v2666
  %2668 = vmatmul.bf16.gmra.mxu0 %v1146
  %v2669 = vpop.f32.mrf.mxu0
  %v2670 = vadd.f32 %v2606, %v2669
  %v2671 = vpop.f32.mrf.mxu0
  %v2672 = vadd.f32 %v2608, %v2671
  %2673 = vdwg.mxu0
  %2674 = vmatpush.bf16.msra.mxu0 %v1921
  %2675 = vmatpush.bf16.msra.mxu0 %v1920
  %2676 = vmatpush.bf16.msra.mxu0 %v1919
  %2677 = vmatpush.bf16.msra.mxu0 %v1918
  %2678 = vmatpush.bf16.msra.mxu0 %v1917
  %2679 = vmatpush.bf16.msra.mxu0 %v1916
  %2680 = vmatpush.bf16.msra.mxu0 %v1915
  %2681 = vmatpush.bf16.msra.mxu0 %v1914
  %2682 = vmatmul.bf16.gmra.mxu0 %v987
  %v2683 = vpop.f32.mrf.mxu0
  %v2684 = vadd.f32 %v2620, %v2683
  %v2685 = vpop.f32.mrf.mxu0
  %v2686 = vadd.f32 %v2622, %v2685
  %2687 = vmatmul.bf16.gmra.mxu0 %v1003
  %v2688 = vpop.f32.mrf.mxu0
  %v2689 = vadd.f32 %v2625, %v2688
  %v2690 = vpop.f32.mrf.mxu0
  %v2691 = vadd.f32 %v2627, %v2690
  %2692 = vmatmul.bf16.gmra.mxu0 %v1019
  %v2693 = vpop.f32.mrf.mxu0
  %v2694 = vadd.f32 %v2630, %v2693
  %v2695 = vpop.f32.mrf.mxu0
  %v2696 = vadd.f32 %v2632, %v2695
  %2697 = vmatmul.bf16.gmra.mxu0 %v1035
  %v2698 = vpop.f32.mrf.mxu0
  %v2699 = vadd.f32 %v2635, %v2698
  %v2700 = vpop.f32.mrf.mxu0
  %v2701 = vadd.f32 %v2637, %v2700
  %2702 = vmatmul.bf16.gmra.mxu0 %v1051
  %v2703 = vpop.f32.mrf.mxu0
  %v2704 = vadd.f32 %v2640, %v2703
  %v2705 = vpop.f32.mrf.mxu0
  %v2706 = vadd.f32 %v2642, %v2705
  %2707 = vmatmul.bf16.gmra.mxu0 %v1067
  %v2708 = vpop.f32.mrf.mxu0
  %v2709 = vadd.f32 %v2645, %v2708
  %v2710 = vpop.f32.mrf.mxu0
  %v2711 = vadd.f32 %v2647, %v2710
  %2712 = vmatmul.bf16.gmra.mxu0 %v1083
  %v2713 = vpop.f32.mrf.mxu0
  %v2714 = vadd.f32 %v2650, %v2713
  %v2715 = vpop.f32.mrf.mxu0
  %v2716 = vadd.f32 %v2652, %v2715
  %2717 = vmatmul.bf16.gmra.mxu0 %v1099
  %v2718 = vpop.f32.mrf.mxu0
  %v2719 = vadd.f32 %v2655, %v2718
  %v2720 = vpop.f32.mrf.mxu0
  %v2721 = vadd.f32 %v2657, %v2720
  %2722 = vmatmul.bf16.gmra.mxu0 %v1115
  %v2723 = vpop.f32.mrf.mxu0
  %v2724 = vadd.f32 %v2660, %v2723
  %v2725 = vpop.f32.mrf.mxu0
  %v2726 = vadd.f32 %v2662, %v2725
  %2727 = vmatmul.bf16.gmra.mxu0 %v1131
  %v2728 = vpop.f32.mrf.mxu0
  %v2729 = vadd.f32 %v2665, %v2728
  %v2730 = vpop.f32.mrf.mxu0
  %v2731 = vadd.f32 %v2667, %v2730
  %2732 = vmatmul.bf16.gmra.mxu0 %v1147
  %v2733 = vpop.f32.mrf.mxu0
  %v2734 = vadd.f32 %v2670, %v2733
  %v2735 = vpop.f32.mrf.mxu0
  %v2736 = vadd.f32 %v2672, %v2735
  %2737 = vdwg.mxu0
  %2738 = vmatpush.bf16.msra.mxu0 %v1929
  %2739 = vmatpush.bf16.msra.mxu0 %v1928
  %2740 = vmatpush.bf16.msra.mxu0 %v1927
  %2741 = vmatpush.bf16.msra.mxu0 %v1926
  %2742 = vmatpush.bf16.msra.mxu0 %v1925
  %2743 = vmatpush.bf16.msra.mxu0 %v1924
  %2744 = vmatpush.bf16.msra.mxu0 %v1923
  %2745 = vmatpush.bf16.msra.mxu0 %v1922
  %2746 = vmatmul.bf16.gmra.mxu0 %v988
  %v2747 = vpop.f32.mrf.mxu0
  %v2748 = vadd.f32 %v2684, %v2747
  %v2749 = vpop.f32.mrf.mxu0
  %v2750 = vadd.f32 %v2686, %v2749
  %2751 = vmatmul.bf16.gmra.mxu0 %v1004
  %v2752 = vpop.f32.mrf.mxu0
  %v2753 = vadd.f32 %v2689, %v2752
  %v2754 = vpop.f32.mrf.mxu0
  %v2755 = vadd.f32 %v2691, %v2754
  %2756 = vmatmul.bf16.gmra.mxu0 %v1020
  %v2757 = vpop.f32.mrf.mxu0
  %v2758 = vadd.f32 %v2694, %v2757
  %v2759 = vpop.f32.mrf.mxu0
  %v2760 = vadd.f32 %v2696, %v2759
  %2761 = vmatmul.bf16.gmra.mxu0 %v1036
  %v2762 = vpop.f32.mrf.mxu0
  %v2763 = vadd.f32 %v2699, %v2762
  %v2764 = vpop.f32.mrf.mxu0
  %v2765 = vadd.f32 %v2701, %v2764
  %2766 = vmatmul.bf16.gmra.mxu0 %v1052
  %v2767 = vpop.f32.mrf.mxu0
  %v2768 = vadd.f32 %v2704, %v2767
  %v2769 = vpop.f32.mrf.mxu0
  %v2770 = vadd.f32 %v2706, %v2769
  %2771 = vmatmul.bf16.gmra.mxu0 %v1068
  %v2772 = vpop.f32.mrf.mxu0
  %v2773 = vadd.f32 %v2709, %v2772
  %v2774 = vpop.f32.mrf.mxu0
  %v2775 = vadd.f32 %v2711, %v2774
  %2776 = vmatmul.bf16.gmra.mxu0 %v1084
  %v2777 = vpop.f32.mrf.mxu0
  %v2778 = vadd.f32 %v2714, %v2777
  %v2779 = vpop.f32.mrf.mxu0
  %v2780 = vadd.f32 %v2716, %v2779
  %2781 = vmatmul.bf16.gmra.mxu0 %v1100
  %v2782 = vpop.f32.mrf.mxu0
  %v2783 = vadd.f32 %v2719, %v2782
  %v2784 = vpop.f32.mrf.mxu0
  %v2785 = vadd.f32 %v2721, %v2784
  %2786 = vmatmul.bf16.gmra.mxu0 %v1116
  %v2787 = vpop.f32.mrf.mxu0
  %v2788 = vadd.f32 %v2724, %v2787
  %v2789 = vpop.f32.mrf.mxu0
  %v2790 = vadd.f32 %v2726, %v2789
  %2791 = vmatmul.bf16.gmra.mxu0 %v1132
  %v2792 = vpop.f32.mrf.mxu0
  %v2793 = vadd.f32 %v2729, %v2792
  %v2794 = vpop.f32.mrf.mxu0
  %v2795 = vadd.f32 %v2731, %v2794
  %2796 = vmatmul.bf16.gmra.mxu0 %v1148
  %v2797 = vpop.f32.mrf.mxu0
  %v2798 = vadd.f32 %v2734, %v2797
  %v2799 = vpop.f32.mrf.mxu0
  %v2800 = vadd.f32 %v2736, %v2799
  %2801 = vdwg.mxu0
  %2802 = vmatpush.bf16.msra.mxu0 %v1937
  %2803 = vmatpush.bf16.msra.mxu0 %v1936
  %2804 = vmatpush.bf16.msra.mxu0 %v1935
  %2805 = vmatpush.bf16.msra.mxu0 %v1934
  %2806 = vmatpush.bf16.msra.mxu0 %v1933
  %2807 = vmatpush.bf16.msra.mxu0 %v1932
  %2808 = vmatpush.bf16.msra.mxu0 %v1931
  %2809 = vmatpush.bf16.msra.mxu0 %v1930
  %2810 = vmatmul.bf16.gmra.mxu0 %v989
  %v2811 = vpop.f32.mrf.mxu0
  %v2812 = vadd.f32 %v2748, %v2811
  %v2813 = vpop.f32.mrf.mxu0
  %v2814 = vadd.f32 %v2750, %v2813
  %2815 = vmatmul.bf16.gmra.mxu0 %v1005
  %v2816 = vpop.f32.mrf.mxu0
  %v2817 = vadd.f32 %v2753, %v2816
  %v2818 = vpop.f32.mrf.mxu0
  %v2819 = vadd.f32 %v2755, %v2818
  %2820 = vmatmul.bf16.gmra.mxu0 %v1021
  %v2821 = vpop.f32.mrf.mxu0
  %v2822 = vadd.f32 %v2758, %v2821
  %v2823 = vpop.f32.mrf.mxu0
  %v2824 = vadd.f32 %v2760, %v2823
  %2825 = vmatmul.bf16.gmra.mxu0 %v1037
  %v2826 = vpop.f32.mrf.mxu0
  %v2827 = vadd.f32 %v2763, %v2826
  %v2828 = vpop.f32.mrf.mxu0
  %v2829 = vadd.f32 %v2765, %v2828
  %2830 = vmatmul.bf16.gmra.mxu0 %v1053
  %v2831 = vpop.f32.mrf.mxu0
  %v2832 = vadd.f32 %v2768, %v2831
  %v2833 = vpop.f32.mrf.mxu0
  %v2834 = vadd.f32 %v2770, %v2833
  %2835 = vmatmul.bf16.gmra.mxu0 %v1069
  %v2836 = vpop.f32.mrf.mxu0
  %v2837 = vadd.f32 %v2773, %v2836
  %v2838 = vpop.f32.mrf.mxu0
  %v2839 = vadd.f32 %v2775, %v2838
  %2840 = vmatmul.bf16.gmra.mxu0 %v1085
  %v2841 = vpop.f32.mrf.mxu0
  %v2842 = vadd.f32 %v2778, %v2841
  %v2843 = vpop.f32.mrf.mxu0
  %v2844 = vadd.f32 %v2780, %v2843
  %2845 = vmatmul.bf16.gmra.mxu0 %v1101
  %v2846 = vpop.f32.mrf.mxu0
  %v2847 = vadd.f32 %v2783, %v2846
  %v2848 = vpop.f32.mrf.mxu0
  %v2849 = vadd.f32 %v2785, %v2848
  %2850 = vmatmul.bf16.gmra.mxu0 %v1117
  %v2851 = vpop.f32.mrf.mxu0
  %v2852 = vadd.f32 %v2788, %v2851
  %v2853 = vpop.f32.mrf.mxu0
  %v2854 = vadd.f32 %v2790, %v2853
  %2855 = vmatmul.bf16.gmra.mxu0 %v1133
  %v2856 = vpop.f32.mrf.mxu0
  %v2857 = vadd.f32 %v2793, %v2856
  %v2858 = vpop.f32.mrf.mxu0
  %v2859 = vadd.f32 %v2795, %v2858
  %2860 = vmatmul.bf16.gmra.mxu0 %v1149
  %v2861 = vpop.f32.mrf.mxu0
  %v2862 = vadd.f32 %v2798, %v2861
  %v2863 = vpop.f32.mrf.mxu0
  %v2864 = vadd.f32 %v2800, %v2863
  %2865 = vdwg.mxu0
  %2866 = vmatpush.bf16.msra.mxu0 %v1945
  %2867 = vmatpush.bf16.msra.mxu0 %v1944
  %2868 = vmatpush.bf16.msra.mxu0 %v1943
  %2869 = vmatpush.bf16.msra.mxu0 %v1942
  %2870 = vmatpush.bf16.msra.mxu0 %v1941
  %2871 = vmatpush.bf16.msra.mxu0 %v1940
  %2872 = vmatpush.bf16.msra.mxu0 %v1939
  %2873 = vmatpush.bf16.msra.mxu0 %v1938
  %2874 = vmatmul.bf16.gmra.mxu0 %v990
  %v2875 = vpop.f32.mrf.mxu0
  %v2876 = vadd.f32 %v2812, %v2875
  %v2877 = vpop.f32.mrf.mxu0
  %v2878 = vadd.f32 %v2814, %v2877
  %2879 = vmatmul.bf16.gmra.mxu0 %v1006
  %v2880 = vpop.f32.mrf.mxu0
  %v2881 = vadd.f32 %v2817, %v2880
  %v2882 = vpop.f32.mrf.mxu0
  %v2883 = vadd.f32 %v2819, %v2882
  %2884 = vmatmul.bf16.gmra.mxu0 %v1022
  %v2885 = vpop.f32.mrf.mxu0
  %v2886 = vadd.f32 %v2822, %v2885
  %v2887 = vpop.f32.mrf.mxu0
  %v2888 = vadd.f32 %v2824, %v2887
  %2889 = vmatmul.bf16.gmra.mxu0 %v1038
  %v2890 = vpop.f32.mrf.mxu0
  %v2891 = vadd.f32 %v2827, %v2890
  %v2892 = vpop.f32.mrf.mxu0
  %v2893 = vadd.f32 %v2829, %v2892
  %2894 = vmatmul.bf16.gmra.mxu0 %v1054
  %v2895 = vpop.f32.mrf.mxu0
  %v2896 = vadd.f32 %v2832, %v2895
  %v2897 = vpop.f32.mrf.mxu0
  %v2898 = vadd.f32 %v2834, %v2897
  %2899 = vmatmul.bf16.gmra.mxu0 %v1070
  %v2900 = vpop.f32.mrf.mxu0
  %v2901 = vadd.f32 %v2837, %v2900
  %v2902 = vpop.f32.mrf.mxu0
  %v2903 = vadd.f32 %v2839, %v2902
  %2904 = vmatmul.bf16.gmra.mxu0 %v1086
  %v2905 = vpop.f32.mrf.mxu0
  %v2906 = vadd.f32 %v2842, %v2905
  %v2907 = vpop.f32.mrf.mxu0
  %v2908 = vadd.f32 %v2844, %v2907
  %2909 = vmatmul.bf16.gmra.mxu0 %v1102
  %v2910 = vpop.f32.mrf.mxu0
  %v2911 = vadd.f32 %v2847, %v2910
  %v2912 = vpop.f32.mrf.mxu0
  %v2913 = vadd.f32 %v2849, %v2912
  %2914 = vmatmul.bf16.gmra.mxu0 %v1118
  %v2915 = vpop.f32.mrf.mxu0
  %v2916 = vadd.f32 %v2852, %v2915
  %v2917 = vpop.f32.mrf.mxu0
  %v2918 = vadd.f32 %v2854, %v2917
  %2919 = vmatmul.bf16.gmra.mxu0 %v1134
  %v2920 = vpop.f32.mrf.mxu0
  %v2921 = vadd.f32 %v2857, %v2920
  %v2922 = vpop.f32.mrf.mxu0
  %v2923 = vadd.f32 %v2859, %v2922
  %2924 = vmatmul.bf16.gmra.mxu0 %v1150
  %v2925 = vpop.f32.mrf.mxu0
  %v2926 = vadd.f32 %v2862, %v2925
  %v2927 = vpop.f32.mrf.mxu0
  %v2928 = vadd.f32 %v2864, %v2927
  %2929 = vdwg.mxu0
  %2930 = vmatpush.bf16.msra.mxu0 %v1953
  %2931 = vmatpush.bf16.msra.mxu0 %v1952
  %2932 = vmatpush.bf16.msra.mxu0 %v1951
  %2933 = vmatpush.bf16.msra.mxu0 %v1950
  %2934 = vmatpush.bf16.msra.mxu0 %v1949
  %2935 = vmatpush.bf16.msra.mxu0 %v1948
  %2936 = vmatpush.bf16.msra.mxu0 %v1947
  %2937 = vmatpush.bf16.msra.mxu0 %v1946
  %2938 = vmatmul.bf16.gmra.mxu0 %v991
  %v2939 = vpop.f32.mrf.mxu0
  %v2940 = vadd.f32 %v2876, %v2939
  %v2941 = vpop.f32.mrf.mxu0
  %v2942 = vadd.f32 %v2878, %v2941
  %2943 = vmatmul.bf16.gmra.mxu0 %v1007
  %v2944 = vpop.f32.mrf.mxu0
  %v2945 = vadd.f32 %v2881, %v2944
  %v2946 = vpop.f32.mrf.mxu0
  %v2947 = vadd.f32 %v2883, %v2946
  %2948 = vmatmul.bf16.gmra.mxu0 %v1023
  %v2949 = vpop.f32.mrf.mxu0
  %v2950 = vadd.f32 %v2886, %v2949
  %v2951 = vpop.f32.mrf.mxu0
  %v2952 = vadd.f32 %v2888, %v2951
  %2953 = vmatmul.bf16.gmra.mxu0 %v1039
  %v2954 = vpop.f32.mrf.mxu0
  %v2955 = vadd.f32 %v2891, %v2954
  %v2956 = vpop.f32.mrf.mxu0
  %v2957 = vadd.f32 %v2893, %v2956
  %2958 = vmatmul.bf16.gmra.mxu0 %v1055
  %v2959 = vpop.f32.mrf.mxu0
  %v2960 = vadd.f32 %v2896, %v2959
  %v2961 = vpop.f32.mrf.mxu0
  %v2962 = vadd.f32 %v2898, %v2961
  %2963 = vmatmul.bf16.gmra.mxu0 %v1071
  %v2964 = vpop.f32.mrf.mxu0
  %v2965 = vadd.f32 %v2901, %v2964
  %v2966 = vpop.f32.mrf.mxu0
  %v2967 = vadd.f32 %v2903, %v2966
  %2968 = vmatmul.bf16.gmra.mxu0 %v1087
  %v2969 = vpop.f32.mrf.mxu0
  %v2970 = vadd.f32 %v2906, %v2969
  %v2971 = vpop.f32.mrf.mxu0
  %v2972 = vadd.f32 %v2908, %v2971
  %2973 = vmatmul.bf16.gmra.mxu0 %v1103
  %v2974 = vpop.f32.mrf.mxu0
  %v2975 = vadd.f32 %v2911, %v2974
  %v2976 = vpop.f32.mrf.mxu0
  %v2977 = vadd.f32 %v2913, %v2976
  %2978 = vmatmul.bf16.gmra.mxu0 %v1119
  %v2979 = vpop.f32.mrf.mxu0
  %v2980 = vadd.f32 %v2916, %v2979
  %v2981 = vpop.f32.mrf.mxu0
  %v2982 = vadd.f32 %v2918, %v2981
  %2983 = vmatmul.bf16.gmra.mxu0 %v1135
  %v2984 = vpop.f32.mrf.mxu0
  %v2985 = vadd.f32 %v2921, %v2984
  %v2986 = vpop.f32.mrf.mxu0
  %v2987 = vadd.f32 %v2923, %v2986
  %2988 = vmatmul.bf16.gmra.mxu0 %v1151
  %v2989 = vpop.f32.mrf.mxu0
  %v2990 = vadd.f32 %v2926, %v2989
  %v2991 = vpop.f32.mrf.mxu0
  %v2992 = vadd.f32 %v2928, %v2991
  %2993 = vdwg.mxu0
  %2994 = vmatpush.bf16.msra.mxu0 %v1961
  %2995 = vmatpush.bf16.msra.mxu0 %v1960
  %2996 = vmatpush.bf16.msra.mxu0 %v1959
  %2997 = vmatpush.bf16.msra.mxu0 %v1958
  %2998 = vmatpush.bf16.msra.mxu0 %v1957
  %2999 = vmatpush.bf16.msra.mxu0 %v1956
  %3000 = vmatpush.bf16.msra.mxu0 %v1955
  %3001 = vmatpush.bf16.msra.mxu0 %v1954
  %3002 = vmatmul.bf16.gmra.mxu0 %v992
  %v3003 = vpop.f32.mrf.mxu0
  %v3004 = vadd.f32 %v2940, %v3003
  %v3005 = vpop.f32.mrf.mxu0
  %v3006 = vadd.f32 %v2942, %v3005
  %3007 = vmatmul.bf16.gmra.mxu0 %v1008
  %v3008 = vpop.f32.mrf.mxu0
  %v3009 = vadd.f32 %v2945, %v3008
  %v3010 = vpop.f32.mrf.mxu0
  %v3011 = vadd.f32 %v2947, %v3010
  %3012 = vmatmul.bf16.gmra.mxu0 %v1024
  %v3013 = vpop.f32.mrf.mxu0
  %v3014 = vadd.f32 %v2950, %v3013
  %v3015 = vpop.f32.mrf.mxu0
  %v3016 = vadd.f32 %v2952, %v3015
  %3017 = vmatmul.bf16.gmra.mxu0 %v1040
  %v3018 = vpop.f32.mrf.mxu0
  %v3019 = vadd.f32 %v2955, %v3018
  %v3020 = vpop.f32.mrf.mxu0
  %v3021 = vadd.f32 %v2957, %v3020
  %3022 = vmatmul.bf16.gmra.mxu0 %v1056
  %v3023 = vpop.f32.mrf.mxu0
  %v3024 = vadd.f32 %v2960, %v3023
  %v3025 = vpop.f32.mrf.mxu0
  %v3026 = vadd.f32 %v2962, %v3025
  %3027 = vmatmul.bf16.gmra.mxu0 %v1072
  %v3028 = vpop.f32.mrf.mxu0
  %v3029 = vadd.f32 %v2965, %v3028
  %v3030 = vpop.f32.mrf.mxu0
  %v3031 = vadd.f32 %v2967, %v3030
  %3032 = vmatmul.bf16.gmra.mxu0 %v1088
  %v3033 = vpop.f32.mrf.mxu0
  %v3034 = vadd.f32 %v2970, %v3033
  %v3035 = vpop.f32.mrf.mxu0
  %v3036 = vadd.f32 %v2972, %v3035
  %3037 = vmatmul.bf16.gmra.mxu0 %v1104
  %v3038 = vpop.f32.mrf.mxu0
  %v3039 = vadd.f32 %v2975, %v3038
  %v3040 = vpop.f32.mrf.mxu0
  %v3041 = vadd.f32 %v2977, %v3040
  %3042 = vmatmul.bf16.gmra.mxu0 %v1120
  %v3043 = vpop.f32.mrf.mxu0
  %v3044 = vadd.f32 %v2980, %v3043
  %v3045 = vpop.f32.mrf.mxu0
  %v3046 = vadd.f32 %v2982, %v3045
  %3047 = vmatmul.bf16.gmra.mxu0 %v1136
  %v3048 = vpop.f32.mrf.mxu0
  %v3049 = vadd.f32 %v2985, %v3048
  %v3050 = vpop.f32.mrf.mxu0
  %v3051 = vadd.f32 %v2987, %v3050
  %3052 = vmatmul.bf16.gmra.mxu0 %v1152
  %v3053 = vpop.f32.mrf.mxu0
  %v3054 = vadd.f32 %v2990, %v3053
  %v3055 = vpop.f32.mrf.mxu0
  %v3056 = vadd.f32 %v2992, %v3055
  %3057 = vdwg.mxu0
  %3058 = vmatpush.bf16.msra.mxu0 %v1969
  %3059 = vmatpush.bf16.msra.mxu0 %v1968
  %3060 = vmatpush.bf16.msra.mxu0 %v1967
  %3061 = vmatpush.bf16.msra.mxu0 %v1966
  %3062 = vmatpush.bf16.msra.mxu0 %v1965
  %3063 = vmatpush.bf16.msra.mxu0 %v1964
  %3064 = vmatpush.bf16.msra.mxu0 %v1963
  %3065 = vmatpush.bf16.msra.mxu0 %v1962
  %3066 = vmatmul.bf16.gmra.mxu0 %v993
  %v3067 = vpop.f32.mrf.mxu0
  %v3068 = vadd.f32 %v3004, %v3067
  %v3069 = vpop.f32.mrf.mxu0
  %v3070 = vadd.f32 %v3006, %v3069
  %3071 = vmatmul.bf16.gmra.mxu0 %v1009
  %v3072 = vpop.f32.mrf.mxu0
  %v3073 = vadd.f32 %v3009, %v3072
  %v3074 = vpop.f32.mrf.mxu0
  %v3075 = vadd.f32 %v3011, %v3074
  %3076 = vmatmul.bf16.gmra.mxu0 %v1025
  %v3077 = vpop.f32.mrf.mxu0
  %v3078 = vadd.f32 %v3014, %v3077
  %v3079 = vpop.f32.mrf.mxu0
  %v3080 = vadd.f32 %v3016, %v3079
  %3081 = vmatmul.bf16.gmra.mxu0 %v1041
  %v3082 = vpop.f32.mrf.mxu0
  %v3083 = vadd.f32 %v3019, %v3082
  %v3084 = vpop.f32.mrf.mxu0
  %v3085 = vadd.f32 %v3021, %v3084
  %3086 = vmatmul.bf16.gmra.mxu0 %v1057
  %v3087 = vpop.f32.mrf.mxu0
  %v3088 = vadd.f32 %v3024, %v3087
  %v3089 = vpop.f32.mrf.mxu0
  %v3090 = vadd.f32 %v3026, %v3089
  %3091 = vmatmul.bf16.gmra.mxu0 %v1073
  %v3092 = vpop.f32.mrf.mxu0
  %v3093 = vadd.f32 %v3029, %v3092
  %v3094 = vpop.f32.mrf.mxu0
  %v3095 = vadd.f32 %v3031, %v3094
  %3096 = vmatmul.bf16.gmra.mxu0 %v1089
  %v3097 = vpop.f32.mrf.mxu0
  %v3098 = vadd.f32 %v3034, %v3097
  %v3099 = vpop.f32.mrf.mxu0
  %v3100 = vadd.f32 %v3036, %v3099
  %3101 = vmatmul.bf16.gmra.mxu0 %v1105
  %v3102 = vpop.f32.mrf.mxu0
  %v3103 = vadd.f32 %v3039, %v3102
  %v3104 = vpop.f32.mrf.mxu0
  %v3105 = vadd.f32 %v3041, %v3104
  %3106 = vmatmul.bf16.gmra.mxu0 %v1121
  %v3107 = vpop.f32.mrf.mxu0
  %v3108 = vadd.f32 %v3044, %v3107
  %v3109 = vpop.f32.mrf.mxu0
  %v3110 = vadd.f32 %v3046, %v3109
  %3111 = vmatmul.bf16.gmra.mxu0 %v1137
  %v3112 = vpop.f32.mrf.mxu0
  %v3113 = vadd.f32 %v3049, %v3112
  %v3114 = vpop.f32.mrf.mxu0
  %v3115 = vadd.f32 %v3051, %v3114
  %3116 = vmatmul.bf16.gmra.mxu0 %v1153
  %v3117 = vpop.f32.mrf.mxu0
  %v3118 = vadd.f32 %v3054, %v3117
  %v3119 = vpop.f32.mrf.mxu0
  %v3120 = vadd.f32 %v3056, %v3119
  %3121 = vdwg.mxu0
  %vm3122 = vcmp.gt.f32.partialorder %v3068, 0.0
  %vm3123 = vcmp.gt.f32.partialorder %v3070, 0.0
  %vm3124 = vcmp.gt.f32.partialorder %v3073, 0.0
  %vm3125 = vcmp.gt.f32.partialorder %v3075, 0.0
  %vm3126 = vcmp.gt.f32.partialorder %v3078, 0.0
  %vm3127 = vcmp.gt.f32.partialorder %v3080, 0.0
  %vm3128 = vcmp.gt.f32.partialorder %v3083, 0.0
  %vm3129 = vcmp.gt.f32.partialorder %v3085, 0.0
  %vm3130 = vcmp.gt.f32.partialorder %v3088, 0.0
  %vm3131 = vcmp.gt.f32.partialorder %v3090, 0.0
  %vm3132 = vcmp.gt.f32.partialorder %v3093, 0.0
  %vm3133 = vcmp.gt.f32.partialorder %v3095, 0.0
  %vm3134 = vcmp.gt.f32.partialorder %v3098, 0.0
  %vm3135 = vcmp.gt.f32.partialorder %v3100, 0.0
  %vm3136 = vcmp.gt.f32.partialorder %v3103, 0.0
  %vm3137 = vcmp.gt.f32.partialorder %v3105, 0.0
  %vm3138 = vcmp.gt.f32.partialorder %v3108, 0.0
  %vm3139 = vcmp.gt.f32.partialorder %v3110, 0.0
  %vm3140 = vcmp.gt.f32.partialorder %v3113, 0.0
  %vm3141 = vcmp.gt.f32.partialorder %v3115, 0.0
  %vm3142 = vcmp.gt.f32.partialorder %v3118, 0.0
  %vm3143 = vcmp.gt.f32.partialorder %v3120, 0.0
  %v3144 = vmin.f32 %v3068, 0.0
  %v3145 = vmin.f32 %v3070, 0.0
  %v3146 = vmin.f32 %v3073, 0.0
  %v3147 = vmin.f32 %v3075, 0.0
  %v3148 = vmin.f32 %v3078, 0.0
  %v3149 = vmin.f32 %v3080, 0.0
  %v3150 = vmin.f32 %v3083, 0.0
  %v3151 = vmin.f32 %v3085, 0.0
  %v3152 = vmin.f32 %v3088, 0.0
  %v3153 = vmin.f32 %v3090, 0.0
  %v3154 = vmin.f32 %v3093, 0.0
  %v3155 = vmin.f32 %v3095, 0.0
  %v3156 = vmin.f32 %v3098, 0.0
  %v3157 = vmin.f32 %v3100, 0.0
  %v3158 = vmin.f32 %v3103, 0.0
  %v3159 = vmin.f32 %v3105, 0.0
  %v3160 = vmin.f32 %v3108, 0.0
  %v3161 = vmin.f32 %v3110, 0.0
  %v3162 = vmin.f32 %v3113, 0.0
  %v3163 = vmin.f32 %v3115, 0.0
  %v3164 = vmin.f32 %v3118, 0.0
  %v3165 = vmin.f32 %v3120, 0.0
  %v3166 = vmul.f32 %v3144, 1.442695
  %v3167 = vpow.pop %v3166
  %v3168 = vmul.f32 %v3145, 1.442695
  %v3169 = vpow.pop %v3168
  %v3170 = vmul.f32 %v3146, 1.442695
  %v3171 = vpow.pop %v3170
  %v3172 = vmul.f32 %v3147, 1.442695
  %v3173 = vpow.pop %v3172
  %v3174 = vmul.f32 %v3148, 1.442695
  %v3175 = vpow.pop %v3174
  %v3176 = vmul.f32 %v3149, 1.442695
  %v3177 = vpow.pop %v3176
  %v3178 = vmul.f32 %v3150, 1.442695
  %v3179 = vpow.pop %v3178
  %v3180 = vmul.f32 %v3151, 1.442695
  %v3181 = vpow.pop %v3180
  %v3182 = vmul.f32 %v3152, 1.442695
  %v3183 = vpow.pop %v3182
  %v3184 = vmul.f32 %v3153, 1.442695
  %v3185 = vpow.pop %v3184
  %v3186 = vmul.f32 %v3154, 1.442695
  %v3187 = vpow.pop %v3186
  %v3188 = vmul.f32 %v3155, 1.442695
  %v3189 = vpow.pop %v3188
  %v3190 = vmul.f32 %v3156, 1.442695
  %v3191 = vpow.pop %v3190
  %v3192 = vmul.f32 %v3157, 1.442695
  %v3193 = vpow.pop %v3192
  %v3194 = vmul.f32 %v3158, 1.442695
  %v3195 = vpow.pop %v3194
  %v3196 = vmul.f32 %v3159, 1.442695
  %v3197 = vpow.pop %v3196
  %v3198 = vmul.f32 %v3160, 1.442695
  %v3199 = vpow.pop %v3198
  %v3200 = vmul.f32 %v3161, 1.442695
  %v3201 = vpow.pop %v3200
  %v3202 = vmul.f32 %v3162, 1.442695
  %v3203 = vpow.pop %v3202
  %v3204 = vmul.f32 %v3163, 1.442695
  %v3205 = vpow.pop %v3204
  %v3206 = vmul.f32 %v3164, 1.442695
  %v3207 = vpow.pop %v3206
  %v3208 = vmul.f32 %v3165, 1.442695
  %v3209 = vpow.pop %v3208
  %v3210 = vsub.f32 %v3167, 1.0
  %v3211 = vsub.f32 %v3169, 1.0
  %v3212 = vsub.f32 %v3171, 1.0
  %v3213 = vsub.f32 %v3173, 1.0
  %v3214 = vsub.f32 %v3175, 1.0
  %v3215 = vsub.f32 %v3177, 1.0
  %v3216 = vsub.f32 %v3179, 1.0
  %v3217 = vsub.f32 %v3181, 1.0
  %v3218 = vsub.f32 %v3183, 1.0
  %v3219 = vsub.f32 %v3185, 1.0
  %v3220 = vsub.f32 %v3187, 1.0
  %v3221 = vsub.f32 %v3189, 1.0
  %v3222 = vsub.f32 %v3191, 1.0
  %v3223 = vsub.f32 %v3193, 1.0
  %v3224 = vsub.f32 %v3195, 1.0
  %v3225 = vsub.f32 %v3197, 1.0
  %v3226 = vsub.f32 %v3199, 1.0
  %v3227 = vsub.f32 %v3201, 1.0
  %v3228 = vsub.f32 %v3203, 1.0
  %v3229 = vsub.f32 %v3205, 1.0
  %v3230 = vsub.f32 %v3207, 1.0
  %v3231 = vsub.f32 %v3209, 1.0
  %v3232 = vsel %vm3122, %v3068, %v3210
  %v3233 = vsel %vm3123, %v3070, %v3211
  %v3234 = vsel %vm3124, %v3073, %v3212
  %v3235 = vsel %vm3125, %v3075, %v3213
  %v3236 = vsel %vm3126, %v3078, %v3214
  %v3237 = vsel %vm3127, %v3080, %v3215
  %v3238 = vsel %vm3128, %v3083, %v3216
  %v3239 = vsel %vm3129, %v3085, %v3217
  %v3240 = vsel %vm3130, %v3088, %v3218
  %v3241 = vsel %vm3131, %v3090, %v3219
  %v3242 = vsel %vm3132, %v3093, %v3220
  %v3243 = vsel %vm3133, %v3095, %v3221
  %v3244 = vsel %vm3134, %v3098, %v3222
  %v3245 = vsel %vm3135, %v3100, %v3223
  %v3246 = vsel %vm3136, %v3103, %v3224
  %v3247 = vsel %vm3137, %v3105, %v3225
  %v3248 = vsel %vm3138, %v3108, %v3226
  %v3249 = vsel %vm3139, %v3110, %v3227
  %v3250 = vsel %vm3140, %v3113, %v3228
  %v3251 = vsel %vm3141, %v3115, %v3229
  %v3252 = vsel %vm3142, %v3118, %v3230
  %v3253 = vsel %vm3143, %v3120, %v3231
  %v3254 = vpack.c.bf16 %v3232, %v3232
  %v3255 = vpack.c.bf16 %v3233, %v3233
  %v3256 = vpack.c.bf16 %v3234, %v3234
  %v3257 = vpack.c.bf16 %v3235, %v3235
  %v3258 = vpack.c.bf16 %v3236, %v3236
  %v3259 = vpack.c.bf16 %v3237, %v3237
  %v3260 = vpack.c.bf16 %v3238, %v3238
  %v3261 = vpack.c.bf16 %v3239, %v3239
  %v3262 = vpack.c.bf16 %v3240, %v3240
  %v3263 = vpack.c.bf16 %v3241, %v3241
  %v3264 = vpack.c.bf16 %v3242, %v3242
  %v3265 = vpack.c.bf16 %v3243, %v3243
  %v3266 = vpack.c.bf16 %v3244, %v3244
  %v3267 = vpack.c.bf16 %v3245, %v3245
  %v3268 = vpack.c.bf16 %v3246, %v3246
  %v3269 = vpack.c.bf16 %v3247, %v3247
  %v3270 = vpack.c.bf16 %v3248, %v3248
  %v3271 = vpack.c.bf16 %v3249, %v3249
  %v3272 = vpack.c.bf16 %v3250, %v3250
  %v3273 = vpack.c.bf16 %v3251, %v3251
  %v3274 = vpack.c.bf16 %v3252, %v3252
  %v3275 = vpack.c.bf16 %v3253, %v3253
  %3276 = vst [vmem:[%s3] sm:$0xf] %v3254
  %3277 = vst [vmem:[%s3 + $0x4] sm:$0xf] %v3255
  %3278 = vst [vmem:[%s3 + $0x8] sm:$0xf] %v3256
  %3279 = vst [vmem:[%s3 + $0xc] sm:$0xf] %v3257
  %3280 = vst [vmem:[%s3 + $0x10] sm:$0xf] %v3258
  %3281 = vst [vmem:[%s3 + $0x14] sm:$0xf] %v3259
  %3282 = vst [vmem:[%s3 + $0x18] sm:$0xf] %v3260
  %3283 = vst [vmem:[%s3 + $0x1c] sm:$0xf] %v3261
  %3284 = vst [vmem:[%s3 + $0x20] sm:$0xf] %v3262
  %3285 = vst [vmem:[%s3 + $0x24] sm:$0xf] %v3263
  %3286 = vst [vmem:[%s3 + $0x28] sm:$0xf] %v3264
  %3287 = vst [vmem:[%s3 + $0x2c] sm:$0xf] %v3265
  %3288 = vst [vmem:[%s3 + $0x30] sm:$0xf] %v3266
  %3289 = vst [vmem:[%s3 + $0x34] sm:$0xf] %v3267
  %3290 = vst [vmem:[%s3 + $0x38] sm:$0xf] %v3268
  %3291 = vst [vmem:[%s3 + $0x3c] sm:$0xf] %v3269
  %3292 = vst [vmem:[%s3 + $0x40] sm:$0xf] %v3270
  %3293 = vst [vmem:[%s3 + $0x44] sm:$0xf] %v3271
  %3294 = vst [vmem:[%s3 + $0x48] sm:$0xf] %v3272
  %3295 = vst [vmem:[%s3 + $0x4c] sm:$0xf] %v3273
  %3296 = vst [vmem:[%s3 + $0x50] sm:$0xf] %v3274
  %3297 = vst [vmem:[%s3 + $0x54] sm:$0xf] %v3275
  // Predicated region
  $region14: #{ppo_forward.5} parent=0 // pred_check
    _
  $region15: #{ppo_forward.5} parent=0 // pred_check_branch
    %3299 = sbr.rel (0) target = $region17
  $region16: #{ppo_forward.5} parent=0 // pred_region
    _
  $region17: #{ppo_forward.5} parent=0 // pred_fallthru
    _
  // Predicated region
  $region18: #{ppo_forward.5} parent=0 // pred_check
    _
  $region19: #{ppo_forward.5} parent=0 // pred_check_branch
    %3301 = sbr.rel (0) target = $region21
  $region20: #{ppo_forward.5} parent=0 // pred_region
    _
  $region21: #{ppo_forward.5} parent=0 // pred_fallthru
    _

// kernel: ppo_forward.6
$region0: #{ppo_forward.6}
  #allocation0 [shape = 'u32[]', space=smem, size = 0x4, offset = 0x4, fixed_abs, tag = 'smem constant byte address 0x4 - core index']
  #allocation1 [shape = 'u32[72,128]{1,0:T(1,128)}', space=vmem, size = 0x9000, scoped, tag = 'internal scratch']
  %s0 = inlined_call_operand.vmem [shape: bf16[112,1152], index: 0, kind: input, shape index: {}]
  %s1 = inlined_call_operand.vmem [shape: bf16[1152,64], index: 1, kind: input, shape index: {}]
  %s2 = inlined_call_operand.vmem [shape: f32[1,64], index: 2, kind: input, shape index: {}]
  %s3 = inlined_call_operand.vmem [shape: bf16[112,64], index: 3, kind: output, shape index: {}]
  %s4 = sld [smem:[#allocation0]]
  $region22: #{ppo_forward.6} parent=0
    _
  %s6 = ssub.s32 1, %s4
  %s7 = scalar_select 0, %s6, %s4
  // Predicated region
  $region2: #{ppo_forward.6} parent=0 // pred_check
    _
  $region3: #{ppo_forward.6} parent=0 // pred_check_branch
    %9 = sbr.rel (0) target = $region5
  $region4: #{ppo_forward.6} parent=0 // pred_region
    _
  $region5: #{ppo_forward.6} parent=0 // pred_fallthru
    _
  // Predicated region
  $region6: #{ppo_forward.6} parent=0 // pred_check
    _
  $region7: #{ppo_forward.6} parent=0 // pred_check_branch
    %11 = sbr.rel (0) target = $region9
  $region8: #{ppo_forward.6} parent=0 // pred_region
    _
  $region9: #{ppo_forward.6} parent=0 // pred_fallthru
    _
  // Predicated region
  $region10: #{ppo_forward.6} parent=0 // pred_check
    _
  $region11: #{ppo_forward.6} parent=0 // pred_check_branch
    %13 = sbr.rel (0) target = $region13
  $region12: #{ppo_forward.6} parent=0 // pred_region
    _
  $region13: #{ppo_forward.6} parent=0 // pred_fallthru
    _
  %v14 = vld [vmem:[%s0] sm:$0xff]
  %v15 = vld [vmem:[%s0 + $0x8] sm:$0xff]
  %v16 = vld [vmem:[%s0 + $0x10] sm:$0xff]
  %v17 = vld [vmem:[%s0 + $0x18] sm:$0xff]
  %v18 = vld [vmem:[%s0 + $0x20] sm:$0xf]
  %v19 = vld [vmem:[%s0 + $0x24] sm:$0xff]
  %v20 = vld [vmem:[%s0 + $0x2c] sm:$0xff]
  %v21 = vld [vmem:[%s0 + $0x34] sm:$0xff]
  %v22 = vld [vmem:[%s0 + $0x3c] sm:$0xff]
  %v23 = vld [vmem:[%s0 + $0x44] sm:$0xf]
  %v24 = vld [vmem:[%s0 + $0x48] sm:$0xff]
  %v25 = vld [vmem:[%s0 + $0x50] sm:$0xff]
  %v26 = vld [vmem:[%s0 + $0x58] sm:$0xff]
  %v27 = vld [vmem:[%s0 + $0x60] sm:$0xff]
  %v28 = vld [vmem:[%s0 + $0x68] sm:$0xf]
  %v29 = vld [vmem:[%s0 + $0x6c] sm:$0xff]
  %v30 = vld [vmem:[%s0 + $0x74] sm:$0xff]
  %v31 = vld [vmem:[%s0 + $0x7c] sm:$0xff]
  %v32 = vld [vmem:[%s0 + $0x84] sm:$0xff]
  %v33 = vld [vmem:[%s0 + $0x8c] sm:$0xf]
  %v34 = vld [vmem:[%s0 + $0x90] sm:$0xff]
  %v35 = vld [vmem:[%s0 + $0x98] sm:$0xff]
  %v36 = vld [vmem:[%s0 + $0xa0] sm:$0xff]
  %v37 = vld [vmem:[%s0 + $0xa8] sm:$0xff]
  %v38 = vld [vmem:[%s0 + $0xb0] sm:$0xf]
  %v39 = vld [vmem:[%s0 + $0xb4] sm:$0xff]
  %v40 = vld [vmem:[%s0 + $0xbc] sm:$0xff]
  %v41 = vld [vmem:[%s0 + $0xc4] sm:$0xff]
  %v42 = vld [vmem:[%s0 + $0xcc] sm:$0xff]
  %v43 = vld [vmem:[%s0 + $0xd4] sm:$0xf]
  %v44 = vld [vmem:[%s0 + $0xd8] sm:$0xff]
  %v45 = vld [vmem:[%s0 + $0xe0] sm:$0xff]
  %v46 = vld [vmem:[%s0 + $0xe8] sm:$0xff]
  %v47 = vld [vmem:[%s0 + $0xf0] sm:$0xff]
  %v48 = vld [vmem:[%s0 + $0xf8] sm:$0xf]
  %v49 = vld [vmem:[%s0 + $0xfc] sm:$0xff]
  %v50 = vld [vmem:[%s0 + $0x104] sm:$0xff]
  %v51 = vld [vmem:[%s0 + $0x10c] sm:$0xff]
  %v52 = vld [vmem:[%s0 + $0x114] sm:$0xff]
  %v53 = vld [vmem:[%s0 + $0x11c] sm:$0xf]
  %v54 = vld [vmem:[%s0 + $0x120] sm:$0xff]
  %v55 = vld [vmem:[%s0 + $0x128] sm:$0xff]
  %v56 = vld [vmem:[%s0 + $0x130] sm:$0xff]
  %v57 = vld [vmem:[%s0 + $0x138] sm:$0xff]
  %v58 = vld [vmem:[%s0 + $0x140] sm:$0xf]
  %v59 = vld [vmem:[%s0 + $0x144] sm:$0xff]
  %v60 = vld [vmem:[%s0 + $0x14c] sm:$0xff]
  %v61 = vld [vmem:[%s0 + $0x154] sm:$0xff]
  %v62 = vld [vmem:[%s0 + $0x15c] sm:$0xff]
  %v63 = vld [vmem:[%s0 + $0x164] sm:$0xf]
  %v64 = vld [vmem:[%s0 + $0x168] sm:$0xff]
  %v65 = vld [vmem:[%s0 + $0x170] sm:$0xff]
  %v66 = vld [vmem:[%s0 + $0x178] sm:$0xff]
  %v67 = vld [vmem:[%s0 + $0x180] sm:$0xff]
  %v68 = vld [vmem:[%s0 + $0x188] sm:$0xf]
  %v69 = vld [vmem:[%s0 + $0x18c] sm:$0xff]
  %v70 = vld [vmem:[%s0 + $0x194] sm:$0xff]
  %v71 = vld [vmem:[%s0 + $0x19c] sm:$0xff]
  %v72 = vld [vmem:[%s0 + $0x1a4] sm:$0xff]
  %v73 = vld [vmem:[%s0 + $0x1ac] sm:$0xf]
  %v74 = vld [vmem:[%s0 + $0x1b0] sm:$0xff]
  %v75 = vld [vmem:[%s0 + $0x1b8] sm:$0xff]
  %v76 = vld [vmem:[%s0 + $0x1c0] sm:$0xff]
  %v77 = vld [vmem:[%s0 + $0x1c8] sm:$0xff]
  %v78 = vld [vmem:[%s0 + $0x1d0] sm:$0xf]
  %v79 = vld [vmem:[%s0 + $0x1d4] sm:$0xff]
  %v80 = vld [vmem:[%s0 + $0x1dc] sm:$0xff]
  %v81 = vld [vmem:[%s0 + $0x1e4] sm:$0xff]
  %v82 = vld [vmem:[%s0 + $0x1ec] sm:$0xff]
  %v83 = vld [vmem:[%s0 + $0x1f4] sm:$0xf]
  %v84 = vld [vmem:[%s1] sm:$0xf]
  %v85 = vld [vmem:[%s1 + $0x4] sm:$0xf]
  %v86 = vld [vmem:[%s1 + $0x8] sm:$0xf]
  %v87 = vld [vmem:[%s1 + $0xc] sm:$0xf]
  %v88 = vld [vmem:[%s1 + $0x10] sm:$0xf]
  %v89 = vld [vmem:[%s1 + $0x14] sm:$0xf]
  %v90 = vld [vmem:[%s1 + $0x18] sm:$0xf]
  %v91 = vld [vmem:[%s1 + $0x1c] sm:$0xf]
  %v92 = vld [vmem:[%s1 + $0x20] sm:$0xf]
  %v93 = vld [vmem:[%s1 + $0x24] sm:$0xf]
  %v94 = vld [vmem:[%s1 + $0x28] sm:$0xf]
  %v95 = vld [vmem:[%s1 + $0x2c] sm:$0xf]
  %v96 = vld [vmem:[%s1 + $0x30] sm:$0xf]
  %v97 = vld [vmem:[%s1 + $0x34] sm:$0xf]
  %v98 = vld [vmem:[%s1 + $0x38] sm:$0xf]
  %v99 = vld [vmem:[%s1 + $0x3c] sm:$0xf]
  %v100 = vld [vmem:[%s1 + $0x40] sm:$0xf]
  %v101 = vld [vmem:[%s1 + $0x44] sm:$0xf]
  %v102 = vld [vmem:[%s1 + $0x48] sm:$0xf]
  %v103 = vld [vmem:[%s1 + $0x4c] sm:$0xf]
  %v104 = vld [vmem:[%s1 + $0x50] sm:$0xf]
  %v105 = vld [vmem:[%s1 + $0x54] sm:$0xf]
  %v106 = vld [vmem:[%s1 + $0x58] sm:$0xf]
  %v107 = vld [vmem:[%s1 + $0x5c] sm:$0xf]
  %v108 = vld [vmem:[%s1 + $0x60] sm:$0xf]
  %v109 = vld [vmem:[%s1 + $0x64] sm:$0xf]
  %v110 = vld [vmem:[%s1 + $0x68] sm:$0xf]
  %v111 = vld [vmem:[%s1 + $0x6c] sm:$0xf]
  %v112 = vld [vmem:[%s1 + $0x70] sm:$0xf]
  %v113 = vld [vmem:[%s1 + $0x74] sm:$0xf]
  %v114 = vld [vmem:[%s1 + $0x78] sm:$0xf]
  %v115 = vld [vmem:[%s1 + $0x7c] sm:$0xf]
  %v116 = vld [vmem:[%s1 + $0x80] sm:$0xf]
  %v117 = vld [vmem:[%s1 + $0x84] sm:$0xf]
  %v118 = vld [vmem:[%s1 + $0x88] sm:$0xf]
  %v119 = vld [vmem:[%s1 + $0x8c] sm:$0xf]
  %v120 = vld [vmem:[%s1 + $0x90] sm:$0xf]
  %v121 = vld [vmem:[%s1 + $0x94] sm:$0xf]
  %v122 = vld [vmem:[%s1 + $0x98] sm:$0xf]
  %v123 = vld [vmem:[%s1 + $0x9c] sm:$0xf]
  %v124 = vld [vmem:[%s1 + $0xa0] sm:$0xf]
  %v125 = vld [vmem:[%s1 + $0xa4] sm:$0xf]
  %v126 = vld [vmem:[%s1 + $0xa8] sm:$0xf]
  %v127 = vld [vmem:[%s1 + $0xac] sm:$0xf]
  %v128 = vld [vmem:[%s1 + $0xb0] sm:$0xf]
  %v129 = vld [vmem:[%s1 + $0xb4] sm:$0xf]
  %v130 = vld [vmem:[%s1 + $0xb8] sm:$0xf]
  %v131 = vld [vmem:[%s1 + $0xbc] sm:$0xf]
  %v132 = vld [vmem:[%s1 + $0xc0] sm:$0xf]
  %v133 = vld [vmem:[%s1 + $0xc4] sm:$0xf]
  %v134 = vld [vmem:[%s1 + $0xc8] sm:$0xf]
  %v135 = vld [vmem:[%s1 + $0xcc] sm:$0xf]
  %v136 = vld [vmem:[%s1 + $0xd0] sm:$0xf]
  %v137 = vld [vmem:[%s1 + $0xd4] sm:$0xf]
  %v138 = vld [vmem:[%s1 + $0xd8] sm:$0xf]
  %v139 = vld [vmem:[%s1 + $0xdc] sm:$0xf]
  %v140 = vld [vmem:[%s1 + $0xe0] sm:$0xf]
  %v141 = vld [vmem:[%s1 + $0xe4] sm:$0xf]
  %v142 = vld [vmem:[%s1 + $0xe8] sm:$0xf]
  %v143 = vld [vmem:[%s1 + $0xec] sm:$0xf]
  %v144 = vld [vmem:[%s1 + $0xf0] sm:$0xf]
  %v145 = vld [vmem:[%s1 + $0xf4] sm:$0xf]
  %v146 = vld [vmem:[%s1 + $0xf8] sm:$0xf]
  %v147 = vld [vmem:[%s1 + $0xfc] sm:$0xf]
  %v148 = vld [vmem:[%s1 + $0x100] sm:$0xf]
  %v149 = vld [vmem:[%s1 + $0x104] sm:$0xf]
  %v150 = vld [vmem:[%s1 + $0x108] sm:$0xf]
  %v151 = vld [vmem:[%s1 + $0x10c] sm:$0xf]
  %v152 = vld [vmem:[%s1 + $0x110] sm:$0xf]
  %v153 = vld [vmem:[%s1 + $0x114] sm:$0xf]
  %v154 = vld [vmem:[%s1 + $0x118] sm:$0xf]
  %v155 = vld [vmem:[%s1 + $0x11c] sm:$0xf]
  %v156 = vld [vmem:[%s1 + $0x120] sm:$0xf]
  %v157 = vld [vmem:[%s1 + $0x124] sm:$0xf]
  %v158 = vld [vmem:[%s1 + $0x128] sm:$0xf]
  %v159 = vld [vmem:[%s1 + $0x12c] sm:$0xf]
  %v160 = vld [vmem:[%s1 + $0x130] sm:$0xf]
  %v161 = vld [vmem:[%s1 + $0x134] sm:$0xf]
  %v162 = vld [vmem:[%s1 + $0x138] sm:$0xf]
  %v163 = vld [vmem:[%s1 + $0x13c] sm:$0xf]
  %v164 = vld [vmem:[%s1 + $0x140] sm:$0xf]
  %v165 = vld [vmem:[%s1 + $0x144] sm:$0xf]
  %v166 = vld [vmem:[%s1 + $0x148] sm:$0xf]
  %v167 = vld [vmem:[%s1 + $0x14c] sm:$0xf]
  %v168 = vld [vmem:[%s1 + $0x150] sm:$0xf]
  %v169 = vld [vmem:[%s1 + $0x154] sm:$0xf]
  %v170 = vld [vmem:[%s1 + $0x158] sm:$0xf]
  %v171 = vld [vmem:[%s1 + $0x15c] sm:$0xf]
  %v172 = vld [vmem:[%s1 + $0x160] sm:$0xf]
  %v173 = vld [vmem:[%s1 + $0x164] sm:$0xf]
  %v174 = vld [vmem:[%s1 + $0x168] sm:$0xf]
  %v175 = vld [vmem:[%s1 + $0x16c] sm:$0xf]
  %v176 = vld [vmem:[%s1 + $0x170] sm:$0xf]
  %v177 = vld [vmem:[%s1 + $0x174] sm:$0xf]
  %v178 = vld [vmem:[%s1 + $0x178] sm:$0xf]
  %v179 = vld [vmem:[%s1 + $0x17c] sm:$0xf]
  %v180 = vld [vmem:[%s1 + $0x180] sm:$0xf]
  %v181 = vld [vmem:[%s1 + $0x184] sm:$0xf]
  %v182 = vld [vmem:[%s1 + $0x188] sm:$0xf]
  %v183 = vld [vmem:[%s1 + $0x18c] sm:$0xf]
  %v184 = vld [vmem:[%s1 + $0x190] sm:$0xf]
  %v185 = vld [vmem:[%s1 + $0x194] sm:$0xf]
  %v186 = vld [vmem:[%s1 + $0x198] sm:$0xf]
  %v187 = vld [vmem:[%s1 + $0x19c] sm:$0xf]
  %v188 = vld [vmem:[%s1 + $0x1a0] sm:$0xf]
  %v189 = vld [vmem:[%s1 + $0x1a4] sm:$0xf]
  %v190 = vld [vmem:[%s1 + $0x1a8] sm:$0xf]
  %v191 = vld [vmem:[%s1 + $0x1ac] sm:$0xf]
  %v192 = vld [vmem:[%s1 + $0x1b0] sm:$0xf]
  %v193 = vld [vmem:[%s1 + $0x1b4] sm:$0xf]
  %v194 = vld [vmem:[%s1 + $0x1b8] sm:$0xf]
  %v195 = vld [vmem:[%s1 + $0x1bc] sm:$0xf]
  %v196 = vld [vmem:[%s1 + $0x1c0] sm:$0xf]
  %v197 = vld [vmem:[%s1 + $0x1c4] sm:$0xf]
  %v198 = vld [vmem:[%s1 + $0x1c8] sm:$0xf]
  %v199 = vld [vmem:[%s1 + $0x1cc] sm:$0xf]
  %v200 = vld [vmem:[%s1 + $0x1d0] sm:$0xf]
  %v201 = vld [vmem:[%s1 + $0x1d4] sm:$0xf]
  %v202 = vld [vmem:[%s1 + $0x1d8] sm:$0xf]
  %v203 = vld [vmem:[%s1 + $0x1dc] sm:$0xf]
  %v204 = vld [vmem:[%s1 + $0x1e0] sm:$0xf]
  %v205 = vld [vmem:[%s1 + $0x1e4] sm:$0xf]
  %v206 = vld [vmem:[%s1 + $0x1e8] sm:$0xf]
  %v207 = vld [vmem:[%s1 + $0x1ec] sm:$0xf]
  %v208 = vld [vmem:[%s1 + $0x1f0] sm:$0xf]
  %v209 = vld [vmem:[%s1 + $0x1f4] sm:$0xf]
  %v210 = vld [vmem:[%s1 + $0x1f8] sm:$0xf]
  %v211 = vld [vmem:[%s1 + $0x1fc] sm:$0xf]
  %v212 = vld [vmem:[%s1 + $0x200] sm:$0xf]
  %v213 = vld [vmem:[%s1 + $0x204] sm:$0xf]
  %v214 = vld [vmem:[%s1 + $0x208] sm:$0xf]
  %v215 = vld [vmem:[%s1 + $0x20c] sm:$0xf]
  %v216 = vld [vmem:[%s1 + $0x210] sm:$0xf]
  %v217 = vld [vmem:[%s1 + $0x214] sm:$0xf]
  %v218 = vld [vmem:[%s1 + $0x218] sm:$0xf]
  %v219 = vld [vmem:[%s1 + $0x21c] sm:$0xf]
  %v220 = vld [vmem:[%s1 + $0x220] sm:$0xf]
  %v221 = vld [vmem:[%s1 + $0x224] sm:$0xf]
  %v222 = vld [vmem:[%s1 + $0x228] sm:$0xf]
  %v223 = vld [vmem:[%s1 + $0x22c] sm:$0xf]
  %v224 = vld [vmem:[%s1 + $0x230] sm:$0xf]
  %v225 = vld [vmem:[%s1 + $0x234] sm:$0xf]
  %v226 = vld [vmem:[%s1 + $0x238] sm:$0xf]
  %v227 = vld [vmem:[%s1 + $0x23c] sm:$0xf]
  %v228 = vld [vmem:[%s2] sm:$0x1]
  %v230 = vperm.slane %v228, 0
  %v302 = vunpack.c.l.b16 %v14
  %v303 = vunpack.c.h.b16 %v14
  %v304 = vunpack.c.l.b16 %v15
  %v305 = vunpack.c.h.b16 %v15
  %v306 = vunpack.c.l.b16 %v16
  %v307 = vunpack.c.h.b16 %v16
  %v308 = vunpack.c.l.b16 %v17
  %v309 = vunpack.c.h.b16 %v17
  %v310 = vunpack.c.l.b16 %v18
  %v311 = vunpack.c.l.b16 %v19
  %v312 = vunpack.c.h.b16 %v19
  %v313 = vunpack.c.l.b16 %v20
  %v314 = vunpack.c.h.b16 %v20
  %v315 = vunpack.c.l.b16 %v21
  %v316 = vunpack.c.h.b16 %v21
  %v317 = vunpack.c.l.b16 %v22
  %v318 = vunpack.c.h.b16 %v22
  %v319 = vunpack.c.l.b16 %v23
  %v320 = vunpack.c.l.b16 %v24
  %v321 = vunpack.c.h.b16 %v24
  %v322 = vunpack.c.l.b16 %v25
  %v323 = vunpack.c.h.b16 %v25
  %v324 = vunpack.c.l.b16 %v26
  %v325 = vunpack.c.h.b16 %v26
  %v326 = vunpack.c.l.b16 %v27
  %v327 = vunpack.c.h.b16 %v27
  %v328 = vunpack.c.l.b16 %v28
  %v329 = vunpack.c.l.b16 %v29
  %v330 = vunpack.c.h.b16 %v29
  %v331 = vunpack.c.l.b16 %v30
  %v332 = vunpack.c.h.b16 %v30
  %v333 = vunpack.c.l.b16 %v31
  %v334 = vunpack.c.h.b16 %v31
  %v335 = vunpack.c.l.b16 %v32
  %v336 = vunpack.c.h.b16 %v32
  %v337 = vunpack.c.l.b16 %v33
  %v338 = vunpack.c.l.b16 %v34
  %v339 = vunpack.c.h.b16 %v34
  %v340 = vunpack.c.l.b16 %v35
  %v341 = vunpack.c.h.b16 %v35
  %v342 = vunpack.c.l.b16 %v36
  %v343 = vunpack.c.h.b16 %v36
  %v344 = vunpack.c.l.b16 %v37
  %v345 = vunpack.c.h.b16 %v37
  %v346 = vunpack.c.l.b16 %v38
  %v347 = vunpack.c.l.b16 %v39
  %v348 = vunpack.c.h.b16 %v39
  %v349 = vunpack.c.l.b16 %v40
  %v350 = vunpack.c.h.b16 %v40
  %v351 = vunpack.c.l.b16 %v41
  %v352 = vunpack.c.h.b16 %v41
  %v353 = vunpack.c.l.b16 %v42
  %v354 = vunpack.c.h.b16 %v42
  %v355 = vunpack.c.l.b16 %v43
  %v356 = vunpack.c.l.b16 %v44
  %v357 = vunpack.c.h.b16 %v44
  %v358 = vunpack.c.l.b16 %v45
  %v359 = vunpack.c.h.b16 %v45
  %v360 = vunpack.c.l.b16 %v46
  %v361 = vunpack.c.h.b16 %v46
  %v362 = vunpack.c.l.b16 %v47
  %v363 = vunpack.c.h.b16 %v47
  %v364 = vunpack.c.l.b16 %v48
  %v365 = vunpack.c.l.b16 %v49
  %v366 = vunpack.c.h.b16 %v49
  %v367 = vunpack.c.l.b16 %v50
  %v368 = vunpack.c.h.b16 %v50
  %v369 = vunpack.c.l.b16 %v51
  %v370 = vunpack.c.h.b16 %v51
  %v371 = vunpack.c.l.b16 %v52
  %v372 = vunpack.c.h.b16 %v52
  %v373 = vunpack.c.l.b16 %v53
  %v374 = vunpack.c.l.b16 %v54
  %v375 = vunpack.c.h.b16 %v54
  %v376 = vunpack.c.l.b16 %v55
  %v377 = vunpack.c.h.b16 %v55
  %v378 = vunpack.c.l.b16 %v56
  %v379 = vunpack.c.h.b16 %v56
  %v380 = vunpack.c.l.b16 %v57
  %v381 = vunpack.c.h.b16 %v57
  %v382 = vunpack.c.l.b16 %v58
  %v383 = vunpack.c.l.b16 %v59
  %v384 = vunpack.c.h.b16 %v59
  %v385 = vunpack.c.l.b16 %v60
  %v386 = vunpack.c.h.b16 %v60
  %v387 = vunpack.c.l.b16 %v61
  %v388 = vunpack.c.h.b16 %v61
  %v389 = vunpack.c.l.b16 %v62
  %v390 = vunpack.c.h.b16 %v62
  %v391 = vunpack.c.l.b16 %v63
  %v392 = vunpack.c.l.b16 %v64
  %v393 = vunpack.c.h.b16 %v64
  %v394 = vunpack.c.l.b16 %v65
  %v395 = vunpack.c.h.b16 %v65
  %v396 = vunpack.c.l.b16 %v66
  %v397 = vunpack.c.h.b16 %v66
  %v398 = vunpack.c.l.b16 %v67
  %v399 = vunpack.c.h.b16 %v67
  %v400 = vunpack.c.l.b16 %v68
  %v401 = vunpack.c.l.b16 %v69
  %v402 = vunpack.c.h.b16 %v69
  %v403 = vunpack.c.l.b16 %v70
  %v404 = vunpack.c.h.b16 %v70
  %v405 = vunpack.c.l.b16 %v71
  %v406 = vunpack.c.h.b16 %v71
  %v407 = vunpack.c.l.b16 %v72
  %v408 = vunpack.c.h.b16 %v72
  %v409 = vunpack.c.l.b16 %v73
  %v410 = vunpack.c.l.b16 %v74
  %v411 = vunpack.c.h.b16 %v74
  %v412 = vunpack.c.l.b16 %v75
  %v413 = vunpack.c.h.b16 %v75
  %v414 = vunpack.c.l.b16 %v76
  %v415 = vunpack.c.h.b16 %v76
  %v416 = vunpack.c.l.b16 %v77
  %v417 = vunpack.c.h.b16 %v77
  %v418 = vunpack.c.l.b16 %v78
  %v419 = vunpack.c.l.b16 %v79
  %v420 = vunpack.c.h.b16 %v79
  %v421 = vunpack.c.l.b16 %v80
  %v422 = vunpack.c.h.b16 %v80
  %v423 = vunpack.c.l.b16 %v81
  %v424 = vunpack.c.h.b16 %v81
  %v425 = vunpack.c.l.b16 %v82
  %v426 = vunpack.c.h.b16 %v82
  %v427 = vunpack.c.l.b16 %v83
  %v428 = vpack.c.b16 %v311, %v302
  %v429 = vpack.c.b16 %v312, %v303
  %v430 = vpack.c.b16 %v313, %v304
  %v431 = vpack.c.b16 %v314, %v305
  %v432 = vpack.c.b16 %v315, %v306
  %v433 = vpack.c.b16 %v316, %v307
  %v434 = vpack.c.b16 %v317, %v308
  %v435 = vpack.c.b16 %v318, %v309
  %v436 = vpack.c.b16 %v319, %v310
  %v437 = vpack.c.b16 %v329, %v320
  %v438 = vpack.c.b16 %v330, %v321
  %v439 = vpack.c.b16 %v331, %v322
  %v440 = vpack.c.b16 %v332, %v323
  %v441 = vpack.c.b16 %v333, %v324
  %v442 = vpack.c.b16 %v334, %v325
  %v443 = vpack.c.b16 %v335, %v326
  %v444 = vpack.c.b16 %v336, %v327
  %v445 = vpack.c.b16 %v337, %v328
  %v446 = vpack.c.b16 %v347, %v338
  %v447 = vpack.c.b16 %v348, %v339
  %v448 = vpack.c.b16 %v349, %v340
  %v449 = vpack.c.b16 %v350, %v341
  %v450 = vpack.c.b16 %v351, %v342
  %v451 = vpack.c.b16 %v352, %v343
  %v452 = vpack.c.b16 %v353, %v344
  %v453 = vpack.c.b16 %v354, %v345
  %v454 = vpack.c.b16 %v355, %v346
  %v455 = vpack.c.b16 %v365, %v356
  %v456 = vpack.c.b16 %v366, %v357
  %v457 = vpack.c.b16 %v367, %v358
  %v458 = vpack.c.b16 %v368, %v359
  %v459 = vpack.c.b16 %v369, %v360
  %v460 = vpack.c.b16 %v370, %v361
  %v461 = vpack.c.b16 %v371, %v362
  %v462 = vpack.c.b16 %v372, %v363
  %v463 = vpack.c.b16 %v373, %v364
  %v464 = vpack.c.b16 %v383, %v374
  %v465 = vpack.c.b16 %v384, %v375
  %v466 = vpack.c.b16 %v385, %v376
  %v467 = vpack.c.b16 %v386, %v377
  %v468 = vpack.c.b16 %v387, %v378
  %v469 = vpack.c.b16 %v388, %v379
  %v470 = vpack.c.b16 %v389, %v380
  %v471 = vpack.c.b16 %v390, %v381
  %v472 = vpack.c.b16 %v391, %v382
  %v473 = vpack.c.b16 %v401, %v392
  %v474 = vpack.c.b16 %v402, %v393
  %v475 = vpack.c.b16 %v403, %v394
  %v476 = vpack.c.b16 %v404, %v395
  %v477 = vpack.c.b16 %v405, %v396
  %v478 = vpack.c.b16 %v406, %v397
  %v479 = vpack.c.b16 %v407, %v398
  %v480 = vpack.c.b16 %v408, %v399
  %v481 = vpack.c.b16 %v409, %v400
  %v482 = vpack.c.b16 %v419, %v410
  %v483 = vpack.c.b16 %v420, %v411
  %v484 = vpack.c.b16 %v421, %v412
  %v485 = vpack.c.b16 %v422, %v413
  %v486 = vpack.c.b16 %v423, %v414
  %v487 = vpack.c.b16 %v424, %v415
  %v488 = vpack.c.b16 %v425, %v416
  %v489 = vpack.c.b16 %v426, %v417
  %v490 = vpack.c.b16 %v427, %v418
  %v698 = vunpack.c.l.b16 %v84
  %v699 = vunpack.c.l.b16 %v85
  %v700 = vunpack.c.l.b16 %v86
  %v701 = vunpack.c.l.b16 %v87
  %v702 = vunpack.c.l.b16 %v88
  %v703 = vunpack.c.l.b16 %v89
  %v704 = vunpack.c.l.b16 %v90
  %v705 = vunpack.c.l.b16 %v91
  %v706 = vunpack.c.l.b16 %v92
  %v707 = vunpack.c.l.b16 %v93
  %v708 = vunpack.c.l.b16 %v94
  %v709 = vunpack.c.l.b16 %v95
  %v710 = vunpack.c.l.b16 %v96
  %v711 = vunpack.c.l.b16 %v97
  %v712 = vunpack.c.l.b16 %v98
  %v713 = vunpack.c.l.b16 %v99
  %v714 = vunpack.c.l.b16 %v100
  %v715 = vunpack.c.l.b16 %v101
  %v716 = vunpack.c.l.b16 %v102
  %v717 = vunpack.c.l.b16 %v103
  %v718 = vunpack.c.l.b16 %v104
  %v719 = vunpack.c.l.b16 %v105
  %v720 = vunpack.c.l.b16 %v106
  %v721 = vunpack.c.l.b16 %v107
  %v722 = vunpack.c.l.b16 %v108
  %v723 = vunpack.c.l.b16 %v109
  %v724 = vunpack.c.l.b16 %v110
  %v725 = vunpack.c.l.b16 %v111
  %v726 = vunpack.c.l.b16 %v112
  %v727 = vunpack.c.l.b16 %v113
  %v728 = vunpack.c.l.b16 %v114
  %v729 = vunpack.c.l.b16 %v115
  %v730 = vunpack.c.l.b16 %v116
  %v731 = vunpack.c.l.b16 %v117
  %v732 = vunpack.c.l.b16 %v118
  %v733 = vunpack.c.l.b16 %v119
  %v734 = vunpack.c.l.b16 %v120
  %v735 = vunpack.c.l.b16 %v121
  %v736 = vunpack.c.l.b16 %v122
  %v737 = vunpack.c.l.b16 %v123
  %v738 = vunpack.c.l.b16 %v124
  %v739 = vunpack.c.l.b16 %v125
  %v740 = vunpack.c.l.b16 %v126
  %v741 = vunpack.c.l.b16 %v127
  %v742 = vunpack.c.l.b16 %v128
  %v743 = vunpack.c.l.b16 %v129
  %v744 = vunpack.c.l.b16 %v130
  %v745 = vunpack.c.l.b16 %v131
  %v746 = vunpack.c.l.b16 %v132
  %v747 = vunpack.c.l.b16 %v133
  %v748 = vunpack.c.l.b16 %v134
  %v749 = vunpack.c.l.b16 %v135
  %v750 = vunpack.c.l.b16 %v136
  %v751 = vunpack.c.l.b16 %v137
  %v752 = vunpack.c.l.b16 %v138
  %v753 = vunpack.c.l.b16 %v139
  %v754 = vunpack.c.l.b16 %v140
  %v755 = vunpack.c.l.b16 %v141
  %v756 = vunpack.c.l.b16 %v142
  %v757 = vunpack.c.l.b16 %v143
  %v758 = vunpack.c.l.b16 %v144
  %v759 = vunpack.c.l.b16 %v145
  %v760 = vunpack.c.l.b16 %v146
  %v761 = vunpack.c.l.b16 %v147
  %v762 = vunpack.c.l.b16 %v148
  %v763 = vunpack.c.l.b16 %v149
  %v764 = vunpack.c.l.b16 %v150
  %v765 = vunpack.c.l.b16 %v151
  %v766 = vunpack.c.l.b16 %v152
  %v767 = vunpack.c.l.b16 %v153
  %v768 = vunpack.c.l.b16 %v154
  %v769 = vunpack.c.l.b16 %v155
  %v770 = vunpack.c.l.b16 %v156
  %v771 = vunpack.c.l.b16 %v157
  %v772 = vunpack.c.l.b16 %v158
  %v773 = vunpack.c.l.b16 %v159
  %v774 = vunpack.c.l.b16 %v160
  %v775 = vunpack.c.l.b16 %v161
  %v776 = vunpack.c.l.b16 %v162
  %v777 = vunpack.c.l.b16 %v163
  %v778 = vunpack.c.l.b16 %v164
  %v779 = vunpack.c.l.b16 %v165
  %v780 = vunpack.c.l.b16 %v166
  %v781 = vunpack.c.l.b16 %v167
  %v782 = vunpack.c.l.b16 %v168
  %v783 = vunpack.c.l.b16 %v169
  %v784 = vunpack.c.l.b16 %v170
  %v785 = vunpack.c.l.b16 %v171
  %v786 = vunpack.c.l.b16 %v172
  %v787 = vunpack.c.l.b16 %v173
  %v788 = vunpack.c.l.b16 %v174
  %v789 = vunpack.c.l.b16 %v175
  %v790 = vunpack.c.l.b16 %v176
  %v791 = vunpack.c.l.b16 %v177
  %v792 = vunpack.c.l.b16 %v178
  %v793 = vunpack.c.l.b16 %v179
  %v794 = vunpack.c.l.b16 %v180
  %v795 = vunpack.c.l.b16 %v181
  %v796 = vunpack.c.l.b16 %v182
  %v797 = vunpack.c.l.b16 %v183
  %v798 = vunpack.c.l.b16 %v184
  %v799 = vunpack.c.l.b16 %v185
  %v800 = vunpack.c.l.b16 %v186
  %v801 = vunpack.c.l.b16 %v187
  %v802 = vunpack.c.l.b16 %v188
  %v803 = vunpack.c.l.b16 %v189
  %v804 = vunpack.c.l.b16 %v190
  %v805 = vunpack.c.l.b16 %v191
  %v806 = vunpack.c.l.b16 %v192
  %v807 = vunpack.c.l.b16 %v193
  %v808 = vunpack.c.l.b16 %v194
  %v809 = vunpack.c.l.b16 %v195
  %v810 = vunpack.c.l.b16 %v196
  %v811 = vunpack.c.l.b16 %v197
  %v812 = vunpack.c.l.b16 %v198
  %v813 = vunpack.c.l.b16 %v199
  %v814 = vunpack.c.l.b16 %v200
  %v815 = vunpack.c.l.b16 %v201
  %v816 = vunpack.c.l.b16 %v202
  %v817 = vunpack.c.l.b16 %v203
  %v818 = vunpack.c.l.b16 %v204
  %v819 = vunpack.c.l.b16 %v205
  %v820 = vunpack.c.l.b16 %v206
  %v821 = vunpack.c.l.b16 %v207
  %v822 = vunpack.c.l.b16 %v208
  %v823 = vunpack.c.l.b16 %v209
  %v824 = vunpack.c.l.b16 %v210
  %v825 = vunpack.c.l.b16 %v211
  %v826 = vunpack.c.l.b16 %v212
  %v827 = vunpack.c.l.b16 %v213
  %v828 = vunpack.c.l.b16 %v214
  %v829 = vunpack.c.l.b16 %v215
  %v830 = vunpack.c.l.b16 %v216
  %v831 = vunpack.c.l.b16 %v217
  %v832 = vunpack.c.l.b16 %v218
  %v833 = vunpack.c.l.b16 %v219
  %v834 = vunpack.c.l.b16 %v220
  %v835 = vunpack.c.l.b16 %v221
  %v836 = vunpack.c.l.b16 %v222
  %v837 = vunpack.c.l.b16 %v223
  %v838 = vunpack.c.l.b16 %v224
  %v839 = vunpack.c.l.b16 %v225
  %v840 = vunpack.c.l.b16 %v226
  %v841 = vunpack.c.l.b16 %v227
  %v842 = vpack.c.b16 %v699, %v698
  %v843 = vpack.c.b16 %v701, %v700
  %v844 = vpack.c.b16 %v703, %v702
  %v845 = vpack.c.b16 %v705, %v704
  %v846 = vpack.c.b16 %v707, %v706
  %v847 = vpack.c.b16 %v709, %v708
  %v848 = vpack.c.b16 %v711, %v710
  %v849 = vpack.c.b16 %v713, %v712
  %v850 = vpack.c.b16 %v715, %v714
  %v851 = vpack.c.b16 %v717, %v716
  %v852 = vpack.c.b16 %v719, %v718
  %v853 = vpack.c.b16 %v721, %v720
  %v854 = vpack.c.b16 %v723, %v722
  %v855 = vpack.c.b16 %v725, %v724
  %v856 = vpack.c.b16 %v727, %v726
  %v857 = vpack.c.b16 %v729, %v728
  %v858 = vpack.c.b16 %v731, %v730
  %v859 = vpack.c.b16 %v733, %v732
  %v860 = vpack.c.b16 %v735, %v734
  %v861 = vpack.c.b16 %v737, %v736
  %v862 = vpack.c.b16 %v739, %v738
  %v863 = vpack.c.b16 %v741, %v740
  %v864 = vpack.c.b16 %v743, %v742
  %v865 = vpack.c.b16 %v745, %v744
  %v866 = vpack.c.b16 %v747, %v746
  %v867 = vpack.c.b16 %v749, %v748
  %v868 = vpack.c.b16 %v751, %v750
  %v869 = vpack.c.b16 %v753, %v752
  %v870 = vpack.c.b16 %v755, %v754
  %v871 = vpack.c.b16 %v757, %v756
  %v872 = vpack.c.b16 %v759, %v758
  %v873 = vpack.c.b16 %v761, %v760
  %v874 = vpack.c.b16 %v763, %v762
  %v875 = vpack.c.b16 %v765, %v764
  %v876 = vpack.c.b16 %v767, %v766
  %v877 = vpack.c.b16 %v769, %v768
  %v878 = vpack.c.b16 %v771, %v770
  %v879 = vpack.c.b16 %v773, %v772
  %v880 = vpack.c.b16 %v775, %v774
  %v881 = vpack.c.b16 %v777, %v776
  %v882 = vpack.c.b16 %v779, %v778
  %v883 = vpack.c.b16 %v781, %v780
  %v884 = vpack.c.b16 %v783, %v782
  %v885 = vpack.c.b16 %v785, %v784
  %v886 = vpack.c.b16 %v787, %v786
  %v887 = vpack.c.b16 %v789, %v788
  %v888 = vpack.c.b16 %v791, %v790
  %v889 = vpack.c.b16 %v793, %v792
  %v890 = vpack.c.b16 %v795, %v794
  %v891 = vpack.c.b16 %v797, %v796
  %v892 = vpack.c.b16 %v799, %v798
  %v893 = vpack.c.b16 %v801, %v800
  %v894 = vpack.c.b16 %v803, %v802
  %v895 = vpack.c.b16 %v805, %v804
  %v896 = vpack.c.b16 %v807, %v806
  %v897 = vpack.c.b16 %v809, %v808
  %v898 = vpack.c.b16 %v811, %v810
  %v899 = vpack.c.b16 %v813, %v812
  %v900 = vpack.c.b16 %v815, %v814
  %v901 = vpack.c.b16 %v817, %v816
  %v902 = vpack.c.b16 %v819, %v818
  %v903 = vpack.c.b16 %v821, %v820
  %v904 = vpack.c.b16 %v823, %v822
  %v905 = vpack.c.b16 %v825, %v824
  %v906 = vpack.c.b16 %v827, %v826
  %v907 = vpack.c.b16 %v829, %v828
  %v908 = vpack.c.b16 %v831, %v830
  %v909 = vpack.c.b16 %v833, %v832
  %v910 = vpack.c.b16 %v835, %v834
  %v911 = vpack.c.b16 %v837, %v836
  %v912 = vpack.c.b16 %v839, %v838
  %v913 = vpack.c.b16 %v841, %v840
  %986 = vmatpush.bf16.msra.mxu0 %v849
  %987 = vmatpush.bf16.msra.mxu0 %v848
  %988 = vmatpush.bf16.msra.mxu0 %v847
  %989 = vmatpush.bf16.msra.mxu0 %v846
  %990 = vmatpush.bf16.msra.mxu0 %v845
  %991 = vmatpush.bf16.msra.mxu0 %v844
  %992 = vmatpush.bf16.msra.mxu0 %v843
  %993 = vmatpush.bf16.msra.mxu0 %v842
  %994 = vmatmul.bf16.gmra.mxu0 %v428
  %v995 = vpop.f32.mrf.mxu0
  %v996 = vadd.f32 %v230, %v995
  %v997 = vpop.f32.mrf.mxu0
  %v998 = vadd.f32 %v230, %v997
  %999 = vmatmul.bf16.gmra.mxu0 %v437
  %v1000 = vpop.f32.mrf.mxu0
  %v1001 = vadd.f32 %v230, %v1000
  %v1002 = vpop.f32.mrf.mxu0
  %v1003 = vadd.f32 %v230, %v1002
  %1004 = vmatmul.bf16.gmra.mxu0 %v446
  %v1005 = vpop.f32.mrf.mxu0
  %v1006 = vadd.f32 %v230, %v1005
  %v1007 = vpop.f32.mrf.mxu0
  %v1008 = vadd.f32 %v230, %v1007
  %1009 = vmatmul.bf16.gmra.mxu0 %v455
  %v1010 = vpop.f32.mrf.mxu0
  %v1011 = vadd.f32 %v230, %v1010
  %v1012 = vpop.f32.mrf.mxu0
  %v1013 = vadd.f32 %v230, %v1012
  %1014 = vmatmul.bf16.gmra.mxu0 %v464
  %v1015 = vpop.f32.mrf.mxu0
  %v1016 = vadd.f32 %v230, %v1015
  %v1017 = vpop.f32.mrf.mxu0
  %v1018 = vadd.f32 %v230, %v1017
  %1019 = vmatmul.bf16.gmra.mxu0 %v473
  %v1020 = vpop.f32.mrf.mxu0
  %v1021 = vadd.f32 %v230, %v1020
  %v1022 = vpop.f32.mrf.mxu0
  %v1023 = vadd.f32 %v230, %v1022
  %1024 = vmatmul.bf16.gmra.mxu0 %v482
  %v1025 = vpop.f32.mrf.mxu0
  %v1026 = vadd.f32 %v230, %v1025
  %v1027 = vpop.f32.mrf.mxu0
  %v1028 = vadd.f32 %v230, %v1027
  %1029 = vdwg.mxu0
  %1030 = vmatpush.bf16.msra.mxu0 %v857
  %1031 = vmatpush.bf16.msra.mxu0 %v856
  %1032 = vmatpush.bf16.msra.mxu0 %v855
  %1033 = vmatpush.bf16.msra.mxu0 %v854
  %1034 = vmatpush.bf16.msra.mxu0 %v853
  %1035 = vmatpush.bf16.msra.mxu0 %v852
  %1036 = vmatpush.bf16.msra.mxu0 %v851
  %1037 = vmatpush.bf16.msra.mxu0 %v850
  %1038 = vmatmul.bf16.gmra.mxu0 %v429
  %v1039 = vpop.f32.mrf.mxu0
  %v1040 = vadd.f32 %v996, %v1039
  %v1041 = vpop.f32.mrf.mxu0
  %v1042 = vadd.f32 %v998, %v1041
  %1043 = vmatmul.bf16.gmra.mxu0 %v438
  %v1044 = vpop.f32.mrf.mxu0
  %v1045 = vadd.f32 %v1001, %v1044
  %v1046 = vpop.f32.mrf.mxu0
  %v1047 = vadd.f32 %v1003, %v1046
  %1048 = vmatmul.bf16.gmra.mxu0 %v447
  %v1049 = vpop.f32.mrf.mxu0
  %v1050 = vadd.f32 %v1006, %v1049
  %v1051 = vpop.f32.mrf.mxu0
  %v1052 = vadd.f32 %v1008, %v1051
  %1053 = vmatmul.bf16.gmra.mxu0 %v456
  %v1054 = vpop.f32.mrf.mxu0
  %v1055 = vadd.f32 %v1011, %v1054
  %v1056 = vpop.f32.mrf.mxu0
  %v1057 = vadd.f32 %v1013, %v1056
  %1058 = vmatmul.bf16.gmra.mxu0 %v465
  %v1059 = vpop.f32.mrf.mxu0
  %v1060 = vadd.f32 %v1016, %v1059
  %v1061 = vpop.f32.mrf.mxu0
  %v1062 = vadd.f32 %v1018, %v1061
  %1063 = vmatmul.bf16.gmra.mxu0 %v474
  %v1064 = vpop.f32.mrf.mxu0
  %v1065 = vadd.f32 %v1021, %v1064
  %v1066 = vpop.f32.mrf.mxu0
  %v1067 = vadd.f32 %v1023, %v1066
  %1068 = vmatmul.bf16.gmra.mxu0 %v483
  %v1069 = vpop.f32.mrf.mxu0
  %v1070 = vadd.f32 %v1026, %v1069
  %v1071 = vpop.f32.mrf.mxu0
  %v1072 = vadd.f32 %v1028, %v1071
  %1073 = vdwg.mxu0
  %1074 = vmatpush.bf16.msra.mxu0 %v865
  %1075 = vmatpush.bf16.msra.mxu0 %v864
  %1076 = vmatpush.bf16.msra.mxu0 %v863
  %1077 = vmatpush.bf16.msra.mxu0 %v862
  %1078 = vmatpush.bf16.msra.mxu0 %v861
  %1079 = vmatpush.bf16.msra.mxu0 %v860
  %1080 = vmatpush.bf16.msra.mxu0 %v859
  %1081 = vmatpush.bf16.msra.mxu0 %v858
  %1082 = vmatmul.bf16.gmra.mxu0 %v430
  %v1083 = vpop.f32.mrf.mxu0
  %v1084 = vadd.f32 %v1040, %v1083
  %v1085 = vpop.f32.mrf.mxu0
  %v1086 = vadd.f32 %v1042, %v1085
  %1087 = vmatmul.bf16.gmra.mxu0 %v439
  %v1088 = vpop.f32.mrf.mxu0
  %v1089 = vadd.f32 %v1045, %v1088
  %v1090 = vpop.f32.mrf.mxu0
  %v1091 = vadd.f32 %v1047, %v1090
  %1092 = vmatmul.bf16.gmra.mxu0 %v448
  %v1093 = vpop.f32.mrf.mxu0
  %v1094 = vadd.f32 %v1050, %v1093
  %v1095 = vpop.f32.mrf.mxu0
  %v1096 = vadd.f32 %v1052, %v1095
  %1097 = vmatmul.bf16.gmra.mxu0 %v457
  %v1098 = vpop.f32.mrf.mxu0
  %v1099 = vadd.f32 %v1055, %v1098
  %v1100 = vpop.f32.mrf.mxu0
  %v1101 = vadd.f32 %v1057, %v1100
  %1102 = vmatmul.bf16.gmra.mxu0 %v466
  %v1103 = vpop.f32.mrf.mxu0
  %v1104 = vadd.f32 %v1060, %v1103
  %v1105 = vpop.f32.mrf.mxu0
  %v1106 = vadd.f32 %v1062, %v1105
  %1107 = vmatmul.bf16.gmra.mxu0 %v475
  %v1108 = vpop.f32.mrf.mxu0
  %v1109 = vadd.f32 %v1065, %v1108
  %v1110 = vpop.f32.mrf.mxu0
  %v1111 = vadd.f32 %v1067, %v1110
  %1112 = vmatmul.bf16.gmra.mxu0 %v484
  %v1113 = vpop.f32.mrf.mxu0
  %v1114 = vadd.f32 %v1070, %v1113
  %v1115 = vpop.f32.mrf.mxu0
  %v1116 = vadd.f32 %v1072, %v1115
  %1117 = vdwg.mxu0
  %1118 = vmatpush.bf16.msra.mxu0 %v873
  %1119 = vmatpush.bf16.msra.mxu0 %v872
  %1120 = vmatpush.bf16.msra.mxu0 %v871
  %1121 = vmatpush.bf16.msra.mxu0 %v870
  %1122 = vmatpush.bf16.msra.mxu0 %v869
  %1123 = vmatpush.bf16.msra.mxu0 %v868
  %1124 = vmatpush.bf16.msra.mxu0 %v867
  %1125 = vmatpush.bf16.msra.mxu0 %v866
  %1126 = vmatmul.bf16.gmra.mxu0 %v431
  %v1127 = vpop.f32.mrf.mxu0
  %v1128 = vadd.f32 %v1084, %v1127
  %v1129 = vpop.f32.mrf.mxu0
  %v1130 = vadd.f32 %v1086, %v1129
  %1131 = vmatmul.bf16.gmra.mxu0 %v440
  %v1132 = vpop.f32.mrf.mxu0
  %v1133 = vadd.f32 %v1089, %v1132
  %v1134 = vpop.f32.mrf.mxu0
  %v1135 = vadd.f32 %v1091, %v1134
  %1136 = vmatmul.bf16.gmra.mxu0 %v449
  %v1137 = vpop.f32.mrf.mxu0
  %v1138 = vadd.f32 %v1094, %v1137
  %v1139 = vpop.f32.mrf.mxu0
  %v1140 = vadd.f32 %v1096, %v1139
  %1141 = vmatmul.bf16.gmra.mxu0 %v458
  %v1142 = vpop.f32.mrf.mxu0
  %v1143 = vadd.f32 %v1099, %v1142
  %v1144 = vpop.f32.mrf.mxu0
  %v1145 = vadd.f32 %v1101, %v1144
  %1146 = vmatmul.bf16.gmra.mxu0 %v467
  %v1147 = vpop.f32.mrf.mxu0
  %v1148 = vadd.f32 %v1104, %v1147
  %v1149 = vpop.f32.mrf.mxu0
  %v1150 = vadd.f32 %v1106, %v1149
  %1151 = vmatmul.bf16.gmra.mxu0 %v476
  %v1152 = vpop.f32.mrf.mxu0
  %v1153 = vadd.f32 %v1109, %v1152
  %v1154 = vpop.f32.mrf.mxu0
  %v1155 = vadd.f32 %v1111, %v1154
  %1156 = vmatmul.bf16.gmra.mxu0 %v485
  %v1157 = vpop.f32.mrf.mxu0
  %v1158 = vadd.f32 %v1114, %v1157
  %v1159 = vpop.f32.mrf.mxu0
  %v1160 = vadd.f32 %v1116, %v1159
  %1161 = vdwg.mxu0
  %1162 = vmatpush.bf16.msra.mxu0 %v881
  %1163 = vmatpush.bf16.msra.mxu0 %v880
  %1164 = vmatpush.bf16.msra.mxu0 %v879
  %1165 = vmatpush.bf16.msra.mxu0 %v878
  %1166 = vmatpush.bf16.msra.mxu0 %v877
  %1167 = vmatpush.bf16.msra.mxu0 %v876
  %1168 = vmatpush.bf16.msra.mxu0 %v875
  %1169 = vmatpush.bf16.msra.mxu0 %v874
  %1170 = vmatmul.bf16.gmra.mxu0 %v432
  %v1171 = vpop.f32.mrf.mxu0
  %v1172 = vadd.f32 %v1128, %v1171
  %v1173 = vpop.f32.mrf.mxu0
  %v1174 = vadd.f32 %v1130, %v1173
  %1175 = vmatmul.bf16.gmra.mxu0 %v441
  %v1176 = vpop.f32.mrf.mxu0
  %v1177 = vadd.f32 %v1133, %v1176
  %v1178 = vpop.f32.mrf.mxu0
  %v1179 = vadd.f32 %v1135, %v1178
  %1180 = vmatmul.bf16.gmra.mxu0 %v450
  %v1181 = vpop.f32.mrf.mxu0
  %v1182 = vadd.f32 %v1138, %v1181
  %v1183 = vpop.f32.mrf.mxu0
  %v1184 = vadd.f32 %v1140, %v1183
  %1185 = vmatmul.bf16.gmra.mxu0 %v459
  %v1186 = vpop.f32.mrf.mxu0
  %v1187 = vadd.f32 %v1143, %v1186
  %v1188 = vpop.f32.mrf.mxu0
  %v1189 = vadd.f32 %v1145, %v1188
  %1190 = vmatmul.bf16.gmra.mxu0 %v468
  %v1191 = vpop.f32.mrf.mxu0
  %v1192 = vadd.f32 %v1148, %v1191
  %v1193 = vpop.f32.mrf.mxu0
  %v1194 = vadd.f32 %v1150, %v1193
  %1195 = vmatmul.bf16.gmra.mxu0 %v477
  %v1196 = vpop.f32.mrf.mxu0
  %v1197 = vadd.f32 %v1153, %v1196
  %v1198 = vpop.f32.mrf.mxu0
  %v1199 = vadd.f32 %v1155, %v1198
  %1200 = vmatmul.bf16.gmra.mxu0 %v486
  %v1201 = vpop.f32.mrf.mxu0
  %v1202 = vadd.f32 %v1158, %v1201
  %v1203 = vpop.f32.mrf.mxu0
  %v1204 = vadd.f32 %v1160, %v1203
  %1205 = vdwg.mxu0
  %1206 = vmatpush.bf16.msra.mxu0 %v889
  %1207 = vmatpush.bf16.msra.mxu0 %v888
  %1208 = vmatpush.bf16.msra.mxu0 %v887
  %1209 = vmatpush.bf16.msra.mxu0 %v886
  %1210 = vmatpush.bf16.msra.mxu0 %v885
  %1211 = vmatpush.bf16.msra.mxu0 %v884
  %1212 = vmatpush.bf16.msra.mxu0 %v883
  %1213 = vmatpush.bf16.msra.mxu0 %v882
  %1214 = vmatmul.bf16.gmra.mxu0 %v433
  %v1215 = vpop.f32.mrf.mxu0
  %v1216 = vadd.f32 %v1172, %v1215
  %v1217 = vpop.f32.mrf.mxu0
  %v1218 = vadd.f32 %v1174, %v1217
  %1219 = vmatmul.bf16.gmra.mxu0 %v442
  %v1220 = vpop.f32.mrf.mxu0
  %v1221 = vadd.f32 %v1177, %v1220
  %v1222 = vpop.f32.mrf.mxu0
  %v1223 = vadd.f32 %v1179, %v1222
  %1224 = vmatmul.bf16.gmra.mxu0 %v451
  %v1225 = vpop.f32.mrf.mxu0
  %v1226 = vadd.f32 %v1182, %v1225
  %v1227 = vpop.f32.mrf.mxu0
  %v1228 = vadd.f32 %v1184, %v1227
  %1229 = vmatmul.bf16.gmra.mxu0 %v460
  %v1230 = vpop.f32.mrf.mxu0
  %v1231 = vadd.f32 %v1187, %v1230
  %v1232 = vpop.f32.mrf.mxu0
  %v1233 = vadd.f32 %v1189, %v1232
  %1234 = vmatmul.bf16.gmra.mxu0 %v469
  %v1235 = vpop.f32.mrf.mxu0
  %v1236 = vadd.f32 %v1192, %v1235
  %v1237 = vpop.f32.mrf.mxu0
  %v1238 = vadd.f32 %v1194, %v1237
  %1239 = vmatmul.bf16.gmra.mxu0 %v478
  %v1240 = vpop.f32.mrf.mxu0
  %v1241 = vadd.f32 %v1197, %v1240
  %v1242 = vpop.f32.mrf.mxu0
  %v1243 = vadd.f32 %v1199, %v1242
  %1244 = vmatmul.bf16.gmra.mxu0 %v487
  %v1245 = vpop.f32.mrf.mxu0
  %v1246 = vadd.f32 %v1202, %v1245
  %v1247 = vpop.f32.mrf.mxu0
  %v1248 = vadd.f32 %v1204, %v1247
  %1249 = vdwg.mxu0
  %1250 = vmatpush.bf16.msra.mxu0 %v897
  %1251 = vmatpush.bf16.msra.mxu0 %v896
  %1252 = vmatpush.bf16.msra.mxu0 %v895
  %1253 = vmatpush.bf16.msra.mxu0 %v894
  %1254 = vmatpush.bf16.msra.mxu0 %v893
  %1255 = vmatpush.bf16.msra.mxu0 %v892
  %1256 = vmatpush.bf16.msra.mxu0 %v891
  %1257 = vmatpush.bf16.msra.mxu0 %v890
  %1258 = vmatmul.bf16.gmra.mxu0 %v434
  %v1259 = vpop.f32.mrf.mxu0
  %v1260 = vadd.f32 %v1216, %v1259
  %v1261 = vpop.f32.mrf.mxu0
  %v1262 = vadd.f32 %v1218, %v1261
  %1263 = vmatmul.bf16.gmra.mxu0 %v443
  %v1264 = vpop.f32.mrf.mxu0
  %v1265 = vadd.f32 %v1221, %v1264
  %v1266 = vpop.f32.mrf.mxu0
  %v1267 = vadd.f32 %v1223, %v1266
  %1268 = vmatmul.bf16.gmra.mxu0 %v452
  %v1269 = vpop.f32.mrf.mxu0
  %v1270 = vadd.f32 %v1226, %v1269
  %v1271 = vpop.f32.mrf.mxu0
  %v1272 = vadd.f32 %v1228, %v1271
  %1273 = vmatmul.bf16.gmra.mxu0 %v461
  %v1274 = vpop.f32.mrf.mxu0
  %v1275 = vadd.f32 %v1231, %v1274
  %v1276 = vpop.f32.mrf.mxu0
  %v1277 = vadd.f32 %v1233, %v1276
  %1278 = vmatmul.bf16.gmra.mxu0 %v470
  %v1279 = vpop.f32.mrf.mxu0
  %v1280 = vadd.f32 %v1236, %v1279
  %v1281 = vpop.f32.mrf.mxu0
  %v1282 = vadd.f32 %v1238, %v1281
  %1283 = vmatmul.bf16.gmra.mxu0 %v479
  %v1284 = vpop.f32.mrf.mxu0
  %v1285 = vadd.f32 %v1241, %v1284
  %v1286 = vpop.f32.mrf.mxu0
  %v1287 = vadd.f32 %v1243, %v1286
  %1288 = vmatmul.bf16.gmra.mxu0 %v488
  %v1289 = vpop.f32.mrf.mxu0
  %v1290 = vadd.f32 %v1246, %v1289
  %v1291 = vpop.f32.mrf.mxu0
  %v1292 = vadd.f32 %v1248, %v1291
  %1293 = vdwg.mxu0
  %1294 = vmatpush.bf16.msra.mxu0 %v905
  %1295 = vmatpush.bf16.msra.mxu0 %v904
  %1296 = vmatpush.bf16.msra.mxu0 %v903
  %1297 = vmatpush.bf16.msra.mxu0 %v902
  %1298 = vmatpush.bf16.msra.mxu0 %v901
  %1299 = vmatpush.bf16.msra.mxu0 %v900
  %1300 = vmatpush.bf16.msra.mxu0 %v899
  %1301 = vmatpush.bf16.msra.mxu0 %v898
  %1302 = vmatmul.bf16.gmra.mxu0 %v435
  %v1303 = vpop.f32.mrf.mxu0
  %v1304 = vadd.f32 %v1260, %v1303
  %v1305 = vpop.f32.mrf.mxu0
  %v1306 = vadd.f32 %v1262, %v1305
  %1307 = vmatmul.bf16.gmra.mxu0 %v444
  %v1308 = vpop.f32.mrf.mxu0
  %v1309 = vadd.f32 %v1265, %v1308
  %v1310 = vpop.f32.mrf.mxu0
  %v1311 = vadd.f32 %v1267, %v1310
  %1312 = vmatmul.bf16.gmra.mxu0 %v453
  %v1313 = vpop.f32.mrf.mxu0
  %v1314 = vadd.f32 %v1270, %v1313
  %v1315 = vpop.f32.mrf.mxu0
  %v1316 = vadd.f32 %v1272, %v1315
  %1317 = vmatmul.bf16.gmra.mxu0 %v462
  %v1318 = vpop.f32.mrf.mxu0
  %v1319 = vadd.f32 %v1275, %v1318
  %v1320 = vpop.f32.mrf.mxu0
  %v1321 = vadd.f32 %v1277, %v1320
  %1322 = vmatmul.bf16.gmra.mxu0 %v471
  %v1323 = vpop.f32.mrf.mxu0
  %v1324 = vadd.f32 %v1280, %v1323
  %v1325 = vpop.f32.mrf.mxu0
  %v1326 = vadd.f32 %v1282, %v1325
  %1327 = vmatmul.bf16.gmra.mxu0 %v480
  %v1328 = vpop.f32.mrf.mxu0
  %v1329 = vadd.f32 %v1285, %v1328
  %v1330 = vpop.f32.mrf.mxu0
  %v1331 = vadd.f32 %v1287, %v1330
  %1332 = vmatmul.bf16.gmra.mxu0 %v489
  %v1333 = vpop.f32.mrf.mxu0
  %v1334 = vadd.f32 %v1290, %v1333
  %v1335 = vpop.f32.mrf.mxu0
  %v1336 = vadd.f32 %v1292, %v1335
  %1337 = vdwg.mxu0
  %1338 = vmatpush.bf16.msra.mxu0 %v913
  %1339 = vmatpush.bf16.msra.mxu0 %v912
  %1340 = vmatpush.bf16.msra.mxu0 %v911
  %1341 = vmatpush.bf16.msra.mxu0 %v910
  %1342 = vmatpush.bf16.msra.mxu0 %v909
  %1343 = vmatpush.bf16.msra.mxu0 %v908
  %1344 = vmatpush.bf16.msra.mxu0 %v907
  %1345 = vmatpush.bf16.msra.mxu0 %v906
  %1346 = vmatmul.bf16.gmra.mxu0 %v436
  %v1347 = vpop.f32.mrf.mxu0
  %v1348 = vadd.f32 %v1304, %v1347
  %v1349 = vpop.f32.mrf.mxu0
  %v1350 = vadd.f32 %v1306, %v1349
  %1351 = vmatmul.bf16.gmra.mxu0 %v445
  %v1352 = vpop.f32.mrf.mxu0
  %v1353 = vadd.f32 %v1309, %v1352
  %v1354 = vpop.f32.mrf.mxu0
  %v1355 = vadd.f32 %v1311, %v1354
  %1356 = vmatmul.bf16.gmra.mxu0 %v454
  %v1357 = vpop.f32.mrf.mxu0
  %v1358 = vadd.f32 %v1314, %v1357
  %v1359 = vpop.f32.mrf.mxu0
  %v1360 = vadd.f32 %v1316, %v1359
  %1361 = vmatmul.bf16.gmra.mxu0 %v463
  %v1362 = vpop.f32.mrf.mxu0
  %v1363 = vadd.f32 %v1319, %v1362
  %v1364 = vpop.f32.mrf.mxu0
  %v1365 = vadd.f32 %v1321, %v1364
  %1366 = vmatmul.bf16.gmra.mxu0 %v472
  %v1367 = vpop.f32.mrf.mxu0
  %v1368 = vadd.f32 %v1324, %v1367
  %v1369 = vpop.f32.mrf.mxu0
  %v1370 = vadd.f32 %v1326, %v1369
  %1371 = vmatmul.bf16.gmra.mxu0 %v481
  %v1372 = vpop.f32.mrf.mxu0
  %v1373 = vadd.f32 %v1329, %v1372
  %v1374 = vpop.f32.mrf.mxu0
  %v1375 = vadd.f32 %v1331, %v1374
  %1376 = vmatmul.bf16.gmra.mxu0 %v490
  %v1377 = vpop.f32.mrf.mxu0
  %v1378 = vadd.f32 %v1334, %v1377
  %v1379 = vpop.f32.mrf.mxu0
  %v1380 = vadd.f32 %v1336, %v1379
  %1381 = vdwg.mxu0
  %vm1382 = vcmp.gt.f32.partialorder %v1348, 0.0
  %vm1383 = vcmp.gt.f32.partialorder %v1350, 0.0
  %vm1384 = vcmp.gt.f32.partialorder %v1353, 0.0
  %vm1385 = vcmp.gt.f32.partialorder %v1355, 0.0
  %vm1386 = vcmp.gt.f32.partialorder %v1358, 0.0
  %vm1387 = vcmp.gt.f32.partialorder %v1360, 0.0
  %vm1388 = vcmp.gt.f32.partialorder %v1363, 0.0
  %vm1389 = vcmp.gt.f32.partialorder %v1365, 0.0
  %vm1390 = vcmp.gt.f32.partialorder %v1368, 0.0
  %vm1391 = vcmp.gt.f32.partialorder %v1370, 0.0
  %vm1392 = vcmp.gt.f32.partialorder %v1373, 0.0
  %vm1393 = vcmp.gt.f32.partialorder %v1375, 0.0
  %vm1394 = vcmp.gt.f32.partialorder %v1378, 0.0
  %vm1395 = vcmp.gt.f32.partialorder %v1380, 0.0
  %v1396 = vmin.f32 %v1348, 0.0
  %v1397 = vmin.f32 %v1350, 0.0
  %v1398 = vmin.f32 %v1353, 0.0
  %v1399 = vmin.f32 %v1355, 0.0
  %v1400 = vmin.f32 %v1358, 0.0
  %v1401 = vmin.f32 %v1360, 0.0
  %v1402 = vmin.f32 %v1363, 0.0
  %v1403 = vmin.f32 %v1365, 0.0
  %v1404 = vmin.f32 %v1368, 0.0
  %v1405 = vmin.f32 %v1370, 0.0
  %v1406 = vmin.f32 %v1373, 0.0
  %v1407 = vmin.f32 %v1375, 0.0
  %v1408 = vmin.f32 %v1378, 0.0
  %v1409 = vmin.f32 %v1380, 0.0
  %v1410 = vmul.f32 %v1396, 1.442695
  %v1411 = vpow.pop %v1410
  %v1412 = vmul.f32 %v1397, 1.442695
  %v1413 = vpow.pop %v1412
  %v1414 = vmul.f32 %v1398, 1.442695
  %v1415 = vpow.pop %v1414
  %v1416 = vmul.f32 %v1399, 1.442695
  %v1417 = vpow.pop %v1416
  %v1418 = vmul.f32 %v1400, 1.442695
  %v1419 = vpow.pop %v1418
  %v1420 = vmul.f32 %v1401, 1.442695
  %v1421 = vpow.pop %v1420
  %v1422 = vmul.f32 %v1402, 1.442695
  %v1423 = vpow.pop %v1422
  %v1424 = vmul.f32 %v1403, 1.442695
  %v1425 = vpow.pop %v1424
  %v1426 = vmul.f32 %v1404, 1.442695
  %v1427 = vpow.pop %v1426
  %v1428 = vmul.f32 %v1405, 1.442695
  %v1429 = vpow.pop %v1428
  %v1430 = vmul.f32 %v1406, 1.442695
  %v1431 = vpow.pop %v1430
  %v1432 = vmul.f32 %v1407, 1.442695
  %v1433 = vpow.pop %v1432
  %v1434 = vmul.f32 %v1408, 1.442695
  %v1435 = vpow.pop %v1434
  %v1436 = vmul.f32 %v1409, 1.442695
  %v1437 = vpow.pop %v1436
  %v1438 = vsub.f32 %v1411, 1.0
  %v1439 = vsub.f32 %v1413, 1.0
  %v1440 = vsub.f32 %v1415, 1.0
  %v1441 = vsub.f32 %v1417, 1.0
  %v1442 = vsub.f32 %v1419, 1.0
  %v1443 = vsub.f32 %v1421, 1.0
  %v1444 = vsub.f32 %v1423, 1.0
  %v1445 = vsub.f32 %v1425, 1.0
  %v1446 = vsub.f32 %v1427, 1.0
  %v1447 = vsub.f32 %v1429, 1.0
  %v1448 = vsub.f32 %v1431, 1.0
  %v1449 = vsub.f32 %v1433, 1.0
  %v1450 = vsub.f32 %v1435, 1.0
  %v1451 = vsub.f32 %v1437, 1.0
  %v1452 = vsel %vm1382, %v1348, %v1438
  %v1453 = vsel %vm1383, %v1350, %v1439
  %v1454 = vsel %vm1384, %v1353, %v1440
  %v1455 = vsel %vm1385, %v1355, %v1441
  %v1456 = vsel %vm1386, %v1358, %v1442
  %v1457 = vsel %vm1387, %v1360, %v1443
  %v1458 = vsel %vm1388, %v1363, %v1444
  %v1459 = vsel %vm1389, %v1365, %v1445
  %v1460 = vsel %vm1390, %v1368, %v1446
  %v1461 = vsel %vm1391, %v1370, %v1447
  %v1462 = vsel %vm1392, %v1373, %v1448
  %v1463 = vsel %vm1393, %v1375, %v1449
  %v1464 = vsel %vm1394, %v1378, %v1450
  %v1465 = vsel %vm1395, %v1380, %v1451
  %v1466 = vpack.c.bf16 %v1452, %v1452
  %v1467 = vpack.c.bf16 %v1453, %v1453
  %v1468 = vpack.c.bf16 %v1454, %v1454
  %v1469 = vpack.c.bf16 %v1455, %v1455
  %v1470 = vpack.c.bf16 %v1456, %v1456
  %v1471 = vpack.c.bf16 %v1457, %v1457
  %v1472 = vpack.c.bf16 %v1458, %v1458
  %v1473 = vpack.c.bf16 %v1459, %v1459
  %v1474 = vpack.c.bf16 %v1460, %v1460
  %v1475 = vpack.c.bf16 %v1461, %v1461
  %v1476 = vpack.c.bf16 %v1462, %v1462
  %v1477 = vpack.c.bf16 %v1463, %v1463
  %v1478 = vpack.c.bf16 %v1464, %v1464
  %v1479 = vpack.c.bf16 %v1465, %v1465
  %vm1480 = vcmask 519168
  %1481 = vst.msk [vmem:[%s3] sm:$0xf] %vm1480, %v1466
  %1482 = vst.msk [vmem:[%s3 + $0x4] sm:$0xf] %vm1480, %v1467
  %1483 = vst.msk [vmem:[%s3 + $0x8] sm:$0xf] %vm1480, %v1468
  %1484 = vst.msk [vmem:[%s3 + $0xc] sm:$0xf] %vm1480, %v1469
  %1485 = vst.msk [vmem:[%s3 + $0x10] sm:$0xf] %vm1480, %v1470
  %1486 = vst.msk [vmem:[%s3 + $0x14] sm:$0xf] %vm1480, %v1471
  %1487 = vst.msk [vmem:[%s3 + $0x18] sm:$0xf] %vm1480, %v1472
  %1488 = vst.msk [vmem:[%s3 + $0x1c] sm:$0xf] %vm1480, %v1473
  %1489 = vst.msk [vmem:[%s3 + $0x20] sm:$0xf] %vm1480, %v1474
  %1490 = vst.msk [vmem:[%s3 + $0x24] sm:$0xf] %vm1480, %v1475
  %1491 = vst.msk [vmem:[%s3 + $0x28] sm:$0xf] %vm1480, %v1476
  %1492 = vst.msk [vmem:[%s3 + $0x2c] sm:$0xf] %vm1480, %v1477
  %1493 = vst.msk [vmem:[%s3 + $0x30] sm:$0xf] %vm1480, %v1478
  %1494 = vst.msk [vmem:[%s3 + $0x34] sm:$0xf] %vm1480, %v1479
  // Predicated region
  $region14: #{ppo_forward.6} parent=0 // pred_check
    _
  $region15: #{ppo_forward.6} parent=0 // pred_check_branch
    %1496 = sbr.rel (0) target = $region17
  $region16: #{ppo_forward.6} parent=0 // pred_region
    _
  $region17: #{ppo_forward.6} parent=0 // pred_fallthru
    _
  // Predicated region
  $region18: #{ppo_forward.6} parent=0 // pred_check
    _
  $region19: #{ppo_forward.6} parent=0 // pred_check_branch
    %1498 = sbr.rel (0) target = $region21
  $region20: #{ppo_forward.6} parent=0 // pred_region
    _
  $region21: #{ppo_forward.6} parent=0 // pred_fallthru
    _

// kernel: ppo_forward.7
$region0: #{ppo_forward.7}
  #allocation0 [shape = 'u32[]', space=smem, size = 0x4, offset = 0x4, fixed_abs, tag = 'smem constant byte address 0x4 - core index']
  #allocation1 [shape = 'u32[72,128]{1,0:T(1,128)}', space=vmem, size = 0x9000, scoped, tag = 'internal scratch']
  #allocation2 [shape = 'f32[8,256]{1,0:T(8,128)}', space=vmem, size = 0x2000, scoped, tag = 'scratch operand']
  %s0 = inlined_call_operand.vmem [shape: bf16[8,3200], index: 0, kind: input, shape index: {}]
  %s1 = inlined_call_operand.vmem [shape: bf16[3200,256], index: 1, kind: input, shape index: {}]
  %s2 = inlined_call_operand.vmem [shape: f32[1,256], index: 2, kind: input, shape index: {}]
  %s3 = inlined_call_operand.vmem [shape: bf16[256,448], index: 3, kind: input, shape index: {}]
  %s4 = inlined_call_operand.vmem [shape: f32[1,448], index: 4, kind: input, shape index: {}]
  %s5 = inlined_call_operand.vmem [shape: bf16[448,448], index: 5, kind: input, shape index: {}]
  %s6 = inlined_call_operand.vmem [shape: f32[1,448], index: 6, kind: input, shape index: {}]
  %s7 = inlined_call_operand.vmem [shape: bf16[448,448], index: 7, kind: input, shape index: {}]
  %s8 = inlined_call_operand.vmem [shape: f32[1,448], index: 8, kind: input, shape index: {}]
  %s9 = inlined_call_operand.vmem [shape: bf16[448,128], index: 9, kind: input, shape index: {}]
  %s10 = inlined_call_operand.vmem [shape: bf16[448,128], index: 10, kind: input, shape index: {}]
  %s11 = inlined_call_operand.vmem [shape: f32[1,128], index: 11, kind: input, shape index: {}]
  %s12 = inlined_call_operand.vmem [shape: f32[8,128], index: 12, kind: output, shape index: {}]
  %s13 = sld [smem:[#allocation0]]
  $region89: #{ppo_forward.7} parent=0
    _
  %s15 = ssub.s32 1, %s13
  %s16 = scalar_select 0, %s15, %s13
  loop: start=0, step=1, limit=7
  $region2: #{ppo_forward.7} parent=0 // loop_pre_header
    _
  $region3: #{ppo_forward.7} parent=0 // loop_header
    %s18 = sphi 0, %s22
    %p19 = scmp.ge.s32.totalorder %s18, 7
    %s28 = sphi 0, %s30
    %s31 = sphi 0, %s28
    %s32 = sphi 0, %s31
    %s48 = sphi 0, %s32
    %s54 = sphi 0, %s56
    %s57 = sphi 0, %s54
    %s58 = sphi 0, %s57
    %s74 = sphi 0, %s58
    %s78 = sphi 0, %s78
    %s80 = sphi 0, %s78
    %s81 = sphi 0, %s80
    %s95 = sphi 0, %s81
    %s99 = sphi 0, %s99
    %s101 = sphi 0, %s99
    %s102 = sphi 0, %s101
    %s116 = sphi 0, %s102
    %s120 = sphi 0, %s120
    %s122 = sphi 0, %s120
    %s123 = sphi 0, %s122
    %s137 = sphi 0, %s123
    %s141 = sphi 0, %s141
    %s143 = sphi 0, %s141
    %s144 = sphi 0, %s143
    %s158 = sphi 0, %s144
    %s162 = sphi 0, %s162
    %s164 = sphi 0, %s162
    %s165 = sphi 0, %s164
    %s179 = sphi 0, %s165
    %s183 = sphi 0, %s183
    %s185 = sphi 0, %s183
    %s186 = sphi 0, %s185
    %s200 = sphi 0, %s186
    %s204 = sphi 0, %s204
    %s206 = sphi 0, %s204
    %s207 = sphi 0, %s206
    %s221 = sphi 0, %s207
    %s225 = sphi 0, %s225
    %s227 = sphi 0, %s225
    %s228 = sphi 0, %s227
    %s242 = sphi 0, %s228
    %s246 = sphi 0, %s246
    %s248 = sphi 0, %s246
    %s249 = sphi 0, %s248
    %s263 = sphi 0, %s249
    %s267 = sphi 0, %s267
    %s269 = sphi 0, %s267
    %s270 = sphi 0, %s269
    %s284 = sphi 0, %s270
    %s288 = sphi 0, %s288
    %s290 = sphi 0, %s288
    %s291 = sphi 0, %s290
    %s305 = sphi 0, %s291
  $region4: #{ppo_forward.7} parent=0 // loop_header_branch
    %21 = sbr.rel (%p19) target = $region8
  $region5: #{ppo_forward.7} parent=0 // loop_body
    %s23 = ssub.s32 %s18, 1
    %s24 = ssub.s32 %s18, 2
    %s25 = sadd.s32 %s18, 1
    %s26 = ssub.s32 %s18, %s25
    %p27 = scmp.eq.s32.totalorder %s26, 0
    %s29 = sadd.s32 %s28, 1
    %s30 = scalar_select %p27, %s28, %s29
    %p33 = pneg %p27
    %p34 = scmp.eq.s32.totalorder %s18, 4
    %p35 = por %p33, %p34
    %p36 = scmp.ne.s32.totalorder %s28, %s31
    %p37 = scmp.eq.s32.totalorder %s18, 0
    %p38 = por %p36, %p37
    %p39 = scmp.ne.s32.totalorder %s28, %s31
    %p40 = scmp.eq.s32.totalorder %s23, 4
    %p41 = por %p39, %p40
    %p42 = scmp.ne.s32.totalorder %s31, %s32
    %p43 = scmp.eq.s32.totalorder %s23, 0
    %p44 = por %p42, %p43
    %p45 = scmp.ne.s32.totalorder %s31, %s32
    %p46 = scmp.eq.s32.totalorder %s24, 4
    %p47 = por %p45, %p46
    %p49 = scmp.ne.s32.totalorder %s32, %s48
    %p50 = scmp.eq.s32.totalorder %s24, 0
    %p51 = por %p49, %p50
    %s52 = ssub.s32 %s18, %s25
    %p53 = scmp.eq.s32.totalorder %s52, 0
    %s55 = sadd.s32 %s54, 1
    %s56 = scalar_select %p53, %s54, %s55
    %p59 = pneg %p53
    %p60 = scmp.eq.s32.totalorder %s18, 4
    %p61 = por %p59, %p60
    %p62 = scmp.ne.s32.totalorder %s54, %s57
    %p63 = scmp.eq.s32.totalorder %s18, 0
    %p64 = por %p62, %p63
    %p65 = scmp.ne.s32.totalorder %s54, %s57
    %p66 = scmp.eq.s32.totalorder %s23, 4
    %p67 = por %p65, %p66
    %p68 = scmp.ne.s32.totalorder %s57, %s58
    %p69 = scmp.eq.s32.totalorder %s23, 0
    %p70 = por %p68, %p69
    %p71 = scmp.ne.s32.totalorder %s57, %s58
    %p72 = scmp.eq.s32.totalorder %s24, 4
    %p73 = por %p71, %p72
    %p75 = scmp.ne.s32.totalorder %s58, %s74
    %p76 = scmp.eq.s32.totalorder %s24, 0
    %p77 = por %p75, %p76
    %s79 = sadd.s32 %s78, 1
    %p82 = scmp.eq.s32.totalorder %s18, 4
    %p83 = scmp.ne.s32.totalorder %s78, %s80
    %p84 = scmp.eq.s32.totalorder %s18, 0
    %p85 = por %p83, %p84
    %p86 = scmp.ne.s32.totalorder %s78, %s80
    %p87 = scmp.eq.s32.totalorder %s23, 4
    %p88 = por %p86, %p87
    %p89 = scmp.ne.s32.totalorder %s80, %s81
    %p90 = scmp.eq.s32.totalorder %s23, 0
    %p91 = por %p89, %p90
    %p92 = scmp.ne.s32.totalorder %s80, %s81
    %p93 = scmp.eq.s32.totalorder %s24, 4
    %p94 = por %p92, %p93
    %p96 = scmp.ne.s32.totalorder %s81, %s95
    %p97 = scmp.eq.s32.totalorder %s24, 0
    %p98 = por %p96, %p97
    %s100 = sadd.s32 %s99, 1
    %p103 = scmp.eq.s32.totalorder %s18, 4
    %p104 = scmp.ne.s32.totalorder %s99, %s101
    %p105 = scmp.eq.s32.totalorder %s18, 0
    %p106 = por %p104, %p105
    %p107 = scmp.ne.s32.totalorder %s99, %s101
    %p108 = scmp.eq.s32.totalorder %s23, 4
    %p109 = por %p107, %p108
    %p110 = scmp.ne.s32.totalorder %s101, %s102
    %p111 = scmp.eq.s32.totalorder %s23, 0
    %p112 = por %p110, %p111
    %p113 = scmp.ne.s32.totalorder %s101, %s102
    %p114 = scmp.eq.s32.totalorder %s24, 4
    %p115 = por %p113, %p114
    %p117 = scmp.ne.s32.totalorder %s102, %s116
    %p118 = scmp.eq.s32.totalorder %s24, 0
    %p119 = por %p117, %p118
    %s121 = sadd.s32 %s120, 1
    %p124 = scmp.eq.s32.totalorder %s18, 4
    %p125 = scmp.ne.s32.totalorder %s120, %s122
    %p126 = scmp.eq.s32.totalorder %s18, 0
    %p127 = por %p125, %p126
    %p128 = scmp.ne.s32.totalorder %s120, %s122
    %p129 = scmp.eq.s32.totalorder %s23, 4
    %p130 = por %p128, %p129
    %p131 = scmp.ne.s32.totalorder %s122, %s123
    %p132 = scmp.eq.s32.totalorder %s23, 0
    %p133 = por %p131, %p132
    %p134 = scmp.ne.s32.totalorder %s122, %s123
    %p135 = scmp.eq.s32.totalorder %s24, 4
    %p136 = por %p134, %p135
    %p138 = scmp.ne.s32.totalorder %s123, %s137
    %p139 = scmp.eq.s32.totalorder %s24, 0
    %p140 = por %p138, %p139
    %s142 = sadd.s32 %s141, 1
    %p145 = scmp.eq.s32.totalorder %s18, 4
    %p146 = scmp.ne.s32.totalorder %s141, %s143
    %p147 = scmp.eq.s32.totalorder %s18, 0
    %p148 = por %p146, %p147
    %p149 = scmp.ne.s32.totalorder %s141, %s143
    %p150 = scmp.eq.s32.totalorder %s23, 4
    %p151 = por %p149, %p150
    %p152 = scmp.ne.s32.totalorder %s143, %s144
    %p153 = scmp.eq.s32.totalorder %s23, 0
    %p154 = por %p152, %p153
    %p155 = scmp.ne.s32.totalorder %s143, %s144
    %p156 = scmp.eq.s32.totalorder %s24, 4
    %p157 = por %p155, %p156
    %p159 = scmp.ne.s32.totalorder %s144, %s158
    %p160 = scmp.eq.s32.totalorder %s24, 0
    %p161 = por %p159, %p160
    %s163 = sadd.s32 %s162, 1
    %p166 = scmp.eq.s32.totalorder %s18, 4
    %p167 = scmp.ne.s32.totalorder %s162, %s164
    %p168 = scmp.eq.s32.totalorder %s18, 0
    %p169 = por %p167, %p168
    %p170 = scmp.ne.s32.totalorder %s162, %s164
    %p171 = scmp.eq.s32.totalorder %s23, 4
    %p172 = por %p170, %p171
    %p173 = scmp.ne.s32.totalorder %s164, %s165
    %p174 = scmp.eq.s32.totalorder %s23, 0
    %p175 = por %p173, %p174
    %p176 = scmp.ne.s32.totalorder %s164, %s165
    %p177 = scmp.eq.s32.totalorder %s24, 4
    %p178 = por %p176, %p177
    %p180 = scmp.ne.s32.totalorder %s165, %s179
    %p181 = scmp.eq.s32.totalorder %s24, 0
    %p182 = por %p180, %p181
    %s184 = sadd.s32 %s183, 1
    %p187 = scmp.eq.s32.totalorder %s18, 4
    %p188 = scmp.ne.s32.totalorder %s183, %s185
    %p189 = scmp.eq.s32.totalorder %s18, 0
    %p190 = por %p188, %p189
    %p191 = scmp.ne.s32.totalorder %s183, %s185
    %p192 = scmp.eq.s32.totalorder %s23, 4
    %p193 = por %p191, %p192
    %p194 = scmp.ne.s32.totalorder %s185, %s186
    %p195 = scmp.eq.s32.totalorder %s23, 0
    %p196 = por %p194, %p195
    %p197 = scmp.ne.s32.totalorder %s185, %s186
    %p198 = scmp.eq.s32.totalorder %s24, 4
    %p199 = por %p197, %p198
    %p201 = scmp.ne.s32.totalorder %s186, %s200
    %p202 = scmp.eq.s32.totalorder %s24, 0
    %p203 = por %p201, %p202
    %s205 = sadd.s32 %s204, 1
    %p208 = scmp.eq.s32.totalorder %s18, 4
    %p209 = scmp.ne.s32.totalorder %s204, %s206
    %p210 = scmp.eq.s32.totalorder %s18, 0
    %p211 = por %p209, %p210
    %p212 = scmp.ne.s32.totalorder %s204, %s206
    %p213 = scmp.eq.s32.totalorder %s23, 4
    %p214 = por %p212, %p213
    %p215 = scmp.ne.s32.totalorder %s206, %s207
    %p216 = scmp.eq.s32.totalorder %s23, 0
    %p217 = por %p215, %p216
    %p218 = scmp.ne.s32.totalorder %s206, %s207
    %p219 = scmp.eq.s32.totalorder %s24, 4
    %p220 = por %p218, %p219
    %p222 = scmp.ne.s32.totalorder %s207, %s221
    %p223 = scmp.eq.s32.totalorder %s24, 0
    %p224 = por %p222, %p223
    %s226 = sadd.s32 %s225, 1
    %p229 = scmp.eq.s32.totalorder %s18, 4
    %p230 = scmp.ne.s32.totalorder %s225, %s227
    %p231 = scmp.eq.s32.totalorder %s18, 0
    %p232 = por %p230, %p231
    %p233 = scmp.ne.s32.totalorder %s225, %s227
    %p234 = scmp.eq.s32.totalorder %s23, 4
    %p235 = por %p233, %p234
    %p236 = scmp.ne.s32.totalorder %s227, %s228
    %p237 = scmp.eq.s32.totalorder %s23, 0
    %p238 = por %p236, %p237
    %p239 = scmp.ne.s32.totalorder %s227, %s228
    %p240 = scmp.eq.s32.totalorder %s24, 4
    %p241 = por %p239, %p240
    %p243 = scmp.ne.s32.totalorder %s228, %s242
    %p244 = scmp.eq.s32.totalorder %s24, 0
    %p245 = por %p243, %p244
    %s247 = sadd.s32 %s246, 1
    %p250 = scmp.eq.s32.totalorder %s18, 4
    %p251 = scmp.ne.s32.totalorder %s246, %s248
    %p252 = scmp.eq.s32.totalorder %s18, 0
    %p253 = por %p251, %p252
    %p254 = scmp.ne.s32.totalorder %s246, %s248
    %p255 = scmp.eq.s32.totalorder %s23, 4
    %p256 = por %p254, %p255
    %p257 = scmp.ne.s32.totalorder %s248, %s249
    %p258 = scmp.eq.s32.totalorder %s23, 0
    %p259 = por %p257, %p258
    %p260 = scmp.ne.s32.totalorder %s248, %s249
    %p261 = scmp.eq.s32.totalorder %s24, 4
    %p262 = por %p260, %p261
    %p264 = scmp.ne.s32.totalorder %s249, %s263
    %p265 = scmp.eq.s32.totalorder %s24, 0
    %p266 = por %p264, %p265
    %s268 = sadd.s32 %s267, 1
    %p271 = scmp.eq.s32.totalorder %s18, 4
    %p272 = scmp.ne.s32.totalorder %s267, %s269
    %p273 = scmp.eq.s32.totalorder %s18, 0
    %p274 = por %p272, %p273
    %p275 = scmp.ne.s32.totalorder %s267, %s269
    %p276 = scmp.eq.s32.totalorder %s23, 4
    %p277 = por %p275, %p276
    %p278 = scmp.ne.s32.totalorder %s269, %s270
    %p279 = scmp.eq.s32.totalorder %s23, 0
    %p280 = por %p278, %p279
    %p281 = scmp.ne.s32.totalorder %s269, %s270
    %p282 = scmp.eq.s32.totalorder %s24, 4
    %p283 = por %p281, %p282
    %p285 = scmp.ne.s32.totalorder %s270, %s284
    %p286 = scmp.eq.s32.totalorder %s24, 0
    %p287 = por %p285, %p286
    %s289 = sadd.s32 %s288, 1
    %p292 = scmp.eq.s32.totalorder %s18, 4
    %p293 = scmp.ne.s32.totalorder %s288, %s290
    %p294 = scmp.eq.s32.totalorder %s18, 0
    %p295 = por %p293, %p294
    %p296 = scmp.ne.s32.totalorder %s288, %s290
    %p297 = scmp.eq.s32.totalorder %s23, 4
    %p298 = por %p296, %p297
    %p299 = scmp.ne.s32.totalorder %s290, %s291
    %p300 = scmp.eq.s32.totalorder %s23, 0
    %p301 = por %p299, %p300
    %p302 = scmp.ne.s32.totalorder %s290, %s291
    %p303 = scmp.eq.s32.totalorder %s24, 4
    %p304 = por %p302, %p303
    %p306 = scmp.ne.s32.totalorder %s291, %s305
    %p307 = scmp.eq.s32.totalorder %s24, 0
    %p308 = por %p306, %p307
    %p309 = scmp.le.s32.totalorder 1, %s18
    %p310 = scmp.lt.s32.totalorder %s18, 6
    %p311 = pnand %p309, %p310
    %p312 = pneg %p311
    // Predicated region
    $region9: #{ppo_forward.7} parent=5 // pred_check
      _
    $region10: #{ppo_forward.7} parent=5 // pred_check_branch
      %314 = sbr.rel (%p311) target = $region12
    $region11: #{ppo_forward.7} parent=5 // pred_region
      %s315 = ssub.s32 %s18, 1
      // Predicated region
      $region13: #{ppo_forward.7} parent=11 // pred_check
        %p316 = pneg %p91
      $region14: #{ppo_forward.7} parent=11 // pred_check_branch
        %318 = sbr.rel (%p316) target = $region16
      $region15: #{ppo_forward.7} parent=11 // pred_region
        _
      $region16: #{ppo_forward.7} parent=11 // pred_fallthru
        _
      // Predicated region
      $region17: #{ppo_forward.7} parent=11 // pred_check
        %p319 = pneg %p112
      $region18: #{ppo_forward.7} parent=11 // pred_check_branch
        %321 = sbr.rel (%p319) target = $region20
      $region19: #{ppo_forward.7} parent=11 // pred_region
        _
      $region20: #{ppo_forward.7} parent=11 // pred_fallthru
        _
      // Predicated region
      $region21: #{ppo_forward.7} parent=11 // pred_check
        %p322 = pneg %p133
      $region22: #{ppo_forward.7} parent=11 // pred_check_branch
        %324 = sbr.rel (%p322) target = $region24
      $region23: #{ppo_forward.7} parent=11 // pred_region
        _
      $region24: #{ppo_forward.7} parent=11 // pred_fallthru
        _
      // Predicated region
      $region25: #{ppo_forward.7} parent=11 // pred_check
        %p325 = pneg %p154
      $region26: #{ppo_forward.7} parent=11 // pred_check_branch
        %327 = sbr.rel (%p325) target = $region28
      $region27: #{ppo_forward.7} parent=11 // pred_region
        _
      $region28: #{ppo_forward.7} parent=11 // pred_fallthru
        _
      // Predicated region
      $region29: #{ppo_forward.7} parent=11 // pred_check
        %p328 = pneg %p175
      $region30: #{ppo_forward.7} parent=11 // pred_check_branch
        %330 = sbr.rel (%p328) target = $region32
      $region31: #{ppo_forward.7} parent=11 // pred_region
        _
      $region32: #{ppo_forward.7} parent=11 // pred_fallthru
        _
      // Predicated region
      $region33: #{ppo_forward.7} parent=11 // pred_check
        %p331 = pneg %p196
      $region34: #{ppo_forward.7} parent=11 // pred_check_branch
        %333 = sbr.rel (%p331) target = $region36
      $region35: #{ppo_forward.7} parent=11 // pred_region
        _
      $region36: #{ppo_forward.7} parent=11 // pred_fallthru
        _
      // Predicated region
      $region37: #{ppo_forward.7} parent=11 // pred_check
        %p334 = pneg %p217
      $region38: #{ppo_forward.7} parent=11 // pred_check_branch
        %336 = sbr.rel (%p334) target = $region40
      $region39: #{ppo_forward.7} parent=11 // pred_region
        _
      $region40: #{ppo_forward.7} parent=11 // pred_fallthru
        _
      // Predicated region
      $region41: #{ppo_forward.7} parent=11 // pred_check
        %p337 = pneg %p238
      $region42: #{ppo_forward.7} parent=11 // pred_check_branch
        %339 = sbr.rel (%p337) target = $region44
      $region43: #{ppo_forward.7} parent=11 // pred_region
        _
      $region44: #{ppo_forward.7} parent=11 // pred_fallthru
        _
      // Predicated region
      $region45: #{ppo_forward.7} parent=11 // pred_check
        %p340 = pneg %p259
      $region46: #{ppo_forward.7} parent=11 // pred_check_branch
        %342 = sbr.rel (%p340) target = $region48
      $region47: #{ppo_forward.7} parent=11 // pred_region
        _
      $region48: #{ppo_forward.7} parent=11 // pred_fallthru
        _
      // Predicated region
      $region49: #{ppo_forward.7} parent=11 // pred_check
        %p343 = pneg %p280
      $region50: #{ppo_forward.7} parent=11 // pred_check_branch
        %345 = sbr.rel (%p343) target = $region52
      $region51: #{ppo_forward.7} parent=11 // pred_region
        _
      $region52: #{ppo_forward.7} parent=11 // pred_fallthru
        _
    $region12: #{ppo_forward.7} parent=5 // pred_fallthru
      _
    %p346 = scmp.lt.s32.totalorder %s18, 5
    // Predicated region
    $region53: #{ppo_forward.7} parent=5 // pred_check
      %p347 = pneg %p346
    $region54: #{ppo_forward.7} parent=5 // pred_check_branch
      %349 = sbr.rel (%p347) target = $region56
    $region55: #{ppo_forward.7} parent=5 // pred_region
      // Predicated region
      $region57: #{ppo_forward.7} parent=55 // pred_check
        %p350 = pneg %p38
      $region58: #{ppo_forward.7} parent=55 // pred_check_branch
        %352 = sbr.rel (%p350) target = $region60
      $region59: #{ppo_forward.7} parent=55 // pred_region
        %s353 = smul.u32 5, %s18
        %p354 = scmp.lt.s32.totalorder %s353, 24
        %s355 = scalar_select %p354, %s353, 24
        %s356 = smul.addr %s355, 4
        %s357 = scalar_lea.vmem %s0, %s356
        %s358 = smul.u32 5, %s18
      $region60: #{ppo_forward.7} parent=55 // pred_fallthru
        _
      // Predicated region
      $region61: #{ppo_forward.7} parent=55 // pred_check
        %p359 = pneg %p64
      $region62: #{ppo_forward.7} parent=55 // pred_check_branch
        %361 = sbr.rel (%p359) target = $region64
      $region63: #{ppo_forward.7} parent=55 // pred_region
        %s362 = smul.u32 80, %s18
        %p363 = scmp.lt.s32.totalorder %s362, 399
        %s364 = scalar_select %p363, %s362, 399
        %s365 = smul.addr %s364, 2
        %s366 = smul.addr %s365, 4
        %s367 = scalar_lea.vmem %s1, %s366
        %s368 = smul.u32 80, %s18
      $region64: #{ppo_forward.7} parent=55 // pred_fallthru
        _
    $region56: #{ppo_forward.7} parent=5 // pred_fallthru
      _
    %p369 = scmp.le.s32.totalorder 1, %s18
    %p370 = scmp.lt.s32.totalorder %s18, 6
    %p371 = pnand %p369, %p370
    %p372 = pneg %p371
    // Predicated region
    $region65: #{ppo_forward.7} parent=5 // pred_check
      _
    $region66: #{ppo_forward.7} parent=5 // pred_check_branch
      %374 = sbr.rel (%p371) target = $region68
    $region67: #{ppo_forward.7} parent=5 // pred_region
      %s375 = ssub.s32 %s18, 1
      %s376 = smul.u32 5, %s23
      %p377 = scmp.lt.s32.totalorder %s376, 24
      %s378 = scalar_select %p377, %s376, 24
      %s379 = smul.addr %s378, 4
      %s380 = scalar_lea.vmem %s0, %s379
      %p381 = pneg %p44
      %p382 = pneg %p41
      %s383 = smul.u32 80, %s23
      %p384 = scmp.lt.s32.totalorder %s383, 399
      %s385 = scalar_select %p384, %s383, 399
      %s386 = smul.addr %s385, 2
      %s387 = smul.addr %s386, 4
      %s388 = scalar_lea.vmem %s1, %s387
      %p389 = pneg %p70
      %p390 = pneg %p67
      %p391 = pneg %p91
      %p392 = pneg %p88
      %p393 = pneg %p112
      %p394 = pneg %p109
      %p395 = pneg %p133
      %p396 = pneg %p130
      %p397 = pneg %p154
      %p398 = pneg %p151
      %p399 = pneg %p175
      %p400 = pneg %p172
      %p401 = pneg %p196
      %p402 = pneg %p193
      %p403 = pneg %p217
      %p404 = pneg %p214
      %p405 = pneg %p238
      %p406 = pneg %p235
      %p407 = pneg %p259
      %p408 = pneg %p256
      %p409 = pneg %p280
      %p410 = pneg %p277
      %p411 = pneg %p301
      %p412 = pneg %p298
      %s413 = smul.u32 5, %s23
      %p414 = scmp.lt.s32.totalorder %s413, 24
      %s415 = scalar_select %p414, %s413, 24
      %s416 = smul.addr %s415, 4
      %s417 = scalar_lea.vmem %s0, %s416
      %s418 = smul.u32 5, %s23
      %s419 = smul.u32 80, %s23
      %p420 = scmp.lt.s32.totalorder %s419, 399
      %s421 = scalar_select %p420, %s419, 399
      %s422 = smul.addr %s421, 2
      %s423 = smul.addr %s422, 4
      %s424 = scalar_lea.vmem %s1, %s423
      %s425 = smul.u32 80, %s23
      %p427 = scmp.eq.s32.totalorder %s23, 0
      // Predicated region
      $region69: #{ppo_forward.7} parent=67 // pred_check
        %p428 = pneg %p427
      $region70: #{ppo_forward.7} parent=67 // pred_check_branch
        %430 = sbr.rel (%p428) target = $region72
      $region71: #{ppo_forward.7} parent=67 // pred_region
        %431 = vst [vmem:[#allocation2] sm:$0xff] 0.0
        %432 = vst [vmem:[#allocation2 + $0x8] sm:$0xff] 0.0
      $region72: #{ppo_forward.7} parent=67 // pred_fallthru
        _
      %v433 = vld [vmem:[#allocation2] sm:$0xff]
      %v434 = vld [vmem:[#allocation2 + $0x8] sm:$0xff]
      %v435 = vld [vmem:[%s417] sm:$0xff]
      %v436 = vld [vmem:[%s417 + $0x8] sm:$0xff]
      %v437 = vld [vmem:[%s417 + $0x10] sm:$0xf]
      %v438 = vld [vmem:[%s424] sm:$0xff]
      %v439 = vld [vmem:[%s424 + $0x8] sm:$0xff]
      %v440 = vld [vmem:[%s424 + $0x10] sm:$0xff]
      %v441 = vld [vmem:[%s424 + $0x18] sm:$0xff]
      %v442 = vld [vmem:[%s424 + $0x20] sm:$0xff]
      %v443 = vld [vmem:[%s424 + $0x28] sm:$0xff]
      %v444 = vld [vmem:[%s424 + $0x30] sm:$0xff]
      %v445 = vld [vmem:[%s424 + $0x38] sm:$0xff]
      %v446 = vld [vmem:[%s424 + $0x40] sm:$0xff]
      %v447 = vld [vmem:[%s424 + $0x48] sm:$0xff]
      %v448 = vld [vmem:[%s424 + $0x50] sm:$0xff]
      %v449 = vld [vmem:[%s424 + $0x58] sm:$0xff]
      %v450 = vld [vmem:[%s424 + $0x60] sm:$0xff]
      %v451 = vld [vmem:[%s424 + $0x68] sm:$0xff]
      %v452 = vld [vmem:[%s424 + $0x70] sm:$0xff]
      %v453 = vld [vmem:[%s424 + $0x78] sm:$0xff]
      %v454 = vld [vmem:[%s424 + $0x80] sm:$0xff]
      %v455 = vld [vmem:[%s424 + $0x88] sm:$0xff]
      %v456 = vld [vmem:[%s424 + $0x90] sm:$0xff]
      %v457 = vld [vmem:[%s424 + $0x98] sm:$0xff]
      %v458 = vld [vmem:[%s424 + $0xa0] sm:$0xff]
      %v459 = vld [vmem:[%s424 + $0xa8] sm:$0xff]
      %v460 = vld [vmem:[%s424 + $0xb0] sm:$0xff]
      %v461 = vld [vmem:[%s424 + $0xb8] sm:$0xff]
      %v462 = vld [vmem:[%s424 + $0xc0] sm:$0xff]
      %v463 = vld [vmem:[%s424 + $0xc8] sm:$0xff]
      %v464 = vld [vmem:[%s424 + $0xd0] sm:$0xff]
      %v465 = vld [vmem:[%s424 + $0xd8] sm:$0xff]
      %v466 = vld [vmem:[%s424 + $0xe0] sm:$0xff]
      %v467 = vld [vmem:[%s424 + $0xe8] sm:$0xff]
      %v468 = vld [vmem:[%s424 + $0xf0] sm:$0xff]
      %v469 = vld [vmem:[%s424 + $0xf8] sm:$0xff]
      %v470 = vld [vmem:[%s424 + $0x100] sm:$0xff]
      %v471 = vld [vmem:[%s424 + $0x108] sm:$0xff]
      %v472 = vld [vmem:[%s424 + $0x110] sm:$0xff]
      %v473 = vld [vmem:[%s424 + $0x118] sm:$0xff]
      %v474 = vld [vmem:[%s424 + $0x120] sm:$0xff]
      %v475 = vld [vmem:[%s424 + $0x128] sm:$0xff]
      %v476 = vld [vmem:[%s424 + $0x130] sm:$0xff]
      %v477 = vld [vmem:[%s424 + $0x138] sm:$0xff]
      %v478 = vld [vmem:[%s424 + $0x140] sm:$0xff]
      %v479 = vld [vmem:[%s424 + $0x148] sm:$0xff]
      %v480 = vld [vmem:[%s424 + $0x150] sm:$0xff]
      %v481 = vld [vmem:[%s424 + $0x158] sm:$0xff]
      %v482 = vld [vmem:[%s424 + $0x160] sm:$0xff]
      %v483 = vld [vmem:[%s424 + $0x168] sm:$0xff]
      %v484 = vld [vmem:[%s424 + $0x170] sm:$0xff]
      %v485 = vld [vmem:[%s424 + $0x178] sm:$0xff]
      %v486 = vld [vmem:[%s424 + $0x180] sm:$0xff]
      %v487 = vld [vmem:[%s424 + $0x188] sm:$0xff]
      %v488 = vld [vmem:[%s424 + $0x190] sm:$0xff]
      %v489 = vld [vmem:[%s424 + $0x198] sm:$0xff]
      %v490 = vld [vmem:[%s424 + $0x1a0] sm:$0xff]
      %v491 = vld [vmem:[%s424 + $0x1a8] sm:$0xff]
      %v492 = vld [vmem:[%s424 + $0x1b0] sm:$0xff]
      %v493 = vld [vmem:[%s424 + $0x1b8] sm:$0xff]
      %v494 = vld [vmem:[%s424 + $0x1c0] sm:$0xff]
      %v495 = vld [vmem:[%s424 + $0x1c8] sm:$0xff]
      %v496 = vld [vmem:[%s424 + $0x1d0] sm:$0xff]
      %v497 = vld [vmem:[%s424 + $0x1d8] sm:$0xff]
      %v498 = vld [vmem:[%s424 + $0x1e0] sm:$0xff]
      %v499 = vld [vmem:[%s424 + $0x1e8] sm:$0xff]
      %v500 = vld [vmem:[%s424 + $0x1f0] sm:$0xff]
      %v501 = vld [vmem:[%s424 + $0x1f8] sm:$0xff]
      %v502 = vld [vmem:[%s424 + $0x200] sm:$0xff]
      %v503 = vld [vmem:[%s424 + $0x208] sm:$0xff]
      %v504 = vld [vmem:[%s424 + $0x210] sm:$0xff]
      %v505 = vld [vmem:[%s424 + $0x218] sm:$0xff]
      %v506 = vld [vmem:[%s424 + $0x220] sm:$0xff]
      %v507 = vld [vmem:[%s424 + $0x228] sm:$0xff]
      %v508 = vld [vmem:[%s424 + $0x230] sm:$0xff]
      %v509 = vld [vmem:[%s424 + $0x238] sm:$0xff]
      %v510 = vld [vmem:[%s424 + $0x240] sm:$0xff]
      %v511 = vld [vmem:[%s424 + $0x248] sm:$0xff]
      %v512 = vld [vmem:[%s424 + $0x250] sm:$0xff]
      %v513 = vld [vmem:[%s424 + $0x258] sm:$0xff]
      %v514 = vld [vmem:[%s424 + $0x260] sm:$0xff]
      %v515 = vld [vmem:[%s424 + $0x268] sm:$0xff]
      %v516 = vld [vmem:[%s424 + $0x270] sm:$0xff]
      %v517 = vld [vmem:[%s424 + $0x278] sm:$0xff]
      %v521 = vunpack.c.l.b16 %v435
      %v522 = vunpack.c.h.b16 %v435
      %v523 = vunpack.c.l.b16 %v436
      %v524 = vunpack.c.h.b16 %v436
      %v525 = vunpack.c.l.b16 %v437
      %v526 = vpack.c.b16 %v521, %v521
      %v527 = vpack.c.b16 %v522, %v522
      %v528 = vpack.c.b16 %v523, %v523
      %v529 = vpack.c.b16 %v524, %v524
      %v530 = vpack.c.b16 %v525, %v525
      %v616 = vunpack.c.l.b16 %v438
      %v617 = vunpack.c.h.b16 %v438
      %v618 = vunpack.c.l.b16 %v439
      %v619 = vunpack.c.h.b16 %v439
      %v620 = vunpack.c.l.b16 %v440
      %v621 = vunpack.c.h.b16 %v440
      %v622 = vunpack.c.l.b16 %v441
      %v623 = vunpack.c.h.b16 %v441
      %v624 = vunpack.c.l.b16 %v442
      %v625 = vunpack.c.h.b16 %v442
      %v626 = vunpack.c.l.b16 %v443
      %v627 = vunpack.c.h.b16 %v443
      %v628 = vunpack.c.l.b16 %v444
      %v629 = vunpack.c.h.b16 %v444
      %v630 = vunpack.c.l.b16 %v445
      %v631 = vunpack.c.h.b16 %v445
      %v632 = vunpack.c.l.b16 %v446
      %v633 = vunpack.c.h.b16 %v446
      %v634 = vunpack.c.l.b16 %v447
      %v635 = vunpack.c.h.b16 %v447
      %v636 = vunpack.c.l.b16 %v448
      %v637 = vunpack.c.h.b16 %v448
      %v638 = vunpack.c.l.b16 %v449
      %v639 = vunpack.c.h.b16 %v449
      %v640 = vunpack.c.l.b16 %v450
      %v641 = vunpack.c.h.b16 %v450
      %v642 = vunpack.c.l.b16 %v451
      %v643 = vunpack.c.h.b16 %v451
      %v644 = vunpack.c.l.b16 %v452
      %v645 = vunpack.c.h.b16 %v452
      %v646 = vunpack.c.l.b16 %v453
      %v647 = vunpack.c.h.b16 %v453
      %v648 = vunpack.c.l.b16 %v454
      %v649 = vunpack.c.h.b16 %v454
      %v650 = vunpack.c.l.b16 %v455
      %v651 = vunpack.c.h.b16 %v455
      %v652 = vunpack.c.l.b16 %v456
      %v653 = vunpack.c.h.b16 %v456
      %v654 = vunpack.c.l.b16 %v457
      %v655 = vunpack.c.h.b16 %v457
      %v656 = vunpack.c.l.b16 %v458
      %v657 = vunpack.c.h.b16 %v458
      %v658 = vunpack.c.l.b16 %v459
      %v659 = vunpack.c.h.b16 %v459
      %v660 = vunpack.c.l.b16 %v460
      %v661 = vunpack.c.h.b16 %v460
      %v662 = vunpack.c.l.b16 %v461
      %v663 = vunpack.c.h.b16 %v461
      %v664 = vunpack.c.l.b16 %v462
      %v665 = vunpack.c.h.b16 %v462
      %v666 = vunpack.c.l.b16 %v463
      %v667 = vunpack.c.h.b16 %v463
      %v668 = vunpack.c.l.b16 %v464
      %v669 = vunpack.c.h.b16 %v464
      %v670 = vunpack.c.l.b16 %v465
      %v671 = vunpack.c.h.b16 %v465
      %v672 = vunpack.c.l.b16 %v466
      %v673 = vunpack.c.h.b16 %v466
      %v674 = vunpack.c.l.b16 %v467
      %v675 = vunpack.c.h.b16 %v467
      %v676 = vunpack.c.l.b16 %v468
      %v677 = vunpack.c.h.b16 %v468
      %v678 = vunpack.c.l.b16 %v469
      %v679 = vunpack.c.h.b16 %v469
      %v680 = vunpack.c.l.b16 %v470
      %v681 = vunpack.c.h.b16 %v470
      %v682 = vunpack.c.l.b16 %v471
      %v683 = vunpack.c.h.b16 %v471
      %v684 = vunpack.c.l.b16 %v472
      %v685 = vunpack.c.h.b16 %v472
      %v686 = vunpack.c.l.b16 %v473
      %v687 = vunpack.c.h.b16 %v473
      %v688 = vunpack.c.l.b16 %v474
      %v689 = vunpack.c.h.b16 %v474
      %v690 = vunpack.c.l.b16 %v475
      %v691 = vunpack.c.h.b16 %v475
      %v692 = vunpack.c.l.b16 %v476
      %v693 = vunpack.c.h.b16 %v476
      %v694 = vunpack.c.l.b16 %v477
      %v695 = vunpack.c.h.b16 %v477
      %v696 = vunpack.c.l.b16 %v478
      %v697 = vunpack.c.h.b16 %v478
      %v698 = vunpack.c.l.b16 %v479
      %v699 = vunpack.c.h.b16 %v479
      %v700 = vunpack.c.l.b16 %v480
      %v701 = vunpack.c.h.b16 %v480
      %v702 = vunpack.c.l.b16 %v481
      %v703 = vunpack.c.h.b16 %v481
      %v704 = vunpack.c.l.b16 %v482
      %v705 = vunpack.c.h.b16 %v482
      %v706 = vunpack.c.l.b16 %v483
      %v707 = vunpack.c.h.b16 %v483
      %v708 = vunpack.c.l.b16 %v484
      %v709 = vunpack.c.h.b16 %v484
      %v710 = vunpack.c.l.b16 %v485
      %v711 = vunpack.c.h.b16 %v485
      %v712 = vunpack.c.l.b16 %v486
      %v713 = vunpack.c.h.b16 %v486
      %v714 = vunpack.c.l.b16 %v487
      %v715 = vunpack.c.h.b16 %v487
      %v716 = vunpack.c.l.b16 %v488
      %v717 = vunpack.c.h.b16 %v488
      %v718 = vunpack.c.l.b16 %v489
      %v719 = vunpack.c.h.b16 %v489
      %v720 = vunpack.c.l.b16 %v490
      %v721 = vunpack.c.h.b16 %v490
      %v722 = vunpack.c.l.b16 %v491
      %v723 = vunpack.c.h.b16 %v491
      %v724 = vunpack.c.l.b16 %v492
      %v725 = vunpack.c.h.b16 %v492
      %v726 = vunpack.c.l.b16 %v493
      %v727 = vunpack.c.h.b16 %v493
      %v728 = vunpack.c.l.b16 %v494
      %v729 = vunpack.c.h.b16 %v494
      %v730 = vunpack.c.l.b16 %v495
      %v731 = vunpack.c.h.b16 %v495
      %v732 = vunpack.c.l.b16 %v496
      %v733 = vunpack.c.h.b16 %v496
      %v734 = vunpack.c.l.b16 %v497
      %v735 = vunpack.c.h.b16 %v497
      %v736 = vunpack.c.l.b16 %v498
      %v737 = vunpack.c.h.b16 %v498
      %v738 = vunpack.c.l.b16 %v499
      %v739 = vunpack.c.h.b16 %v499
      %v740 = vunpack.c.l.b16 %v500
      %v741 = vunpack.c.h.b16 %v500
      %v742 = vunpack.c.l.b16 %v501
      %v743 = vunpack.c.h.b16 %v501
      %v744 = vunpack.c.l.b16 %v502
      %v745 = vunpack.c.h.b16 %v502
      %v746 = vunpack.c.l.b16 %v503
      %v747 = vunpack.c.h.b16 %v503
      %v748 = vunpack.c.l.b16 %v504
      %v749 = vunpack.c.h.b16 %v504
      %v750 = vunpack.c.l.b16 %v505
      %v751 = vunpack.c.h.b16 %v505
      %v752 = vunpack.c.l.b16 %v506
      %v753 = vunpack.c.h.b16 %v506
      %v754 = vunpack.c.l.b16 %v507
      %v755 = vunpack.c.h.b16 %v507
      %v756 = vunpack.c.l.b16 %v508
      %v757 = vunpack.c.h.b16 %v508
      %v758 = vunpack.c.l.b16 %v509
      %v759 = vunpack.c.h.b16 %v509
      %v760 = vunpack.c.l.b16 %v510
      %v761 = vunpack.c.h.b16 %v510
      %v762 = vunpack.c.l.b16 %v511
      %v763 = vunpack.c.h.b16 %v511
      %v764 = vunpack.c.l.b16 %v512
      %v765 = vunpack.c.h.b16 %v512
      %v766 = vunpack.c.l.b16 %v513
      %v767 = vunpack.c.h.b16 %v513
      %v768 = vunpack.c.l.b16 %v514
      %v769 = vunpack.c.h.b16 %v514
      %v770 = vunpack.c.l.b16 %v515
      %v771 = vunpack.c.h.b16 %v515
      %v772 = vunpack.c.l.b16 %v516
      %v773 = vunpack.c.h.b16 %v516
      %v774 = vunpack.c.l.b16 %v517
      %v775 = vunpack.c.h.b16 %v517
      %v776 = vpack.c.b16 %v618, %v616
      %v777 = vpack.c.b16 %v619, %v617
      %v778 = vpack.c.b16 %v622, %v620
      %v779 = vpack.c.b16 %v623, %v621
      %v780 = vpack.c.b16 %v626, %v624
      %v781 = vpack.c.b16 %v627, %v625
      %v782 = vpack.c.b16 %v630, %v628
      %v783 = vpack.c.b16 %v631, %v629
      %v784 = vpack.c.b16 %v634, %v632
      %v785 = vpack.c.b16 %v635, %v633
      %v786 = vpack.c.b16 %v638, %v636
      %v787 = vpack.c.b16 %v639, %v637
      %v788 = vpack.c.b16 %v642, %v640
      %v789 = vpack.c.b16 %v643, %v641
      %v790 = vpack.c.b16 %v646, %v644
      %v791 = vpack.c.b16 %v647, %v645
      %v792 = vpack.c.b16 %v650, %v648
      %v793 = vpack.c.b16 %v651, %v649
      %v794 = vpack.c.b16 %v654, %v652
      %v795 = vpack.c.b16 %v655, %v653
      %v796 = vpack.c.b16 %v658, %v656
      %v797 = vpack.c.b16 %v659, %v657
      %v798 = vpack.c.b16 %v662, %v660
      %v799 = vpack.c.b16 %v663, %v661
      %v800 = vpack.c.b16 %v666, %v664
      %v801 = vpack.c.b16 %v667, %v665
      %v802 = vpack.c.b16 %v670, %v668
      %v803 = vpack.c.b16 %v671, %v669
      %v804 = vpack.c.b16 %v674, %v672
      %v805 = vpack.c.b16 %v675, %v673
      %v806 = vpack.c.b16 %v678, %v676
      %v807 = vpack.c.b16 %v679, %v677
      %v808 = vpack.c.b16 %v682, %v680
      %v809 = vpack.c.b16 %v683, %v681
      %v810 = vpack.c.b16 %v686, %v684
      %v811 = vpack.c.b16 %v687, %v685
      %v812 = vpack.c.b16 %v690, %v688
      %v813 = vpack.c.b16 %v691, %v689
      %v814 = vpack.c.b16 %v694, %v692
      %v815 = vpack.c.b16 %v695, %v693
      %v816 = vpack.c.b16 %v698, %v696
      %v817 = vpack.c.b16 %v699, %v697
      %v818 = vpack.c.b16 %v702, %v700
      %v819 = vpack.c.b16 %v703, %v701
      %v820 = vpack.c.b16 %v706, %v704
      %v821 = vpack.c.b16 %v707, %v705
      %v822 = vpack.c.b16 %v710, %v708
      %v823 = vpack.c.b16 %v711, %v709
      %v824 = vpack.c.b16 %v714, %v712
      %v825 = vpack.c.b16 %v715, %v713
      %v826 = vpack.c.b16 %v718, %v716
      %v827 = vpack.c.b16 %v719, %v717
      %v828 = vpack.c.b16 %v722, %v720
      %v829 = vpack.c.b16 %v723, %v721
      %v830 = vpack.c.b16 %v726, %v724
      %v831 = vpack.c.b16 %v727, %v725
      %v832 = vpack.c.b16 %v730, %v728
      %v833 = vpack.c.b16 %v731, %v729
      %v834 = vpack.c.b16 %v734, %v732
      %v835 = vpack.c.b16 %v735, %v733
      %v836 = vpack.c.b16 %v738, %v736
      %v837 = vpack.c.b16 %v739, %v737
      %v838 = vpack.c.b16 %v742, %v740
      %v839 = vpack.c.b16 %v743, %v741
      %v840 = vpack.c.b16 %v746, %v744
      %v841 = vpack.c.b16 %v747, %v745
      %v842 = vpack.c.b16 %v750, %v748
      %v843 = vpack.c.b16 %v751, %v749
      %v844 = vpack.c.b16 %v754, %v752
      %v845 = vpack.c.b16 %v755, %v753
      %v846 = vpack.c.b16 %v758, %v756
      %v847 = vpack.c.b16 %v759, %v757
      %v848 = vpack.c.b16 %v762, %v760
      %v849 = vpack.c.b16 %v763, %v761
      %v850 = vpack.c.b16 %v766, %v764
      %v851 = vpack.c.b16 %v767, %v765
      %v852 = vpack.c.b16 %v770, %v768
      %v853 = vpack.c.b16 %v771, %v769
      %v854 = vpack.c.b16 %v774, %v772
      %v855 = vpack.c.b16 %v775, %v773
      %936 = vmatpush.bf16.msra.mxu0 %v790
      %937 = vmatpush.bf16.msra.mxu0 %v788
      %938 = vmatpush.bf16.msra.mxu0 %v786
      %939 = vmatpush.bf16.msra.mxu0 %v784
      %940 = vmatpush.bf16.msra.mxu0 %v782
      %941 = vmatpush.bf16.msra.mxu0 %v780
      %942 = vmatpush.bf16.msra.mxu0 %v778
      %943 = vmatpush.bf16.msra.mxu0 %v776
      %944 = vmatmul.bf16.gmra.mxu0 %v526
      %v945 = vpop.f32.mrf.mxu0
      %v946 = vadd.f32 0.0, %v945
      %v947 = vpop.f32.mrf.mxu0
      %948 = vdwg.mxu0
      %949 = vmatpush.bf16.msra.mxu0 %v806
      %950 = vmatpush.bf16.msra.mxu0 %v804
      %951 = vmatpush.bf16.msra.mxu0 %v802
      %952 = vmatpush.bf16.msra.mxu0 %v800
      %953 = vmatpush.bf16.msra.mxu0 %v798
      %954 = vmatpush.bf16.msra.mxu0 %v796
      %955 = vmatpush.bf16.msra.mxu0 %v794
      %956 = vmatpush.bf16.msra.mxu0 %v792
      %957 = vmatmul.bf16.gmra.mxu0 %v527
      %v958 = vpop.f32.mrf.mxu0
      %v959 = vadd.f32 %v946, %v958
      %v960 = vpop.f32.mrf.mxu0
      %961 = vdwg.mxu0
      %962 = vmatpush.bf16.msra.mxu0 %v822
      %963 = vmatpush.bf16.msra.mxu0 %v820
      %964 = vmatpush.bf16.msra.mxu0 %v818
      %965 = vmatpush.bf16.msra.mxu0 %v816
      %966 = vmatpush.bf16.msra.mxu0 %v814
      %967 = vmatpush.bf16.msra.mxu0 %v812
      %968 = vmatpush.bf16.msra.mxu0 %v810
      %969 = vmatpush.bf16.msra.mxu0 %v808
      %970 = vmatmul.bf16.gmra.mxu0 %v528
      %v971 = vpop.f32.mrf.mxu0
      %v972 = vadd.f32 %v959, %v971
      %v973 = vpop.f32.mrf.mxu0
      %974 = vdwg.mxu0
      %975 = vmatpush.bf16.msra.mxu0 %v838
      %976 = vmatpush.bf16.msra.mxu0 %v836
      %977 = vmatpush.bf16.msra.mxu0 %v834
      %978 = vmatpush.bf16.msra.mxu0 %v832
      %979 = vmatpush.bf16.msra.mxu0 %v830
      %980 = vmatpush.bf16.msra.mxu0 %v828
      %981 = vmatpush.bf16.msra.mxu0 %v826
      %982 = vmatpush.bf16.msra.mxu0 %v824
      %983 = vmatmul.bf16.gmra.mxu0 %v529
      %v984 = vpop.f32.mrf.mxu0
      %v985 = vadd.f32 %v972, %v984
      %v986 = vpop.f32.mrf.mxu0
      %987 = vdwg.mxu0
      %988 = vmatpush.bf16.msra.mxu0 %v854
      %989 = vmatpush.bf16.msra.mxu0 %v852
      %990 = vmatpush.bf16.msra.mxu0 %v850
      %991 = vmatpush.bf16.msra.mxu0 %v848
      %992 = vmatpush.bf16.msra.mxu0 %v846
      %993 = vmatpush.bf16.msra.mxu0 %v844
      %994 = vmatpush.bf16.msra.mxu0 %v842
      %995 = vmatpush.bf16.msra.mxu0 %v840
      %996 = vmatmul.bf16.gmra.mxu0 %v530
      %v997 = vpop.f32.mrf.mxu0
      %v998 = vadd.f32 %v985, %v997
      %v999 = vpop.f32.mrf.mxu0
      %1000 = vdwg.mxu0
      %1001 = vmatpush.bf16.msra.mxu0 %v791
      %1002 = vmatpush.bf16.msra.mxu0 %v789
      %1003 = vmatpush.bf16.msra.mxu0 %v787
      %1004 = vmatpush.bf16.msra.mxu0 %v785
      %1005 = vmatpush.bf16.msra.mxu0 %v783
      %1006 = vmatpush.bf16.msra.mxu0 %v781
      %1007 = vmatpush.bf16.msra.mxu0 %v779
      %1008 = vmatpush.bf16.msra.mxu0 %v777
      %1009 = vmatmul.bf16.gmra.mxu0 %v526
      %v1010 = vpop.f32.mrf.mxu0
      %v1011 = vadd.f32 0.0, %v1010
      %v1012 = vpop.f32.mrf.mxu0
      %1013 = vdwg.mxu0
      %1014 = vmatpush.bf16.msra.mxu0 %v807
      %1015 = vmatpush.bf16.msra.mxu0 %v805
      %1016 = vmatpush.bf16.msra.mxu0 %v803
      %1017 = vmatpush.bf16.msra.mxu0 %v801
      %1018 = vmatpush.bf16.msra.mxu0 %v799
      %1019 = vmatpush.bf16.msra.mxu0 %v797
      %1020 = vmatpush.bf16.msra.mxu0 %v795
      %1021 = vmatpush.bf16.msra.mxu0 %v793
      %1022 = vmatmul.bf16.gmra.mxu0 %v527
      %v1023 = vpop.f32.mrf.mxu0
      %v1024 = vadd.f32 %v1011, %v1023
      %v1025 = vpop.f32.mrf.mxu0
      %1026 = vdwg.mxu0
      %1027 = vmatpush.bf16.msra.mxu0 %v823
      %1028 = vmatpush.bf16.msra.mxu0 %v821
      %1029 = vmatpush.bf16.msra.mxu0 %v819
      %1030 = vmatpush.bf16.msra.mxu0 %v817
      %1031 = vmatpush.bf16.msra.mxu0 %v815
      %1032 = vmatpush.bf16.msra.mxu0 %v813
      %1033 = vmatpush.bf16.msra.mxu0 %v811
      %1034 = vmatpush.bf16.msra.mxu0 %v809
      %1035 = vmatmul.bf16.gmra.mxu0 %v528
      %v1036 = vpop.f32.mrf.mxu0
      %v1037 = vadd.f32 %v1024, %v1036
      %v1038 = vpop.f32.mrf.mxu0
      %1039 = vdwg.mxu0
      %1040 = vmatpush.bf16.msra.mxu0 %v839
      %1041 = vmatpush.bf16.msra.mxu0 %v837
      %1042 = vmatpush.bf16.msra.mxu0 %v835
      %1043 = vmatpush.bf16.msra.mxu0 %v833
      %1044 = vmatpush.bf16.msra.mxu0 %v831
      %1045 = vmatpush.bf16.msra.mxu0 %v829
      %1046 = vmatpush.bf16.msra.mxu0 %v827
      %1047 = vmatpush.bf16.msra.mxu0 %v825
      %1048 = vmatmul.bf16.gmra.mxu0 %v529
      %v1049 = vpop.f32.mrf.mxu0
      %v1050 = vadd.f32 %v1037, %v1049
      %v1051 = vpop.f32.mrf.mxu0
      %1052 = vdwg.mxu0
      %1053 = vmatpush.bf16.msra.mxu0 %v855
      %1054 = vmatpush.bf16.msra.mxu0 %v853
      %1055 = vmatpush.bf16.msra.mxu0 %v851
      %1056 = vmatpush.bf16.msra.mxu0 %v849
      %1057 = vmatpush.bf16.msra.mxu0 %v847
      %1058 = vmatpush.bf16.msra.mxu0 %v845
      %1059 = vmatpush.bf16.msra.mxu0 %v843
      %1060 = vmatpush.bf16.msra.mxu0 %v841
      %1061 = vmatmul.bf16.gmra.mxu0 %v530
      %v1062 = vpop.f32.mrf.mxu0
      %v1063 = vadd.f32 %v1050, %v1062
      %v1064 = vpop.f32.mrf.mxu0
      %1065 = vdwg.mxu0
      %v1066 = vadd.f32 %v433, %v998
      %v1067 = vadd.f32 %v434, %v1063
      %1068 = vst [vmem:[#allocation2] sm:$0xff] %v1066
      %1069 = vst [vmem:[#allocation2 + $0x8] sm:$0xff] %v1067
      %p1070 = scmp.eq.s32.totalorder %s23, 4
      // Predicated region
      $region73: #{ppo_forward.7} parent=67 // pred_check
        %p1071 = pneg %p1070
      $region74: #{ppo_forward.7} parent=67 // pred_check_branch
        %1073 = sbr.rel (%p1071) target = $region76
      $region75: #{ppo_forward.7} parent=67 // pred_region
        %v1074 = vld [vmem:[#allocation2] sm:$0xff]
        %v1075 = vld [vmem:[#allocation2 + $0x8] sm:$0xff]
        %v1076 = vld [vmem:[%s2] sm:$0x3]
        %v1078 = vperm.slane %v1076, 0
        %v1079 = vperm.slane %v1076, 1
        %v1082 = vadd.f32 %v1074, %v1078
        %v1083 = vadd.f32 %v1075, %v1079
        %vm1084 = vcmp.gt.f32.partialorder %v1082, 0.0
        %vm1085 = vcmp.gt.f32.partialorder %v1083, 0.0
        %v1086 = vmin.f32 %v1082, 0.0
        %v1087 = vmin.f32 %v1083, 0.0
        %v1088 = vmul.f32 %v1086, 1.442695
        %v1089 = vpow.pop %v1088
        %v1090 = vmul.f32 %v1087, 1.442695
        %v1091 = vpow.pop %v1090
        %v1092 = vsub.f32 %v1089, 1.0
        %v1093 = vsub.f32 %v1091, 1.0
        %v1094 = vsel %vm1084, %v1082, %v1092
        %v1095 = vsel %vm1085, %v1083, %v1093
        %v1096 = vpack.c.bf16 %v1094, %v1094
        %v1097 = vpack.c.bf16 %v1095, %v1095
        %v1098 = vld [vmem:[%s3] sm:$0xff]
        %v1099 = vld [vmem:[%s3 + $0x8] sm:$0xff]
        %v1100 = vld [vmem:[%s3 + $0x10] sm:$0xff]
        %v1101 = vld [vmem:[%s3 + $0x18] sm:$0xff]
        %v1102 = vld [vmem:[%s3 + $0x20] sm:$0xff]
        %v1103 = vld [vmem:[%s3 + $0x28] sm:$0xff]
        %v1104 = vld [vmem:[%s3 + $0x30] sm:$0xff]
        %v1105 = vld [vmem:[%s3 + $0x38] sm:$0xff]
        %v1106 = vld [vmem:[%s3 + $0x40] sm:$0xff]
        %v1107 = vld [vmem:[%s3 + $0x48] sm:$0xff]
        %v1108 = vld [vmem:[%s3 + $0x50] sm:$0xff]
        %v1109 = vld [vmem:[%s3 + $0x58] sm:$0xff]
        %v1110 = vld [vmem:[%s3 + $0x60] sm:$0xff]
        %v1111 = vld [vmem:[%s3 + $0x68] sm:$0xff]
        %v1112 = vld [vmem:[%s3 + $0x70] sm:$0xff]
        %v1113 = vld [vmem:[%s3 + $0x78] sm:$0xff]
        %v1114 = vld [vmem:[%s3 + $0x80] sm:$0xff]
        %v1115 = vld [vmem:[%s3 + $0x88] sm:$0xff]
        %v1116 = vld [vmem:[%s3 + $0x90] sm:$0xff]
        %v1117 = vld [vmem:[%s3 + $0x98] sm:$0xff]
        %v1118 = vld [vmem:[%s3 + $0xa0] sm:$0xff]
        %v1119 = vld [vmem:[%s3 + $0xa8] sm:$0xff]
        %v1120 = vld [vmem:[%s3 + $0xb0] sm:$0xff]
        %v1121 = vld [vmem:[%s3 + $0xb8] sm:$0xff]
        %v1122 = vld [vmem:[%s3 + $0xc0] sm:$0xff]
        %v1123 = vld [vmem:[%s3 + $0xc8] sm:$0xff]
        %v1124 = vld [vmem:[%s3 + $0xd0] sm:$0xff]
        %v1125 = vld [vmem:[%s3 + $0xd8] sm:$0xff]
        %v1126 = vld [vmem:[%s3 + $0xe0] sm:$0xff]
        %v1127 = vld [vmem:[%s3 + $0xe8] sm:$0xff]
        %v1128 = vld [vmem:[%s3 + $0xf0] sm:$0xff]
        %v1129 = vld [vmem:[%s3 + $0xf8] sm:$0xff]
        %v1130 = vld [vmem:[%s3 + $0x100] sm:$0xff]
        %v1131 = vld [vmem:[%s3 + $0x108] sm:$0xff]
        %v1132 = vld [vmem:[%s3 + $0x110] sm:$0xff]
        %v1133 = vld [vmem:[%s3 + $0x118] sm:$0xff]
        %v1134 = vld [vmem:[%s3 + $0x120] sm:$0xff]
        %v1135 = vld [vmem:[%s3 + $0x128] sm:$0xff]
        %v1136 = vld [vmem:[%s3 + $0x130] sm:$0xff]
        %v1137 = vld [vmem:[%s3 + $0x138] sm:$0xff]
        %v1138 = vld [vmem:[%s3 + $0x140] sm:$0xff]
        %v1139 = vld [vmem:[%s3 + $0x148] sm:$0xff]
        %v1140 = vld [vmem:[%s3 + $0x150] sm:$0xff]
        %v1141 = vld [vmem:[%s3 + $0x158] sm:$0xff]
        %v1142 = vld [vmem:[%s3 + $0x160] sm:$0xff]
        %v1143 = vld [vmem:[%s3 + $0x168] sm:$0xff]
        %v1144 = vld [vmem:[%s3 + $0x170] sm:$0xff]
        %v1145 = vld [vmem:[%s3 + $0x178] sm:$0xff]
        %v1146 = vld [vmem:[%s3 + $0x180] sm:$0xff]
        %v1147 = vld [vmem:[%s3 + $0x188] sm:$0xff]
        %v1148 = vld [vmem:[%s3 + $0x190] sm:$0xff]
        %v1149 = vld [vmem:[%s3 + $0x198] sm:$0xff]
        %v1150 = vld [vmem:[%s3 + $0x1a0] sm:$0xff]
        %v1151 = vld [vmem:[%s3 + $0x1a8] sm:$0xff]
        %v1152 = vld [vmem:[%s3 + $0x1b0] sm:$0xff]
        %v1153 = vld [vmem:[%s3 + $0x1b8] sm:$0xff]
        %v1154 = vld [vmem:[%s3 + $0x1c0] sm:$0xff]
        %v1155 = vld [vmem:[%s3 + $0x1c8] sm:$0xff]
        %v1156 = vld [vmem:[%s3 + $0x1d0] sm:$0xff]
        %v1157 = vld [vmem:[%s3 + $0x1d8] sm:$0xff]
        %v1158 = vld [vmem:[%s3 + $0x1e0] sm:$0xff]
        %v1159 = vld [vmem:[%s3 + $0x1e8] sm:$0xff]
        %v1160 = vld [vmem:[%s3 + $0x1f0] sm:$0xff]
        %v1161 = vld [vmem:[%s3 + $0x1f8] sm:$0xff]
        %v1162 = vld [vmem:[%s4] sm:$0xf]
        %v1164 = vperm.slane %v1162, 0
        %v1165 = vperm.slane %v1162, 1
        %v1166 = vperm.slane %v1162, 2
        %v1167 = vperm.slane %v1162, 3
        %v1236 = vunpack.c.l.b16 %v1098
        %v1237 = vunpack.c.h.b16 %v1098
        %v1238 = vunpack.c.l.b16 %v1099
        %v1239 = vunpack.c.h.b16 %v1099
        %v1240 = vunpack.c.l.b16 %v1100
        %v1241 = vunpack.c.h.b16 %v1100
        %v1242 = vunpack.c.l.b16 %v1101
        %v1243 = vunpack.c.h.b16 %v1101
        %v1244 = vunpack.c.l.b16 %v1102
        %v1245 = vunpack.c.h.b16 %v1102
        %v1246 = vunpack.c.l.b16 %v1103
        %v1247 = vunpack.c.h.b16 %v1103
        %v1248 = vunpack.c.l.b16 %v1104
        %v1249 = vunpack.c.h.b16 %v1104
        %v1250 = vunpack.c.l.b16 %v1105
        %v1251 = vunpack.c.h.b16 %v1105
        %v1252 = vunpack.c.l.b16 %v1106
        %v1253 = vunpack.c.h.b16 %v1106
        %v1254 = vunpack.c.l.b16 %v1107
        %v1255 = vunpack.c.h.b16 %v1107
        %v1256 = vunpack.c.l.b16 %v1108
        %v1257 = vunpack.c.h.b16 %v1108
        %v1258 = vunpack.c.l.b16 %v1109
        %v1259 = vunpack.c.h.b16 %v1109
        %v1260 = vunpack.c.l.b16 %v1110
        %v1261 = vunpack.c.h.b16 %v1110
        %v1262 = vunpack.c.l.b16 %v1111
        %v1263 = vunpack.c.h.b16 %v1111
        %v1264 = vunpack.c.l.b16 %v1112
        %v1265 = vunpack.c.h.b16 %v1112
        %v1266 = vunpack.c.l.b16 %v1113
        %v1267 = vunpack.c.h.b16 %v1113
        %v1268 = vunpack.c.l.b16 %v1114
        %v1269 = vunpack.c.h.b16 %v1114
        %v1270 = vunpack.c.l.b16 %v1115
        %v1271 = vunpack.c.h.b16 %v1115
        %v1272 = vunpack.c.l.b16 %v1116
        %v1273 = vunpack.c.h.b16 %v1116
        %v1274 = vunpack.c.l.b16 %v1117
        %v1275 = vunpack.c.h.b16 %v1117
        %v1276 = vunpack.c.l.b16 %v1118
        %v1277 = vunpack.c.h.b16 %v1118
        %v1278 = vunpack.c.l.b16 %v1119
        %v1279 = vunpack.c.h.b16 %v1119
        %v1280 = vunpack.c.l.b16 %v1120
        %v1281 = vunpack.c.h.b16 %v1120
        %v1282 = vunpack.c.l.b16 %v1121
        %v1283 = vunpack.c.h.b16 %v1121
        %v1284 = vunpack.c.l.b16 %v1122
        %v1285 = vunpack.c.h.b16 %v1122
        %v1286 = vunpack.c.l.b16 %v1123
        %v1287 = vunpack.c.h.b16 %v1123
        %v1288 = vunpack.c.l.b16 %v1124
        %v1289 = vunpack.c.h.b16 %v1124
        %v1290 = vunpack.c.l.b16 %v1125
        %v1291 = vunpack.c.h.b16 %v1125
        %v1292 = vunpack.c.l.b16 %v1126
        %v1293 = vunpack.c.h.b16 %v1126
        %v1294 = vunpack.c.l.b16 %v1127
        %v1295 = vunpack.c.h.b16 %v1127
        %v1296 = vunpack.c.l.b16 %v1128
        %v1297 = vunpack.c.h.b16 %v1128
        %v1298 = vunpack.c.l.b16 %v1129
        %v1299 = vunpack.c.h.b16 %v1129
        %v1300 = vunpack.c.l.b16 %v1130
        %v1301 = vunpack.c.h.b16 %v1130
        %v1302 = vunpack.c.l.b16 %v1131
        %v1303 = vunpack.c.h.b16 %v1131
        %v1304 = vunpack.c.l.b16 %v1132
        %v1305 = vunpack.c.h.b16 %v1132
        %v1306 = vunpack.c.l.b16 %v1133
        %v1307 = vunpack.c.h.b16 %v1133
        %v1308 = vunpack.c.l.b16 %v1134
        %v1309 = vunpack.c.h.b16 %v1134
        %v1310 = vunpack.c.l.b16 %v1135
        %v1311 = vunpack.c.h.b16 %v1135
        %v1312 = vunpack.c.l.b16 %v1136
        %v1313 = vunpack.c.h.b16 %v1136
        %v1314 = vunpack.c.l.b16 %v1137
        %v1315 = vunpack.c.h.b16 %v1137
        %v1316 = vunpack.c.l.b16 %v1138
        %v1317 = vunpack.c.h.b16 %v1138
        %v1318 = vunpack.c.l.b16 %v1139
        %v1319 = vunpack.c.h.b16 %v1139
        %v1320 = vunpack.c.l.b16 %v1140
        %v1321 = vunpack.c.h.b16 %v1140
        %v1322 = vunpack.c.l.b16 %v1141
        %v1323 = vunpack.c.h.b16 %v1141
        %v1324 = vunpack.c.l.b16 %v1142
        %v1325 = vunpack.c.h.b16 %v1142
        %v1326 = vunpack.c.l.b16 %v1143
        %v1327 = vunpack.c.h.b16 %v1143
        %v1328 = vunpack.c.l.b16 %v1144
        %v1329 = vunpack.c.h.b16 %v1144
        %v1330 = vunpack.c.l.b16 %v1145
        %v1331 = vunpack.c.h.b16 %v1145
        %v1332 = vunpack.c.l.b16 %v1146
        %v1333 = vunpack.c.h.b16 %v1146
        %v1334 = vunpack.c.l.b16 %v1147
        %v1335 = vunpack.c.h.b16 %v1147
        %v1336 = vunpack.c.l.b16 %v1148
        %v1337 = vunpack.c.h.b16 %v1148
        %v1338 = vunpack.c.l.b16 %v1149
        %v1339 = vunpack.c.h.b16 %v1149
        %v1340 = vunpack.c.l.b16 %v1150
        %v1341 = vunpack.c.h.b16 %v1150
        %v1342 = vunpack.c.l.b16 %v1151
        %v1343 = vunpack.c.h.b16 %v1151
        %v1344 = vunpack.c.l.b16 %v1152
        %v1345 = vunpack.c.h.b16 %v1152
        %v1346 = vunpack.c.l.b16 %v1153
        %v1347 = vunpack.c.h.b16 %v1153
        %v1348 = vunpack.c.l.b16 %v1154
        %v1349 = vunpack.c.h.b16 %v1154
        %v1350 = vunpack.c.l.b16 %v1155
        %v1351 = vunpack.c.h.b16 %v1155
        %v1352 = vunpack.c.l.b16 %v1156
        %v1353 = vunpack.c.h.b16 %v1156
        %v1354 = vunpack.c.l.b16 %v1157
        %v1355 = vunpack.c.h.b16 %v1157
        %v1356 = vunpack.c.l.b16 %v1158
        %v1357 = vunpack.c.h.b16 %v1158
        %v1358 = vunpack.c.l.b16 %v1159
        %v1359 = vunpack.c.h.b16 %v1159
        %v1360 = vunpack.c.l.b16 %v1160
        %v1361 = vunpack.c.h.b16 %v1160
        %v1362 = vunpack.c.l.b16 %v1161
        %v1363 = vunpack.c.h.b16 %v1161
        %v1364 = vpack.c.b16 %v1240, %v1236
        %v1365 = vpack.c.b16 %v1241, %v1237
        %v1366 = vpack.c.b16 %v1242, %v1238
        %v1367 = vpack.c.b16 %v1243, %v1239
        %v1368 = vpack.c.b16 %v1248, %v1244
        %v1369 = vpack.c.b16 %v1249, %v1245
        %v1370 = vpack.c.b16 %v1250, %v1246
        %v1371 = vpack.c.b16 %v1251, %v1247
        %v1372 = vpack.c.b16 %v1256, %v1252
        %v1373 = vpack.c.b16 %v1257, %v1253
        %v1374 = vpack.c.b16 %v1258, %v1254
        %v1375 = vpack.c.b16 %v1259, %v1255
        %v1376 = vpack.c.b16 %v1264, %v1260
        %v1377 = vpack.c.b16 %v1265, %v1261
        %v1378 = vpack.c.b16 %v1266, %v1262
        %v1379 = vpack.c.b16 %v1267, %v1263
        %v1380 = vpack.c.b16 %v1272, %v1268
        %v1381 = vpack.c.b16 %v1273, %v1269
        %v1382 = vpack.c.b16 %v1274, %v1270
        %v1383 = vpack.c.b16 %v1275, %v1271
        %v1384 = vpack.c.b16 %v1280, %v1276
        %v1385 = vpack.c.b16 %v1281, %v1277
        %v1386 = vpack.c.b16 %v1282, %v1278
        %v1387 = vpack.c.b16 %v1283, %v1279
        %v1388 = vpack.c.b16 %v1288, %v1284
        %v1389 = vpack.c.b16 %v1289, %v1285
        %v1390 = vpack.c.b16 %v1290, %v1286
        %v1391 = vpack.c.b16 %v1291, %v1287
        %v1392 = vpack.c.b16 %v1296, %v1292
        %v1393 = vpack.c.b16 %v1297, %v1293
        %v1394 = vpack.c.b16 %v1298, %v1294
        %v1395 = vpack.c.b16 %v1299, %v1295
        %v1396 = vpack.c.b16 %v1304, %v1300
        %v1397 = vpack.c.b16 %v1305, %v1301
        %v1398 = vpack.c.b16 %v1306, %v1302
        %v1399 = vpack.c.b16 %v1307, %v1303
        %v1400 = vpack.c.b16 %v1312, %v1308
        %v1401 = vpack.c.b16 %v1313, %v1309
        %v1402 = vpack.c.b16 %v1314, %v1310
        %v1403 = vpack.c.b16 %v1315, %v1311
        %v1404 = vpack.c.b16 %v1320, %v1316
        %v1405 = vpack.c.b16 %v1321, %v1317
        %v1406 = vpack.c.b16 %v1322, %v1318
        %v1407 = vpack.c.b16 %v1323, %v1319
        %v1408 = vpack.c.b16 %v1328, %v1324
        %v1409 = vpack.c.b16 %v1329, %v1325
        %v1410 = vpack.c.b16 %v1330, %v1326
        %v1411 = vpack.c.b16 %v1331, %v1327
        %v1412 = vpack.c.b16 %v1336, %v1332
        %v1413 = vpack.c.b16 %v1337, %v1333
        %v1414 = vpack.c.b16 %v1338, %v1334
        %v1415 = vpack.c.b16 %v1339, %v1335
        %v1416 = vpack.c.b16 %v1344, %v1340
        %v1417 = vpack.c.b16 %v1345, %v1341
        %v1418 = vpack.c.b16 %v1346, %v1342
        %v1419 = vpack.c.b16 %v1347, %v1343
        %v1420 = vpack.c.b16 %v1352, %v1348
        %v1421 = vpack.c.b16 %v1353, %v1349
        %v1422 = vpack.c.b16 %v1354, %v1350
        %v1423 = vpack.c.b16 %v1355, %v1351
        %v1424 = vpack.c.b16 %v1360, %v1356
        %v1425 = vpack.c.b16 %v1361, %v1357
        %v1426 = vpack.c.b16 %v1362, %v1358
        %v1427 = vpack.c.b16 %v1363, %v1359
        %1492 = vmatpush.bf16.msra.mxu0 %v1392
        %1493 = vmatpush.bf16.msra.mxu0 %v1388
        %1494 = vmatpush.bf16.msra.mxu0 %v1384
        %1495 = vmatpush.bf16.msra.mxu0 %v1380
        %1496 = vmatpush.bf16.msra.mxu0 %v1376
        %1497 = vmatpush.bf16.msra.mxu0 %v1372
        %1498 = vmatpush.bf16.msra.mxu0 %v1368
        %1499 = vmatpush.bf16.msra.mxu0 %v1364
        %1500 = vmatmul.bf16.gmra.mxu0 %v1096
        %v1501 = vpop.f32.mrf.mxu0
        %v1502 = vadd.f32 %v1164, %v1501
        %v1503 = vpop.f32.mrf.mxu0
        %1504 = vdwg.mxu0
        %1505 = vmatpush.bf16.msra.mxu0 %v1424
        %1506 = vmatpush.bf16.msra.mxu0 %v1420
        %1507 = vmatpush.bf16.msra.mxu0 %v1416
        %1508 = vmatpush.bf16.msra.mxu0 %v1412
        %1509 = vmatpush.bf16.msra.mxu0 %v1408
        %1510 = vmatpush.bf16.msra.mxu0 %v1404
        %1511 = vmatpush.bf16.msra.mxu0 %v1400
        %1512 = vmatpush.bf16.msra.mxu0 %v1396
        %1513 = vmatmul.bf16.gmra.mxu0 %v1097
        %v1514 = vpop.f32.mrf.mxu0
        %v1515 = vadd.f32 %v1502, %v1514
        %v1516 = vpop.f32.mrf.mxu0
        %1517 = vdwg.mxu0
        %1518 = vmatpush.bf16.msra.mxu0 %v1393
        %1519 = vmatpush.bf16.msra.mxu0 %v1389
        %1520 = vmatpush.bf16.msra.mxu0 %v1385
        %1521 = vmatpush.bf16.msra.mxu0 %v1381
        %1522 = vmatpush.bf16.msra.mxu0 %v1377
        %1523 = vmatpush.bf16.msra.mxu0 %v1373
        %1524 = vmatpush.bf16.msra.mxu0 %v1369
        %1525 = vmatpush.bf16.msra.mxu0 %v1365
        %1526 = vmatmul.bf16.gmra.mxu0 %v1096
        %v1527 = vpop.f32.mrf.mxu0
        %v1528 = vadd.f32 %v1165, %v1527
        %v1529 = vpop.f32.mrf.mxu0
        %1530 = vdwg.mxu0
        %1531 = vmatpush.bf16.msra.mxu0 %v1425
        %1532 = vmatpush.bf16.msra.mxu0 %v1421
        %1533 = vmatpush.bf16.msra.mxu0 %v1417
        %1534 = vmatpush.bf16.msra.mxu0 %v1413
        %1535 = vmatpush.bf16.msra.mxu0 %v1409
        %1536 = vmatpush.bf16.msra.mxu0 %v1405
        %1537 = vmatpush.bf16.msra.mxu0 %v1401
        %1538 = vmatpush.bf16.msra.mxu0 %v1397
        %1539 = vmatmul.bf16.gmra.mxu0 %v1097
        %v1540 = vpop.f32.mrf.mxu0
        %v1541 = vadd.f32 %v1528, %v1540
        %v1542 = vpop.f32.mrf.mxu0
        %1543 = vdwg.mxu0
        %1544 = vmatpush.bf16.msra.mxu0 %v1394
        %1545 = vmatpush.bf16.msra.mxu0 %v1390
        %1546 = vmatpush.bf16.msra.mxu0 %v1386
        %1547 = vmatpush.bf16.msra.mxu0 %v1382
        %1548 = vmatpush.bf16.msra.mxu0 %v1378
        %1549 = vmatpush.bf16.msra.mxu0 %v1374
        %1550 = vmatpush.bf16.msra.mxu0 %v1370
        %1551 = vmatpush.bf16.msra.mxu0 %v1366
        %1552 = vmatmul.bf16.gmra.mxu0 %v1096
        %v1553 = vpop.f32.mrf.mxu0
        %v1554 = vadd.f32 %v1166, %v1553
        %v1555 = vpop.f32.mrf.mxu0
        %1556 = vdwg.mxu0
        %1557 = vmatpush.bf16.msra.mxu0 %v1426
        %1558 = vmatpush.bf16.msra.mxu0 %v1422
        %1559 = vmatpush.bf16.msra.mxu0 %v1418
        %1560 = vmatpush.bf16.msra.mxu0 %v1414
        %1561 = vmatpush.bf16.msra.mxu0 %v1410
        %1562 = vmatpush.bf16.msra.mxu0 %v1406
        %1563 = vmatpush.bf16.msra.mxu0 %v1402
        %1564 = vmatpush.bf16.msra.mxu0 %v1398
        %1565 = vmatmul.bf16.gmra.mxu0 %v1097
        %v1566 = vpop.f32.mrf.mxu0
        %v1567 = vadd.f32 %v1554, %v1566
        %v1568 = vpop.f32.mrf.mxu0
        %1569 = vdwg.mxu0
        %1570 = vmatpush.bf16.msra.mxu0 %v1395
        %1571 = vmatpush.bf16.msra.mxu0 %v1391
        %1572 = vmatpush.bf16.msra.mxu0 %v1387
        %1573 = vmatpush.bf16.msra.mxu0 %v1383
        %1574 = vmatpush.bf16.msra.mxu0 %v1379
        %1575 = vmatpush.bf16.msra.mxu0 %v1375
        %1576 = vmatpush.bf16.msra.mxu0 %v1371
        %1577 = vmatpush.bf16.msra.mxu0 %v1367
        %1578 = vmatmul.bf16.gmra.mxu0 %v1096
        %v1579 = vpop.f32.mrf.mxu0
        %v1580 = vadd.f32 %v1167, %v1579
        %v1581 = vpop.f32.mrf.mxu0
        %1582 = vdwg.mxu0
        %1583 = vmatpush.bf16.msra.mxu0 %v1427
        %1584 = vmatpush.bf16.msra.mxu0 %v1423
        %1585 = vmatpush.bf16.msra.mxu0 %v1419
        %1586 = vmatpush.bf16.msra.mxu0 %v1415
        %1587 = vmatpush.bf16.msra.mxu0 %v1411
        %1588 = vmatpush.bf16.msra.mxu0 %v1407
        %1589 = vmatpush.bf16.msra.mxu0 %v1403
        %1590 = vmatpush.bf16.msra.mxu0 %v1399
        %1591 = vmatmul.bf16.gmra.mxu0 %v1097
        %v1592 = vpop.f32.mrf.mxu0
        %v1593 = vadd.f32 %v1580, %v1592
        %v1594 = vpop.f32.mrf.mxu0
        %1595 = vdwg.mxu0
        %vm1596 = vcmp.gt.f32.partialorder %v1515, 0.0
        %vm1597 = vcmp.gt.f32.partialorder %v1541, 0.0
        %vm1598 = vcmp.gt.f32.partialorder %v1567, 0.0
        %vm1599 = vcmp.gt.f32.partialorder %v1593, 0.0
        %v1600 = vmin.f32 %v1515, 0.0
        %v1601 = vmin.f32 %v1541, 0.0
        %v1602 = vmin.f32 %v1567, 0.0
        %v1603 = vmin.f32 %v1593, 0.0
        %v1604 = vmul.f32 %v1600, 1.442695
        %v1605 = vpow.pop %v1604
        %v1606 = vmul.f32 %v1601, 1.442695
        %v1607 = vpow.pop %v1606
        %v1608 = vmul.f32 %v1602, 1.442695
        %v1609 = vpow.pop %v1608
        %v1610 = vmul.f32 %v1603, 1.442695
        %v1611 = vpow.pop %v1610
        %v1612 = vsub.f32 %v1605, 1.0
        %v1613 = vsub.f32 %v1607, 1.0
        %v1614 = vsub.f32 %v1609, 1.0
        %v1615 = vsub.f32 %v1611, 1.0
        %v1616 = vsel %vm1596, %v1515, %v1612
        %v1617 = vsel %vm1597, %v1541, %v1613
        %v1618 = vsel %vm1598, %v1567, %v1614
        %v1619 = vsel %vm1599, %v1593, %v1615
        %v1620 = vpack.c.bf16 %v1616, %v1616
        %v1621 = vpack.c.bf16 %v1617, %v1617
        %v1622 = vpack.c.bf16 %v1618, %v1618
        %v1623 = vpack.c.bf16 %v1619, %v1619
        %v1624 = vld [vmem:[%s5] sm:$0xff]
        %v1625 = vld [vmem:[%s5 + $0x8] sm:$0xff]
        %v1626 = vld [vmem:[%s5 + $0x10] sm:$0xff]
        %v1627 = vld [vmem:[%s5 + $0x18] sm:$0xff]
        %v1628 = vld [vmem:[%s5 + $0x20] sm:$0xff]
        %v1629 = vld [vmem:[%s5 + $0x28] sm:$0xff]
        %v1630 = vld [vmem:[%s5 + $0x30] sm:$0xff]
        %v1631 = vld [vmem:[%s5 + $0x38] sm:$0xff]
        %v1632 = vld [vmem:[%s5 + $0x40] sm:$0xff]
        %v1633 = vld [vmem:[%s5 + $0x48] sm:$0xff]
        %v1634 = vld [vmem:[%s5 + $0x50] sm:$0xff]
        %v1635 = vld [vmem:[%s5 + $0x58] sm:$0xff]
        %v1636 = vld [vmem:[%s5 + $0x60] sm:$0xff]
        %v1637 = vld [vmem:[%s5 + $0x68] sm:$0xff]
        %v1638 = vld [vmem:[%s5 + $0x70] sm:$0xff]
        %v1639 = vld [vmem:[%s5 + $0x78] sm:$0xff]
        %v1640 = vld [vmem:[%s5 + $0x80] sm:$0xff]
        %v1641 = vld [vmem:[%s5 + $0x88] sm:$0xff]
        %v1642 = vld [vmem:[%s5 + $0x90] sm:$0xff]
        %v1643 = vld [vmem:[%s5 + $0x98] sm:$0xff]
        %v1644 = vld [vmem:[%s5 + $0xa0] sm:$0xff]
        %v1645 = vld [vmem:[%s5 + $0xa8] sm:$0xff]
        %v1646 = vld [vmem:[%s5 + $0xb0] sm:$0xff]
        %v1647 = vld [vmem:[%s5 + $0xb8] sm:$0xff]
        %v1648 = vld [vmem:[%s5 + $0xc0] sm:$0xff]
        %v1649 = vld [vmem:[%s5 + $0xc8] sm:$0xff]
        %v1650 = vld [vmem:[%s5 + $0xd0] sm:$0xff]
        %v1651 = vld [vmem:[%s5 + $0xd8] sm:$0xff]
        %v1652 = vld [vmem:[%s5 + $0xe0] sm:$0xff]
        %v1653 = vld [vmem:[%s5 + $0xe8] sm:$0xff]
        %v1654 = vld [vmem:[%s5 + $0xf0] sm:$0xff]
        %v1655 = vld [vmem:[%s5 + $0xf8] sm:$0xff]
        %v1656 = vld [vmem:[%s5 + $0x100] sm:$0xff]
        %v1657 = vld [vmem:[%s5 + $0x108] sm:$0xff]
        %v1658 = vld [vmem:[%s5 + $0x110] sm:$0xff]
        %v1659 = vld [vmem:[%s5 + $0x118] sm:$0xff]
        %v1660 = vld [vmem:[%s5 + $0x120] sm:$0xff]
        %v1661 = vld [vmem:[%s5 + $0x128] sm:$0xff]
        %v1662 = vld [vmem:[%s5 + $0x130] sm:$0xff]
        %v1663 = vld [vmem:[%s5 + $0x138] sm:$0xff]
        %v1664 = vld [vmem:[%s5 + $0x140] sm:$0xff]
        %v1665 = vld [vmem:[%s5 + $0x148] sm:$0xff]
        %v1666 = vld [vmem:[%s5 + $0x150] sm:$0xff]
        %v1667 = vld [vmem:[%s5 + $0x158] sm:$0xff]
        %v1668 = vld [vmem:[%s5 + $0x160] sm:$0xff]
        %v1669 = vld [vmem:[%s5 + $0x168] sm:$0xff]
        %v1670 = vld [vmem:[%s5 + $0x170] sm:$0xff]
        %v1671 = vld [vmem:[%s5 + $0x178] sm:$0xff]
        %v1672 = vld [vmem:[%s5 + $0x180] sm:$0xff]
        %v1673 = vld [vmem:[%s5 + $0x188] sm:$0xff]
        %v1674 = vld [vmem:[%s5 + $0x190] sm:$0xff]
        %v1675 = vld [vmem:[%s5 + $0x198] sm:$0xff]
        %v1676 = vld [vmem:[%s5 + $0x1a0] sm:$0xff]
        %v1677 = vld [vmem:[%s5 + $0x1a8] sm:$0xff]
        %v1678 = vld [vmem:[%s5 + $0x1b0] sm:$0xff]
        %v1679 = vld [vmem:[%s5 + $0x1b8] sm:$0xff]
        %v1680 = vld [vmem:[%s5 + $0x1c0] sm:$0xff]
        %v1681 = vld [vmem:[%s5 + $0x1c8] sm:$0xff]
        %v1682 = vld [vmem:[%s5 + $0x1d0] sm:$0xff]
        %v1683 = vld [vmem:[%s5 + $0x1d8] sm:$0xff]
        %v1684 = vld [vmem:[%s5 + $0x1e0] sm:$0xff]
        %v1685 = vld [vmem:[%s5 + $0x1e8] sm:$0xff]
        %v1686 = vld [vmem:[%s5 + $0x1f0] sm:$0xff]
        %v1687 = vld [vmem:[%s5 + $0x1f8] sm:$0xff]
        %v1688 = vld [vmem:[%s5 + $0x200] sm:$0xff]
        %v1689 = vld [vmem:[%s5 + $0x208] sm:$0xff]
        %v1690 = vld [vmem:[%s5 + $0x210] sm:$0xff]
        %v1691 = vld [vmem:[%s5 + $0x218] sm:$0xff]
        %v1692 = vld [vmem:[%s5 + $0x220] sm:$0xff]
        %v1693 = vld [vmem:[%s5 + $0x228] sm:$0xff]
        %v1694 = vld [vmem:[%s5 + $0x230] sm:$0xff]
        %v1695 = vld [vmem:[%s5 + $0x238] sm:$0xff]
        %v1696 = vld [vmem:[%s5 + $0x240] sm:$0xff]
        %v1697 = vld [vmem:[%s5 + $0x248] sm:$0xff]
        %v1698 = vld [vmem:[%s5 + $0x250] sm:$0xff]
        %v1699 = vld [vmem:[%s5 + $0x258] sm:$0xff]
        %v1700 = vld [vmem:[%s5 + $0x260] sm:$0xff]
        %v1701 = vld [vmem:[%s5 + $0x268] sm:$0xff]
        %v1702 = vld [vmem:[%s5 + $0x270] sm:$0xff]
        %v1703 = vld [vmem:[%s5 + $0x278] sm:$0xff]
        %v1704 = vld [vmem:[%s5 + $0x280] sm:$0xff]
        %v1705 = vld [vmem:[%s5 + $0x288] sm:$0xff]
        %v1706 = vld [vmem:[%s5 + $0x290] sm:$0xff]
        %v1707 = vld [vmem:[%s5 + $0x298] sm:$0xff]
        %v1708 = vld [vmem:[%s5 + $0x2a0] sm:$0xff]
        %v1709 = vld [vmem:[%s5 + $0x2a8] sm:$0xff]
        %v1710 = vld [vmem:[%s5 + $0x2b0] sm:$0xff]
        %v1711 = vld [vmem:[%s5 + $0x2b8] sm:$0xff]
        %v1712 = vld [vmem:[%s5 + $0x2c0] sm:$0xff]
        %v1713 = vld [vmem:[%s5 + $0x2c8] sm:$0xff]
        %v1714 = vld [vmem:[%s5 + $0x2d0] sm:$0xff]
        %v1715 = vld [vmem:[%s5 + $0x2d8] sm:$0xff]
        %v1716 = vld [vmem:[%s5 + $0x2e0] sm:$0xff]
        %v1717 = vld [vmem:[%s5 + $0x2e8] sm:$0xff]
        %v1718 = vld [vmem:[%s5 + $0x2f0] sm:$0xff]
        %v1719 = vld [vmem:[%s5 + $0x2f8] sm:$0xff]
        %v1720 = vld [vmem:[%s5 + $0x300] sm:$0xff]
        %v1721 = vld [vmem:[%s5 + $0x308] sm:$0xff]
        %v1722 = vld [vmem:[%s5 + $0x310] sm:$0xff]
        %v1723 = vld [vmem:[%s5 + $0x318] sm:$0xff]
        %v1724 = vld [vmem:[%s5 + $0x320] sm:$0xff]
        %v1725 = vld [vmem:[%s5 + $0x328] sm:$0xff]
        %v1726 = vld [vmem:[%s5 + $0x330] sm:$0xff]
        %v1727 = vld [vmem:[%s5 + $0x338] sm:$0xff]
        %v1728 = vld [vmem:[%s5 + $0x340] sm:$0xff]
        %v1729 = vld [vmem:[%s5 + $0x348] sm:$0xff]
        %v1730 = vld [vmem:[%s5 + $0x350] sm:$0xff]
        %v1731 = vld [vmem:[%s5 + $0x358] sm:$0xff]
        %v1732 = vld [vmem:[%s5 + $0x360] sm:$0xff]
        %v1733 = vld [vmem:[%s5 + $0x368] sm:$0xff]
        %v1734 = vld [vmem:[%s5 + $0x370] sm:$0xff]
        %v1735 = vld [vmem:[%s5 + $0x378] sm:$0xff]
        %v1736 = vld [vmem:[%s6] sm:$0xf]
        %v1738 = vperm.slane %v1736, 0
        %v1739 = vperm.slane %v1736, 1
        %v1740 = vperm.slane %v1736, 2
        %v1741 = vperm.slane %v1736, 3
        %v1858 = vunpack.c.l.b16 %v1624
        %v1859 = vunpack.c.h.b16 %v1624
        %v1860 = vunpack.c.l.b16 %v1625
        %v1861 = vunpack.c.h.b16 %v1625
        %v1862 = vunpack.c.l.b16 %v1626
        %v1863 = vunpack.c.h.b16 %v1626
        %v1864 = vunpack.c.l.b16 %v1627
        %v1865 = vunpack.c.h.b16 %v1627
        %v1866 = vunpack.c.l.b16 %v1628
        %v1867 = vunpack.c.h.b16 %v1628
        %v1868 = vunpack.c.l.b16 %v1629
        %v1869 = vunpack.c.h.b16 %v1629
        %v1870 = vunpack.c.l.b16 %v1630
        %v1871 = vunpack.c.h.b16 %v1630
        %v1872 = vunpack.c.l.b16 %v1631
        %v1873 = vunpack.c.h.b16 %v1631
        %v1874 = vunpack.c.l.b16 %v1632
        %v1875 = vunpack.c.h.b16 %v1632
        %v1876 = vunpack.c.l.b16 %v1633
        %v1877 = vunpack.c.h.b16 %v1633
        %v1878 = vunpack.c.l.b16 %v1634
        %v1879 = vunpack.c.h.b16 %v1634
        %v1880 = vunpack.c.l.b16 %v1635
        %v1881 = vunpack.c.h.b16 %v1635
        %v1882 = vunpack.c.l.b16 %v1636
        %v1883 = vunpack.c.h.b16 %v1636
        %v1884 = vunpack.c.l.b16 %v1637
        %v1885 = vunpack.c.h.b16 %v1637
        %v1886 = vunpack.c.l.b16 %v1638
        %v1887 = vunpack.c.h.b16 %v1638
        %v1888 = vunpack.c.l.b16 %v1639
        %v1889 = vunpack.c.h.b16 %v1639
        %v1890 = vunpack.c.l.b16 %v1640
        %v1891 = vunpack.c.h.b16 %v1640
        %v1892 = vunpack.c.l.b16 %v1641
        %v1893 = vunpack.c.h.b16 %v1641
        %v1894 = vunpack.c.l.b16 %v1642
        %v1895 = vunpack.c.h.b16 %v1642
        %v1896 = vunpack.c.l.b16 %v1643
        %v1897 = vunpack.c.h.b16 %v1643
        %v1898 = vunpack.c.l.b16 %v1644
        %v1899 = vunpack.c.h.b16 %v1644
        %v1900 = vunpack.c.l.b16 %v1645
        %v1901 = vunpack.c.h.b16 %v1645
        %v1902 = vunpack.c.l.b16 %v1646
        %v1903 = vunpack.c.h.b16 %v1646
        %v1904 = vunpack.c.l.b16 %v1647
        %v1905 = vunpack.c.h.b16 %v1647
        %v1906 = vunpack.c.l.b16 %v1648
        %v1907 = vunpack.c.h.b16 %v1648
        %v1908 = vunpack.c.l.b16 %v1649
        %v1909 = vunpack.c.h.b16 %v1649
        %v1910 = vunpack.c.l.b16 %v1650
        %v1911 = vunpack.c.h.b16 %v1650
        %v1912 = vunpack.c.l.b16 %v1651
        %v1913 = vunpack.c.h.b16 %v1651
        %v1914 = vunpack.c.l.b16 %v1652
        %v1915 = vunpack.c.h.b16 %v1652
        %v1916 = vunpack.c.l.b16 %v1653
        %v1917 = vunpack.c.h.b16 %v1653
        %v1918 = vunpack.c.l.b16 %v1654
        %v1919 = vunpack.c.h.b16 %v1654
        %v1920 = vunpack.c.l.b16 %v1655
        %v1921 = vunpack.c.h.b16 %v1655
        %v1922 = vunpack.c.l.b16 %v1656
        %v1923 = vunpack.c.h.b16 %v1656
        %v1924 = vunpack.c.l.b16 %v1657
        %v1925 = vunpack.c.h.b16 %v1657
        %v1926 = vunpack.c.l.b16 %v1658
        %v1927 = vunpack.c.h.b16 %v1658
        %v1928 = vunpack.c.l.b16 %v1659
        %v1929 = vunpack.c.h.b16 %v1659
        %v1930 = vunpack.c.l.b16 %v1660
        %v1931 = vunpack.c.h.b16 %v1660
        %v1932 = vunpack.c.l.b16 %v1661
        %v1933 = vunpack.c.h.b16 %v1661
        %v1934 = vunpack.c.l.b16 %v1662
        %v1935 = vunpack.c.h.b16 %v1662
        %v1936 = vunpack.c.l.b16 %v1663
        %v1937 = vunpack.c.h.b16 %v1663
        %v1938 = vunpack.c.l.b16 %v1664
        %v1939 = vunpack.c.h.b16 %v1664
        %v1940 = vunpack.c.l.b16 %v1665
        %v1941 = vunpack.c.h.b16 %v1665
        %v1942 = vunpack.c.l.b16 %v1666
        %v1943 = vunpack.c.h.b16 %v1666
        %v1944 = vunpack.c.l.b16 %v1667
        %v1945 = vunpack.c.h.b16 %v1667
        %v1946 = vunpack.c.l.b16 %v1668
        %v1947 = vunpack.c.h.b16 %v1668
        %v1948 = vunpack.c.l.b16 %v1669
        %v1949 = vunpack.c.h.b16 %v1669
        %v1950 = vunpack.c.l.b16 %v1670
        %v1951 = vunpack.c.h.b16 %v1670
        %v1952 = vunpack.c.l.b16 %v1671
        %v1953 = vunpack.c.h.b16 %v1671
        %v1954 = vunpack.c.l.b16 %v1672
        %v1955 = vunpack.c.h.b16 %v1672
        %v1956 = vunpack.c.l.b16 %v1673
        %v1957 = vunpack.c.h.b16 %v1673
        %v1958 = vunpack.c.l.b16 %v1674
        %v1959 = vunpack.c.h.b16 %v1674
        %v1960 = vunpack.c.l.b16 %v1675
        %v1961 = vunpack.c.h.b16 %v1675
        %v1962 = vunpack.c.l.b16 %v1676
        %v1963 = vunpack.c.h.b16 %v1676
        %v1964 = vunpack.c.l.b16 %v1677
        %v1965 = vunpack.c.h.b16 %v1677
        %v1966 = vunpack.c.l.b16 %v1678
        %v1967 = vunpack.c.h.b16 %v1678
        %v1968 = vunpack.c.l.b16 %v1679
        %v1969 = vunpack.c.h.b16 %v1679
        %v1970 = vunpack.c.l.b16 %v1680
        %v1971 = vunpack.c.h.b16 %v1680
        %v1972 = vunpack.c.l.b16 %v1681
        %v1973 = vunpack.c.h.b16 %v1681
        %v1974 = vunpack.c.l.b16 %v1682
        %v1975 = vunpack.c.h.b16 %v1682
        %v1976 = vunpack.c.l.b16 %v1683
        %v1977 = vunpack.c.h.b16 %v1683
        %v1978 = vunpack.c.l.b16 %v1684
        %v1979 = vunpack.c.h.b16 %v1684
        %v1980 = vunpack.c.l.b16 %v1685
        %v1981 = vunpack.c.h.b16 %v1685
        %v1982 = vunpack.c.l.b16 %v1686
        %v1983 = vunpack.c.h.b16 %v1686
        %v1984 = vunpack.c.l.b16 %v1687
        %v1985 = vunpack.c.h.b16 %v1687
        %v1986 = vunpack.c.l.b16 %v1688
        %v1987 = vunpack.c.h.b16 %v1688
        %v1988 = vunpack.c.l.b16 %v1689
        %v1989 = vunpack.c.h.b16 %v1689
        %v1990 = vunpack.c.l.b16 %v1690
        %v1991 = vunpack.c.h.b16 %v1690
        %v1992 = vunpack.c.l.b16 %v1691
        %v1993 = vunpack.c.h.b16 %v1691
        %v1994 = vunpack.c.l.b16 %v1692
        %v1995 = vunpack.c.h.b16 %v1692
        %v1996 = vunpack.c.l.b16 %v1693
        %v1997 = vunpack.c.h.b16 %v1693
        %v1998 = vunpack.c.l.b16 %v1694
        %v1999 = vunpack.c.h.b16 %v1694
        %v2000 = vunpack.c.l.b16 %v1695
        %v2001 = vunpack.c.h.b16 %v1695
        %v2002 = vunpack.c.l.b16 %v1696
        %v2003 = vunpack.c.h.b16 %v1696
        %v2004 = vunpack.c.l.b16 %v1697
        %v2005 = vunpack.c.h.b16 %v1697
        %v2006 = vunpack.c.l.b16 %v1698
        %v2007 = vunpack.c.h.b16 %v1698
        %v2008 = vunpack.c.l.b16 %v1699
        %v2009 = vunpack.c.h.b16 %v1699
        %v2010 = vunpack.c.l.b16 %v1700
        %v2011 = vunpack.c.h.b16 %v1700
        %v2012 = vunpack.c.l.b16 %v1701
        %v2013 = vunpack.c.h.b16 %v1701
        %v2014 = vunpack.c.l.b16 %v1702
        %v2015 = vunpack.c.h.b16 %v1702
        %v2016 = vunpack.c.l.b16 %v1703
        %v2017 = vunpack.c.h.b16 %v1703
        %v2018 = vunpack.c.l.b16 %v1704
        %v2019 = vunpack.c.h.b16 %v1704
        %v2020 = vunpack.c.l.b16 %v1705
        %v2021 = vunpack.c.h.b16 %v1705
        %v2022 = vunpack.c.l.b16 %v1706
        %v2023 = vunpack.c.h.b16 %v1706
        %v2024 = vunpack.c.l.b16 %v1707
        %v2025 = vunpack.c.h.b16 %v1707
        %v2026 = vunpack.c.l.b16 %v1708
        %v2027 = vunpack.c.h.b16 %v1708
        %v2028 = vunpack.c.l.b16 %v1709
        %v2029 = vunpack.c.h.b16 %v1709
        %v2030 = vunpack.c.l.b16 %v1710
        %v2031 = vunpack.c.h.b16 %v1710
        %v2032 = vunpack.c.l.b16 %v1711
        %v2033 = vunpack.c.h.b16 %v1711
        %v2034 = vunpack.c.l.b16 %v1712
        %v2035 = vunpack.c.h.b16 %v1712
        %v2036 = vunpack.c.l.b16 %v1713
        %v2037 = vunpack.c.h.b16 %v1713
        %v2038 = vunpack.c.l.b16 %v1714
        %v2039 = vunpack.c.h.b16 %v1714
        %v2040 = vunpack.c.l.b16 %v1715
        %v2041 = vunpack.c.h.b16 %v1715
        %v2042 = vunpack.c.l.b16 %v1716
        %v2043 = vunpack.c.h.b16 %v1716
        %v2044 = vunpack.c.l.b16 %v1717
        %v2045 = vunpack.c.h.b16 %v1717
        %v2046 = vunpack.c.l.b16 %v1718
        %v2047 = vunpack.c.h.b16 %v1718
        %v2048 = vunpack.c.l.b16 %v1719
        %v2049 = vunpack.c.h.b16 %v1719
        %v2050 = vunpack.c.l.b16 %v1720
        %v2051 = vunpack.c.h.b16 %v1720
        %v2052 = vunpack.c.l.b16 %v1721
        %v2053 = vunpack.c.h.b16 %v1721
        %v2054 = vunpack.c.l.b16 %v1722
        %v2055 = vunpack.c.h.b16 %v1722
        %v2056 = vunpack.c.l.b16 %v1723
        %v2057 = vunpack.c.h.b16 %v1723
        %v2058 = vunpack.c.l.b16 %v1724
        %v2059 = vunpack.c.h.b16 %v1724
        %v2060 = vunpack.c.l.b16 %v1725
        %v2061 = vunpack.c.h.b16 %v1725
        %v2062 = vunpack.c.l.b16 %v1726
        %v2063 = vunpack.c.h.b16 %v1726
        %v2064 = vunpack.c.l.b16 %v1727
        %v2065 = vunpack.c.h.b16 %v1727
        %v2066 = vunpack.c.l.b16 %v1728
        %v2067 = vunpack.c.h.b16 %v1728
        %v2068 = vunpack.c.l.b16 %v1729
        %v2069 = vunpack.c.h.b16 %v1729
        %v2070 = vunpack.c.l.b16 %v1730
        %v2071 = vunpack.c.h.b16 %v1730
        %v2072 = vunpack.c.l.b16 %v1731
        %v2073 = vunpack.c.h.b16 %v1731
        %v2074 = vunpack.c.l.b16 %v1732
        %v2075 = vunpack.c.h.b16 %v1732
        %v2076 = vunpack.c.l.b16 %v1733
        %v2077 = vunpack.c.h.b16 %v1733
        %v2078 = vunpack.c.l.b16 %v1734
        %v2079 = vunpack.c.h.b16 %v1734
        %v2080 = vunpack.c.l.b16 %v1735
        %v2081 = vunpack.c.h.b16 %v1735
        %v2082 = vpack.c.b16 %v1862, %v1858
        %v2083 = vpack.c.b16 %v1863, %v1859
        %v2084 = vpack.c.b16 %v1864, %v1860
        %v2085 = vpack.c.b16 %v1865, %v1861
        %v2086 = vpack.c.b16 %v1870, %v1866
        %v2087 = vpack.c.b16 %v1871, %v1867
        %v2088 = vpack.c.b16 %v1872, %v1868
        %v2089 = vpack.c.b16 %v1873, %v1869
        %v2090 = vpack.c.b16 %v1878, %v1874
        %v2091 = vpack.c.b16 %v1879, %v1875
        %v2092 = vpack.c.b16 %v1880, %v1876
        %v2093 = vpack.c.b16 %v1881, %v1877
        %v2094 = vpack.c.b16 %v1886, %v1882
        %v2095 = vpack.c.b16 %v1887, %v1883
        %v2096 = vpack.c.b16 %v1888, %v1884
        %v2097 = vpack.c.b16 %v1889, %v1885
        %v2098 = vpack.c.b16 %v1894, %v1890
        %v2099 = vpack.c.b16 %v1895, %v1891
        %v2100 = vpack.c.b16 %v1896, %v1892
        %v2101 = vpack.c.b16 %v1897, %v1893
        %v2102 = vpack.c.b16 %v1902, %v1898
        %v2103 = vpack.c.b16 %v1903, %v1899
        %v2104 = vpack.c.b16 %v1904, %v1900
        %v2105 = vpack.c.b16 %v1905, %v1901
        %v2106 = vpack.c.b16 %v1910, %v1906
        %v2107 = vpack.c.b16 %v1911, %v1907
        %v2108 = vpack.c.b16 %v1912, %v1908
        %v2109 = vpack.c.b16 %v1913, %v1909
        %v2110 = vpack.c.b16 %v1918, %v1914
        %v2111 = vpack.c.b16 %v1919, %v1915
        %v2112 = vpack.c.b16 %v1920, %v1916
        %v2113 = vpack.c.b16 %v1921, %v1917
        %v2114 = vpack.c.b16 %v1926, %v1922
        %v2115 = vpack.c.b16 %v1927, %v1923
        %v2116 = vpack.c.b16 %v1928, %v1924
        %v2117 = vpack.c.b16 %v1929, %v1925
        %v2118 = vpack.c.b16 %v1934, %v1930
        %v2119 = vpack.c.b16 %v1935, %v1931
        %v2120 = vpack.c.b16 %v1936, %v1932
        %v2121 = vpack.c.b16 %v1937, %v1933
        %v2122 = vpack.c.b16 %v1942, %v1938
        %v2123 = vpack.c.b16 %v1943, %v1939
        %v2124 = vpack.c.b16 %v1944, %v1940
        %v2125 = vpack.c.b16 %v1945, %v1941
        %v2126 = vpack.c.b16 %v1950, %v1946
        %v2127 = vpack.c.b16 %v1951, %v1947
        %v2128 = vpack.c.b16 %v1952, %v1948
        %v2129 = vpack.c.b16 %v1953, %v1949
        %v2130 = vpack.c.b16 %v1958, %v1954
        %v2131 = vpack.c.b16 %v1959, %v1955
        %v2132 = vpack.c.b16 %v1960, %v1956
        %v2133 = vpack.c.b16 %v1961, %v1957
        %v2134 = vpack.c.b16 %v1966, %v1962
        %v2135 = vpack.c.b16 %v1967, %v1963
        %v2136 = vpack.c.b16 %v1968, %v1964
        %v2137 = vpack.c.b16 %v1969, %v1965
        %v2138 = vpack.c.b16 %v1974, %v1970
        %v2139 = vpack.c.b16 %v1975, %v1971
        %v2140 = vpack.c.b16 %v1976, %v1972
        %v2141 = vpack.c.b16 %v1977, %v1973
        %v2142 = vpack.c.b16 %v1982, %v1978
        %v2143 = vpack.c.b16 %v1983, %v1979
        %v2144 = vpack.c.b16 %v1984, %v1980
        %v2145 = vpack.c.b16 %v1985, %v1981
        %v2146 = vpack.c.b16 %v1990, %v1986
        %v2147 = vpack.c.b16 %v1991, %v1987
        %v2148 = vpack.c.b16 %v1992, %v1988
        %v2149 = vpack.c.b16 %v1993, %v1989
        %v2150 = vpack.c.b16 %v1998, %v1994
        %v2151 = vpack.c.b16 %v1999, %v1995
        %v2152 = vpack.c.b16 %v2000, %v1996
        %v2153 = vpack.c.b16 %v2001, %v1997
        %v2154 = vpack.c.b16 %v2006, %v2002
        %v2155 = vpack.c.b16 %v2007, %v2003
        %v2156 = vpack.c.b16 %v2008, %v2004
        %v2157 = vpack.c.b16 %v2009, %v2005
        %v2158 = vpack.c.b16 %v2014, %v2010
        %v2159 = vpack.c.b16 %v2015, %v2011
        %v2160 = vpack.c.b16 %v2016, %v2012
        %v2161 = vpack.c.b16 %v2017, %v2013
        %v2162 = vpack.c.b16 %v2022, %v2018
        %v2163 = vpack.c.b16 %v2023, %v2019
        %v2164 = vpack.c.b16 %v2024, %v2020
        %v2165 = vpack.c.b16 %v2025, %v2021
        %v2166 = vpack.c.b16 %v2030, %v2026
        %v2167 = vpack.c.b16 %v2031, %v2027
        %v2168 = vpack.c.b16 %v2032, %v2028
        %v2169 = vpack.c.b16 %v2033, %v2029
        %v2170 = vpack.c.b16 %v2038, %v2034
        %v2171 = vpack.c.b16 %v2039, %v2035
        %v2172 = vpack.c.b16 %v2040, %v2036
        %v2173 = vpack.c.b16 %v2041, %v2037
        %v2174 = vpack.c.b16 %v2046, %v2042
        %v2175 = vpack.c.b16 %v2047, %v2043
        %v2176 = vpack.c.b16 %v2048, %v2044
        %v2177 = vpack.c.b16 %v2049, %v2045
        %v2178 = vpack.c.b16 %v2054, %v2050
        %v2179 = vpack.c.b16 %v2055, %v2051
        %v2180 = vpack.c.b16 %v2056, %v2052
        %v2181 = vpack.c.b16 %v2057, %v2053
        %v2182 = vpack.c.b16 %v2062, %v2058
        %v2183 = vpack.c.b16 %v2063, %v2059
        %v2184 = vpack.c.b16 %v2064, %v2060
        %v2185 = vpack.c.b16 %v2065, %v2061
        %v2186 = vpack.c.b16 %v2070, %v2066
        %v2187 = vpack.c.b16 %v2071, %v2067
        %v2188 = vpack.c.b16 %v2072, %v2068
        %v2189 = vpack.c.b16 %v2073, %v2069
        %v2190 = vpack.c.b16 %v2078, %v2074
        %v2191 = vpack.c.b16 %v2079, %v2075
        %v2192 = vpack.c.b16 %v2080, %v2076
        %v2193 = vpack.c.b16 %v2081, %v2077
        %vm2306 = vcmask 523264
        %v2308 = vsel %vm2306, %v1623, 0
        %2310 = vmatpush.bf16.msra.mxu0 %v2110
        %2311 = vmatpush.bf16.msra.mxu0 %v2106
        %2312 = vmatpush.bf16.msra.mxu0 %v2102
        %2313 = vmatpush.bf16.msra.mxu0 %v2098
        %2314 = vmatpush.bf16.msra.mxu0 %v2094
        %2315 = vmatpush.bf16.msra.mxu0 %v2090
        %2316 = vmatpush.bf16.msra.mxu0 %v2086
        %2317 = vmatpush.bf16.msra.mxu0 %v2082
        %2318 = vmatmul.bf16.gmra.mxu0 %v1620
        %v2319 = vpop.f32.mrf.mxu0
        %v2320 = vadd.f32 %v1738, %v2319
        %v2321 = vpop.f32.mrf.mxu0
        %2322 = vdwg.mxu0
        %2323 = vmatpush.bf16.msra.mxu0 %v2142
        %2324 = vmatpush.bf16.msra.mxu0 %v2138
        %2325 = vmatpush.bf16.msra.mxu0 %v2134
        %2326 = vmatpush.bf16.msra.mxu0 %v2130
        %2327 = vmatpush.bf16.msra.mxu0 %v2126
        %2328 = vmatpush.bf16.msra.mxu0 %v2122
        %2329 = vmatpush.bf16.msra.mxu0 %v2118
        %2330 = vmatpush.bf16.msra.mxu0 %v2114
        %2331 = vmatmul.bf16.gmra.mxu0 %v1621
        %v2332 = vpop.f32.mrf.mxu0
        %v2333 = vadd.f32 %v2320, %v2332
        %v2334 = vpop.f32.mrf.mxu0
        %2335 = vdwg.mxu0
        %2336 = vmatpush.bf16.msra.mxu0 %v2174
        %2337 = vmatpush.bf16.msra.mxu0 %v2170
        %2338 = vmatpush.bf16.msra.mxu0 %v2166
        %2339 = vmatpush.bf16.msra.mxu0 %v2162
        %2340 = vmatpush.bf16.msra.mxu0 %v2158
        %2341 = vmatpush.bf16.msra.mxu0 %v2154
        %2342 = vmatpush.bf16.msra.mxu0 %v2150
        %2343 = vmatpush.bf16.msra.mxu0 %v2146
        %2344 = vmatmul.bf16.gmra.mxu0 %v1622
        %v2345 = vpop.f32.mrf.mxu0
        %v2346 = vadd.f32 %v2333, %v2345
        %v2347 = vpop.f32.mrf.mxu0
        %2348 = vdwg.mxu0
        %2349 = vmatpush.bf16.msra.mxu0 0
        %2350 = vmatpush.bf16.msra.mxu0 0
        %2351 = vmatpush.bf16.msra.mxu0 0
        %2352 = vmatpush.bf16.msra.mxu0 0
        %2353 = vmatpush.bf16.msra.mxu0 %v2190
        %2354 = vmatpush.bf16.msra.mxu0 %v2186
        %2355 = vmatpush.bf16.msra.mxu0 %v2182
        %2356 = vmatpush.bf16.msra.mxu0 %v2178
        %2357 = vmatmul.bf16.gmra.mxu0 %v2308
        %v2358 = vpop.f32.mrf.mxu0
        %v2359 = vadd.f32 %v2346, %v2358
        %v2360 = vpop.f32.mrf.mxu0
        %2361 = vdwg.mxu0
        %2362 = vmatpush.bf16.msra.mxu0 %v2111
        %2363 = vmatpush.bf16.msra.mxu0 %v2107
        %2364 = vmatpush.bf16.msra.mxu0 %v2103
        %2365 = vmatpush.bf16.msra.mxu0 %v2099
        %2366 = vmatpush.bf16.msra.mxu0 %v2095
        %2367 = vmatpush.bf16.msra.mxu0 %v2091
        %2368 = vmatpush.bf16.msra.mxu0 %v2087
        %2369 = vmatpush.bf16.msra.mxu0 %v2083
        %2370 = vmatmul.bf16.gmra.mxu0 %v1620
        %v2371 = vpop.f32.mrf.mxu0
        %v2372 = vadd.f32 %v1739, %v2371
        %v2373 = vpop.f32.mrf.mxu0
        %2374 = vdwg.mxu0
        %2375 = vmatpush.bf16.msra.mxu0 %v2143
        %2376 = vmatpush.bf16.msra.mxu0 %v2139
        %2377 = vmatpush.bf16.msra.mxu0 %v2135
        %2378 = vmatpush.bf16.msra.mxu0 %v2131
        %2379 = vmatpush.bf16.msra.mxu0 %v2127
        %2380 = vmatpush.bf16.msra.mxu0 %v2123
        %2381 = vmatpush.bf16.msra.mxu0 %v2119
        %2382 = vmatpush.bf16.msra.mxu0 %v2115
        %2383 = vmatmul.bf16.gmra.mxu0 %v1621
        %v2384 = vpop.f32.mrf.mxu0
        %v2385 = vadd.f32 %v2372, %v2384
        %v2386 = vpop.f32.mrf.mxu0
        %2387 = vdwg.mxu0
        %2388 = vmatpush.bf16.msra.mxu0 %v2175
        %2389 = vmatpush.bf16.msra.mxu0 %v2171
        %2390 = vmatpush.bf16.msra.mxu0 %v2167
        %2391 = vmatpush.bf16.msra.mxu0 %v2163
        %2392 = vmatpush.bf16.msra.mxu0 %v2159
        %2393 = vmatpush.bf16.msra.mxu0 %v2155
        %2394 = vmatpush.bf16.msra.mxu0 %v2151
        %2395 = vmatpush.bf16.msra.mxu0 %v2147
        %2396 = vmatmul.bf16.gmra.mxu0 %v1622
        %v2397 = vpop.f32.mrf.mxu0
        %v2398 = vadd.f32 %v2385, %v2397
        %v2399 = vpop.f32.mrf.mxu0
        %2400 = vdwg.mxu0
        %2401 = vmatpush.bf16.msra.mxu0 0
        %2402 = vmatpush.bf16.msra.mxu0 0
        %2403 = vmatpush.bf16.msra.mxu0 0
        %2404 = vmatpush.bf16.msra.mxu0 0
        %2405 = vmatpush.bf16.msra.mxu0 %v2191
        %2406 = vmatpush.bf16.msra.mxu0 %v2187
        %2407 = vmatpush.bf16.msra.mxu0 %v2183
        %2408 = vmatpush.bf16.msra.mxu0 %v2179
        %2409 = vmatmul.bf16.gmra.mxu0 %v2308
        %v2410 = vpop.f32.mrf.mxu0
        %v2411 = vadd.f32 %v2398, %v2410
        %v2412 = vpop.f32.mrf.mxu0
        %2413 = vdwg.mxu0
        %2414 = vmatpush.bf16.msra.mxu0 %v2112
        %2415 = vmatpush.bf16.msra.mxu0 %v2108
        %2416 = vmatpush.bf16.msra.mxu0 %v2104
        %2417 = vmatpush.bf16.msra.mxu0 %v2100
        %2418 = vmatpush.bf16.msra.mxu0 %v2096
        %2419 = vmatpush.bf16.msra.mxu0 %v2092
        %2420 = vmatpush.bf16.msra.mxu0 %v2088
        %2421 = vmatpush.bf16.msra.mxu0 %v2084
        %2422 = vmatmul.bf16.gmra.mxu0 %v1620
        %v2423 = vpop.f32.mrf.mxu0
        %v2424 = vadd.f32 %v1740, %v2423
        %v2425 = vpop.f32.mrf.mxu0
        %2426 = vdwg.mxu0
        %2427 = vmatpush.bf16.msra.mxu0 %v2144
        %2428 = vmatpush.bf16.msra.mxu0 %v2140
        %2429 = vmatpush.bf16.msra.mxu0 %v2136
        %2430 = vmatpush.bf16.msra.mxu0 %v2132
        %2431 = vmatpush.bf16.msra.mxu0 %v2128
        %2432 = vmatpush.bf16.msra.mxu0 %v2124
        %2433 = vmatpush.bf16.msra.mxu0 %v2120
        %2434 = vmatpush.bf16.msra.mxu0 %v2116
        %2435 = vmatmul.bf16.gmra.mxu0 %v1621
        %v2436 = vpop.f32.mrf.mxu0
        %v2437 = vadd.f32 %v2424, %v2436
        %v2438 = vpop.f32.mrf.mxu0
        %2439 = vdwg.mxu0
        %2440 = vmatpush.bf16.msra.mxu0 %v2176
        %2441 = vmatpush.bf16.msra.mxu0 %v2172
        %2442 = vmatpush.bf16.msra.mxu0 %v2168
        %2443 = vmatpush.bf16.msra.mxu0 %v2164
        %2444 = vmatpush.bf16.msra.mxu0 %v2160
        %2445 = vmatpush.bf16.msra.mxu0 %v2156
        %2446 = vmatpush.bf16.msra.mxu0 %v2152
        %2447 = vmatpush.bf16.msra.mxu0 %v2148
        %2448 = vmatmul.bf16.gmra.mxu0 %v1622
        %v2449 = vpop.f32.mrf.mxu0
        %v2450 = vadd.f32 %v2437, %v2449
        %v2451 = vpop.f32.mrf.mxu0
        %2452 = vdwg.mxu0
        %2453 = vmatpush.bf16.msra.mxu0 0
        %2454 = vmatpush.bf16.msra.mxu0 0
        %2455 = vmatpush.bf16.msra.mxu0 0
        %2456 = vmatpush.bf16.msra.mxu0 0
        %2457 = vmatpush.bf16.msra.mxu0 %v2192
        %2458 = vmatpush.bf16.msra.mxu0 %v2188
        %2459 = vmatpush.bf16.msra.mxu0 %v2184
        %2460 = vmatpush.bf16.msra.mxu0 %v2180
        %2461 = vmatmul.bf16.gmra.mxu0 %v2308
        %v2462 = vpop.f32.mrf.mxu0
        %v2463 = vadd.f32 %v2450, %v2462
        %v2464 = vpop.f32.mrf.mxu0
        %2465 = vdwg.mxu0
        %2466 = vmatpush.bf16.msra.mxu0 %v2113
        %2467 = vmatpush.bf16.msra.mxu0 %v2109
        %2468 = vmatpush.bf16.msra.mxu0 %v2105
        %2469 = vmatpush.bf16.msra.mxu0 %v2101
        %2470 = vmatpush.bf16.msra.mxu0 %v2097
        %2471 = vmatpush.bf16.msra.mxu0 %v2093
        %2472 = vmatpush.bf16.msra.mxu0 %v2089
        %2473 = vmatpush.bf16.msra.mxu0 %v2085
        %2474 = vmatmul.bf16.gmra.mxu0 %v1620
        %v2475 = vpop.f32.mrf.mxu0
        %v2476 = vadd.f32 %v1741, %v2475
        %v2477 = vpop.f32.mrf.mxu0
        %2478 = vdwg.mxu0
        %2479 = vmatpush.bf16.msra.mxu0 %v2145
        %2480 = vmatpush.bf16.msra.mxu0 %v2141
        %2481 = vmatpush.bf16.msra.mxu0 %v2137
        %2482 = vmatpush.bf16.msra.mxu0 %v2133
        %2483 = vmatpush.bf16.msra.mxu0 %v2129
        %2484 = vmatpush.bf16.msra.mxu0 %v2125
        %2485 = vmatpush.bf16.msra.mxu0 %v2121
        %2486 = vmatpush.bf16.msra.mxu0 %v2117
        %2487 = vmatmul.bf16.gmra.mxu0 %v1621
        %v2488 = vpop.f32.mrf.mxu0
        %v2489 = vadd.f32 %v2476, %v2488
        %v2490 = vpop.f32.mrf.mxu0
        %2491 = vdwg.mxu0
        %2492 = vmatpush.bf16.msra.mxu0 %v2177
        %2493 = vmatpush.bf16.msra.mxu0 %v2173
        %2494 = vmatpush.bf16.msra.mxu0 %v2169
        %2495 = vmatpush.bf16.msra.mxu0 %v2165
        %2496 = vmatpush.bf16.msra.mxu0 %v2161
        %2497 = vmatpush.bf16.msra.mxu0 %v2157
        %2498 = vmatpush.bf16.msra.mxu0 %v2153
        %2499 = vmatpush.bf16.msra.mxu0 %v2149
        %2500 = vmatmul.bf16.gmra.mxu0 %v1622
        %v2501 = vpop.f32.mrf.mxu0
        %v2502 = vadd.f32 %v2489, %v2501
        %v2503 = vpop.f32.mrf.mxu0
        %2504 = vdwg.mxu0
        %2505 = vmatpush.bf16.msra.mxu0 0
        %2506 = vmatpush.bf16.msra.mxu0 0
        %2507 = vmatpush.bf16.msra.mxu0 0
        %2508 = vmatpush.bf16.msra.mxu0 0
        %2509 = vmatpush.bf16.msra.mxu0 %v2193
        %2510 = vmatpush.bf16.msra.mxu0 %v2189
        %2511 = vmatpush.bf16.msra.mxu0 %v2185
        %2512 = vmatpush.bf16.msra.mxu0 %v2181
        %2513 = vmatmul.bf16.gmra.mxu0 %v2308
        %v2514 = vpop.f32.mrf.mxu0
        %v2515 = vadd.f32 %v2502, %v2514
        %v2516 = vpop.f32.mrf.mxu0
        %2517 = vdwg.mxu0
        %vm2518 = vcmp.gt.f32.partialorder %v2359, 0.0
        %vm2519 = vcmp.gt.f32.partialorder %v2411, 0.0
        %vm2520 = vcmp.gt.f32.partialorder %v2463, 0.0
        %vm2521 = vcmp.gt.f32.partialorder %v2515, 0.0
        %v2522 = vmin.f32 %v2359, 0.0
        %v2523 = vmin.f32 %v2411, 0.0
        %v2524 = vmin.f32 %v2463, 0.0
        %v2525 = vmin.f32 %v2515, 0.0
        %v2526 = vmul.f32 %v2522, 1.442695
        %v2527 = vpow.pop %v2526
        %v2528 = vmul.f32 %v2523, 1.442695
        %v2529 = vpow.pop %v2528
        %v2530 = vmul.f32 %v2524, 1.442695
        %v2531 = vpow.pop %v2530
        %v2532 = vmul.f32 %v2525, 1.442695
        %v2533 = vpow.pop %v2532
        %v2534 = vsub.f32 %v2527, 1.0
        %v2535 = vsub.f32 %v2529, 1.0
        %v2536 = vsub.f32 %v2531, 1.0
        %v2537 = vsub.f32 %v2533, 1.0
        %v2538 = vsel %vm2518, %v2359, %v2534
        %v2539 = vsel %vm2519, %v2411, %v2535
        %v2540 = vsel %vm2520, %v2463, %v2536
        %v2541 = vsel %vm2521, %v2515, %v2537
        %v2542 = vld [vmem:[%s7] sm:$0xff]
        %v2543 = vld [vmem:[%s7 + $0x8] sm:$0xff]
        %v2544 = vld [vmem:[%s7 + $0x10] sm:$0xff]
        %v2545 = vld [vmem:[%s7 + $0x18] sm:$0xff]
        %v2546 = vld [vmem:[%s7 + $0x20] sm:$0xff]
        %v2547 = vld [vmem:[%s7 + $0x28] sm:$0xff]
        %v2548 = vld [vmem:[%s7 + $0x30] sm:$0xff]
        %v2549 = vld [vmem:[%s7 + $0x38] sm:$0xff]
        %v2550 = vld [vmem:[%s7 + $0x40] sm:$0xff]
        %v2551 = vld [vmem:[%s7 + $0x48] sm:$0xff]
        %v2552 = vld [vmem:[%s7 + $0x50] sm:$0xff]
        %v2553 = vld [vmem:[%s7 + $0x58] sm:$0xff]
        %v2554 = vld [vmem:[%s7 + $0x60] sm:$0xff]
        %v2555 = vld [vmem:[%s7 + $0x68] sm:$0xff]
        %v2556 = vld [vmem:[%s7 + $0x70] sm:$0xff]
        %v2557 = vld [vmem:[%s7 + $0x78] sm:$0xff]
        %v2558 = vld [vmem:[%s7 + $0x80] sm:$0xff]
        %v2559 = vld [vmem:[%s7 + $0x88] sm:$0xff]
        %v2560 = vld [vmem:[%s7 + $0x90] sm:$0xff]
        %v2561 = vld [vmem:[%s7 + $0x98] sm:$0xff]
        %v2562 = vld [vmem:[%s7 + $0xa0] sm:$0xff]
        %v2563 = vld [vmem:[%s7 + $0xa8] sm:$0xff]
        %v2564 = vld [vmem:[%s7 + $0xb0] sm:$0xff]
        %v2565 = vld [vmem:[%s7 + $0xb8] sm:$0xff]
        %v2566 = vld [vmem:[%s7 + $0xc0] sm:$0xff]
        %v2567 = vld [vmem:[%s7 + $0xc8] sm:$0xff]
        %v2568 = vld [vmem:[%s7 + $0xd0] sm:$0xff]
        %v2569 = vld [vmem:[%s7 + $0xd8] sm:$0xff]
        %v2570 = vld [vmem:[%s7 + $0xe0] sm:$0xff]
        %v2571 = vld [vmem:[%s7 + $0xe8] sm:$0xff]
        %v2572 = vld [vmem:[%s7 + $0xf0] sm:$0xff]
        %v2573 = vld [vmem:[%s7 + $0xf8] sm:$0xff]
        %v2574 = vld [vmem:[%s7 + $0x100] sm:$0xff]
        %v2575 = vld [vmem:[%s7 + $0x108] sm:$0xff]
        %v2576 = vld [vmem:[%s7 + $0x110] sm:$0xff]
        %v2577 = vld [vmem:[%s7 + $0x118] sm:$0xff]
        %v2578 = vld [vmem:[%s7 + $0x120] sm:$0xff]
        %v2579 = vld [vmem:[%s7 + $0x128] sm:$0xff]
        %v2580 = vld [vmem:[%s7 + $0x130] sm:$0xff]
        %v2581 = vld [vmem:[%s7 + $0x138] sm:$0xff]
        %v2582 = vld [vmem:[%s7 + $0x140] sm:$0xff]
        %v2583 = vld [vmem:[%s7 + $0x148] sm:$0xff]
        %v2584 = vld [vmem:[%s7 + $0x150] sm:$0xff]
        %v2585 = vld [vmem:[%s7 + $0x158] sm:$0xff]
        %v2586 = vld [vmem:[%s7 + $0x160] sm:$0xff]
        %v2587 = vld [vmem:[%s7 + $0x168] sm:$0xff]
        %v2588 = vld [vmem:[%s7 + $0x170] sm:$0xff]
        %v2589 = vld [vmem:[%s7 + $0x178] sm:$0xff]
        %v2590 = vld [vmem:[%s7 + $0x180] sm:$0xff]
        %v2591 = vld [vmem:[%s7 + $0x188] sm:$0xff]
        %v2592 = vld [vmem:[%s7 + $0x190] sm:$0xff]
        %v2593 = vld [vmem:[%s7 + $0x198] sm:$0xff]
        %v2594 = vld [vmem:[%s7 + $0x1a0] sm:$0xff]
        %v2595 = vld [vmem:[%s7 + $0x1a8] sm:$0xff]
        %v2596 = vld [vmem:[%s7 + $0x1b0] sm:$0xff]
        %v2597 = vld [vmem:[%s7 + $0x1b8] sm:$0xff]
        %v2598 = vld [vmem:[%s7 + $0x1c0] sm:$0xff]
        %v2599 = vld [vmem:[%s7 + $0x1c8] sm:$0xff]
        %v2600 = vld [vmem:[%s7 + $0x1d0] sm:$0xff]
        %v2601 = vld [vmem:[%s7 + $0x1d8] sm:$0xff]
        %v2602 = vld [vmem:[%s7 + $0x1e0] sm:$0xff]
        %v2603 = vld [vmem:[%s7 + $0x1e8] sm:$0xff]
        %v2604 = vld [vmem:[%s7 + $0x1f0] sm:$0xff]
        %v2605 = vld [vmem:[%s7 + $0x1f8] sm:$0xff]
        %v2606 = vld [vmem:[%s7 + $0x200] sm:$0xff]
        %v2607 = vld [vmem:[%s7 + $0x208] sm:$0xff]
        %v2608 = vld [vmem:[%s7 + $0x210] sm:$0xff]
        %v2609 = vld [vmem:[%s7 + $0x218] sm:$0xff]
        %v2610 = vld [vmem:[%s7 + $0x220] sm:$0xff]
        %v2611 = vld [vmem:[%s7 + $0x228] sm:$0xff]
        %v2612 = vld [vmem:[%s7 + $0x230] sm:$0xff]
        %v2613 = vld [vmem:[%s7 + $0x238] sm:$0xff]
        %v2614 = vld [vmem:[%s7 + $0x240] sm:$0xff]
        %v2615 = vld [vmem:[%s7 + $0x248] sm:$0xff]
        %v2616 = vld [vmem:[%s7 + $0x250] sm:$0xff]
        %v2617 = vld [vmem:[%s7 + $0x258] sm:$0xff]
        %v2618 = vld [vmem:[%s7 + $0x260] sm:$0xff]
        %v2619 = vld [vmem:[%s7 + $0x268] sm:$0xff]
        %v2620 = vld [vmem:[%s7 + $0x270] sm:$0xff]
        %v2621 = vld [vmem:[%s7 + $0x278] sm:$0xff]
        %v2622 = vld [vmem:[%s7 + $0x280] sm:$0xff]
        %v2623 = vld [vmem:[%s7 + $0x288] sm:$0xff]
        %v2624 = vld [vmem:[%s7 + $0x290] sm:$0xff]
        %v2625 = vld [vmem:[%s7 + $0x298] sm:$0xff]
        %v2626 = vld [vmem:[%s7 + $0x2a0] sm:$0xff]
        %v2627 = vld [vmem:[%s7 + $0x2a8] sm:$0xff]
        %v2628 = vld [vmem:[%s7 + $0x2b0] sm:$0xff]
        %v2629 = vld [vmem:[%s7 + $0x2b8] sm:$0xff]
        %v2630 = vld [vmem:[%s7 + $0x2c0] sm:$0xff]
        %v2631 = vld [vmem:[%s7 + $0x2c8] sm:$0xff]
        %v2632 = vld [vmem:[%s7 + $0x2d0] sm:$0xff]
        %v2633 = vld [vmem:[%s7 + $0x2d8] sm:$0xff]
        %v2634 = vld [vmem:[%s7 + $0x2e0] sm:$0xff]
        %v2635 = vld [vmem:[%s7 + $0x2e8] sm:$0xff]
        %v2636 = vld [vmem:[%s7 + $0x2f0] sm:$0xff]
        %v2637 = vld [vmem:[%s7 + $0x2f8] sm:$0xff]
        %v2638 = vld [vmem:[%s7 + $0x300] sm:$0xff]
        %v2639 = vld [vmem:[%s7 + $0x308] sm:$0xff]
        %v2640 = vld [vmem:[%s7 + $0x310] sm:$0xff]
        %v2641 = vld [vmem:[%s7 + $0x318] sm:$0xff]
        %v2642 = vld [vmem:[%s7 + $0x320] sm:$0xff]
        %v2643 = vld [vmem:[%s7 + $0x328] sm:$0xff]
        %v2644 = vld [vmem:[%s7 + $0x330] sm:$0xff]
        %v2645 = vld [vmem:[%s7 + $0x338] sm:$0xff]
        %v2646 = vld [vmem:[%s7 + $0x340] sm:$0xff]
        %v2647 = vld [vmem:[%s7 + $0x348] sm:$0xff]
        %v2648 = vld [vmem:[%s7 + $0x350] sm:$0xff]
        %v2649 = vld [vmem:[%s7 + $0x358] sm:$0xff]
        %v2650 = vld [vmem:[%s7 + $0x360] sm:$0xff]
        %v2651 = vld [vmem:[%s7 + $0x368] sm:$0xff]
        %v2652 = vld [vmem:[%s7 + $0x370] sm:$0xff]
        %v2653 = vld [vmem:[%s7 + $0x378] sm:$0xff]
        %v2654 = vld [vmem:[%s8] sm:$0xf]
        %v2656 = vperm.slane %v2654, 0
        %v2657 = vperm.slane %v2654, 1
        %v2658 = vperm.slane %v2654, 2
        %v2659 = vperm.slane %v2654, 3
        %v2776 = vunpack.c.l.b16 %v2542
        %v2777 = vunpack.c.h.b16 %v2542
        %v2778 = vunpack.c.l.b16 %v2543
        %v2779 = vunpack.c.h.b16 %v2543
        %v2780 = vunpack.c.l.b16 %v2544
        %v2781 = vunpack.c.h.b16 %v2544
        %v2782 = vunpack.c.l.b16 %v2545
        %v2783 = vunpack.c.h.b16 %v2545
        %v2784 = vunpack.c.l.b16 %v2546
        %v2785 = vunpack.c.h.b16 %v2546
        %v2786 = vunpack.c.l.b16 %v2547
        %v2787 = vunpack.c.h.b16 %v2547
        %v2788 = vunpack.c.l.b16 %v2548
        %v2789 = vunpack.c.h.b16 %v2548
        %v2790 = vunpack.c.l.b16 %v2549
        %v2791 = vunpack.c.h.b16 %v2549
        %v2792 = vunpack.c.l.b16 %v2550
        %v2793 = vunpack.c.h.b16 %v2550
        %v2794 = vunpack.c.l.b16 %v2551
        %v2795 = vunpack.c.h.b16 %v2551
        %v2796 = vunpack.c.l.b16 %v2552
        %v2797 = vunpack.c.h.b16 %v2552
        %v2798 = vunpack.c.l.b16 %v2553
        %v2799 = vunpack.c.h.b16 %v2553
        %v2800 = vunpack.c.l.b16 %v2554
        %v2801 = vunpack.c.h.b16 %v2554
        %v2802 = vunpack.c.l.b16 %v2555
        %v2803 = vunpack.c.h.b16 %v2555
        %v2804 = vunpack.c.l.b16 %v2556
        %v2805 = vunpack.c.h.b16 %v2556
        %v2806 = vunpack.c.l.b16 %v2557
        %v2807 = vunpack.c.h.b16 %v2557
        %v2808 = vunpack.c.l.b16 %v2558
        %v2809 = vunpack.c.h.b16 %v2558
        %v2810 = vunpack.c.l.b16 %v2559
        %v2811 = vunpack.c.h.b16 %v2559
        %v2812 = vunpack.c.l.b16 %v2560
        %v2813 = vunpack.c.h.b16 %v2560
        %v2814 = vunpack.c.l.b16 %v2561
        %v2815 = vunpack.c.h.b16 %v2561
        %v2816 = vunpack.c.l.b16 %v2562
        %v2817 = vunpack.c.h.b16 %v2562
        %v2818 = vunpack.c.l.b16 %v2563
        %v2819 = vunpack.c.h.b16 %v2563
        %v2820 = vunpack.c.l.b16 %v2564
        %v2821 = vunpack.c.h.b16 %v2564
        %v2822 = vunpack.c.l.b16 %v2565
        %v2823 = vunpack.c.h.b16 %v2565
        %v2824 = vunpack.c.l.b16 %v2566
        %v2825 = vunpack.c.h.b16 %v2566
        %v2826 = vunpack.c.l.b16 %v2567
        %v2827 = vunpack.c.h.b16 %v2567
        %v2828 = vunpack.c.l.b16 %v2568
        %v2829 = vunpack.c.h.b16 %v2568
        %v2830 = vunpack.c.l.b16 %v2569
        %v2831 = vunpack.c.h.b16 %v2569
        %v2832 = vunpack.c.l.b16 %v2570
        %v2833 = vunpack.c.h.b16 %v2570
        %v2834 = vunpack.c.l.b16 %v2571
        %v2835 = vunpack.c.h.b16 %v2571
        %v2836 = vunpack.c.l.b16 %v2572
        %v2837 = vunpack.c.h.b16 %v2572
        %v2838 = vunpack.c.l.b16 %v2573
        %v2839 = vunpack.c.h.b16 %v2573
        %v2840 = vunpack.c.l.b16 %v2574
        %v2841 = vunpack.c.h.b16 %v2574
        %v2842 = vunpack.c.l.b16 %v2575
        %v2843 = vunpack.c.h.b16 %v2575
        %v2844 = vunpack.c.l.b16 %v2576
        %v2845 = vunpack.c.h.b16 %v2576
        %v2846 = vunpack.c.l.b16 %v2577
        %v2847 = vunpack.c.h.b16 %v2577
        %v2848 = vunpack.c.l.b16 %v2578
        %v2849 = vunpack.c.h.b16 %v2578
        %v2850 = vunpack.c.l.b16 %v2579
        %v2851 = vunpack.c.h.b16 %v2579
        %v2852 = vunpack.c.l.b16 %v2580
        %v2853 = vunpack.c.h.b16 %v2580
        %v2854 = vunpack.c.l.b16 %v2581
        %v2855 = vunpack.c.h.b16 %v2581
        %v2856 = vunpack.c.l.b16 %v2582
        %v2857 = vunpack.c.h.b16 %v2582
        %v2858 = vunpack.c.l.b16 %v2583
        %v2859 = vunpack.c.h.b16 %v2583
        %v2860 = vunpack.c.l.b16 %v2584
        %v2861 = vunpack.c.h.b16 %v2584
        %v2862 = vunpack.c.l.b16 %v2585
        %v2863 = vunpack.c.h.b16 %v2585
        %v2864 = vunpack.c.l.b16 %v2586
        %v2865 = vunpack.c.h.b16 %v2586
        %v2866 = vunpack.c.l.b16 %v2587
        %v2867 = vunpack.c.h.b16 %v2587
        %v2868 = vunpack.c.l.b16 %v2588
        %v2869 = vunpack.c.h.b16 %v2588
        %v2870 = vunpack.c.l.b16 %v2589
        %v2871 = vunpack.c.h.b16 %v2589
        %v2872 = vunpack.c.l.b16 %v2590
        %v2873 = vunpack.c.h.b16 %v2590
        %v2874 = vunpack.c.l.b16 %v2591
        %v2875 = vunpack.c.h.b16 %v2591
        %v2876 = vunpack.c.l.b16 %v2592
        %v2877 = vunpack.c.h.b16 %v2592
        %v2878 = vunpack.c.l.b16 %v2593
        %v2879 = vunpack.c.h.b16 %v2593
        %v2880 = vunpack.c.l.b16 %v2594
        %v2881 = vunpack.c.h.b16 %v2594
        %v2882 = vunpack.c.l.b16 %v2595
        %v2883 = vunpack.c.h.b16 %v2595
        %v2884 = vunpack.c.l.b16 %v2596
        %v2885 = vunpack.c.h.b16 %v2596
        %v2886 = vunpack.c.l.b16 %v2597
        %v2887 = vunpack.c.h.b16 %v2597
        %v2888 = vunpack.c.l.b16 %v2598
        %v2889 = vunpack.c.h.b16 %v2598
        %v2890 = vunpack.c.l.b16 %v2599
        %v2891 = vunpack.c.h.b16 %v2599
        %v2892 = vunpack.c.l.b16 %v2600
        %v2893 = vunpack.c.h.b16 %v2600
        %v2894 = vunpack.c.l.b16 %v2601
        %v2895 = vunpack.c.h.b16 %v2601
        %v2896 = vunpack.c.l.b16 %v2602
        %v2897 = vunpack.c.h.b16 %v2602
        %v2898 = vunpack.c.l.b16 %v2603
        %v2899 = vunpack.c.h.b16 %v2603
        %v2900 = vunpack.c.l.b16 %v2604
        %v2901 = vunpack.c.h.b16 %v2604
        %v2902 = vunpack.c.l.b16 %v2605
        %v2903 = vunpack.c.h.b16 %v2605
        %v2904 = vunpack.c.l.b16 %v2606
        %v2905 = vunpack.c.h.b16 %v2606
        %v2906 = vunpack.c.l.b16 %v2607
        %v2907 = vunpack.c.h.b16 %v2607
        %v2908 = vunpack.c.l.b16 %v2608
        %v2909 = vunpack.c.h.b16 %v2608
        %v2910 = vunpack.c.l.b16 %v2609
        %v2911 = vunpack.c.h.b16 %v2609
        %v2912 = vunpack.c.l.b16 %v2610
        %v2913 = vunpack.c.h.b16 %v2610
        %v2914 = vunpack.c.l.b16 %v2611
        %v2915 = vunpack.c.h.b16 %v2611
        %v2916 = vunpack.c.l.b16 %v2612
        %v2917 = vunpack.c.h.b16 %v2612
        %v2918 = vunpack.c.l.b16 %v2613
        %v2919 = vunpack.c.h.b16 %v2613
        %v2920 = vunpack.c.l.b16 %v2614
        %v2921 = vunpack.c.h.b16 %v2614
        %v2922 = vunpack.c.l.b16 %v2615
        %v2923 = vunpack.c.h.b16 %v2615
        %v2924 = vunpack.c.l.b16 %v2616
        %v2925 = vunpack.c.h.b16 %v2616
        %v2926 = vunpack.c.l.b16 %v2617
        %v2927 = vunpack.c.h.b16 %v2617
        %v2928 = vunpack.c.l.b16 %v2618
        %v2929 = vunpack.c.h.b16 %v2618
        %v2930 = vunpack.c.l.b16 %v2619
        %v2931 = vunpack.c.h.b16 %v2619
        %v2932 = vunpack.c.l.b16 %v2620
        %v2933 = vunpack.c.h.b16 %v2620
        %v2934 = vunpack.c.l.b16 %v2621
        %v2935 = vunpack.c.h.b16 %v2621
        %v2936 = vunpack.c.l.b16 %v2622
        %v2937 = vunpack.c.h.b16 %v2622
        %v2938 = vunpack.c.l.b16 %v2623
        %v2939 = vunpack.c.h.b16 %v2623
        %v2940 = vunpack.c.l.b16 %v2624
        %v2941 = vunpack.c.h.b16 %v2624
        %v2942 = vunpack.c.l.b16 %v2625
        %v2943 = vunpack.c.h.b16 %v2625
        %v2944 = vunpack.c.l.b16 %v2626
        %v2945 = vunpack.c.h.b16 %v2626
        %v2946 = vunpack.c.l.b16 %v2627
        %v2947 = vunpack.c.h.b16 %v2627
        %v2948 = vunpack.c.l.b16 %v2628
        %v2949 = vunpack.c.h.b16 %v2628
        %v2950 = vunpack.c.l.b16 %v2629
        %v2951 = vunpack.c.h.b16 %v2629
        %v2952 = vunpack.c.l.b16 %v2630
        %v2953 = vunpack.c.h.b16 %v2630
        %v2954 = vunpack.c.l.b16 %v2631
        %v2955 = vunpack.c.h.b16 %v2631
        %v2956 = vunpack.c.l.b16 %v2632
        %v2957 = vunpack.c.h.b16 %v2632
        %v2958 = vunpack.c.l.b16 %v2633
        %v2959 = vunpack.c.h.b16 %v2633
        %v2960 = vunpack.c.l.b16 %v2634
        %v2961 = vunpack.c.h.b16 %v2634
        %v2962 = vunpack.c.l.b16 %v2635
        %v2963 = vunpack.c.h.b16 %v2635
        %v2964 = vunpack.c.l.b16 %v2636
        %v2965 = vunpack.c.h.b16 %v2636
        %v2966 = vunpack.c.l.b16 %v2637
        %v2967 = vunpack.c.h.b16 %v2637
        %v2968 = vunpack.c.l.b16 %v2638
        %v2969 = vunpack.c.h.b16 %v2638
        %v2970 = vunpack.c.l.b16 %v2639
        %v2971 = vunpack.c.h.b16 %v2639
        %v2972 = vunpack.c.l.b16 %v2640
        %v2973 = vunpack.c.h.b16 %v2640
        %v2974 = vunpack.c.l.b16 %v2641
        %v2975 = vunpack.c.h.b16 %v2641
        %v2976 = vunpack.c.l.b16 %v2642
        %v2977 = vunpack.c.h.b16 %v2642
        %v2978 = vunpack.c.l.b16 %v2643
        %v2979 = vunpack.c.h.b16 %v2643
        %v2980 = vunpack.c.l.b16 %v2644
        %v2981 = vunpack.c.h.b16 %v2644
        %v2982 = vunpack.c.l.b16 %v2645
        %v2983 = vunpack.c.h.b16 %v2645
        %v2984 = vunpack.c.l.b16 %v2646
        %v2985 = vunpack.c.h.b16 %v2646
        %v2986 = vunpack.c.l.b16 %v2647
        %v2987 = vunpack.c.h.b16 %v2647
        %v2988 = vunpack.c.l.b16 %v2648
        %v2989 = vunpack.c.h.b16 %v2648
        %v2990 = vunpack.c.l.b16 %v2649
        %v2991 = vunpack.c.h.b16 %v2649
        %v2992 = vunpack.c.l.b16 %v2650
        %v2993 = vunpack.c.h.b16 %v2650
        %v2994 = vunpack.c.l.b16 %v2651
        %v2995 = vunpack.c.h.b16 %v2651
        %v2996 = vunpack.c.l.b16 %v2652
        %v2997 = vunpack.c.h.b16 %v2652
        %v2998 = vunpack.c.l.b16 %v2653
        %v2999 = vunpack.c.h.b16 %v2653
        %v3000 = vpack.c.b16 %v2780, %v2776
        %v3001 = vpack.c.b16 %v2781, %v2777
        %v3002 = vpack.c.b16 %v2782, %v2778
        %v3003 = vpack.c.b16 %v2783, %v2779
        %v3004 = vpack.c.b16 %v2788, %v2784
        %v3005 = vpack.c.b16 %v2789, %v2785
        %v3006 = vpack.c.b16 %v2790, %v2786
        %v3007 = vpack.c.b16 %v2791, %v2787
        %v3008 = vpack.c.b16 %v2796, %v2792
        %v3009 = vpack.c.b16 %v2797, %v2793
        %v3010 = vpack.c.b16 %v2798, %v2794
        %v3011 = vpack.c.b16 %v2799, %v2795
        %v3012 = vpack.c.b16 %v2804, %v2800
        %v3013 = vpack.c.b16 %v2805, %v2801
        %v3014 = vpack.c.b16 %v2806, %v2802
        %v3015 = vpack.c.b16 %v2807, %v2803
        %v3016 = vpack.c.b16 %v2812, %v2808
        %v3017 = vpack.c.b16 %v2813, %v2809
        %v3018 = vpack.c.b16 %v2814, %v2810
        %v3019 = vpack.c.b16 %v2815, %v2811
        %v3020 = vpack.c.b16 %v2820, %v2816
        %v3021 = vpack.c.b16 %v2821, %v2817
        %v3022 = vpack.c.b16 %v2822, %v2818
        %v3023 = vpack.c.b16 %v2823, %v2819
        %v3024 = vpack.c.b16 %v2828, %v2824
        %v3025 = vpack.c.b16 %v2829, %v2825
        %v3026 = vpack.c.b16 %v2830, %v2826
        %v3027 = vpack.c.b16 %v2831, %v2827
        %v3028 = vpack.c.b16 %v2836, %v2832
        %v3029 = vpack.c.b16 %v2837, %v2833
        %v3030 = vpack.c.b16 %v2838, %v2834
        %v3031 = vpack.c.b16 %v2839, %v2835
        %v3032 = vpack.c.b16 %v2844, %v2840
        %v3033 = vpack.c.b16 %v2845, %v2841
        %v3034 = vpack.c.b16 %v2846, %v2842
        %v3035 = vpack.c.b16 %v2847, %v2843
        %v3036 = vpack.c.b16 %v2852, %v2848
        %v3037 = vpack.c.b16 %v2853, %v2849
        %v3038 = vpack.c.b16 %v2854, %v2850
        %v3039 = vpack.c.b16 %v2855, %v2851
        %v3040 = vpack.c.b16 %v2860, %v2856
        %v3041 = vpack.c.b16 %v2861, %v2857
        %v3042 = vpack.c.b16 %v2862, %v2858
        %v3043 = vpack.c.b16 %v2863, %v2859
        %v3044 = vpack.c.b16 %v2868, %v2864
        %v3045 = vpack.c.b16 %v2869, %v2865
        %v3046 = vpack.c.b16 %v2870, %v2866
        %v3047 = vpack.c.b16 %v2871, %v2867
        %v3048 = vpack.c.b16 %v2876, %v2872
        %v3049 = vpack.c.b16 %v2877, %v2873
        %v3050 = vpack.c.b16 %v2878, %v2874
        %v3051 = vpack.c.b16 %v2879, %v2875
        %v3052 = vpack.c.b16 %v2884, %v2880
        %v3053 = vpack.c.b16 %v2885, %v2881
        %v3054 = vpack.c.b16 %v2886, %v2882
        %v3055 = vpack.c.b16 %v2887, %v2883
        %v3056 = vpack.c.b16 %v2892, %v2888
        %v3057 = vpack.c.b16 %v2893, %v2889
        %v3058 = vpack.c.b16 %v2894, %v2890
        %v3059 = vpack.c.b16 %v2895, %v2891
        %v3060 = vpack.c.b16 %v2900, %v2896
        %v3061 = vpack.c.b16 %v2901, %v2897
        %v3062 = vpack.c.b16 %v2902, %v2898
        %v3063 = vpack.c.b16 %v2903, %v2899
        %v3064 = vpack.c.b16 %v2908, %v2904
        %v3065 = vpack.c.b16 %v2909, %v2905
        %v3066 = vpack.c.b16 %v2910, %v2906
        %v3067 = vpack.c.b16 %v2911, %v2907
        %v3068 = vpack.c.b16 %v2916, %v2912
        %v3069 = vpack.c.b16 %v2917, %v2913
        %v3070 = vpack.c.b16 %v2918, %v2914
        %v3071 = vpack.c.b16 %v2919, %v2915
        %v3072 = vpack.c.b16 %v2924, %v2920
        %v3073 = vpack.c.b16 %v2925, %v2921
        %v3074 = vpack.c.b16 %v2926, %v2922
        %v3075 = vpack.c.b16 %v2927, %v2923
        %v3076 = vpack.c.b16 %v2932, %v2928
        %v3077 = vpack.c.b16 %v2933, %v2929
        %v3078 = vpack.c.b16 %v2934, %v2930
        %v3079 = vpack.c.b16 %v2935, %v2931
        %v3080 = vpack.c.b16 %v2940, %v2936
        %v3081 = vpack.c.b16 %v2941, %v2937
        %v3082 = vpack.c.b16 %v2942, %v2938
        %v3083 = vpack.c.b16 %v2943, %v2939
        %v3084 = vpack.c.b16 %v2948, %v2944
        %v3085 = vpack.c.b16 %v2949, %v2945
        %v3086 = vpack.c.b16 %v2950, %v2946
        %v3087 = vpack.c.b16 %v2951, %v2947
        %v3088 = vpack.c.b16 %v2956, %v2952
        %v3089 = vpack.c.b16 %v2957, %v2953
        %v3090 = vpack.c.b16 %v2958, %v2954
        %v3091 = vpack.c.b16 %v2959, %v2955
        %v3092 = vpack.c.b16 %v2964, %v2960
        %v3093 = vpack.c.b16 %v2965, %v2961
        %v3094 = vpack.c.b16 %v2966, %v2962
        %v3095 = vpack.c.b16 %v2967, %v2963
        %v3096 = vpack.c.b16 %v2972, %v2968
        %v3097 = vpack.c.b16 %v2973, %v2969
        %v3098 = vpack.c.b16 %v2974, %v2970
        %v3099 = vpack.c.b16 %v2975, %v2971
        %v3100 = vpack.c.b16 %v2980, %v2976
        %v3101 = vpack.c.b16 %v2981, %v2977
        %v3102 = vpack.c.b16 %v2982, %v2978
        %v3103 = vpack.c.b16 %v2983, %v2979
        %v3104 = vpack.c.b16 %v2988, %v2984
        %v3105 = vpack.c.b16 %v2989, %v2985
        %v3106 = vpack.c.b16 %v2990, %v2986
        %v3107 = vpack.c.b16 %v2991, %v2987
        %v3108 = vpack.c.b16 %v2996, %v2992
        %v3109 = vpack.c.b16 %v2997, %v2993
        %v3110 = vpack.c.b16 %v2998, %v2994
        %v3111 = vpack.c.b16 %v2999, %v2995
        %3224 = vmatpush.bf16.msra.mxu0 %v3028
        %3225 = vmatpush.bf16.msra.mxu0 %v3024
        %3226 = vmatpush.bf16.msra.mxu0 %v3020
        %3227 = vmatpush.bf16.msra.mxu0 %v3016
        %3228 = vmatpush.bf16.msra.mxu0 %v3012
        %3229 = vmatpush.bf16.msra.mxu0 %v3008
        %3230 = vmatpush.bf16.msra.mxu0 %v3004
        %3231 = vmatpush.bf16.msra.mxu0 %v3000
        %3232 = vmatmul.bf16.gmra.mxu0 %v1620
        %v3233 = vpop.f32.mrf.mxu0
        %v3234 = vadd.f32 %v2656, %v3233
        %v3235 = vpop.f32.mrf.mxu0
        %3236 = vdwg.mxu0
        %3237 = vmatpush.bf16.msra.mxu0 %v3060
        %3238 = vmatpush.bf16.msra.mxu0 %v3056
        %3239 = vmatpush.bf16.msra.mxu0 %v3052
        %3240 = vmatpush.bf16.msra.mxu0 %v3048
        %3241 = vmatpush.bf16.msra.mxu0 %v3044
        %3242 = vmatpush.bf16.msra.mxu0 %v3040
        %3243 = vmatpush.bf16.msra.mxu0 %v3036
        %3244 = vmatpush.bf16.msra.mxu0 %v3032
        %3245 = vmatmul.bf16.gmra.mxu0 %v1621
        %v3246 = vpop.f32.mrf.mxu0
        %v3247 = vadd.f32 %v3234, %v3246
        %v3248 = vpop.f32.mrf.mxu0
        %3249 = vdwg.mxu0
        %3250 = vmatpush.bf16.msra.mxu0 %v3092
        %3251 = vmatpush.bf16.msra.mxu0 %v3088
        %3252 = vmatpush.bf16.msra.mxu0 %v3084
        %3253 = vmatpush.bf16.msra.mxu0 %v3080
        %3254 = vmatpush.bf16.msra.mxu0 %v3076
        %3255 = vmatpush.bf16.msra.mxu0 %v3072
        %3256 = vmatpush.bf16.msra.mxu0 %v3068
        %3257 = vmatpush.bf16.msra.mxu0 %v3064
        %3258 = vmatmul.bf16.gmra.mxu0 %v1622
        %v3259 = vpop.f32.mrf.mxu0
        %v3260 = vadd.f32 %v3247, %v3259
        %v3261 = vpop.f32.mrf.mxu0
        %3262 = vdwg.mxu0
        %3263 = vmatpush.bf16.msra.mxu0 0
        %3264 = vmatpush.bf16.msra.mxu0 0
        %3265 = vmatpush.bf16.msra.mxu0 0
        %3266 = vmatpush.bf16.msra.mxu0 0
        %3267 = vmatpush.bf16.msra.mxu0 %v3108
        %3268 = vmatpush.bf16.msra.mxu0 %v3104
        %3269 = vmatpush.bf16.msra.mxu0 %v3100
        %3270 = vmatpush.bf16.msra.mxu0 %v3096
        %3271 = vmatmul.bf16.gmra.mxu0 %v2308
        %v3272 = vpop.f32.mrf.mxu0
        %v3273 = vadd.f32 %v3260, %v3272
        %v3274 = vpop.f32.mrf.mxu0
        %3275 = vdwg.mxu0
        %3276 = vmatpush.bf16.msra.mxu0 %v3029
        %3277 = vmatpush.bf16.msra.mxu0 %v3025
        %3278 = vmatpush.bf16.msra.mxu0 %v3021
        %3279 = vmatpush.bf16.msra.mxu0 %v3017
        %3280 = vmatpush.bf16.msra.mxu0 %v3013
        %3281 = vmatpush.bf16.msra.mxu0 %v3009
        %3282 = vmatpush.bf16.msra.mxu0 %v3005
        %3283 = vmatpush.bf16.msra.mxu0 %v3001
        %3284 = vmatmul.bf16.gmra.mxu0 %v1620
        %v3285 = vpop.f32.mrf.mxu0
        %v3286 = vadd.f32 %v2657, %v3285
        %v3287 = vpop.f32.mrf.mxu0
        %3288 = vdwg.mxu0
        %3289 = vmatpush.bf16.msra.mxu0 %v3061
        %3290 = vmatpush.bf16.msra.mxu0 %v3057
        %3291 = vmatpush.bf16.msra.mxu0 %v3053
        %3292 = vmatpush.bf16.msra.mxu0 %v3049
        %3293 = vmatpush.bf16.msra.mxu0 %v3045
        %3294 = vmatpush.bf16.msra.mxu0 %v3041
        %3295 = vmatpush.bf16.msra.mxu0 %v3037
        %3296 = vmatpush.bf16.msra.mxu0 %v3033
        %3297 = vmatmul.bf16.gmra.mxu0 %v1621
        %v3298 = vpop.f32.mrf.mxu0
        %v3299 = vadd.f32 %v3286, %v3298
        %v3300 = vpop.f32.mrf.mxu0
        %3301 = vdwg.mxu0
        %3302 = vmatpush.bf16.msra.mxu0 %v3093
        %3303 = vmatpush.bf16.msra.mxu0 %v3089
        %3304 = vmatpush.bf16.msra.mxu0 %v3085
        %3305 = vmatpush.bf16.msra.mxu0 %v3081
        %3306 = vmatpush.bf16.msra.mxu0 %v3077
        %3307 = vmatpush.bf16.msra.mxu0 %v3073
        %3308 = vmatpush.bf16.msra.mxu0 %v3069
        %3309 = vmatpush.bf16.msra.mxu0 %v3065
        %3310 = vmatmul.bf16.gmra.mxu0 %v1622
        %v3311 = vpop.f32.mrf.mxu0
        %v3312 = vadd.f32 %v3299, %v3311
        %v3313 = vpop.f32.mrf.mxu0
        %3314 = vdwg.mxu0
        %3315 = vmatpush.bf16.msra.mxu0 0
        %3316 = vmatpush.bf16.msra.mxu0 0
        %3317 = vmatpush.bf16.msra.mxu0 0
        %3318 = vmatpush.bf16.msra.mxu0 0
        %3319 = vmatpush.bf16.msra.mxu0 %v3109
        %3320 = vmatpush.bf16.msra.mxu0 %v3105
        %3321 = vmatpush.bf16.msra.mxu0 %v3101
        %3322 = vmatpush.bf16.msra.mxu0 %v3097
        %3323 = vmatmul.bf16.gmra.mxu0 %v2308
        %v3324 = vpop.f32.mrf.mxu0
        %v3325 = vadd.f32 %v3312, %v3324
        %v3326 = vpop.f32.mrf.mxu0
        %3327 = vdwg.mxu0
        %3328 = vmatpush.bf16.msra.mxu0 %v3030
        %3329 = vmatpush.bf16.msra.mxu0 %v3026
        %3330 = vmatpush.bf16.msra.mxu0 %v3022
        %3331 = vmatpush.bf16.msra.mxu0 %v3018
        %3332 = vmatpush.bf16.msra.mxu0 %v3014
        %3333 = vmatpush.bf16.msra.mxu0 %v3010
        %3334 = vmatpush.bf16.msra.mxu0 %v3006
        %3335 = vmatpush.bf16.msra.mxu0 %v3002
        %3336 = vmatmul.bf16.gmra.mxu0 %v1620
        %v3337 = vpop.f32.mrf.mxu0
        %v3338 = vadd.f32 %v2658, %v3337
        %v3339 = vpop.f32.mrf.mxu0
        %3340 = vdwg.mxu0
        %3341 = vmatpush.bf16.msra.mxu0 %v3062
        %3342 = vmatpush.bf16.msra.mxu0 %v3058
        %3343 = vmatpush.bf16.msra.mxu0 %v3054
        %3344 = vmatpush.bf16.msra.mxu0 %v3050
        %3345 = vmatpush.bf16.msra.mxu0 %v3046
        %3346 = vmatpush.bf16.msra.mxu0 %v3042
        %3347 = vmatpush.bf16.msra.mxu0 %v3038
        %3348 = vmatpush.bf16.msra.mxu0 %v3034
        %3349 = vmatmul.bf16.gmra.mxu0 %v1621
        %v3350 = vpop.f32.mrf.mxu0
        %v3351 = vadd.f32 %v3338, %v3350
        %v3352 = vpop.f32.mrf.mxu0
        %3353 = vdwg.mxu0
        %3354 = vmatpush.bf16.msra.mxu0 %v3094
        %3355 = vmatpush.bf16.msra.mxu0 %v3090
        %3356 = vmatpush.bf16.msra.mxu0 %v3086
        %3357 = vmatpush.bf16.msra.mxu0 %v3082
        %3358 = vmatpush.bf16.msra.mxu0 %v3078
        %3359 = vmatpush.bf16.msra.mxu0 %v3074
        %3360 = vmatpush.bf16.msra.mxu0 %v3070
        %3361 = vmatpush.bf16.msra.mxu0 %v3066
        %3362 = vmatmul.bf16.gmra.mxu0 %v1622
        %v3363 = vpop.f32.mrf.mxu0
        %v3364 = vadd.f32 %v3351, %v3363
        %v3365 = vpop.f32.mrf.mxu0
        %3366 = vdwg.mxu0
        %3367 = vmatpush.bf16.msra.mxu0 0
        %3368 = vmatpush.bf16.msra.mxu0 0
        %3369 = vmatpush.bf16.msra.mxu0 0
        %3370 = vmatpush.bf16.msra.mxu0 0
        %3371 = vmatpush.bf16.msra.mxu0 %v3110
        %3372 = vmatpush.bf16.msra.mxu0 %v3106
        %3373 = vmatpush.bf16.msra.mxu0 %v3102
        %3374 = vmatpush.bf16.msra.mxu0 %v3098
        %3375 = vmatmul.bf16.gmra.mxu0 %v2308
        %v3376 = vpop.f32.mrf.mxu0
        %v3377 = vadd.f32 %v3364, %v3376
        %v3378 = vpop.f32.mrf.mxu0
        %3379 = vdwg.mxu0
        %3380 = vmatpush.bf16.msra.mxu0 %v3031
        %3381 = vmatpush.bf16.msra.mxu0 %v3027
        %3382 = vmatpush.bf16.msra.mxu0 %v3023
        %3383 = vmatpush.bf16.msra.mxu0 %v3019
        %3384 = vmatpush.bf16.msra.mxu0 %v3015
        %3385 = vmatpush.bf16.msra.mxu0 %v3011
        %3386 = vmatpush.bf16.msra.mxu0 %v3007
        %3387 = vmatpush.bf16.msra.mxu0 %v3003
        %3388 = vmatmul.bf16.gmra.mxu0 %v1620
        %v3389 = vpop.f32.mrf.mxu0
        %v3390 = vadd.f32 %v2659, %v3389
        %v3391 = vpop.f32.mrf.mxu0
        %3392 = vdwg.mxu0
        %3393 = vmatpush.bf16.msra.mxu0 %v3063
        %3394 = vmatpush.bf16.msra.mxu0 %v3059
        %3395 = vmatpush.bf16.msra.mxu0 %v3055
        %3396 = vmatpush.bf16.msra.mxu0 %v3051
        %3397 = vmatpush.bf16.msra.mxu0 %v3047
        %3398 = vmatpush.bf16.msra.mxu0 %v3043
        %3399 = vmatpush.bf16.msra.mxu0 %v3039
        %3400 = vmatpush.bf16.msra.mxu0 %v3035
        %3401 = vmatmul.bf16.gmra.mxu0 %v1621
        %v3402 = vpop.f32.mrf.mxu0
        %v3403 = vadd.f32 %v3390, %v3402
        %v3404 = vpop.f32.mrf.mxu0
        %3405 = vdwg.mxu0
        %3406 = vmatpush.bf16.msra.mxu0 %v3095
        %3407 = vmatpush.bf16.msra.mxu0 %v3091
        %3408 = vmatpush.bf16.msra.mxu0 %v3087
        %3409 = vmatpush.bf16.msra.mxu0 %v3083
        %3410 = vmatpush.bf16.msra.mxu0 %v3079
        %3411 = vmatpush.bf16.msra.mxu0 %v3075
        %3412 = vmatpush.bf16.msra.mxu0 %v3071
        %3413 = vmatpush.bf16.msra.mxu0 %v3067
        %3414 = vmatmul.bf16.gmra.mxu0 %v1622
        %v3415 = vpop.f32.mrf.mxu0
        %v3416 = vadd.f32 %v3403, %v3415
        %v3417 = vpop.f32.mrf.mxu0
        %3418 = vdwg.mxu0
        %3419 = vmatpush.bf16.msra.mxu0 0
        %3420 = vmatpush.bf16.msra.mxu0 0
        %3421 = vmatpush.bf16.msra.mxu0 0
        %3422 = vmatpush.bf16.msra.mxu0 0
        %3423 = vmatpush.bf16.msra.mxu0 %v3111
        %3424 = vmatpush.bf16.msra.mxu0 %v3107
        %3425 = vmatpush.bf16.msra.mxu0 %v3103
        %3426 = vmatpush.bf16.msra.mxu0 %v3099
        %3427 = vmatmul.bf16.gmra.mxu0 %v2308
        %v3428 = vpop.f32.mrf.mxu0
        %v3429 = vadd.f32 %v3416, %v3428
        %v3430 = vpop.f32.mrf.mxu0
        %3431 = vdwg.mxu0
        %vm3432 = vcmp.gt.f32.partialorder %v3273, 0.0
        %vm3433 = vcmp.gt.f32.partialorder %v3325, 0.0
        %vm3434 = vcmp.gt.f32.partialorder %v3377, 0.0
        %vm3435 = vcmp.gt.f32.partialorder %v3429, 0.0
        %v3436 = vmin.f32 %v3273, 0.0
        %v3437 = vmin.f32 %v3325, 0.0
        %v3438 = vmin.f32 %v3377, 0.0
        %v3439 = vmin.f32 %v3429, 0.0
        %v3440 = vmul.f32 %v3436, 1.442695
        %v3441 = vpow.pop %v3440
        %v3442 = vmul.f32 %v3437, 1.442695
        %v3443 = vpow.pop %v3442
        %v3444 = vmul.f32 %v3438, 1.442695
        %v3445 = vpow.pop %v3444
        %v3446 = vmul.f32 %v3439, 1.442695
        %v3447 = vpow.pop %v3446
        %v3448 = vsub.f32 %v3441, 1.0
        %v3449 = vsub.f32 %v3443, 1.0
        %v3450 = vsub.f32 %v3445, 1.0
        %v3451 = vsub.f32 %v3447, 1.0
        %v3452 = vsel %vm3432, %v3273, %v3448
        %v3453 = vsel %vm3433, %v3325, %v3449
        %v3454 = vsel %vm3434, %v3377, %v3450
        %v3455 = vsel %vm3435, %v3429, %v3451
        %v3456 = vadd.f32 %v3452, %v1616
        %v3457 = vadd.f32 %v3453, %v1617
        %v3458 = vadd.f32 %v3454, %v1618
        %v3459 = vadd.f32 %v3455, %v1619
        %v3460 = vpack.c.bf16 %v3456, %v3456
        %v3461 = vpack.c.bf16 %v3457, %v3457
        %v3462 = vpack.c.bf16 %v3458, %v3458
        %v3463 = vpack.c.bf16 %v3459, %v3459
        %v3464 = vpack.c.bf16 %v2538, %v2538
        %v3465 = vpack.c.bf16 %v2539, %v2539
        %v3466 = vpack.c.bf16 %v2540, %v2540
        %v3467 = vpack.c.bf16 %v2541, %v2541
        %v3468 = vld [vmem:[%s9] sm:$0xf]
        %v3469 = vld [vmem:[%s9 + $0x4] sm:$0xf]
        %v3470 = vld [vmem:[%s9 + $0x8] sm:$0xf]
        %v3471 = vld [vmem:[%s9 + $0xc] sm:$0xf]
        %v3472 = vld [vmem:[%s9 + $0x10] sm:$0xf]
        %v3473 = vld [vmem:[%s9 + $0x14] sm:$0xf]
        %v3474 = vld [vmem:[%s9 + $0x18] sm:$0xf]
        %v3475 = vld [vmem:[%s9 + $0x1c] sm:$0xf]
        %v3476 = vld [vmem:[%s9 + $0x20] sm:$0xf]
        %v3477 = vld [vmem:[%s9 + $0x24] sm:$0xf]
        %v3478 = vld [vmem:[%s9 + $0x28] sm:$0xf]
        %v3479 = vld [vmem:[%s9 + $0x2c] sm:$0xf]
        %v3480 = vld [vmem:[%s9 + $0x30] sm:$0xf]
        %v3481 = vld [vmem:[%s9 + $0x34] sm:$0xf]
        %v3482 = vld [vmem:[%s9 + $0x38] sm:$0xf]
        %v3483 = vld [vmem:[%s9 + $0x3c] sm:$0xf]
        %v3484 = vld [vmem:[%s9 + $0x40] sm:$0xf]
        %v3485 = vld [vmem:[%s9 + $0x44] sm:$0xf]
        %v3486 = vld [vmem:[%s9 + $0x48] sm:$0xf]
        %v3487 = vld [vmem:[%s9 + $0x4c] sm:$0xf]
        %v3488 = vld [vmem:[%s9 + $0x50] sm:$0xf]
        %v3489 = vld [vmem:[%s9 + $0x54] sm:$0xf]
        %v3490 = vld [vmem:[%s9 + $0x58] sm:$0xf]
        %v3491 = vld [vmem:[%s9 + $0x5c] sm:$0xf]
        %v3492 = vld [vmem:[%s9 + $0x60] sm:$0xf]
        %v3493 = vld [vmem:[%s9 + $0x64] sm:$0xf]
        %v3494 = vld [vmem:[%s9 + $0x68] sm:$0xf]
        %v3495 = vld [vmem:[%s9 + $0x6c] sm:$0xf]
        %v3496 = vld [vmem:[%s9 + $0x70] sm:$0xf]
        %v3497 = vld [vmem:[%s9 + $0x74] sm:$0xf]
        %v3498 = vld [vmem:[%s9 + $0x78] sm:$0xf]
        %v3499 = vld [vmem:[%s9 + $0x7c] sm:$0xf]
        %v3500 = vld [vmem:[%s9 + $0x80] sm:$0xf]
        %v3501 = vld [vmem:[%s9 + $0x84] sm:$0xf]
        %v3502 = vld [vmem:[%s9 + $0x88] sm:$0xf]
        %v3503 = vld [vmem:[%s9 + $0x8c] sm:$0xf]
        %v3504 = vld [vmem:[%s9 + $0x90] sm:$0xf]
        %v3505 = vld [vmem:[%s9 + $0x94] sm:$0xf]
        %v3506 = vld [vmem:[%s9 + $0x98] sm:$0xf]
        %v3507 = vld [vmem:[%s9 + $0x9c] sm:$0xf]
        %v3508 = vld [vmem:[%s9 + $0xa0] sm:$0xf]
        %v3509 = vld [vmem:[%s9 + $0xa4] sm:$0xf]
        %v3510 = vld [vmem:[%s9 + $0xa8] sm:$0xf]
        %v3511 = vld [vmem:[%s9 + $0xac] sm:$0xf]
        %v3512 = vld [vmem:[%s9 + $0xb0] sm:$0xf]
        %v3513 = vld [vmem:[%s9 + $0xb4] sm:$0xf]
        %v3514 = vld [vmem:[%s9 + $0xb8] sm:$0xf]
        %v3515 = vld [vmem:[%s9 + $0xbc] sm:$0xf]
        %v3516 = vld [vmem:[%s9 + $0xc0] sm:$0xf]
        %v3517 = vld [vmem:[%s9 + $0xc4] sm:$0xf]
        %v3518 = vld [vmem:[%s9 + $0xc8] sm:$0xf]
        %v3519 = vld [vmem:[%s9 + $0xcc] sm:$0xf]
        %v3520 = vld [vmem:[%s9 + $0xd0] sm:$0xf]
        %v3521 = vld [vmem:[%s9 + $0xd4] sm:$0xf]
        %v3522 = vld [vmem:[%s9 + $0xd8] sm:$0xf]
        %v3523 = vld [vmem:[%s9 + $0xdc] sm:$0xf]
        %v3524 = vld [vmem:[%s10] sm:$0xf]
        %v3525 = vld [vmem:[%s10 + $0x4] sm:$0xf]
        %v3526 = vld [vmem:[%s10 + $0x8] sm:$0xf]
        %v3527 = vld [vmem:[%s10 + $0xc] sm:$0xf]
        %v3528 = vld [vmem:[%s10 + $0x10] sm:$0xf]
        %v3529 = vld [vmem:[%s10 + $0x14] sm:$0xf]
        %v3530 = vld [vmem:[%s10 + $0x18] sm:$0xf]
        %v3531 = vld [vmem:[%s10 + $0x1c] sm:$0xf]
        %v3532 = vld [vmem:[%s10 + $0x20] sm:$0xf]
        %v3533 = vld [vmem:[%s10 + $0x24] sm:$0xf]
        %v3534 = vld [vmem:[%s10 + $0x28] sm:$0xf]
        %v3535 = vld [vmem:[%s10 + $0x2c] sm:$0xf]
        %v3536 = vld [vmem:[%s10 + $0x30] sm:$0xf]
        %v3537 = vld [vmem:[%s10 + $0x34] sm:$0xf]
        %v3538 = vld [vmem:[%s10 + $0x38] sm:$0xf]
        %v3539 = vld [vmem:[%s10 + $0x3c] sm:$0xf]
        %v3540 = vld [vmem:[%s10 + $0x40] sm:$0xf]
        %v3541 = vld [vmem:[%s10 + $0x44] sm:$0xf]
        %v3542 = vld [vmem:[%s10 + $0x48] sm:$0xf]
        %v3543 = vld [vmem:[%s10 + $0x4c] sm:$0xf]
        %v3544 = vld [vmem:[%s10 + $0x50] sm:$0xf]
        %v3545 = vld [vmem:[%s10 + $0x54] sm:$0xf]
        %v3546 = vld [vmem:[%s10 + $0x58] sm:$0xf]
        %v3547 = vld [vmem:[%s10 + $0x5c] sm:$0xf]
        %v3548 = vld [vmem:[%s10 + $0x60] sm:$0xf]
        %v3549 = vld [vmem:[%s10 + $0x64] sm:$0xf]
        %v3550 = vld [vmem:[%s10 + $0x68] sm:$0xf]
        %v3551 = vld [vmem:[%s10 + $0x6c] sm:$0xf]
        %v3552 = vld [vmem:[%s10 + $0x70] sm:$0xf]
        %v3553 = vld [vmem:[%s10 + $0x74] sm:$0xf]
        %v3554 = vld [vmem:[%s10 + $0x78] sm:$0xf]
        %v3555 = vld [vmem:[%s10 + $0x7c] sm:$0xf]
        %v3556 = vld [vmem:[%s10 + $0x80] sm:$0xf]
        %v3557 = vld [vmem:[%s10 + $0x84] sm:$0xf]
        %v3558 = vld [vmem:[%s10 + $0x88] sm:$0xf]
        %v3559 = vld [vmem:[%s10 + $0x8c] sm:$0xf]
        %v3560 = vld [vmem:[%s10 + $0x90] sm:$0xf]
        %v3561 = vld [vmem:[%s10 + $0x94] sm:$0xf]
        %v3562 = vld [vmem:[%s10 + $0x98] sm:$0xf]
        %v3563 = vld [vmem:[%s10 + $0x9c] sm:$0xf]
        %v3564 = vld [vmem:[%s10 + $0xa0] sm:$0xf]
        %v3565 = vld [vmem:[%s10 + $0xa4] sm:$0xf]
        %v3566 = vld [vmem:[%s10 + $0xa8] sm:$0xf]
        %v3567 = vld [vmem:[%s10 + $0xac] sm:$0xf]
        %v3568 = vld [vmem:[%s10 + $0xb0] sm:$0xf]
        %v3569 = vld [vmem:[%s10 + $0xb4] sm:$0xf]
        %v3570 = vld [vmem:[%s10 + $0xb8] sm:$0xf]
        %v3571 = vld [vmem:[%s10 + $0xbc] sm:$0xf]
        %v3572 = vld [vmem:[%s10 + $0xc0] sm:$0xf]
        %v3573 = vld [vmem:[%s10 + $0xc4] sm:$0xf]
        %v3574 = vld [vmem:[%s10 + $0xc8] sm:$0xf]
        %v3575 = vld [vmem:[%s10 + $0xcc] sm:$0xf]
        %v3576 = vld [vmem:[%s10 + $0xd0] sm:$0xf]
        %v3577 = vld [vmem:[%s10 + $0xd4] sm:$0xf]
        %v3578 = vld [vmem:[%s10 + $0xd8] sm:$0xf]
        %v3579 = vld [vmem:[%s10 + $0xdc] sm:$0xf]
        %v3636 = vunpack.c.l.b16 %v3524
        %v3637 = vunpack.c.l.b16 %v3525
        %v3638 = vunpack.c.l.b16 %v3526
        %v3639 = vunpack.c.l.b16 %v3527
        %v3640 = vunpack.c.l.b16 %v3528
        %v3641 = vunpack.c.l.b16 %v3529
        %v3642 = vunpack.c.l.b16 %v3530
        %v3643 = vunpack.c.l.b16 %v3531
        %v3644 = vunpack.c.l.b16 %v3532
        %v3645 = vunpack.c.l.b16 %v3533
        %v3646 = vunpack.c.l.b16 %v3534
        %v3647 = vunpack.c.l.b16 %v3535
        %v3648 = vunpack.c.l.b16 %v3536
        %v3649 = vunpack.c.l.b16 %v3537
        %v3650 = vunpack.c.l.b16 %v3538
        %v3651 = vunpack.c.l.b16 %v3539
        %v3652 = vunpack.c.l.b16 %v3540
        %v3653 = vunpack.c.l.b16 %v3541
        %v3654 = vunpack.c.l.b16 %v3542
        %v3655 = vunpack.c.l.b16 %v3543
        %v3656 = vunpack.c.l.b16 %v3544
        %v3657 = vunpack.c.l.b16 %v3545
        %v3658 = vunpack.c.l.b16 %v3546
        %v3659 = vunpack.c.l.b16 %v3547
        %v3660 = vunpack.c.l.b16 %v3548
        %v3661 = vunpack.c.l.b16 %v3549
        %v3662 = vunpack.c.l.b16 %v3550
        %v3663 = vunpack.c.l.b16 %v3551
        %v3664 = vunpack.c.l.b16 %v3552
        %v3665 = vunpack.c.l.b16 %v3553
        %v3666 = vunpack.c.l.b16 %v3554
        %v3667 = vunpack.c.l.b16 %v3555
        %v3668 = vunpack.c.l.b16 %v3556
        %v3669 = vunpack.c.l.b16 %v3557
        %v3670 = vunpack.c.l.b16 %v3558
        %v3671 = vunpack.c.l.b16 %v3559
        %v3672 = vunpack.c.l.b16 %v3560
        %v3673 = vunpack.c.l.b16 %v3561
        %v3674 = vunpack.c.l.b16 %v3562
        %v3675 = vunpack.c.l.b16 %v3563
        %v3676 = vunpack.c.l.b16 %v3564
        %v3677 = vunpack.c.l.b16 %v3565
        %v3678 = vunpack.c.l.b16 %v3566
        %v3679 = vunpack.c.l.b16 %v3567
        %v3680 = vunpack.c.l.b16 %v3568
        %v3681 = vunpack.c.l.b16 %v3569
        %v3682 = vunpack.c.l.b16 %v3570
        %v3683 = vunpack.c.l.b16 %v3571
        %v3684 = vunpack.c.l.b16 %v3572
        %v3685 = vunpack.c.l.b16 %v3573
        %v3686 = vunpack.c.l.b16 %v3574
        %v3687 = vunpack.c.l.b16 %v3575
        %v3688 = vunpack.c.l.b16 %v3576
        %v3689 = vunpack.c.l.b16 %v3577
        %v3690 = vunpack.c.l.b16 %v3578
        %v3691 = vunpack.c.l.b16 %v3579
        %v3692 = vpack.c.b16 %v3637, %v3636
        %v3693 = vpack.c.b16 %v3639, %v3638
        %v3694 = vpack.c.b16 %v3641, %v3640
        %v3695 = vpack.c.b16 %v3643, %v3642
        %v3696 = vpack.c.b16 %v3645, %v3644
        %v3697 = vpack.c.b16 %v3647, %v3646
        %v3698 = vpack.c.b16 %v3649, %v3648
        %v3699 = vpack.c.b16 %v3651, %v3650
        %v3700 = vpack.c.b16 %v3653, %v3652
        %v3701 = vpack.c.b16 %v3655, %v3654
        %v3702 = vpack.c.b16 %v3657, %v3656
        %v3703 = vpack.c.b16 %v3659, %v3658
        %v3704 = vpack.c.b16 %v3661, %v3660
        %v3705 = vpack.c.b16 %v3663, %v3662
        %v3706 = vpack.c.b16 %v3665, %v3664
        %v3707 = vpack.c.b16 %v3667, %v3666
        %v3708 = vpack.c.b16 %v3669, %v3668
        %v3709 = vpack.c.b16 %v3671, %v3670
        %v3710 = vpack.c.b16 %v3673, %v3672
        %v3711 = vpack.c.b16 %v3675, %v3674
        %v3712 = vpack.c.b16 %v3677, %v3676
        %v3713 = vpack.c.b16 %v3679, %v3678
        %v3714 = vpack.c.b16 %v3681, %v3680
        %v3715 = vpack.c.b16 %v3683, %v3682
        %v3716 = vpack.c.b16 %v3685, %v3684
        %v3717 = vpack.c.b16 %v3687, %v3686
        %v3718 = vpack.c.b16 %v3689, %v3688
        %v3719 = vpack.c.b16 %v3691, %v3690
        %v3749 = vsel %vm2306, %v3463, 0
        %3751 = vmatpush.bf16.msra.mxu0 %v3699
        %3752 = vmatpush.bf16.msra.mxu0 %v3698
        %3753 = vmatpush.bf16.msra.mxu0 %v3697
        %3754 = vmatpush.bf16.msra.mxu0 %v3696
        %3755 = vmatpush.bf16.msra.mxu0 %v3695
        %3756 = vmatpush.bf16.msra.mxu0 %v3694
        %3757 = vmatpush.bf16.msra.mxu0 %v3693
        %3758 = vmatpush.bf16.msra.mxu0 %v3692
        %3759 = vmatmul.bf16.gmra.mxu0 %v3460
        %v3760 = vpop.f32.mrf.mxu0
        %v3761 = vadd.f32 0.0, %v3760
        %v3762 = vpop.f32.mrf.mxu0
        %3763 = vdwg.mxu0
        %3764 = vmatpush.bf16.msra.mxu0 %v3707
        %3765 = vmatpush.bf16.msra.mxu0 %v3706
        %3766 = vmatpush.bf16.msra.mxu0 %v3705
        %3767 = vmatpush.bf16.msra.mxu0 %v3704
        %3768 = vmatpush.bf16.msra.mxu0 %v3703
        %3769 = vmatpush.bf16.msra.mxu0 %v3702
        %3770 = vmatpush.bf16.msra.mxu0 %v3701
        %3771 = vmatpush.bf16.msra.mxu0 %v3700
        %3772 = vmatmul.bf16.gmra.mxu0 %v3461
        %v3773 = vpop.f32.mrf.mxu0
        %v3774 = vadd.f32 %v3761, %v3773
        %v3775 = vpop.f32.mrf.mxu0
        %3776 = vdwg.mxu0
        %3777 = vmatpush.bf16.msra.mxu0 %v3715
        %3778 = vmatpush.bf16.msra.mxu0 %v3714
        %3779 = vmatpush.bf16.msra.mxu0 %v3713
        %3780 = vmatpush.bf16.msra.mxu0 %v3712
        %3781 = vmatpush.bf16.msra.mxu0 %v3711
        %3782 = vmatpush.bf16.msra.mxu0 %v3710
        %3783 = vmatpush.bf16.msra.mxu0 %v3709
        %3784 = vmatpush.bf16.msra.mxu0 %v3708
        %3785 = vmatmul.bf16.gmra.mxu0 %v3462
        %v3786 = vpop.f32.mrf.mxu0
        %v3787 = vadd.f32 %v3774, %v3786
        %v3788 = vpop.f32.mrf.mxu0
        %3789 = vdwg.mxu0
        %3790 = vmatpush.bf16.msra.mxu0 0
        %3791 = vmatpush.bf16.msra.mxu0 0
        %3792 = vmatpush.bf16.msra.mxu0 0
        %3793 = vmatpush.bf16.msra.mxu0 0
        %3794 = vmatpush.bf16.msra.mxu0 %v3719
        %3795 = vmatpush.bf16.msra.mxu0 %v3718
        %3796 = vmatpush.bf16.msra.mxu0 %v3717
        %3797 = vmatpush.bf16.msra.mxu0 %v3716
        %3798 = vmatmul.bf16.gmra.mxu0 %v3749
        %v3799 = vpop.f32.mrf.mxu0
        %v3800 = vadd.f32 %v3787, %v3799
        %v3801 = vpop.f32.mrf.mxu0
        %3802 = vdwg.mxu0
        %v3859 = vunpack.c.l.b16 %v3468
        %v3860 = vunpack.c.l.b16 %v3469
        %v3861 = vunpack.c.l.b16 %v3470
        %v3862 = vunpack.c.l.b16 %v3471
        %v3863 = vunpack.c.l.b16 %v3472
        %v3864 = vunpack.c.l.b16 %v3473
        %v3865 = vunpack.c.l.b16 %v3474
        %v3866 = vunpack.c.l.b16 %v3475
        %v3867 = vunpack.c.l.b16 %v3476
        %v3868 = vunpack.c.l.b16 %v3477
        %v3869 = vunpack.c.l.b16 %v3478
        %v3870 = vunpack.c.l.b16 %v3479
        %v3871 = vunpack.c.l.b16 %v3480
        %v3872 = vunpack.c.l.b16 %v3481
        %v3873 = vunpack.c.l.b16 %v3482
        %v3874 = vunpack.c.l.b16 %v3483
        %v3875 = vunpack.c.l.b16 %v3484
        %v3876 = vunpack.c.l.b16 %v3485
        %v3877 = vunpack.c.l.b16 %v3486
        %v3878 = vunpack.c.l.b16 %v3487
        %v3879 = vunpack.c.l.b16 %v3488
        %v3880 = vunpack.c.l.b16 %v3489
        %v3881 = vunpack.c.l.b16 %v3490
        %v3882 = vunpack.c.l.b16 %v3491
        %v3883 = vunpack.c.l.b16 %v3492
        %v3884 = vunpack.c.l.b16 %v3493
        %v3885 = vunpack.c.l.b16 %v3494
        %v3886 = vunpack.c.l.b16 %v3495
        %v3887 = vunpack.c.l.b16 %v3496
        %v3888 = vunpack.c.l.b16 %v3497
        %v3889 = vunpack.c.l.b16 %v3498
        %v3890 = vunpack.c.l.b16 %v3499
        %v3891 = vunpack.c.l.b16 %v3500
        %v3892 = vunpack.c.l.b16 %v3501
        %v3893 = vunpack.c.l.b16 %v3502
        %v3894 = vunpack.c.l.b16 %v3503
        %v3895 = vunpack.c.l.b16 %v3504
        %v3896 = vunpack.c.l.b16 %v3505
        %v3897 = vunpack.c.l.b16 %v3506
        %v3898 = vunpack.c.l.b16 %v3507
        %v3899 = vunpack.c.l.b16 %v3508
        %v3900 = vunpack.c.l.b16 %v3509
        %v3901 = vunpack.c.l.b16 %v3510
        %v3902 = vunpack.c.l.b16 %v3511
        %v3903 = vunpack.c.l.b16 %v3512
        %v3904 = vunpack.c.l.b16 %v3513
        %v3905 = vunpack.c.l.b16 %v3514
        %v3906 = vunpack.c.l.b16 %v3515
        %v3907 = vunpack.c.l.b16 %v3516
        %v3908 = vunpack.c.l.b16 %v3517
        %v3909 = vunpack.c.l.b16 %v3518
        %v3910 = vunpack.c.l.b16 %v3519
        %v3911 = vunpack.c.l.b16 %v3520
        %v3912 = vunpack.c.l.b16 %v3521
        %v3913 = vunpack.c.l.b16 %v3522
        %v3914 = vunpack.c.l.b16 %v3523
        %v3915 = vpack.c.b16 %v3860, %v3859
        %v3916 = vpack.c.b16 %v3862, %v3861
        %v3917 = vpack.c.b16 %v3864, %v3863
        %v3918 = vpack.c.b16 %v3866, %v3865
        %v3919 = vpack.c.b16 %v3868, %v3867
        %v3920 = vpack.c.b16 %v3870, %v3869
        %v3921 = vpack.c.b16 %v3872, %v3871
        %v3922 = vpack.c.b16 %v3874, %v3873
        %v3923 = vpack.c.b16 %v3876, %v3875
        %v3924 = vpack.c.b16 %v3878, %v3877
        %v3925 = vpack.c.b16 %v3880, %v3879
        %v3926 = vpack.c.b16 %v3882, %v3881
        %v3927 = vpack.c.b16 %v3884, %v3883
        %v3928 = vpack.c.b16 %v3886, %v3885
        %v3929 = vpack.c.b16 %v3888, %v3887
        %v3930 = vpack.c.b16 %v3890, %v3889
        %v3931 = vpack.c.b16 %v3892, %v3891
        %v3932 = vpack.c.b16 %v3894, %v3893
        %v3933 = vpack.c.b16 %v3896, %v3895
        %v3934 = vpack.c.b16 %v3898, %v3897
        %v3935 = vpack.c.b16 %v3900, %v3899
        %v3936 = vpack.c.b16 %v3902, %v3901
        %v3937 = vpack.c.b16 %v3904, %v3903
        %v3938 = vpack.c.b16 %v3906, %v3905
        %v3939 = vpack.c.b16 %v3908, %v3907
        %v3940 = vpack.c.b16 %v3910, %v3909
        %v3941 = vpack.c.b16 %v3912, %v3911
        %v3942 = vpack.c.b16 %v3914, %v3913
        %v3972 = vsel %vm2306, %v3467, 0
        %3974 = vmatpush.bf16.msra.mxu0 %v3922
        %3975 = vmatpush.bf16.msra.mxu0 %v3921
        %3976 = vmatpush.bf16.msra.mxu0 %v3920
        %3977 = vmatpush.bf16.msra.mxu0 %v3919
        %3978 = vmatpush.bf16.msra.mxu0 %v3918
        %3979 = vmatpush.bf16.msra.mxu0 %v3917
        %3980 = vmatpush.bf16.msra.mxu0 %v3916
        %3981 = vmatpush.bf16.msra.mxu0 %v3915
        %3982 = vmatmul.bf16.gmra.mxu0 %v3464
        %v3983 = vpop.f32.mrf.mxu0
        %v3984 = vadd.f32 %v3800, %v3983
        %v3985 = vpop.f32.mrf.mxu0
        %3986 = vdwg.mxu0
        %3987 = vmatpush.bf16.msra.mxu0 %v3930
        %3988 = vmatpush.bf16.msra.mxu0 %v3929
        %3989 = vmatpush.bf16.msra.mxu0 %v3928
        %3990 = vmatpush.bf16.msra.mxu0 %v3927
        %3991 = vmatpush.bf16.msra.mxu0 %v3926
        %3992 = vmatpush.bf16.msra.mxu0 %v3925
        %3993 = vmatpush.bf16.msra.mxu0 %v3924
        %3994 = vmatpush.bf16.msra.mxu0 %v3923
        %3995 = vmatmul.bf16.gmra.mxu0 %v3465
        %v3996 = vpop.f32.mrf.mxu0
        %v3997 = vadd.f32 %v3984, %v3996
        %v3998 = vpop.f32.mrf.mxu0
        %3999 = vdwg.mxu0
        %4000 = vmatpush.bf16.msra.mxu0 %v3938
        %4001 = vmatpush.bf16.msra.mxu0 %v3937
        %4002 = vmatpush.bf16.msra.mxu0 %v3936
        %4003 = vmatpush.bf16.msra.mxu0 %v3935
        %4004 = vmatpush.bf16.msra.mxu0 %v3934
        %4005 = vmatpush.bf16.msra.mxu0 %v3933
        %4006 = vmatpush.bf16.msra.mxu0 %v3932
        %4007 = vmatpush.bf16.msra.mxu0 %v3931
        %4008 = vmatmul.bf16.gmra.mxu0 %v3466
        %v4009 = vpop.f32.mrf.mxu0
        %v4010 = vadd.f32 %v3997, %v4009
        %v4011 = vpop.f32.mrf.mxu0
        %4012 = vdwg.mxu0
        %4013 = vmatpush.bf16.msra.mxu0 0
        %4014 = vmatpush.bf16.msra.mxu0 0
        %4015 = vmatpush.bf16.msra.mxu0 0
        %4016 = vmatpush.bf16.msra.mxu0 0
        %4017 = vmatpush.bf16.msra.mxu0 %v3942
        %4018 = vmatpush.bf16.msra.mxu0 %v3941
        %4019 = vmatpush.bf16.msra.mxu0 %v3940
        %4020 = vmatpush.bf16.msra.mxu0 %v3939
        %4021 = vmatmul.bf16.gmra.mxu0 %v3972
        %v4022 = vpop.f32.mrf.mxu0
        %v4023 = vadd.f32 %v4010, %v4022
        %v4024 = vpop.f32.mrf.mxu0
        %4025 = vdwg.mxu0
        %v4026 = vld [vmem:[%s11] sm:$0x1]
        %v4028 = vperm.slane %v4026, 0
        %v4030 = vadd.f32 %v4023, %v4028
        %4031 = vst [vmem:[%s12] sm:$0xff] %v4030
      $region76: #{ppo_forward.7} parent=67 // pred_fallthru
        _
      // Predicated region
      $region77: #{ppo_forward.7} parent=67 // pred_check
        %p4032 = pneg %p298
      $region78: #{ppo_forward.7} parent=67 // pred_check_branch
        %4034 = sbr.rel (%p4032) target = $region80
      $region79: #{ppo_forward.7} parent=67 // pred_region
        _
      $region80: #{ppo_forward.7} parent=67 // pred_fallthru
        _
      // Predicated region
      $region81: #{ppo_forward.7} parent=67 // pred_check
        %p4035 = pneg %p298
      $region82: #{ppo_forward.7} parent=67 // pred_check_branch
        %4037 = sbr.rel (%p4035) target = $region84
      $region83: #{ppo_forward.7} parent=67 // pred_region
        _
      $region84: #{ppo_forward.7} parent=67 // pred_fallthru
        _
    $region68: #{ppo_forward.7} parent=5 // pred_fallthru
      _
    %p4038 = scmp.le.s32.totalorder 2, %s18
    // Predicated region
    $region85: #{ppo_forward.7} parent=5 // pred_check
      %p4039 = pneg %p4038
    $region86: #{ppo_forward.7} parent=5 // pred_check_branch
      %4041 = sbr.rel (%p4039) target = $region88
    $region87: #{ppo_forward.7} parent=5 // pred_region
      %s4042 = ssub.s32 %s18, 2
    $region88: #{ppo_forward.7} parent=5 // pred_fallthru
      _
  $region6: #{ppo_forward.7} parent=0 // loop_footer
    %s22 = sadd.s32 1, %s18
  $region7: #{ppo_forward.7} parent=0 // loop_footer_branch
    %17 = sbr.rel target = $region3
  $region8: #{ppo_forward.7} parent=0 // loop_exit
    _

</llo_original>
